<compile_context>
chip_gen: v7x
topology: tpu7x:2x2x1
jax: 0.10.0
libtpu: 0.0.40
codegen_flags: <defaults>
</compile_context>

<pallas_src>
import math

import jax
import jax.numpy as jnp
from jax.experimental import pallas as pl
from jax.experimental.pallas import tpu as pltpu


def _round_up(v, m):
    return ((v + m - 1) // m) * m


def _mlp_kernel(x_ref, y_ref, w1t_ref, b1t_ref, w2t_ref, b2t_ref, w3t_ref,
                b3_ref, o_ref):
    xr = x_ref[...]                               # (1, tm)  batch on lanes
    yr = y_ref[...]                               # (1, tm)

    # Layer 1 (in=2): VPU broadcast mul-adds.  The (H1,1)->(H1,tm) lane
    # broadcasts of the weight columns are re-materialized per grid step, but
    # the MXU (layers 2/3) is the binding unit, so this VPU work sits in slack.
    w1t = w1t_ref[...]                            # (H1, 2)  f32
    h1 = jnp.maximum(w1t[:, 0:1] * xr + w1t[:, 1:2] * yr + b1t_ref[...], 0.0)

    # Layer 2: MXU, bf16 operands, f32 accumulation; bias/ReLU in f32.
    h1 = h1.astype(w2t_ref.dtype)                 # (H1, tm) bf16
    h2 = jnp.dot(w2t_ref[...], h1,
                 preferred_element_type=jnp.float32) + b2t_ref[...]
    h2 = jnp.maximum(h2, 0.0).astype(w3t_ref.dtype)   # (H2, tm) bf16

    # Output projection (kept on the MXU; vext slot has slack) + SMEM bias.
    o_ref[...] = (jnp.dot(w3t_ref[...], h2,
                          preferred_element_type=jnp.float32) + b3_ref[0])


def nn_forward_pallas(x, y, params, *, tm=8192):
    """Fused MLP forward. x, y: (N, 1) float32. Returns (N, n_output) float32."""
    w1, b1, w2, b2, w3, b3 = params
    N = x.shape[0]
    H1 = w1.shape[1]
    H2 = w2.shape[1]
    n_out = w3.shape[1]

    # Lane tile: multiple of 128, never (much) larger than the batch.
    tm = max(128, (int(tm) // 128) * 128)
    tm = min(tm, _round_up(N, 128))
    grid = pl.cdiv(N, tm)
    if grid > 1 and grid % 2 == 1:
        # Best-effort re-balance to an even number of steps so v7x's two
        # TensorCores (sharding the "parallel" axis) get equal work.
        tm = max(128, _round_up(pl.cdiv(N, grid + 1), 128))
        grid = pl.cdiv(N, tm)

    # Free re-layout: (N, 1) -> (1, N); batch lands on the lane axis.  No
    # concatenate / pad / transpose HBM passes in the wrapper.
    x_l = x.reshape(1, N)
    y_l = y.reshape(1, N)

    # Transposed weights (out_features, in_features) for W @ h^T.  MXU
    # operands in bf16 (f32 accumulation in-kernel); layer-1/bias math in f32.
    w1t = w1.T                                   # (H1, 2)   f32
    b1t = b1.T                                   # (H1, 1)   f32
    w2t = w2.T.astype(jnp.bfloat16)              # (H2, H1)  bf16
    b2t = b2.T                                   # (H2, 1)   f32
    w3t = w3.T.astype(jnp.bfloat16)              # (n_out, H2) bf16
    b3s = b3.reshape(-1)                         # (1,) -> SMEM scalar

    flops = 2 * N * (2 * H1 + H1 * H2 + H2 * n_out)
    bytes_accessed = (4 * N * (2 + n_out)                       # x, y, out
                      + 4 * (2 * H1 + H1 + H2 + n_out)          # f32 params
                      + 2 * (H1 * H2 + H2 * n_out))             # bf16 params
    cost = pl.CostEstimate(flops=int(flops), transcendentals=0,
                           bytes_accessed=int(bytes_accessed))

    def full(a):
        return pl.BlockSpec(a.shape, lambda i: (0, 0))

    out = pl.pallas_call(
        _mlp_kernel,
        out_shape=jax.ShapeDtypeStruct((n_out, N), jnp.float32),
        grid_spec=pltpu.PrefetchScalarGridSpec(
            num_scalar_prefetch=0,
            grid=(grid,),
            in_specs=[
                pl.BlockSpec((1, tm), lambda i: (0, i)),            # x tile
                pl.BlockSpec((1, tm), lambda i: (0, i)),            # y tile
                full(w1t), full(b1t),                               # layer 1
                full(w2t), full(b2t),                               # layer 2
                full(w3t),                                          # layer 3 W
                pl.BlockSpec(memory_space=pltpu.MemorySpace.SMEM),  # b3 scalar
            ],
            out_specs=pl.BlockSpec((n_out, tm), lambda i: (0, i)),  # lane-dense
        ),
        compiler_params=pltpu.CompilerParams(
            dimension_semantics=("parallel",),
            vmem_limit_bytes=32 * 1024 * 1024),
        cost_estimate=cost,
    )(x_l, y_l, w1t, b1t, w2t, b2t, w3t, b3s)

    if n_out == 1:
        return out.reshape(N, 1)
    return out.T


def init_params(key, n_feature, n_hidden, n_output, depth=2):
    """PyTorch-nn.Linear-style init (uniform +-1/sqrt(fan_in)).

    Weights stored as (in_features, out_features); biases as (1, out_features).
    """
    assert depth >= 2, "depth=1 is ill-defined in the reference module"
    # TODO(synk): wrapper/kernel hardcode the depth=2 layer stack (3 Linears).
    dims = [n_feature, n_hidden]
    in_ch = n_hidden
    for _ in range(depth - 1):
        dims.append(2 * in_ch)
        in_ch = 2 * in_ch
    dims.append(n_output)           # attend: Linear(out_ch // 2, n_output)

    params = []
    keys = jax.random.split(key, 2 * (len(dims) - 1))
    for li in range(len(dims) - 1):
        fan_in, fan_out = dims[li], dims[li + 1]
        bound = 1.0 / math.sqrt(fan_in)
        w = jax.random.uniform(keys[2 * li], (fan_in, fan_out),
                               minval=-bound, maxval=bound, dtype=jnp.float32)
        b = jax.random.uniform(keys[2 * li + 1], (1, fan_out),
                               minval=-bound, maxval=bound, dtype=jnp.float32)
        params += [w, b]
    return tuple(params)


def nn_forward_ref(x, y, params):
    """Pure-f32 reference (matches the PyTorch module's math)."""
    w1, b1, w2, b2, w3, b3 = params
    h = jnp.concatenate([x, y], axis=-1)
    h = jnp.maximum(h @ w1 + b1, 0.0)
    h = jnp.maximum(h @ w2 + b2, 0.0)
    return h @ w3 + b3


def nn_forward_ref_bf16(x, y, params):
    """Precision-matched reference: bf16 matmul operands, f32 accumulation."""
    w1, b1, w2, b2, w3, b3 = params
    h = jnp.concatenate([x, y], axis=-1)
    h = jnp.maximum(h @ w1 + b1, 0.0)
    h = jnp.dot(h.astype(jnp.bfloat16), w2.astype(jnp.bfloat16),
                preferred_element_type=jnp.float32) + b2
    h = jnp.maximum(h, 0.0)
    return jnp.dot(h.astype(jnp.bfloat16), w3.astype(jnp.bfloat16),
                   preferred_element_type=jnp.float32) + b3


if __name__ == "__main__":
    key = jax.random.PRNGKey(0)
    k_param, k_x, k_x2 = jax.random.split(key, 3)

    n_feature, n_hidden, n_output, depth = 2, 32, 1, 2
    params = init_params(k_param, n_feature, n_hidden, n_output, depth)

    # Two batch sizes: the module's 10000 (grid=2, partial last tile) and a
    # small one (grid=1, partial tile).  Neither is a multiple of 128/tm.
    for N in (10000, 777):
        kx, kx2 = jax.random.fold_in(k_x, N), jax.random.fold_in(k_x2, N)
        x = jax.random.uniform(kx, (N, 1), minval=1.0, maxval=100.0,
                               dtype=jnp.float32)
        x2 = jax.random.uniform(kx2, (N, 1), minval=1.0, maxval=100.0,
                                dtype=jnp.float32)
        y = x / x2

        out = nn_forward_pallas(x, y, params)
        out = jax.block_until_ready(out)
        assert out.shape == (N, n_output)
        assert bool(jnp.all(jnp.isfinite(out))), "non-finite output"

        # Tight check vs a precision-matched (bf16 matmul operand) reference.
        ref_m = nn_forward_ref_bf16(x, y, params)
        assert jnp.allclose(out, ref_m, atol=1.5e-1, rtol=1e-2), \
            "mismatch vs precision-matched reference"

        # Looser check vs the full-f32 module semantics (bf16 rounding only).
        ref = nn_forward_ref(x, y, params)
        assert jnp.allclose(out, ref, atol=1.0, rtol=2e-2), \
            "mismatch vs f32 reference"

    print("KERNEL_OK")
</pallas_src>

<mosaic_0001>
module attributes {stable_mosaic.version = 11 : i64} {
  func.func @_mlp_kernel(%arg0: i32, %arg1: memref<1x8192xf32, #tpu.memory_space<vmem>>, %arg2: memref<1x8192xf32, #tpu.memory_space<vmem>>, %arg3: memref<32x2xf32, #tpu.memory_space<vmem>>, %arg4: memref<32x1xf32, #tpu.memory_space<vmem>>, %arg5: memref<64x32xbf16, #tpu.memory_space<vmem>>, %arg6: memref<64x1xf32, #tpu.memory_space<vmem>>, %arg7: memref<1x64xbf16, #tpu.memory_space<vmem>>, %arg8: memref<1xf32, #tpu.memory_space<smem>>, %arg9: memref<1x8192xf32, #tpu.memory_space<vmem>>) attributes {dimension_semantics = [#tpu.dimension_semantics<parallel>], iteration_bounds = array<i64: 2>, scalar_prefetch = 0 : i64, scratch_operands = 0 : i64, tpu.core_type = #tpu.core_type<tc>, window_params = [{transform_indices = @transform_0, window_bounds = array<i64: 1, 8192>}, {transform_indices = @transform_1, window_bounds = array<i64: 1, 8192>}, {pipeline_mode = #tpu.pipeline_mode<synchronous>, transform_indices = @transform_2, window_bounds = array<i64: 32, 2>}, {pipeline_mode = #tpu.pipeline_mode<synchronous>, transform_indices = @transform_3, window_bounds = array<i64: 32, 1>}, {pipeline_mode = #tpu.pipeline_mode<synchronous>, transform_indices = @transform_4, window_bounds = array<i64: 64, 32>}, {pipeline_mode = #tpu.pipeline_mode<synchronous>, transform_indices = @transform_5, window_bounds = array<i64: 64, 1>}, {pipeline_mode = #tpu.pipeline_mode<synchronous>, transform_indices = @transform_6, window_bounds = array<i64: 1, 64>}, {transform_indices = @transform_7, window_bounds = array<i64: 1>}, {transform_indices = @transform_8, window_bounds = array<i64: 1, 8192>}]} {
    %c0 = arith.constant 0 : index
    %c0_0 = arith.constant 0 : index
    %0 = vector.load %arg1[%c0, %c0_0] : memref<1x8192xf32, #tpu.memory_space<vmem>>, vector<1x8192xf32>
    %c0_1 = arith.constant 0 : index
    %c0_2 = arith.constant 0 : index
    %1 = vector.load %arg2[%c0_1, %c0_2] : memref<1x8192xf32, #tpu.memory_space<vmem>>, vector<1x8192xf32>
    %c0_3 = arith.constant 0 : index
    %c0_4 = arith.constant 0 : index
    %2 = vector.load %arg3[%c0_3, %c0_4] : memref<32x2xf32, #tpu.memory_space<vmem>>, vector<32x2xf32>
    %3 = vector.extract_strided_slice %2 {offsets = [0, 0], sizes = [32, 1], strides = [1, 1]} : vector<32x2xf32> to vector<32x1xf32>
    %4 = vector.broadcast %3 : vector<32x1xf32> to vector<32x8192xf32>
    %5 = vector.broadcast %0 : vector<1x8192xf32> to vector<32x8192xf32>
    %6 = arith.mulf %4, %5 : vector<32x8192xf32>
    %7 = vector.extract_strided_slice %2 {offsets = [0, 1], sizes = [32, 1], strides = [1, 1]} : vector<32x2xf32> to vector<32x1xf32>
    %8 = vector.broadcast %7 : vector<32x1xf32> to vector<32x8192xf32>
    %9 = vector.broadcast %1 : vector<1x8192xf32> to vector<32x8192xf32>
    %10 = arith.mulf %8, %9 : vector<32x8192xf32>
    %11 = arith.addf %6, %10 : vector<32x8192xf32>
    %c0_5 = arith.constant 0 : index
    %c0_6 = arith.constant 0 : index
    %12 = vector.load %arg4[%c0_5, %c0_6] : memref<32x1xf32, #tpu.memory_space<vmem>>, vector<32x1xf32>
    %13 = vector.broadcast %12 : vector<32x1xf32> to vector<32x8192xf32>
    %14 = arith.addf %11, %13 : vector<32x8192xf32>
    %cst = arith.constant 0.000000e+00 : f32
    %15 = vector.broadcast %cst : f32 to vector<32x8192xf32>
    %16 = arith.maximumf %14, %15 : vector<32x8192xf32>
    %17 = arith.truncf %16 : vector<32x8192xf32> to vector<32x8192xbf16>
    %c0_7 = arith.constant 0 : index
    %c0_8 = arith.constant 0 : index
    %18 = vector.load %arg5[%c0_7, %c0_8] : memref<64x32xbf16, #tpu.memory_space<vmem>>, vector<64x32xbf16>
    %cst_9 = arith.constant dense<0.000000e+00> : vector<64x8192xf32>
    %19 = tpu.matmul %18, %17, %cst_9 {dimension_numbers = #tpu.dot_dimension_numbers<[1], [0], [0], [1], [0, 0, 1, 1], [], []>} : vector<64x32xbf16>, vector<32x8192xbf16>, vector<64x8192xf32> -> vector<64x8192xf32>
    %c0_10 = arith.constant 0 : index
    %c0_11 = arith.constant 0 : index
    %20 = vector.load %arg6[%c0_10, %c0_11] : memref<64x1xf32, #tpu.memory_space<vmem>>, vector<64x1xf32>
    %21 = vector.broadcast %20 : vector<64x1xf32> to vector<64x8192xf32>
    %22 = arith.addf %19, %21 : vector<64x8192xf32>
    %cst_12 = arith.constant 0.000000e+00 : f32
    %23 = vector.broadcast %cst_12 : f32 to vector<64x8192xf32>
    %24 = arith.maximumf %22, %23 : vector<64x8192xf32>
    %25 = arith.truncf %24 : vector<64x8192xf32> to vector<64x8192xbf16>
    %c0_13 = arith.constant 0 : index
    %c0_14 = arith.constant 0 : index
    %26 = vector.load %arg7[%c0_13, %c0_14] : memref<1x64xbf16, #tpu.memory_space<vmem>>, vector<1x64xbf16>
    %cst_15 = arith.constant dense<0.000000e+00> : vector<1x8192xf32>
    %27 = tpu.matmul %26, %25, %cst_15 {dimension_numbers = #tpu.dot_dimension_numbers<[1], [0], [0], [1], [0, 0, 1, 1], [], []>} : vector<1x64xbf16>, vector<64x8192xbf16>, vector<1x8192xf32> -> vector<1x8192xf32>
    %c0_16 = arith.constant 0 : index
    %28 = memref.load %arg8[%c0_16] : memref<1xf32, #tpu.memory_space<smem>>
    %29 = vector.broadcast %28 : f32 to vector<1x8192xf32>
    %30 = arith.addf %27, %29 : vector<1x8192xf32>
    %c0_17 = arith.constant 0 : index
    %c0_18 = arith.constant 0 : index
    %31 = vector.load %arg9[%c0_17, %c0_18] : memref<1x8192xf32, #tpu.memory_space<vmem>>, vector<1x8192xf32>
    tpu.vector_store %arg9[%c0_17, %c0_18], %30 {strides = array<i32>} : memref<1x8192xf32, #tpu.memory_space<vmem>>, vector<1x8192xf32>,
    return
  }
  func.func @transform_0(%arg0: i32) -> (i32, i32) {
    %c0_i32 = arith.constant 0 : i32
    %c0_i32_0 = arith.constant 0 : i32
    return %c0_i32, %arg0 : i32, i32
  }
  func.func @transform_1(%arg0: i32) -> (i32, i32) {
    %c0_i32 = arith.constant 0 : i32
    %c0_i32_0 = arith.constant 0 : i32
    return %c0_i32, %arg0 : i32, i32
  }
  func.func @transform_2(%arg0: i32) -> (i32, i32) {
    %c0_i32 = arith.constant 0 : i32
    %c0_i32_0 = arith.constant 0 : i32
    %c0_i32_1 = arith.constant 0 : i32
    return %c0_i32, %c0_i32_0 : i32, i32
  }
  func.func @transform_3(%arg0: i32) -> (i32, i32) {
    %c0_i32 = arith.constant 0 : i32
    %c0_i32_0 = arith.constant 0 : i32
    %c0_i32_1 = arith.constant 0 : i32
    return %c0_i32, %c0_i32_0 : i32, i32
  }
  func.func @transform_4(%arg0: i32) -> (i32, i32) {
    %c0_i32 = arith.constant 0 : i32
    %c0_i32_0 = arith.constant 0 : i32
    %c0_i32_1 = arith.constant 0 : i32
    return %c0_i32, %c0_i32_0 : i32, i32
  }
  func.func @transform_5(%arg0: i32) -> (i32, i32) {
    %c0_i32 = arith.constant 0 : i32
    %c0_i32_0 = arith.constant 0 : i32
    %c0_i32_1 = arith.constant 0 : i32
    return %c0_i32, %c0_i32_0 : i32, i32
  }
  func.func @transform_6(%arg0: i32) -> (i32, i32) {
    %c0_i32 = arith.constant 0 : i32
    %c0_i32_0 = arith.constant 0 : i32
    %c0_i32_1 = arith.constant 0 : i32
    return %c0_i32, %c0_i32_0 : i32, i32
  }
  func.func @transform_7(%arg0: i32) -> i32 {
    %c0_i32 = arith.constant 0 : i32
    %c0_i32_0 = arith.constant 0 : i32
    return %c0_i32 : i32
  }
  func.func @transform_8(%arg0: i32) -> (i32, i32) {
    %c0_i32 = arith.constant 0 : i32
    %c0_i32_0 = arith.constant 0 : i32
    return %c0_i32, %arg0 : i32, i32
  }
}

</mosaic_0001>

<llo_original>
// kernel: tpu_custom_call.1
$region0: #{tpu_custom_call.1}
  #allocation0 [shape = 'u32[]', space=smem, size = 0x4, offset = 0x4, fixed_abs, tag = 'smem constant byte address 0x4 - core index']
  #allocation1 [shape = 'u32[144,128]{1,0:T(1,128)}', space=vmem, size = 0x12000, scoped, tag = 'internal scratch']
  #allocation2 [shape = 'f32[1]{0:T(128)S(6)}', space=smem, size = 0x200, scoped, tag = 'scoped memory for tpu_custom_call.1']
  %s0 = inlined_call_operand.vmem [shape: f32[1,10000], index: 0, kind: input, shape index: {}]
  %s1 = inlined_call_operand.vmem [shape: f32[1,10000], index: 1, kind: input, shape index: {}]
  %s2 = inlined_call_operand.vmem [shape: f32[32,2], index: 2, kind: input, shape index: {}]
  %s3 = inlined_call_operand.vmem [shape: f32[32,1], index: 3, kind: input, shape index: {}]
  %s4 = inlined_call_operand.vmem [shape: bf16[64,32], index: 4, kind: input, shape index: {}]
  %s5 = inlined_call_operand.vmem [shape: f32[64,1], index: 5, kind: input, shape index: {}]
  %s6 = inlined_call_operand.vmem [shape: bf16[1,64], index: 6, kind: input, shape index: {}]
  %s7 = inlined_call_operand.<no memory space> [shape: f32[1], index: 7, kind: input, shape index: {}]
  %s8 = inlined_call_operand.hbm [shape: f32[1,10000], index: 8, kind: output, shape index: {}]
  %s9 = sld [smem:[#allocation0]]
  $region65: #{tpu_custom_call.1} parent=0
    _
  %s11 = ssub.s32 1, %s9
  %s12 = scalar_select 0, %s11, %s9
  %13 = sst [smem:[#allocation2]] %s7
  $region1: #{tpu_custom_call.1} parent=0
    #allocation3 [shape = 'u8[65536]{0}', space=vmem, size = 0x10000, scoped, tag = 'output window, operand 0']
    #allocation4 [shape = 's32[2]{0}', space=sflag, size = 0x8, scoped, tag = 'scoped memory for tpu_custom_call.1']
    %14 = vsyncpa [#allocation4], 0
    %s15 = scalar_lea.sflag [#allocation4], 1
    %16 = vsyncpa %s15, 0
    loop: start=0, step=1, limit=4
    $region2: #{tpu_custom_call.1} parent=1 // loop_pre_header
      _
    $region3: #{tpu_custom_call.1} parent=1 // loop_header
      %s18 = sphi 0, %s22
      %p19 = scmp.ge.s32.totalorder %s18, 4
      %s28 = sphi 0, %s30
      %s31 = sphi 0, %s28
      %s32 = sphi 0, %s31
      %s48 = sphi 0, %s32
      %s54 = sphi 0, %s56
      %s57 = sphi 0, %s54
      %s58 = sphi 0, %s57
      %s74 = sphi 0, %s58
      %s78 = sphi 0, %s78
      %s80 = sphi 0, %s78
      %s81 = sphi 0, %s80
      %s95 = sphi 0, %s81
      %s99 = sphi 0, %s99
      %s101 = sphi 0, %s99
      %s102 = sphi 0, %s101
      %s116 = sphi 0, %s102
      %s120 = sphi 0, %s120
      %s122 = sphi 0, %s120
      %s123 = sphi 0, %s122
      %s137 = sphi 0, %s123
      %s141 = sphi 0, %s141
      %s143 = sphi 0, %s141
      %s144 = sphi 0, %s143
      %s158 = sphi 0, %s144
      %s162 = sphi 0, %s162
      %s164 = sphi 0, %s162
      %s165 = sphi 0, %s164
      %s179 = sphi 0, %s165
      %s183 = sphi 0, %s183
      %s185 = sphi 0, %s183
      %s186 = sphi 0, %s185
      %s200 = sphi 0, %s186
      %s206 = sphi 0, %s208
      %s209 = sphi 0, %s206
      %s210 = sphi 0, %s209
      %s226 = sphi 0, %s210
    $region4: #{tpu_custom_call.1} parent=1 // loop_header_branch
      %21 = sbr.rel (%p19) target = $region8
    $region5: #{tpu_custom_call.1} parent=1 // loop_body
      %s23 = ssub.s32 %s18, 1
      %s24 = ssub.s32 %s18, 2
      %s25 = sadd.s32 %s18, 1
      %s26 = ssub.s32 %s18, %s25
      %p27 = scmp.eq.s32.totalorder %s26, 0
      %s29 = sadd.s32 %s28, 1
      %s30 = scalar_select %p27, %s28, %s29
      %p33 = pneg %p27
      %p34 = scmp.eq.s32.totalorder %s18, 1
      %p35 = por %p33, %p34
      %p36 = scmp.ne.s32.totalorder %s28, %s31
      %p37 = scmp.eq.s32.totalorder %s18, 0
      %p38 = por %p36, %p37
      %p39 = scmp.ne.s32.totalorder %s28, %s31
      %p40 = scmp.eq.s32.totalorder %s23, 1
      %p41 = por %p39, %p40
      %p42 = scmp.ne.s32.totalorder %s31, %s32
      %p43 = scmp.eq.s32.totalorder %s23, 0
      %p44 = por %p42, %p43
      %p45 = scmp.ne.s32.totalorder %s31, %s32
      %p46 = scmp.eq.s32.totalorder %s24, 1
      %p47 = por %p45, %p46
      %p49 = scmp.ne.s32.totalorder %s32, %s48
      %p50 = scmp.eq.s32.totalorder %s24, 0
      %p51 = por %p49, %p50
      %s52 = ssub.s32 %s18, %s25
      %p53 = scmp.eq.s32.totalorder %s52, 0
      %s55 = sadd.s32 %s54, 1
      %s56 = scalar_select %p53, %s54, %s55
      %p59 = pneg %p53
      %p60 = scmp.eq.s32.totalorder %s18, 1
      %p61 = por %p59, %p60
      %p62 = scmp.ne.s32.totalorder %s54, %s57
      %p63 = scmp.eq.s32.totalorder %s18, 0
      %p64 = por %p62, %p63
      %p65 = scmp.ne.s32.totalorder %s54, %s57
      %p66 = scmp.eq.s32.totalorder %s23, 1
      %p67 = por %p65, %p66
      %p68 = scmp.ne.s32.totalorder %s57, %s58
      %p69 = scmp.eq.s32.totalorder %s23, 0
      %p70 = por %p68, %p69
      %p71 = scmp.ne.s32.totalorder %s57, %s58
      %p72 = scmp.eq.s32.totalorder %s24, 1
      %p73 = por %p71, %p72
      %p75 = scmp.ne.s32.totalorder %s58, %s74
      %p76 = scmp.eq.s32.totalorder %s24, 0
      %p77 = por %p75, %p76
      %s79 = sadd.s32 %s78, 1
      %p82 = scmp.eq.s32.totalorder %s18, 1
      %p83 = scmp.ne.s32.totalorder %s78, %s80
      %p84 = scmp.eq.s32.totalorder %s18, 0
      %p85 = por %p83, %p84
      %p86 = scmp.ne.s32.totalorder %s78, %s80
      %p87 = scmp.eq.s32.totalorder %s23, 1
      %p88 = por %p86, %p87
      %p89 = scmp.ne.s32.totalorder %s80, %s81
      %p90 = scmp.eq.s32.totalorder %s23, 0
      %p91 = por %p89, %p90
      %p92 = scmp.ne.s32.totalorder %s80, %s81
      %p93 = scmp.eq.s32.totalorder %s24, 1
      %p94 = por %p92, %p93
      %p96 = scmp.ne.s32.totalorder %s81, %s95
      %p97 = scmp.eq.s32.totalorder %s24, 0
      %p98 = por %p96, %p97
      %s100 = sadd.s32 %s99, 1
      %p103 = scmp.eq.s32.totalorder %s18, 1
      %p104 = scmp.ne.s32.totalorder %s99, %s101
      %p105 = scmp.eq.s32.totalorder %s18, 0
      %p106 = por %p104, %p105
      %p107 = scmp.ne.s32.totalorder %s99, %s101
      %p108 = scmp.eq.s32.totalorder %s23, 1
      %p109 = por %p107, %p108
      %p110 = scmp.ne.s32.totalorder %s101, %s102
      %p111 = scmp.eq.s32.totalorder %s23, 0
      %p112 = por %p110, %p111
      %p113 = scmp.ne.s32.totalorder %s101, %s102
      %p114 = scmp.eq.s32.totalorder %s24, 1
      %p115 = por %p113, %p114
      %p117 = scmp.ne.s32.totalorder %s102, %s116
      %p118 = scmp.eq.s32.totalorder %s24, 0
      %p119 = por %p117, %p118
      %s121 = sadd.s32 %s120, 1
      %p124 = scmp.eq.s32.totalorder %s18, 1
      %p125 = scmp.ne.s32.totalorder %s120, %s122
      %p126 = scmp.eq.s32.totalorder %s18, 0
      %p127 = por %p125, %p126
      %p128 = scmp.ne.s32.totalorder %s120, %s122
      %p129 = scmp.eq.s32.totalorder %s23, 1
      %p130 = por %p128, %p129
      %p131 = scmp.ne.s32.totalorder %s122, %s123
      %p132 = scmp.eq.s32.totalorder %s23, 0
      %p133 = por %p131, %p132
      %p134 = scmp.ne.s32.totalorder %s122, %s123
      %p135 = scmp.eq.s32.totalorder %s24, 1
      %p136 = por %p134, %p135
      %p138 = scmp.ne.s32.totalorder %s123, %s137
      %p139 = scmp.eq.s32.totalorder %s24, 0
      %p140 = por %p138, %p139
      %s142 = sadd.s32 %s141, 1
      %p145 = scmp.eq.s32.totalorder %s18, 1
      %p146 = scmp.ne.s32.totalorder %s141, %s143
      %p147 = scmp.eq.s32.totalorder %s18, 0
      %p148 = por %p146, %p147
      %p149 = scmp.ne.s32.totalorder %s141, %s143
      %p150 = scmp.eq.s32.totalorder %s23, 1
      %p151 = por %p149, %p150
      %p152 = scmp.ne.s32.totalorder %s143, %s144
      %p153 = scmp.eq.s32.totalorder %s23, 0
      %p154 = por %p152, %p153
      %p155 = scmp.ne.s32.totalorder %s143, %s144
      %p156 = scmp.eq.s32.totalorder %s24, 1
      %p157 = por %p155, %p156
      %p159 = scmp.ne.s32.totalorder %s144, %s158
      %p160 = scmp.eq.s32.totalorder %s24, 0
      %p161 = por %p159, %p160
      %s163 = sadd.s32 %s162, 1
      %p166 = scmp.eq.s32.totalorder %s18, 1
      %p167 = scmp.ne.s32.totalorder %s162, %s164
      %p168 = scmp.eq.s32.totalorder %s18, 0
      %p169 = por %p167, %p168
      %p170 = scmp.ne.s32.totalorder %s162, %s164
      %p171 = scmp.eq.s32.totalorder %s23, 1
      %p172 = por %p170, %p171
      %p173 = scmp.ne.s32.totalorder %s164, %s165
      %p174 = scmp.eq.s32.totalorder %s23, 0
      %p175 = por %p173, %p174
      %p176 = scmp.ne.s32.totalorder %s164, %s165
      %p177 = scmp.eq.s32.totalorder %s24, 1
      %p178 = por %p176, %p177
      %p180 = scmp.ne.s32.totalorder %s165, %s179
      %p181 = scmp.eq.s32.totalorder %s24, 0
      %p182 = por %p180, %p181
      %s184 = sadd.s32 %s183, 1
      %p187 = scmp.eq.s32.totalorder %s18, 1
      %p188 = scmp.ne.s32.totalorder %s183, %s185
      %p189 = scmp.eq.s32.totalorder %s18, 0
      %p190 = por %p188, %p189
      %p191 = scmp.ne.s32.totalorder %s183, %s185
      %p192 = scmp.eq.s32.totalorder %s23, 1
      %p193 = por %p191, %p192
      %p194 = scmp.ne.s32.totalorder %s185, %s186
      %p195 = scmp.eq.s32.totalorder %s23, 0
      %p196 = por %p194, %p195
      %p197 = scmp.ne.s32.totalorder %s185, %s186
      %p198 = scmp.eq.s32.totalorder %s24, 1
      %p199 = por %p197, %p198
      %p201 = scmp.ne.s32.totalorder %s186, %s200
      %p202 = scmp.eq.s32.totalorder %s24, 0
      %p203 = por %p201, %p202
      %s204 = ssub.s32 %s18, %s25
      %p205 = scmp.eq.s32.totalorder %s204, 0
      %s207 = sadd.s32 %s206, 1
      %s208 = scalar_select %p205, %s206, %s207
      %p211 = pneg %p205
      %p212 = scmp.eq.s32.totalorder %s18, 1
      %p213 = por %p211, %p212
      %p214 = scmp.ne.s32.totalorder %s206, %s209
      %p215 = scmp.eq.s32.totalorder %s18, 0
      %p216 = por %p214, %p215
      %p217 = scmp.ne.s32.totalorder %s206, %s209
      %p218 = scmp.eq.s32.totalorder %s23, 1
      %p219 = por %p217, %p218
      %p220 = scmp.ne.s32.totalorder %s209, %s210
      %p221 = scmp.eq.s32.totalorder %s23, 0
      %p222 = por %p220, %p221
      %p223 = scmp.ne.s32.totalorder %s209, %s210
      %p224 = scmp.eq.s32.totalorder %s24, 1
      %p225 = por %p223, %p224
      %p227 = scmp.ne.s32.totalorder %s210, %s226
      %p228 = scmp.eq.s32.totalorder %s24, 0
      %p229 = por %p227, %p228
      %p230 = scmp.le.s32.totalorder 1, %s18
      %p231 = scmp.lt.s32.totalorder %s18, 3
      %p232 = pnand %p230, %p231
      %p233 = pneg %p232
      // Predicated region
      $region9: #{tpu_custom_call.1} parent=5 // pred_check
        _
      $region10: #{tpu_custom_call.1} parent=5 // pred_check_branch
        %235 = sbr.rel (%p232) target = $region12
      $region11: #{tpu_custom_call.1} parent=5 // pred_region
        %s236 = ssub.s32 %s18, 1
        // Predicated region
        $region13: #{tpu_custom_call.1} parent=11 // pred_check
          %p237 = pneg %p91
        $region14: #{tpu_custom_call.1} parent=11 // pred_check_branch
          %239 = sbr.rel (%p237) target = $region16
        $region15: #{tpu_custom_call.1} parent=11 // pred_region
          _
        $region16: #{tpu_custom_call.1} parent=11 // pred_fallthru
          _
        // Predicated region
        $region17: #{tpu_custom_call.1} parent=11 // pred_check
          %p240 = pneg %p112
        $region18: #{tpu_custom_call.1} parent=11 // pred_check_branch
          %242 = sbr.rel (%p240) target = $region20
        $region19: #{tpu_custom_call.1} parent=11 // pred_region
          _
        $region20: #{tpu_custom_call.1} parent=11 // pred_fallthru
          _
        // Predicated region
        $region21: #{tpu_custom_call.1} parent=11 // pred_check
          %p243 = pneg %p133
        $region22: #{tpu_custom_call.1} parent=11 // pred_check_branch
          %245 = sbr.rel (%p243) target = $region24
        $region23: #{tpu_custom_call.1} parent=11 // pred_region
          _
        $region24: #{tpu_custom_call.1} parent=11 // pred_fallthru
          _
        // Predicated region
        $region25: #{tpu_custom_call.1} parent=11 // pred_check
          %p246 = pneg %p154
        $region26: #{tpu_custom_call.1} parent=11 // pred_check_branch
          %248 = sbr.rel (%p246) target = $region28
        $region27: #{tpu_custom_call.1} parent=11 // pred_region
          _
        $region28: #{tpu_custom_call.1} parent=11 // pred_fallthru
          _
        // Predicated region
        $region29: #{tpu_custom_call.1} parent=11 // pred_check
          %p249 = pneg %p175
        $region30: #{tpu_custom_call.1} parent=11 // pred_check_branch
          %251 = sbr.rel (%p249) target = $region32
        $region31: #{tpu_custom_call.1} parent=11 // pred_region
          _
        $region32: #{tpu_custom_call.1} parent=11 // pred_fallthru
          _
        // Predicated region
        $region33: #{tpu_custom_call.1} parent=11 // pred_check
          %p252 = pneg %p196
        $region34: #{tpu_custom_call.1} parent=11 // pred_check_branch
          %254 = sbr.rel (%p252) target = $region36
        $region35: #{tpu_custom_call.1} parent=11 // pred_region
          _
        $region36: #{tpu_custom_call.1} parent=11 // pred_fallthru
          _
      $region12: #{tpu_custom_call.1} parent=5 // pred_fallthru
        _
      %p255 = scmp.lt.s32.totalorder %s18, 2
      // Predicated region
      $region37: #{tpu_custom_call.1} parent=5 // pred_check
        %p256 = pneg %p255
      $region38: #{tpu_custom_call.1} parent=5 // pred_check_branch
        %258 = sbr.rel (%p256) target = $region40
      $region39: #{tpu_custom_call.1} parent=5 // pred_region
        // Predicated region
        $region41: #{tpu_custom_call.1} parent=39 // pred_check
          %p259 = pneg %p38
        $region42: #{tpu_custom_call.1} parent=39 // pred_check_branch
          %261 = sbr.rel (%p259) target = $region44
        $region43: #{tpu_custom_call.1} parent=39 // pred_region
          %s262 = smul.u32 64, %s18
          %s263 = ssub.s32 79, %s262
          %p264 = scmp.lt.s32.totalorder %s263, 64
          %s265 = scalar_select %p264, %s263, 64
          %s266 = smul.u32 16, %s265
          %p267 = scmp.lt.s32.totalorder %s262, 78
          %s268 = scalar_select %p267, %s262, 78
          %s269 = scalar_lea.vmem %s0, %s268
          %s270 = smul.u32 64, %s18
          %s271 = ssub.s32 79, %s270
          %p272 = scmp.lt.s32.totalorder %s271, 64
          %s273 = scalar_select %p272, %s271, 64
          %s274 = smul.u32 16, %s273
        $region44: #{tpu_custom_call.1} parent=39 // pred_fallthru
          _
        // Predicated region
        $region45: #{tpu_custom_call.1} parent=39 // pred_check
          %p275 = pneg %p64
        $region46: #{tpu_custom_call.1} parent=39 // pred_check_branch
          %277 = sbr.rel (%p275) target = $region48
        $region47: #{tpu_custom_call.1} parent=39 // pred_region
          %s278 = smul.u32 64, %s18
          %s279 = ssub.s32 79, %s278
          %p280 = scmp.lt.s32.totalorder %s279, 64
          %s281 = scalar_select %p280, %s279, 64
          %s282 = smul.u32 16, %s281
          %p283 = scmp.lt.s32.totalorder %s278, 78
          %s284 = scalar_select %p283, %s278, 78
          %s285 = scalar_lea.vmem %s1, %s284
          %s286 = smul.u32 64, %s18
          %s287 = ssub.s32 79, %s286
          %p288 = scmp.lt.s32.totalorder %s287, 64
          %s289 = scalar_select %p288, %s287, 64
          %s290 = smul.u32 16, %s289
        $region48: #{tpu_custom_call.1} parent=39 // pred_fallthru
          _
      $region40: #{tpu_custom_call.1} parent=5 // pred_fallthru
        _
      %p291 = scmp.le.s32.totalorder 1, %s18
      %p292 = scmp.lt.s32.totalorder %s18, 3
      %p293 = pnand %p291, %p292
      %p294 = pneg %p293
      // Predicated region
      $region49: #{tpu_custom_call.1} parent=5 // pred_check
        _
      $region50: #{tpu_custom_call.1} parent=5 // pred_check_branch
        %296 = sbr.rel (%p293) target = $region52
      $region51: #{tpu_custom_call.1} parent=5 // pred_region
        %s297 = ssub.s32 %s18, 1
        %s298 = smul.u32 64, %s23
        %s299 = ssub.s32 79, %s298
        %p300 = scmp.lt.s32.totalorder %s299, 64
        %s301 = scalar_select %p300, %s299, 64
        %s302 = smul.u32 16, %s301
        %p303 = scmp.lt.s32.totalorder %s298, 78
        %s304 = scalar_select %p303, %s298, 78
        %s305 = scalar_lea.vmem %s0, %s304
        %p306 = pneg %p44
        %p307 = pneg %p41
        %s308 = smul.u32 64, %s23
        %s309 = ssub.s32 79, %s308
        %p310 = scmp.lt.s32.totalorder %s309, 64
        %s311 = scalar_select %p310, %s309, 64
        %s312 = smul.u32 16, %s311
        %p313 = scmp.lt.s32.totalorder %s308, 78
        %s314 = scalar_select %p313, %s308, 78
        %s315 = scalar_lea.vmem %s1, %s314
        %p316 = pneg %p70
        %p317 = pneg %p67
        %p318 = pneg %p91
        %p319 = pneg %p88
        %p320 = pneg %p112
        %p321 = pneg %p109
        %p322 = pneg %p133
        %p323 = pneg %p130
        %p324 = pneg %p154
        %p325 = pneg %p151
        %p326 = pneg %p175
        %p327 = pneg %p172
        %p328 = pneg %p196
        %p329 = pneg %p193
        %p330 = pneg %p222
        %p331 = pneg %p219
        %s332 = sand.u32 %s209, 1
        %s333 = scalar_lea.sflag [#allocation4], %s332
        %s334 = sand.u32 %s209, 1
        %s335 = smul.addr %s334, 64
        %s336 = scalar_lea.vmem [#allocation3], %s335
        %s337 = smul.u32 64, %s23
        %s338 = ssub.s32 79, %s337
        %p339 = scmp.lt.s32.totalorder %s338, 64
        %s340 = scalar_select %p339, %s338, 64
        %s341 = smul.u32 16, %s340
        %p342 = scmp.lt.s32.totalorder %s337, 78
        %s343 = scalar_select %p342, %s337, 78
        %s344 = scalar_lea.vmem %s0, %s343
        %s345 = smul.u32 64, %s23
        %s346 = ssub.s32 79, %s345
        %p347 = scmp.lt.s32.totalorder %s346, 64
        %s348 = scalar_select %p347, %s346, 64
        %s349 = smul.u32 16, %s348
        %s350 = smul.u32 64, %s23
        %s351 = ssub.s32 79, %s350
        %p352 = scmp.lt.s32.totalorder %s351, 64
        %s353 = scalar_select %p352, %s351, 64
        %s354 = smul.u32 16, %s353
        %p355 = scmp.lt.s32.totalorder %s350, 78
        %s356 = scalar_select %p355, %s350, 78
        %s357 = scalar_lea.vmem %s1, %s356
        %s358 = smul.u32 64, %s23
        %s359 = ssub.s32 79, %s358
        %p360 = scmp.lt.s32.totalorder %s359, 64
        %s361 = scalar_select %p360, %s359, 64
        %s362 = smul.u32 16, %s361
        %s363 = smul.u32 64, %s23
        %s364 = ssub.s32 79, %s363
        %p365 = scmp.lt.s32.totalorder %s364, 64
        %s366 = scalar_select %p365, %s364, 64
        %s367 = smul.u32 16, %s366
        %v369 = vld [vmem:[%s344] sm:$0xff]
        %v370 = vld [vmem:[%s344 + $0x8] sm:$0xff]
        %v371 = vld [vmem:[%s344 + $0x10] sm:$0xff]
        %v372 = vld [vmem:[%s344 + $0x18] sm:$0xff]
        %v373 = vld [vmem:[%s344 + $0x20] sm:$0xff]
        %v374 = vld [vmem:[%s344 + $0x28] sm:$0xff]
        %v375 = vld [vmem:[%s344 + $0x30] sm:$0xff]
        %v376 = vld [vmem:[%s344 + $0x38] sm:$0xff]
        %v377 = vld [vmem:[%s357] sm:$0xff]
        %v378 = vld [vmem:[%s357 + $0x8] sm:$0xff]
        %v379 = vld [vmem:[%s357 + $0x10] sm:$0xff]
        %v380 = vld [vmem:[%s357 + $0x18] sm:$0xff]
        %v381 = vld [vmem:[%s357 + $0x20] sm:$0xff]
        %v382 = vld [vmem:[%s357 + $0x28] sm:$0xff]
        %v383 = vld [vmem:[%s357 + $0x30] sm:$0xff]
        %v384 = vld [vmem:[%s357 + $0x38] sm:$0xff]
        %v385 = vld [vmem:[%s2] sm:$0xff]
        %v386 = vld [vmem:[%s2 + $0x8] sm:$0xff]
        %v387 = vld [vmem:[%s2 + $0x10] sm:$0xff]
        %v388 = vld [vmem:[%s2 + $0x18] sm:$0xff]
        %390 = vset.pattern.permute.xlu0 0
        %391 = vperm.xlu0 %390, %v385
        %v392 = vpop.permute.xlu0 %391
        %395 = vset.pattern.permute.xlu0 0
        %396 = vperm.xlu0 %395, %v386
        %v397 = vpop.permute.xlu0 %396
        %400 = vset.pattern.permute.xlu0 0
        %401 = vperm.xlu0 %400, %v387
        %v402 = vpop.permute.xlu0 %401
        %405 = vset.pattern.permute.xlu0 0
        %406 = vperm.xlu0 %405, %v388
        %v407 = vpop.permute.xlu0 %406
        %v417 = vlaneseq
        %v418 = vshrl.u32 %v417, 7
        %v419 = vsub.s32 0, %v418
        %v420 = vrot.slane %v369, %v419
        %v421 = vlaneseq
        %v422 = vshrl.u32 %v421, 7
        %v423 = vsub.s32 1, %v422
        %v424 = vrot.slane %v369, %v423
        %v425 = vlaneseq
        %v426 = vshrl.u32 %v425, 7
        %v427 = vsub.s32 2, %v426
        %v428 = vrot.slane %v369, %v427
        %v429 = vlaneseq
        %v430 = vshrl.u32 %v429, 7
        %v431 = vsub.s32 3, %v430
        %v432 = vrot.slane %v369, %v431
        %v433 = vlaneseq
        %v434 = vshrl.u32 %v433, 7
        %v435 = vsub.s32 4, %v434
        %v436 = vrot.slane %v369, %v435
        %v437 = vlaneseq
        %v438 = vshrl.u32 %v437, 7
        %v439 = vsub.s32 5, %v438
        %v440 = vrot.slane %v369, %v439
        %v441 = vlaneseq
        %v442 = vshrl.u32 %v441, 7
        %v443 = vsub.s32 6, %v442
        %v444 = vrot.slane %v369, %v443
        %v445 = vlaneseq
        %v446 = vshrl.u32 %v445, 7
        %v447 = vsub.s32 7, %v446
        %v448 = vrot.slane %v369, %v447
        %v449 = vlaneseq
        %v450 = vshrl.u32 %v449, 7
        %v451 = vsub.s32 0, %v450
        %v452 = vrot.slane %v370, %v451
        %v453 = vlaneseq
        %v454 = vshrl.u32 %v453, 7
        %v455 = vsub.s32 1, %v454
        %v456 = vrot.slane %v370, %v455
        %v457 = vlaneseq
        %v458 = vshrl.u32 %v457, 7
        %v459 = vsub.s32 2, %v458
        %v460 = vrot.slane %v370, %v459
        %v461 = vlaneseq
        %v462 = vshrl.u32 %v461, 7
        %v463 = vsub.s32 3, %v462
        %v464 = vrot.slane %v370, %v463
        %v465 = vlaneseq
        %v466 = vshrl.u32 %v465, 7
        %v467 = vsub.s32 4, %v466
        %v468 = vrot.slane %v370, %v467
        %v469 = vlaneseq
        %v470 = vshrl.u32 %v469, 7
        %v471 = vsub.s32 5, %v470
        %v472 = vrot.slane %v370, %v471
        %v473 = vlaneseq
        %v474 = vshrl.u32 %v473, 7
        %v475 = vsub.s32 6, %v474
        %v476 = vrot.slane %v370, %v475
        %v477 = vlaneseq
        %v478 = vshrl.u32 %v477, 7
        %v479 = vsub.s32 7, %v478
        %v480 = vrot.slane %v370, %v479
        %v481 = vlaneseq
        %v482 = vshrl.u32 %v481, 7
        %v483 = vsub.s32 0, %v482
        %v484 = vrot.slane %v371, %v483
        %v485 = vlaneseq
        %v486 = vshrl.u32 %v485, 7
        %v487 = vsub.s32 1, %v486
        %v488 = vrot.slane %v371, %v487
        %v489 = vlaneseq
        %v490 = vshrl.u32 %v489, 7
        %v491 = vsub.s32 2, %v490
        %v492 = vrot.slane %v371, %v491
        %v493 = vlaneseq
        %v494 = vshrl.u32 %v493, 7
        %v495 = vsub.s32 3, %v494
        %v496 = vrot.slane %v371, %v495
        %v497 = vlaneseq
        %v498 = vshrl.u32 %v497, 7
        %v499 = vsub.s32 4, %v498
        %v500 = vrot.slane %v371, %v499
        %v501 = vlaneseq
        %v502 = vshrl.u32 %v501, 7
        %v503 = vsub.s32 5, %v502
        %v504 = vrot.slane %v371, %v503
        %v505 = vlaneseq
        %v506 = vshrl.u32 %v505, 7
        %v507 = vsub.s32 6, %v506
        %v508 = vrot.slane %v371, %v507
        %v509 = vlaneseq
        %v510 = vshrl.u32 %v509, 7
        %v511 = vsub.s32 7, %v510
        %v512 = vrot.slane %v371, %v511
        %v513 = vlaneseq
        %v514 = vshrl.u32 %v513, 7
        %v515 = vsub.s32 0, %v514
        %v516 = vrot.slane %v372, %v515
        %v517 = vlaneseq
        %v518 = vshrl.u32 %v517, 7
        %v519 = vsub.s32 1, %v518
        %v520 = vrot.slane %v372, %v519
        %v521 = vlaneseq
        %v522 = vshrl.u32 %v521, 7
        %v523 = vsub.s32 2, %v522
        %v524 = vrot.slane %v372, %v523
        %v525 = vlaneseq
        %v526 = vshrl.u32 %v525, 7
        %v527 = vsub.s32 3, %v526
        %v528 = vrot.slane %v372, %v527
        %v529 = vlaneseq
        %v530 = vshrl.u32 %v529, 7
        %v531 = vsub.s32 4, %v530
        %v532 = vrot.slane %v372, %v531
        %v533 = vlaneseq
        %v534 = vshrl.u32 %v533, 7
        %v535 = vsub.s32 5, %v534
        %v536 = vrot.slane %v372, %v535
        %v537 = vlaneseq
        %v538 = vshrl.u32 %v537, 7
        %v539 = vsub.s32 6, %v538
        %v540 = vrot.slane %v372, %v539
        %v541 = vlaneseq
        %v542 = vshrl.u32 %v541, 7
        %v543 = vsub.s32 7, %v542
        %v544 = vrot.slane %v372, %v543
        %v545 = vlaneseq
        %v546 = vshrl.u32 %v545, 7
        %v547 = vsub.s32 0, %v546
        %v548 = vrot.slane %v373, %v547
        %v549 = vlaneseq
        %v550 = vshrl.u32 %v549, 7
        %v551 = vsub.s32 1, %v550
        %v552 = vrot.slane %v373, %v551
        %v553 = vlaneseq
        %v554 = vshrl.u32 %v553, 7
        %v555 = vsub.s32 2, %v554
        %v556 = vrot.slane %v373, %v555
        %v557 = vlaneseq
        %v558 = vshrl.u32 %v557, 7
        %v559 = vsub.s32 3, %v558
        %v560 = vrot.slane %v373, %v559
        %v561 = vlaneseq
        %v562 = vshrl.u32 %v561, 7
        %v563 = vsub.s32 4, %v562
        %v564 = vrot.slane %v373, %v563
        %v565 = vlaneseq
        %v566 = vshrl.u32 %v565, 7
        %v567 = vsub.s32 5, %v566
        %v568 = vrot.slane %v373, %v567
        %v569 = vlaneseq
        %v570 = vshrl.u32 %v569, 7
        %v571 = vsub.s32 6, %v570
        %v572 = vrot.slane %v373, %v571
        %v573 = vlaneseq
        %v574 = vshrl.u32 %v573, 7
        %v575 = vsub.s32 7, %v574
        %v576 = vrot.slane %v373, %v575
        %v577 = vlaneseq
        %v578 = vshrl.u32 %v577, 7
        %v579 = vsub.s32 0, %v578
        %v580 = vrot.slane %v374, %v579
        %v581 = vlaneseq
        %v582 = vshrl.u32 %v581, 7
        %v583 = vsub.s32 1, %v582
        %v584 = vrot.slane %v374, %v583
        %v585 = vlaneseq
        %v586 = vshrl.u32 %v585, 7
        %v587 = vsub.s32 2, %v586
        %v588 = vrot.slane %v374, %v587
        %v589 = vlaneseq
        %v590 = vshrl.u32 %v589, 7
        %v591 = vsub.s32 3, %v590
        %v592 = vrot.slane %v374, %v591
        %v593 = vlaneseq
        %v594 = vshrl.u32 %v593, 7
        %v595 = vsub.s32 4, %v594
        %v596 = vrot.slane %v374, %v595
        %v597 = vlaneseq
        %v598 = vshrl.u32 %v597, 7
        %v599 = vsub.s32 5, %v598
        %v600 = vrot.slane %v374, %v599
        %v601 = vlaneseq
        %v602 = vshrl.u32 %v601, 7
        %v603 = vsub.s32 6, %v602
        %v604 = vrot.slane %v374, %v603
        %v605 = vlaneseq
        %v606 = vshrl.u32 %v605, 7
        %v607 = vsub.s32 7, %v606
        %v608 = vrot.slane %v374, %v607
        %v609 = vlaneseq
        %v610 = vshrl.u32 %v609, 7
        %v611 = vsub.s32 0, %v610
        %v612 = vrot.slane %v375, %v611
        %v613 = vlaneseq
        %v614 = vshrl.u32 %v613, 7
        %v615 = vsub.s32 1, %v614
        %v616 = vrot.slane %v375, %v615
        %v617 = vlaneseq
        %v618 = vshrl.u32 %v617, 7
        %v619 = vsub.s32 2, %v618
        %v620 = vrot.slane %v375, %v619
        %v621 = vlaneseq
        %v622 = vshrl.u32 %v621, 7
        %v623 = vsub.s32 3, %v622
        %v624 = vrot.slane %v375, %v623
        %v625 = vlaneseq
        %v626 = vshrl.u32 %v625, 7
        %v627 = vsub.s32 4, %v626
        %v628 = vrot.slane %v375, %v627
        %v629 = vlaneseq
        %v630 = vshrl.u32 %v629, 7
        %v631 = vsub.s32 5, %v630
        %v632 = vrot.slane %v375, %v631
        %v633 = vlaneseq
        %v634 = vshrl.u32 %v633, 7
        %v635 = vsub.s32 6, %v634
        %v636 = vrot.slane %v375, %v635
        %v637 = vlaneseq
        %v638 = vshrl.u32 %v637, 7
        %v639 = vsub.s32 7, %v638
        %v640 = vrot.slane %v375, %v639
        %v641 = vlaneseq
        %v642 = vshrl.u32 %v641, 7
        %v643 = vsub.s32 0, %v642
        %v644 = vrot.slane %v376, %v643
        %v645 = vlaneseq
        %v646 = vshrl.u32 %v645, 7
        %v647 = vsub.s32 1, %v646
        %v648 = vrot.slane %v376, %v647
        %v649 = vlaneseq
        %v650 = vshrl.u32 %v649, 7
        %v651 = vsub.s32 2, %v650
        %v652 = vrot.slane %v376, %v651
        %v653 = vlaneseq
        %v654 = vshrl.u32 %v653, 7
        %v655 = vsub.s32 3, %v654
        %v656 = vrot.slane %v376, %v655
        %v657 = vlaneseq
        %v658 = vshrl.u32 %v657, 7
        %v659 = vsub.s32 4, %v658
        %v660 = vrot.slane %v376, %v659
        %v661 = vlaneseq
        %v662 = vshrl.u32 %v661, 7
        %v663 = vsub.s32 5, %v662
        %v664 = vrot.slane %v376, %v663
        %v665 = vlaneseq
        %v666 = vshrl.u32 %v665, 7
        %v667 = vsub.s32 6, %v666
        %v668 = vrot.slane %v376, %v667
        %v669 = vlaneseq
        %v670 = vshrl.u32 %v669, 7
        %v671 = vsub.s32 7, %v670
        %v672 = vrot.slane %v376, %v671
        %v737 = vmul.f32 %v392, %v420
        %v738 = vmul.f32 %v392, %v424
        %v739 = vmul.f32 %v392, %v428
        %v740 = vmul.f32 %v392, %v432
        %v741 = vmul.f32 %v392, %v436
        %v742 = vmul.f32 %v392, %v440
        %v743 = vmul.f32 %v392, %v444
        %v744 = vmul.f32 %v392, %v448
        %v745 = vmul.f32 %v392, %v452
        %v746 = vmul.f32 %v392, %v456
        %v747 = vmul.f32 %v392, %v460
        %v748 = vmul.f32 %v392, %v464
        %v749 = vmul.f32 %v392, %v468
        %v750 = vmul.f32 %v392, %v472
        %v751 = vmul.f32 %v392, %v476
        %v752 = vmul.f32 %v392, %v480
        %v753 = vmul.f32 %v392, %v484
        %v754 = vmul.f32 %v392, %v488
        %v755 = vmul.f32 %v392, %v492
        %v756 = vmul.f32 %v392, %v496
        %v757 = vmul.f32 %v392, %v500
        %v758 = vmul.f32 %v392, %v504
        %v759 = vmul.f32 %v392, %v508
        %v760 = vmul.f32 %v392, %v512
        %v761 = vmul.f32 %v392, %v516
        %v762 = vmul.f32 %v392, %v520
        %v763 = vmul.f32 %v392, %v524
        %v764 = vmul.f32 %v392, %v528
        %v765 = vmul.f32 %v392, %v532
        %v766 = vmul.f32 %v392, %v536
        %v767 = vmul.f32 %v392, %v540
        %v768 = vmul.f32 %v392, %v544
        %v769 = vmul.f32 %v392, %v548
        %v770 = vmul.f32 %v392, %v552
        %v771 = vmul.f32 %v392, %v556
        %v772 = vmul.f32 %v392, %v560
        %v773 = vmul.f32 %v392, %v564
        %v774 = vmul.f32 %v392, %v568
        %v775 = vmul.f32 %v392, %v572
        %v776 = vmul.f32 %v392, %v576
        %v777 = vmul.f32 %v392, %v580
        %v778 = vmul.f32 %v392, %v584
        %v779 = vmul.f32 %v392, %v588
        %v780 = vmul.f32 %v392, %v592
        %v781 = vmul.f32 %v392, %v596
        %v782 = vmul.f32 %v392, %v600
        %v783 = vmul.f32 %v392, %v604
        %v784 = vmul.f32 %v392, %v608
        %v785 = vmul.f32 %v392, %v612
        %v786 = vmul.f32 %v392, %v616
        %v787 = vmul.f32 %v392, %v620
        %v788 = vmul.f32 %v392, %v624
        %v789 = vmul.f32 %v392, %v628
        %v790 = vmul.f32 %v392, %v632
        %v791 = vmul.f32 %v392, %v636
        %v792 = vmul.f32 %v392, %v640
        %v793 = vmul.f32 %v392, %v644
        %v794 = vmul.f32 %v392, %v648
        %v795 = vmul.f32 %v392, %v652
        %v796 = vmul.f32 %v392, %v656
        %v797 = vmul.f32 %v392, %v660
        %v798 = vmul.f32 %v392, %v664
        %v799 = vmul.f32 %v392, %v668
        %v800 = vmul.f32 %v392, %v672
        %v801 = vmul.f32 %v397, %v420
        %v802 = vmul.f32 %v397, %v424
        %v803 = vmul.f32 %v397, %v428
        %v804 = vmul.f32 %v397, %v432
        %v805 = vmul.f32 %v397, %v436
        %v806 = vmul.f32 %v397, %v440
        %v807 = vmul.f32 %v397, %v444
        %v808 = vmul.f32 %v397, %v448
        %v809 = vmul.f32 %v397, %v452
        %v810 = vmul.f32 %v397, %v456
        %v811 = vmul.f32 %v397, %v460
        %v812 = vmul.f32 %v397, %v464
        %v813 = vmul.f32 %v397, %v468
        %v814 = vmul.f32 %v397, %v472
        %v815 = vmul.f32 %v397, %v476
        %v816 = vmul.f32 %v397, %v480
        %v817 = vmul.f32 %v397, %v484
        %v818 = vmul.f32 %v397, %v488
        %v819 = vmul.f32 %v397, %v492
        %v820 = vmul.f32 %v397, %v496
        %v821 = vmul.f32 %v397, %v500
        %v822 = vmul.f32 %v397, %v504
        %v823 = vmul.f32 %v397, %v508
        %v824 = vmul.f32 %v397, %v512
        %v825 = vmul.f32 %v397, %v516
        %v826 = vmul.f32 %v397, %v520
        %v827 = vmul.f32 %v397, %v524
        %v828 = vmul.f32 %v397, %v528
        %v829 = vmul.f32 %v397, %v532
        %v830 = vmul.f32 %v397, %v536
        %v831 = vmul.f32 %v397, %v540
        %v832 = vmul.f32 %v397, %v544
        %v833 = vmul.f32 %v397, %v548
        %v834 = vmul.f32 %v397, %v552
        %v835 = vmul.f32 %v397, %v556
        %v836 = vmul.f32 %v397, %v560
        %v837 = vmul.f32 %v397, %v564
        %v838 = vmul.f32 %v397, %v568
        %v839 = vmul.f32 %v397, %v572
        %v840 = vmul.f32 %v397, %v576
        %v841 = vmul.f32 %v397, %v580
        %v842 = vmul.f32 %v397, %v584
        %v843 = vmul.f32 %v397, %v588
        %v844 = vmul.f32 %v397, %v592
        %v845 = vmul.f32 %v397, %v596
        %v846 = vmul.f32 %v397, %v600
        %v847 = vmul.f32 %v397, %v604
        %v848 = vmul.f32 %v397, %v608
        %v849 = vmul.f32 %v397, %v612
        %v850 = vmul.f32 %v397, %v616
        %v851 = vmul.f32 %v397, %v620
        %v852 = vmul.f32 %v397, %v624
        %v853 = vmul.f32 %v397, %v628
        %v854 = vmul.f32 %v397, %v632
        %v855 = vmul.f32 %v397, %v636
        %v856 = vmul.f32 %v397, %v640
        %v857 = vmul.f32 %v397, %v644
        %v858 = vmul.f32 %v397, %v648
        %v859 = vmul.f32 %v397, %v652
        %v860 = vmul.f32 %v397, %v656
        %v861 = vmul.f32 %v397, %v660
        %v862 = vmul.f32 %v397, %v664
        %v863 = vmul.f32 %v397, %v668
        %v864 = vmul.f32 %v397, %v672
        %v865 = vmul.f32 %v402, %v420
        %v866 = vmul.f32 %v402, %v424
        %v867 = vmul.f32 %v402, %v428
        %v868 = vmul.f32 %v402, %v432
        %v869 = vmul.f32 %v402, %v436
        %v870 = vmul.f32 %v402, %v440
        %v871 = vmul.f32 %v402, %v444
        %v872 = vmul.f32 %v402, %v448
        %v873 = vmul.f32 %v402, %v452
        %v874 = vmul.f32 %v402, %v456
        %v875 = vmul.f32 %v402, %v460
        %v876 = vmul.f32 %v402, %v464
        %v877 = vmul.f32 %v402, %v468
        %v878 = vmul.f32 %v402, %v472
        %v879 = vmul.f32 %v402, %v476
        %v880 = vmul.f32 %v402, %v480
        %v881 = vmul.f32 %v402, %v484
        %v882 = vmul.f32 %v402, %v488
        %v883 = vmul.f32 %v402, %v492
        %v884 = vmul.f32 %v402, %v496
        %v885 = vmul.f32 %v402, %v500
        %v886 = vmul.f32 %v402, %v504
        %v887 = vmul.f32 %v402, %v508
        %v888 = vmul.f32 %v402, %v512
        %v889 = vmul.f32 %v402, %v516
        %v890 = vmul.f32 %v402, %v520
        %v891 = vmul.f32 %v402, %v524
        %v892 = vmul.f32 %v402, %v528
        %v893 = vmul.f32 %v402, %v532
        %v894 = vmul.f32 %v402, %v536
        %v895 = vmul.f32 %v402, %v540
        %v896 = vmul.f32 %v402, %v544
        %v897 = vmul.f32 %v402, %v548
        %v898 = vmul.f32 %v402, %v552
        %v899 = vmul.f32 %v402, %v556
        %v900 = vmul.f32 %v402, %v560
        %v901 = vmul.f32 %v402, %v564
        %v902 = vmul.f32 %v402, %v568
        %v903 = vmul.f32 %v402, %v572
        %v904 = vmul.f32 %v402, %v576
        %v905 = vmul.f32 %v402, %v580
        %v906 = vmul.f32 %v402, %v584
        %v907 = vmul.f32 %v402, %v588
        %v908 = vmul.f32 %v402, %v592
        %v909 = vmul.f32 %v402, %v596
        %v910 = vmul.f32 %v402, %v600
        %v911 = vmul.f32 %v402, %v604
        %v912 = vmul.f32 %v402, %v608
        %v913 = vmul.f32 %v402, %v612
        %v914 = vmul.f32 %v402, %v616
        %v915 = vmul.f32 %v402, %v620
        %v916 = vmul.f32 %v402, %v624
        %v917 = vmul.f32 %v402, %v628
        %v918 = vmul.f32 %v402, %v632
        %v919 = vmul.f32 %v402, %v636
        %v920 = vmul.f32 %v402, %v640
        %v921 = vmul.f32 %v402, %v644
        %v922 = vmul.f32 %v402, %v648
        %v923 = vmul.f32 %v402, %v652
        %v924 = vmul.f32 %v402, %v656
        %v925 = vmul.f32 %v402, %v660
        %v926 = vmul.f32 %v402, %v664
        %v927 = vmul.f32 %v402, %v668
        %v928 = vmul.f32 %v402, %v672
        %v929 = vmul.f32 %v407, %v420
        %v930 = vmul.f32 %v407, %v424
        %v931 = vmul.f32 %v407, %v428
        %v932 = vmul.f32 %v407, %v432
        %v933 = vmul.f32 %v407, %v436
        %v934 = vmul.f32 %v407, %v440
        %v935 = vmul.f32 %v407, %v444
        %v936 = vmul.f32 %v407, %v448
        %v937 = vmul.f32 %v407, %v452
        %v938 = vmul.f32 %v407, %v456
        %v939 = vmul.f32 %v407, %v460
        %v940 = vmul.f32 %v407, %v464
        %v941 = vmul.f32 %v407, %v468
        %v942 = vmul.f32 %v407, %v472
        %v943 = vmul.f32 %v407, %v476
        %v944 = vmul.f32 %v407, %v480
        %v945 = vmul.f32 %v407, %v484
        %v946 = vmul.f32 %v407, %v488
        %v947 = vmul.f32 %v407, %v492
        %v948 = vmul.f32 %v407, %v496
        %v949 = vmul.f32 %v407, %v500
        %v950 = vmul.f32 %v407, %v504
        %v951 = vmul.f32 %v407, %v508
        %v952 = vmul.f32 %v407, %v512
        %v953 = vmul.f32 %v407, %v516
        %v954 = vmul.f32 %v407, %v520
        %v955 = vmul.f32 %v407, %v524
        %v956 = vmul.f32 %v407, %v528
        %v957 = vmul.f32 %v407, %v532
        %v958 = vmul.f32 %v407, %v536
        %v959 = vmul.f32 %v407, %v540
        %v960 = vmul.f32 %v407, %v544
        %v961 = vmul.f32 %v407, %v548
        %v962 = vmul.f32 %v407, %v552
        %v963 = vmul.f32 %v407, %v556
        %v964 = vmul.f32 %v407, %v560
        %v965 = vmul.f32 %v407, %v564
        %v966 = vmul.f32 %v407, %v568
        %v967 = vmul.f32 %v407, %v572
        %v968 = vmul.f32 %v407, %v576
        %v969 = vmul.f32 %v407, %v580
        %v970 = vmul.f32 %v407, %v584
        %v971 = vmul.f32 %v407, %v588
        %v972 = vmul.f32 %v407, %v592
        %v973 = vmul.f32 %v407, %v596
        %v974 = vmul.f32 %v407, %v600
        %v975 = vmul.f32 %v407, %v604
        %v976 = vmul.f32 %v407, %v608
        %v977 = vmul.f32 %v407, %v612
        %v978 = vmul.f32 %v407, %v616
        %v979 = vmul.f32 %v407, %v620
        %v980 = vmul.f32 %v407, %v624
        %v981 = vmul.f32 %v407, %v628
        %v982 = vmul.f32 %v407, %v632
        %v983 = vmul.f32 %v407, %v636
        %v984 = vmul.f32 %v407, %v640
        %v985 = vmul.f32 %v407, %v644
        %v986 = vmul.f32 %v407, %v648
        %v987 = vmul.f32 %v407, %v652
        %v988 = vmul.f32 %v407, %v656
        %v989 = vmul.f32 %v407, %v660
        %v990 = vmul.f32 %v407, %v664
        %v991 = vmul.f32 %v407, %v668
        %v992 = vmul.f32 %v407, %v672
        %993 = vset.pattern.permute.xlu0 1
        %994 = vperm.xlu0 %993, %v385
        %v995 = vpop.permute.xlu0 %994
        %997 = vset.pattern.permute.xlu0 1
        %998 = vperm.xlu0 %997, %v386
        %v999 = vpop.permute.xlu0 %998
        %1001 = vset.pattern.permute.xlu0 1
        %1002 = vperm.xlu0 %1001, %v387
        %v1003 = vpop.permute.xlu0 %1002
        %1005 = vset.pattern.permute.xlu0 1
        %1006 = vperm.xlu0 %1005, %v388
        %v1007 = vpop.permute.xlu0 %1006
        %v1017 = vlaneseq
        %v1018 = vshrl.u32 %v1017, 7
        %v1019 = vsub.s32 0, %v1018
        %v1020 = vrot.slane %v377, %v1019
        %v1021 = vlaneseq
        %v1022 = vshrl.u32 %v1021, 7
        %v1023 = vsub.s32 1, %v1022
        %v1024 = vrot.slane %v377, %v1023
        %v1025 = vlaneseq
        %v1026 = vshrl.u32 %v1025, 7
        %v1027 = vsub.s32 2, %v1026
        %v1028 = vrot.slane %v377, %v1027
        %v1029 = vlaneseq
        %v1030 = vshrl.u32 %v1029, 7
        %v1031 = vsub.s32 3, %v1030
        %v1032 = vrot.slane %v377, %v1031
        %v1033 = vlaneseq
        %v1034 = vshrl.u32 %v1033, 7
        %v1035 = vsub.s32 4, %v1034
        %v1036 = vrot.slane %v377, %v1035
        %v1037 = vlaneseq
        %v1038 = vshrl.u32 %v1037, 7
        %v1039 = vsub.s32 5, %v1038
        %v1040 = vrot.slane %v377, %v1039
        %v1041 = vlaneseq
        %v1042 = vshrl.u32 %v1041, 7
        %v1043 = vsub.s32 6, %v1042
        %v1044 = vrot.slane %v377, %v1043
        %v1045 = vlaneseq
        %v1046 = vshrl.u32 %v1045, 7
        %v1047 = vsub.s32 7, %v1046
        %v1048 = vrot.slane %v377, %v1047
        %v1049 = vlaneseq
        %v1050 = vshrl.u32 %v1049, 7
        %v1051 = vsub.s32 0, %v1050
        %v1052 = vrot.slane %v378, %v1051
        %v1053 = vlaneseq
        %v1054 = vshrl.u32 %v1053, 7
        %v1055 = vsub.s32 1, %v1054
        %v1056 = vrot.slane %v378, %v1055
        %v1057 = vlaneseq
        %v1058 = vshrl.u32 %v1057, 7
        %v1059 = vsub.s32 2, %v1058
        %v1060 = vrot.slane %v378, %v1059
        %v1061 = vlaneseq
        %v1062 = vshrl.u32 %v1061, 7
        %v1063 = vsub.s32 3, %v1062
        %v1064 = vrot.slane %v378, %v1063
        %v1065 = vlaneseq
        %v1066 = vshrl.u32 %v1065, 7
        %v1067 = vsub.s32 4, %v1066
        %v1068 = vrot.slane %v378, %v1067
        %v1069 = vlaneseq
        %v1070 = vshrl.u32 %v1069, 7
        %v1071 = vsub.s32 5, %v1070
        %v1072 = vrot.slane %v378, %v1071
        %v1073 = vlaneseq
        %v1074 = vshrl.u32 %v1073, 7
        %v1075 = vsub.s32 6, %v1074
        %v1076 = vrot.slane %v378, %v1075
        %v1077 = vlaneseq
        %v1078 = vshrl.u32 %v1077, 7
        %v1079 = vsub.s32 7, %v1078
        %v1080 = vrot.slane %v378, %v1079
        %v1081 = vlaneseq
        %v1082 = vshrl.u32 %v1081, 7
        %v1083 = vsub.s32 0, %v1082
        %v1084 = vrot.slane %v379, %v1083
        %v1085 = vlaneseq
        %v1086 = vshrl.u32 %v1085, 7
        %v1087 = vsub.s32 1, %v1086
        %v1088 = vrot.slane %v379, %v1087
        %v1089 = vlaneseq
        %v1090 = vshrl.u32 %v1089, 7
        %v1091 = vsub.s32 2, %v1090
        %v1092 = vrot.slane %v379, %v1091
        %v1093 = vlaneseq
        %v1094 = vshrl.u32 %v1093, 7
        %v1095 = vsub.s32 3, %v1094
        %v1096 = vrot.slane %v379, %v1095
        %v1097 = vlaneseq
        %v1098 = vshrl.u32 %v1097, 7
        %v1099 = vsub.s32 4, %v1098
        %v1100 = vrot.slane %v379, %v1099
        %v1101 = vlaneseq
        %v1102 = vshrl.u32 %v1101, 7
        %v1103 = vsub.s32 5, %v1102
        %v1104 = vrot.slane %v379, %v1103
        %v1105 = vlaneseq
        %v1106 = vshrl.u32 %v1105, 7
        %v1107 = vsub.s32 6, %v1106
        %v1108 = vrot.slane %v379, %v1107
        %v1109 = vlaneseq
        %v1110 = vshrl.u32 %v1109, 7
        %v1111 = vsub.s32 7, %v1110
        %v1112 = vrot.slane %v379, %v1111
        %v1113 = vlaneseq
        %v1114 = vshrl.u32 %v1113, 7
        %v1115 = vsub.s32 0, %v1114
        %v1116 = vrot.slane %v380, %v1115
        %v1117 = vlaneseq
        %v1118 = vshrl.u32 %v1117, 7
        %v1119 = vsub.s32 1, %v1118
        %v1120 = vrot.slane %v380, %v1119
        %v1121 = vlaneseq
        %v1122 = vshrl.u32 %v1121, 7
        %v1123 = vsub.s32 2, %v1122
        %v1124 = vrot.slane %v380, %v1123
        %v1125 = vlaneseq
        %v1126 = vshrl.u32 %v1125, 7
        %v1127 = vsub.s32 3, %v1126
        %v1128 = vrot.slane %v380, %v1127
        %v1129 = vlaneseq
        %v1130 = vshrl.u32 %v1129, 7
        %v1131 = vsub.s32 4, %v1130
        %v1132 = vrot.slane %v380, %v1131
        %v1133 = vlaneseq
        %v1134 = vshrl.u32 %v1133, 7
        %v1135 = vsub.s32 5, %v1134
        %v1136 = vrot.slane %v380, %v1135
        %v1137 = vlaneseq
        %v1138 = vshrl.u32 %v1137, 7
        %v1139 = vsub.s32 6, %v1138
        %v1140 = vrot.slane %v380, %v1139
        %v1141 = vlaneseq
        %v1142 = vshrl.u32 %v1141, 7
        %v1143 = vsub.s32 7, %v1142
        %v1144 = vrot.slane %v380, %v1143
        %v1145 = vlaneseq
        %v1146 = vshrl.u32 %v1145, 7
        %v1147 = vsub.s32 0, %v1146
        %v1148 = vrot.slane %v381, %v1147
        %v1149 = vlaneseq
        %v1150 = vshrl.u32 %v1149, 7
        %v1151 = vsub.s32 1, %v1150
        %v1152 = vrot.slane %v381, %v1151
        %v1153 = vlaneseq
        %v1154 = vshrl.u32 %v1153, 7
        %v1155 = vsub.s32 2, %v1154
        %v1156 = vrot.slane %v381, %v1155
        %v1157 = vlaneseq
        %v1158 = vshrl.u32 %v1157, 7
        %v1159 = vsub.s32 3, %v1158
        %v1160 = vrot.slane %v381, %v1159
        %v1161 = vlaneseq
        %v1162 = vshrl.u32 %v1161, 7
        %v1163 = vsub.s32 4, %v1162
        %v1164 = vrot.slane %v381, %v1163
        %v1165 = vlaneseq
        %v1166 = vshrl.u32 %v1165, 7
        %v1167 = vsub.s32 5, %v1166
        %v1168 = vrot.slane %v381, %v1167
        %v1169 = vlaneseq
        %v1170 = vshrl.u32 %v1169, 7
        %v1171 = vsub.s32 6, %v1170
        %v1172 = vrot.slane %v381, %v1171
        %v1173 = vlaneseq
        %v1174 = vshrl.u32 %v1173, 7
        %v1175 = vsub.s32 7, %v1174
        %v1176 = vrot.slane %v381, %v1175
        %v1177 = vlaneseq
        %v1178 = vshrl.u32 %v1177, 7
        %v1179 = vsub.s32 0, %v1178
        %v1180 = vrot.slane %v382, %v1179
        %v1181 = vlaneseq
        %v1182 = vshrl.u32 %v1181, 7
        %v1183 = vsub.s32 1, %v1182
        %v1184 = vrot.slane %v382, %v1183
        %v1185 = vlaneseq
        %v1186 = vshrl.u32 %v1185, 7
        %v1187 = vsub.s32 2, %v1186
        %v1188 = vrot.slane %v382, %v1187
        %v1189 = vlaneseq
        %v1190 = vshrl.u32 %v1189, 7
        %v1191 = vsub.s32 3, %v1190
        %v1192 = vrot.slane %v382, %v1191
        %v1193 = vlaneseq
        %v1194 = vshrl.u32 %v1193, 7
        %v1195 = vsub.s32 4, %v1194
        %v1196 = vrot.slane %v382, %v1195
        %v1197 = vlaneseq
        %v1198 = vshrl.u32 %v1197, 7
        %v1199 = vsub.s32 5, %v1198
        %v1200 = vrot.slane %v382, %v1199
        %v1201 = vlaneseq
        %v1202 = vshrl.u32 %v1201, 7
        %v1203 = vsub.s32 6, %v1202
        %v1204 = vrot.slane %v382, %v1203
        %v1205 = vlaneseq
        %v1206 = vshrl.u32 %v1205, 7
        %v1207 = vsub.s32 7, %v1206
        %v1208 = vrot.slane %v382, %v1207
        %v1209 = vlaneseq
        %v1210 = vshrl.u32 %v1209, 7
        %v1211 = vsub.s32 0, %v1210
        %v1212 = vrot.slane %v383, %v1211
        %v1213 = vlaneseq
        %v1214 = vshrl.u32 %v1213, 7
        %v1215 = vsub.s32 1, %v1214
        %v1216 = vrot.slane %v383, %v1215
        %v1217 = vlaneseq
        %v1218 = vshrl.u32 %v1217, 7
        %v1219 = vsub.s32 2, %v1218
        %v1220 = vrot.slane %v383, %v1219
        %v1221 = vlaneseq
        %v1222 = vshrl.u32 %v1221, 7
        %v1223 = vsub.s32 3, %v1222
        %v1224 = vrot.slane %v383, %v1223
        %v1225 = vlaneseq
        %v1226 = vshrl.u32 %v1225, 7
        %v1227 = vsub.s32 4, %v1226
        %v1228 = vrot.slane %v383, %v1227
        %v1229 = vlaneseq
        %v1230 = vshrl.u32 %v1229, 7
        %v1231 = vsub.s32 5, %v1230
        %v1232 = vrot.slane %v383, %v1231
        %v1233 = vlaneseq
        %v1234 = vshrl.u32 %v1233, 7
        %v1235 = vsub.s32 6, %v1234
        %v1236 = vrot.slane %v383, %v1235
        %v1237 = vlaneseq
        %v1238 = vshrl.u32 %v1237, 7
        %v1239 = vsub.s32 7, %v1238
        %v1240 = vrot.slane %v383, %v1239
        %v1241 = vlaneseq
        %v1242 = vshrl.u32 %v1241, 7
        %v1243 = vsub.s32 0, %v1242
        %v1244 = vrot.slane %v384, %v1243
        %v1245 = vlaneseq
        %v1246 = vshrl.u32 %v1245, 7
        %v1247 = vsub.s32 1, %v1246
        %v1248 = vrot.slane %v384, %v1247
        %v1249 = vlaneseq
        %v1250 = vshrl.u32 %v1249, 7
        %v1251 = vsub.s32 2, %v1250
        %v1252 = vrot.slane %v384, %v1251
        %v1253 = vlaneseq
        %v1254 = vshrl.u32 %v1253, 7
        %v1255 = vsub.s32 3, %v1254
        %v1256 = vrot.slane %v384, %v1255
        %v1257 = vlaneseq
        %v1258 = vshrl.u32 %v1257, 7
        %v1259 = vsub.s32 4, %v1258
        %v1260 = vrot.slane %v384, %v1259
        %v1261 = vlaneseq
        %v1262 = vshrl.u32 %v1261, 7
        %v1263 = vsub.s32 5, %v1262
        %v1264 = vrot.slane %v384, %v1263
        %v1265 = vlaneseq
        %v1266 = vshrl.u32 %v1265, 7
        %v1267 = vsub.s32 6, %v1266
        %v1268 = vrot.slane %v384, %v1267
        %v1269 = vlaneseq
        %v1270 = vshrl.u32 %v1269, 7
        %v1271 = vsub.s32 7, %v1270
        %v1272 = vrot.slane %v384, %v1271
        %v1337 = vmul.f32 %v995, %v1020
        %v1338 = vmul.f32 %v995, %v1024
        %v1339 = vmul.f32 %v995, %v1028
        %v1340 = vmul.f32 %v995, %v1032
        %v1341 = vmul.f32 %v995, %v1036
        %v1342 = vmul.f32 %v995, %v1040
        %v1343 = vmul.f32 %v995, %v1044
        %v1344 = vmul.f32 %v995, %v1048
        %v1345 = vmul.f32 %v995, %v1052
        %v1346 = vmul.f32 %v995, %v1056
        %v1347 = vmul.f32 %v995, %v1060
        %v1348 = vmul.f32 %v995, %v1064
        %v1349 = vmul.f32 %v995, %v1068
        %v1350 = vmul.f32 %v995, %v1072
        %v1351 = vmul.f32 %v995, %v1076
        %v1352 = vmul.f32 %v995, %v1080
        %v1353 = vmul.f32 %v995, %v1084
        %v1354 = vmul.f32 %v995, %v1088
        %v1355 = vmul.f32 %v995, %v1092
        %v1356 = vmul.f32 %v995, %v1096
        %v1357 = vmul.f32 %v995, %v1100
        %v1358 = vmul.f32 %v995, %v1104
        %v1359 = vmul.f32 %v995, %v1108
        %v1360 = vmul.f32 %v995, %v1112
        %v1361 = vmul.f32 %v995, %v1116
        %v1362 = vmul.f32 %v995, %v1120
        %v1363 = vmul.f32 %v995, %v1124
        %v1364 = vmul.f32 %v995, %v1128
        %v1365 = vmul.f32 %v995, %v1132
        %v1366 = vmul.f32 %v995, %v1136
        %v1367 = vmul.f32 %v995, %v1140
        %v1368 = vmul.f32 %v995, %v1144
        %v1369 = vmul.f32 %v995, %v1148
        %v1370 = vmul.f32 %v995, %v1152
        %v1371 = vmul.f32 %v995, %v1156
        %v1372 = vmul.f32 %v995, %v1160
        %v1373 = vmul.f32 %v995, %v1164
        %v1374 = vmul.f32 %v995, %v1168
        %v1375 = vmul.f32 %v995, %v1172
        %v1376 = vmul.f32 %v995, %v1176
        %v1377 = vmul.f32 %v995, %v1180
        %v1378 = vmul.f32 %v995, %v1184
        %v1379 = vmul.f32 %v995, %v1188
        %v1380 = vmul.f32 %v995, %v1192
        %v1381 = vmul.f32 %v995, %v1196
        %v1382 = vmul.f32 %v995, %v1200
        %v1383 = vmul.f32 %v995, %v1204
        %v1384 = vmul.f32 %v995, %v1208
        %v1385 = vmul.f32 %v995, %v1212
        %v1386 = vmul.f32 %v995, %v1216
        %v1387 = vmul.f32 %v995, %v1220
        %v1388 = vmul.f32 %v995, %v1224
        %v1389 = vmul.f32 %v995, %v1228
        %v1390 = vmul.f32 %v995, %v1232
        %v1391 = vmul.f32 %v995, %v1236
        %v1392 = vmul.f32 %v995, %v1240
        %v1393 = vmul.f32 %v995, %v1244
        %v1394 = vmul.f32 %v995, %v1248
        %v1395 = vmul.f32 %v995, %v1252
        %v1396 = vmul.f32 %v995, %v1256
        %v1397 = vmul.f32 %v995, %v1260
        %v1398 = vmul.f32 %v995, %v1264
        %v1399 = vmul.f32 %v995, %v1268
        %v1400 = vmul.f32 %v995, %v1272
        %v1401 = vmul.f32 %v999, %v1020
        %v1402 = vmul.f32 %v999, %v1024
        %v1403 = vmul.f32 %v999, %v1028
        %v1404 = vmul.f32 %v999, %v1032
        %v1405 = vmul.f32 %v999, %v1036
        %v1406 = vmul.f32 %v999, %v1040
        %v1407 = vmul.f32 %v999, %v1044
        %v1408 = vmul.f32 %v999, %v1048
        %v1409 = vmul.f32 %v999, %v1052
        %v1410 = vmul.f32 %v999, %v1056
        %v1411 = vmul.f32 %v999, %v1060
        %v1412 = vmul.f32 %v999, %v1064
        %v1413 = vmul.f32 %v999, %v1068
        %v1414 = vmul.f32 %v999, %v1072
        %v1415 = vmul.f32 %v999, %v1076
        %v1416 = vmul.f32 %v999, %v1080
        %v1417 = vmul.f32 %v999, %v1084
        %v1418 = vmul.f32 %v999, %v1088
        %v1419 = vmul.f32 %v999, %v1092
        %v1420 = vmul.f32 %v999, %v1096
        %v1421 = vmul.f32 %v999, %v1100
        %v1422 = vmul.f32 %v999, %v1104
        %v1423 = vmul.f32 %v999, %v1108
        %v1424 = vmul.f32 %v999, %v1112
        %v1425 = vmul.f32 %v999, %v1116
        %v1426 = vmul.f32 %v999, %v1120
        %v1427 = vmul.f32 %v999, %v1124
        %v1428 = vmul.f32 %v999, %v1128
        %v1429 = vmul.f32 %v999, %v1132
        %v1430 = vmul.f32 %v999, %v1136
        %v1431 = vmul.f32 %v999, %v1140
        %v1432 = vmul.f32 %v999, %v1144
        %v1433 = vmul.f32 %v999, %v1148
        %v1434 = vmul.f32 %v999, %v1152
        %v1435 = vmul.f32 %v999, %v1156
        %v1436 = vmul.f32 %v999, %v1160
        %v1437 = vmul.f32 %v999, %v1164
        %v1438 = vmul.f32 %v999, %v1168
        %v1439 = vmul.f32 %v999, %v1172
        %v1440 = vmul.f32 %v999, %v1176
        %v1441 = vmul.f32 %v999, %v1180
        %v1442 = vmul.f32 %v999, %v1184
        %v1443 = vmul.f32 %v999, %v1188
        %v1444 = vmul.f32 %v999, %v1192
        %v1445 = vmul.f32 %v999, %v1196
        %v1446 = vmul.f32 %v999, %v1200
        %v1447 = vmul.f32 %v999, %v1204
        %v1448 = vmul.f32 %v999, %v1208
        %v1449 = vmul.f32 %v999, %v1212
        %v1450 = vmul.f32 %v999, %v1216
        %v1451 = vmul.f32 %v999, %v1220
        %v1452 = vmul.f32 %v999, %v1224
        %v1453 = vmul.f32 %v999, %v1228
        %v1454 = vmul.f32 %v999, %v1232
        %v1455 = vmul.f32 %v999, %v1236
        %v1456 = vmul.f32 %v999, %v1240
        %v1457 = vmul.f32 %v999, %v1244
        %v1458 = vmul.f32 %v999, %v1248
        %v1459 = vmul.f32 %v999, %v1252
        %v1460 = vmul.f32 %v999, %v1256
        %v1461 = vmul.f32 %v999, %v1260
        %v1462 = vmul.f32 %v999, %v1264
        %v1463 = vmul.f32 %v999, %v1268
        %v1464 = vmul.f32 %v999, %v1272
        %v1465 = vmul.f32 %v1003, %v1020
        %v1466 = vmul.f32 %v1003, %v1024
        %v1467 = vmul.f32 %v1003, %v1028
        %v1468 = vmul.f32 %v1003, %v1032
        %v1469 = vmul.f32 %v1003, %v1036
        %v1470 = vmul.f32 %v1003, %v1040
        %v1471 = vmul.f32 %v1003, %v1044
        %v1472 = vmul.f32 %v1003, %v1048
        %v1473 = vmul.f32 %v1003, %v1052
        %v1474 = vmul.f32 %v1003, %v1056
        %v1475 = vmul.f32 %v1003, %v1060
        %v1476 = vmul.f32 %v1003, %v1064
        %v1477 = vmul.f32 %v1003, %v1068
        %v1478 = vmul.f32 %v1003, %v1072
        %v1479 = vmul.f32 %v1003, %v1076
        %v1480 = vmul.f32 %v1003, %v1080
        %v1481 = vmul.f32 %v1003, %v1084
        %v1482 = vmul.f32 %v1003, %v1088
        %v1483 = vmul.f32 %v1003, %v1092
        %v1484 = vmul.f32 %v1003, %v1096
        %v1485 = vmul.f32 %v1003, %v1100
        %v1486 = vmul.f32 %v1003, %v1104
        %v1487 = vmul.f32 %v1003, %v1108
        %v1488 = vmul.f32 %v1003, %v1112
        %v1489 = vmul.f32 %v1003, %v1116
        %v1490 = vmul.f32 %v1003, %v1120
        %v1491 = vmul.f32 %v1003, %v1124
        %v1492 = vmul.f32 %v1003, %v1128
        %v1493 = vmul.f32 %v1003, %v1132
        %v1494 = vmul.f32 %v1003, %v1136
        %v1495 = vmul.f32 %v1003, %v1140
        %v1496 = vmul.f32 %v1003, %v1144
        %v1497 = vmul.f32 %v1003, %v1148
        %v1498 = vmul.f32 %v1003, %v1152
        %v1499 = vmul.f32 %v1003, %v1156
        %v1500 = vmul.f32 %v1003, %v1160
        %v1501 = vmul.f32 %v1003, %v1164
        %v1502 = vmul.f32 %v1003, %v1168
        %v1503 = vmul.f32 %v1003, %v1172
        %v1504 = vmul.f32 %v1003, %v1176
        %v1505 = vmul.f32 %v1003, %v1180
        %v1506 = vmul.f32 %v1003, %v1184
        %v1507 = vmul.f32 %v1003, %v1188
        %v1508 = vmul.f32 %v1003, %v1192
        %v1509 = vmul.f32 %v1003, %v1196
        %v1510 = vmul.f32 %v1003, %v1200
        %v1511 = vmul.f32 %v1003, %v1204
        %v1512 = vmul.f32 %v1003, %v1208
        %v1513 = vmul.f32 %v1003, %v1212
        %v1514 = vmul.f32 %v1003, %v1216
        %v1515 = vmul.f32 %v1003, %v1220
        %v1516 = vmul.f32 %v1003, %v1224
        %v1517 = vmul.f32 %v1003, %v1228
        %v1518 = vmul.f32 %v1003, %v1232
        %v1519 = vmul.f32 %v1003, %v1236
        %v1520 = vmul.f32 %v1003, %v1240
        %v1521 = vmul.f32 %v1003, %v1244
        %v1522 = vmul.f32 %v1003, %v1248
        %v1523 = vmul.f32 %v1003, %v1252
        %v1524 = vmul.f32 %v1003, %v1256
        %v1525 = vmul.f32 %v1003, %v1260
        %v1526 = vmul.f32 %v1003, %v1264
        %v1527 = vmul.f32 %v1003, %v1268
        %v1528 = vmul.f32 %v1003, %v1272
        %v1529 = vmul.f32 %v1007, %v1020
        %v1530 = vmul.f32 %v1007, %v1024
        %v1531 = vmul.f32 %v1007, %v1028
        %v1532 = vmul.f32 %v1007, %v1032
        %v1533 = vmul.f32 %v1007, %v1036
        %v1534 = vmul.f32 %v1007, %v1040
        %v1535 = vmul.f32 %v1007, %v1044
        %v1536 = vmul.f32 %v1007, %v1048
        %v1537 = vmul.f32 %v1007, %v1052
        %v1538 = vmul.f32 %v1007, %v1056
        %v1539 = vmul.f32 %v1007, %v1060
        %v1540 = vmul.f32 %v1007, %v1064
        %v1541 = vmul.f32 %v1007, %v1068
        %v1542 = vmul.f32 %v1007, %v1072
        %v1543 = vmul.f32 %v1007, %v1076
        %v1544 = vmul.f32 %v1007, %v1080
        %v1545 = vmul.f32 %v1007, %v1084
        %v1546 = vmul.f32 %v1007, %v1088
        %v1547 = vmul.f32 %v1007, %v1092
        %v1548 = vmul.f32 %v1007, %v1096
        %v1549 = vmul.f32 %v1007, %v1100
        %v1550 = vmul.f32 %v1007, %v1104
        %v1551 = vmul.f32 %v1007, %v1108
        %v1552 = vmul.f32 %v1007, %v1112
        %v1553 = vmul.f32 %v1007, %v1116
        %v1554 = vmul.f32 %v1007, %v1120
        %v1555 = vmul.f32 %v1007, %v1124
        %v1556 = vmul.f32 %v1007, %v1128
        %v1557 = vmul.f32 %v1007, %v1132
        %v1558 = vmul.f32 %v1007, %v1136
        %v1559 = vmul.f32 %v1007, %v1140
        %v1560 = vmul.f32 %v1007, %v1144
        %v1561 = vmul.f32 %v1007, %v1148
        %v1562 = vmul.f32 %v1007, %v1152
        %v1563 = vmul.f32 %v1007, %v1156
        %v1564 = vmul.f32 %v1007, %v1160
        %v1565 = vmul.f32 %v1007, %v1164
        %v1566 = vmul.f32 %v1007, %v1168
        %v1567 = vmul.f32 %v1007, %v1172
        %v1568 = vmul.f32 %v1007, %v1176
        %v1569 = vmul.f32 %v1007, %v1180
        %v1570 = vmul.f32 %v1007, %v1184
        %v1571 = vmul.f32 %v1007, %v1188
        %v1572 = vmul.f32 %v1007, %v1192
        %v1573 = vmul.f32 %v1007, %v1196
        %v1574 = vmul.f32 %v1007, %v1200
        %v1575 = vmul.f32 %v1007, %v1204
        %v1576 = vmul.f32 %v1007, %v1208
        %v1577 = vmul.f32 %v1007, %v1212
        %v1578 = vmul.f32 %v1007, %v1216
        %v1579 = vmul.f32 %v1007, %v1220
        %v1580 = vmul.f32 %v1007, %v1224
        %v1581 = vmul.f32 %v1007, %v1228
        %v1582 = vmul.f32 %v1007, %v1232
        %v1583 = vmul.f32 %v1007, %v1236
        %v1584 = vmul.f32 %v1007, %v1240
        %v1585 = vmul.f32 %v1007, %v1244
        %v1586 = vmul.f32 %v1007, %v1248
        %v1587 = vmul.f32 %v1007, %v1252
        %v1588 = vmul.f32 %v1007, %v1256
        %v1589 = vmul.f32 %v1007, %v1260
        %v1590 = vmul.f32 %v1007, %v1264
        %v1591 = vmul.f32 %v1007, %v1268
        %v1592 = vmul.f32 %v1007, %v1272
        %v1593 = vadd.f32 %v737, %v1337
        %v1594 = vadd.f32 %v738, %v1338
        %v1595 = vadd.f32 %v739, %v1339
        %v1596 = vadd.f32 %v740, %v1340
        %v1597 = vadd.f32 %v741, %v1341
        %v1598 = vadd.f32 %v742, %v1342
        %v1599 = vadd.f32 %v743, %v1343
        %v1600 = vadd.f32 %v744, %v1344
        %v1601 = vadd.f32 %v745, %v1345
        %v1602 = vadd.f32 %v746, %v1346
        %v1603 = vadd.f32 %v747, %v1347
        %v1604 = vadd.f32 %v748, %v1348
        %v1605 = vadd.f32 %v749, %v1349
        %v1606 = vadd.f32 %v750, %v1350
        %v1607 = vadd.f32 %v751, %v1351
        %v1608 = vadd.f32 %v752, %v1352
        %v1609 = vadd.f32 %v753, %v1353
        %v1610 = vadd.f32 %v754, %v1354
        %v1611 = vadd.f32 %v755, %v1355
        %v1612 = vadd.f32 %v756, %v1356
        %v1613 = vadd.f32 %v757, %v1357
        %v1614 = vadd.f32 %v758, %v1358
        %v1615 = vadd.f32 %v759, %v1359
        %v1616 = vadd.f32 %v760, %v1360
        %v1617 = vadd.f32 %v761, %v1361
        %v1618 = vadd.f32 %v762, %v1362
        %v1619 = vadd.f32 %v763, %v1363
        %v1620 = vadd.f32 %v764, %v1364
        %v1621 = vadd.f32 %v765, %v1365
        %v1622 = vadd.f32 %v766, %v1366
        %v1623 = vadd.f32 %v767, %v1367
        %v1624 = vadd.f32 %v768, %v1368
        %v1625 = vadd.f32 %v769, %v1369
        %v1626 = vadd.f32 %v770, %v1370
        %v1627 = vadd.f32 %v771, %v1371
        %v1628 = vadd.f32 %v772, %v1372
        %v1629 = vadd.f32 %v773, %v1373
        %v1630 = vadd.f32 %v774, %v1374
        %v1631 = vadd.f32 %v775, %v1375
        %v1632 = vadd.f32 %v776, %v1376
        %v1633 = vadd.f32 %v777, %v1377
        %v1634 = vadd.f32 %v778, %v1378
        %v1635 = vadd.f32 %v779, %v1379
        %v1636 = vadd.f32 %v780, %v1380
        %v1637 = vadd.f32 %v781, %v1381
        %v1638 = vadd.f32 %v782, %v1382
        %v1639 = vadd.f32 %v783, %v1383
        %v1640 = vadd.f32 %v784, %v1384
        %v1641 = vadd.f32 %v785, %v1385
        %v1642 = vadd.f32 %v786, %v1386
        %v1643 = vadd.f32 %v787, %v1387
        %v1644 = vadd.f32 %v788, %v1388
        %v1645 = vadd.f32 %v789, %v1389
        %v1646 = vadd.f32 %v790, %v1390
        %v1647 = vadd.f32 %v791, %v1391
        %v1648 = vadd.f32 %v792, %v1392
        %v1649 = vadd.f32 %v793, %v1393
        %v1650 = vadd.f32 %v794, %v1394
        %v1651 = vadd.f32 %v795, %v1395
        %v1652 = vadd.f32 %v796, %v1396
        %v1653 = vadd.f32 %v797, %v1397
        %v1654 = vadd.f32 %v798, %v1398
        %v1655 = vadd.f32 %v799, %v1399
        %v1656 = vadd.f32 %v800, %v1400
        %v1657 = vadd.f32 %v801, %v1401
        %v1658 = vadd.f32 %v802, %v1402
        %v1659 = vadd.f32 %v803, %v1403
        %v1660 = vadd.f32 %v804, %v1404
        %v1661 = vadd.f32 %v805, %v1405
        %v1662 = vadd.f32 %v806, %v1406
        %v1663 = vadd.f32 %v807, %v1407
        %v1664 = vadd.f32 %v808, %v1408
        %v1665 = vadd.f32 %v809, %v1409
        %v1666 = vadd.f32 %v810, %v1410
        %v1667 = vadd.f32 %v811, %v1411
        %v1668 = vadd.f32 %v812, %v1412
        %v1669 = vadd.f32 %v813, %v1413
        %v1670 = vadd.f32 %v814, %v1414
        %v1671 = vadd.f32 %v815, %v1415
        %v1672 = vadd.f32 %v816, %v1416
        %v1673 = vadd.f32 %v817, %v1417
        %v1674 = vadd.f32 %v818, %v1418
        %v1675 = vadd.f32 %v819, %v1419
        %v1676 = vadd.f32 %v820, %v1420
        %v1677 = vadd.f32 %v821, %v1421
        %v1678 = vadd.f32 %v822, %v1422
        %v1679 = vadd.f32 %v823, %v1423
        %v1680 = vadd.f32 %v824, %v1424
        %v1681 = vadd.f32 %v825, %v1425
        %v1682 = vadd.f32 %v826, %v1426
        %v1683 = vadd.f32 %v827, %v1427
        %v1684 = vadd.f32 %v828, %v1428
        %v1685 = vadd.f32 %v829, %v1429
        %v1686 = vadd.f32 %v830, %v1430
        %v1687 = vadd.f32 %v831, %v1431
        %v1688 = vadd.f32 %v832, %v1432
        %v1689 = vadd.f32 %v833, %v1433
        %v1690 = vadd.f32 %v834, %v1434
        %v1691 = vadd.f32 %v835, %v1435
        %v1692 = vadd.f32 %v836, %v1436
        %v1693 = vadd.f32 %v837, %v1437
        %v1694 = vadd.f32 %v838, %v1438
        %v1695 = vadd.f32 %v839, %v1439
        %v1696 = vadd.f32 %v840, %v1440
        %v1697 = vadd.f32 %v841, %v1441
        %v1698 = vadd.f32 %v842, %v1442
        %v1699 = vadd.f32 %v843, %v1443
        %v1700 = vadd.f32 %v844, %v1444
        %v1701 = vadd.f32 %v845, %v1445
        %v1702 = vadd.f32 %v846, %v1446
        %v1703 = vadd.f32 %v847, %v1447
        %v1704 = vadd.f32 %v848, %v1448
        %v1705 = vadd.f32 %v849, %v1449
        %v1706 = vadd.f32 %v850, %v1450
        %v1707 = vadd.f32 %v851, %v1451
        %v1708 = vadd.f32 %v852, %v1452
        %v1709 = vadd.f32 %v853, %v1453
        %v1710 = vadd.f32 %v854, %v1454
        %v1711 = vadd.f32 %v855, %v1455
        %v1712 = vadd.f32 %v856, %v1456
        %v1713 = vadd.f32 %v857, %v1457
        %v1714 = vadd.f32 %v858, %v1458
        %v1715 = vadd.f32 %v859, %v1459
        %v1716 = vadd.f32 %v860, %v1460
        %v1717 = vadd.f32 %v861, %v1461
        %v1718 = vadd.f32 %v862, %v1462
        %v1719 = vadd.f32 %v863, %v1463
        %v1720 = vadd.f32 %v864, %v1464
        %v1721 = vadd.f32 %v865, %v1465
        %v1722 = vadd.f32 %v866, %v1466
        %v1723 = vadd.f32 %v867, %v1467
        %v1724 = vadd.f32 %v868, %v1468
        %v1725 = vadd.f32 %v869, %v1469
        %v1726 = vadd.f32 %v870, %v1470
        %v1727 = vadd.f32 %v871, %v1471
        %v1728 = vadd.f32 %v872, %v1472
        %v1729 = vadd.f32 %v873, %v1473
        %v1730 = vadd.f32 %v874, %v1474
        %v1731 = vadd.f32 %v875, %v1475
        %v1732 = vadd.f32 %v876, %v1476
        %v1733 = vadd.f32 %v877, %v1477
        %v1734 = vadd.f32 %v878, %v1478
        %v1735 = vadd.f32 %v879, %v1479
        %v1736 = vadd.f32 %v880, %v1480
        %v1737 = vadd.f32 %v881, %v1481
        %v1738 = vadd.f32 %v882, %v1482
        %v1739 = vadd.f32 %v883, %v1483
        %v1740 = vadd.f32 %v884, %v1484
        %v1741 = vadd.f32 %v885, %v1485
        %v1742 = vadd.f32 %v886, %v1486
        %v1743 = vadd.f32 %v887, %v1487
        %v1744 = vadd.f32 %v888, %v1488
        %v1745 = vadd.f32 %v889, %v1489
        %v1746 = vadd.f32 %v890, %v1490
        %v1747 = vadd.f32 %v891, %v1491
        %v1748 = vadd.f32 %v892, %v1492
        %v1749 = vadd.f32 %v893, %v1493
        %v1750 = vadd.f32 %v894, %v1494
        %v1751 = vadd.f32 %v895, %v1495
        %v1752 = vadd.f32 %v896, %v1496
        %v1753 = vadd.f32 %v897, %v1497
        %v1754 = vadd.f32 %v898, %v1498
        %v1755 = vadd.f32 %v899, %v1499
        %v1756 = vadd.f32 %v900, %v1500
        %v1757 = vadd.f32 %v901, %v1501
        %v1758 = vadd.f32 %v902, %v1502
        %v1759 = vadd.f32 %v903, %v1503
        %v1760 = vadd.f32 %v904, %v1504
        %v1761 = vadd.f32 %v905, %v1505
        %v1762 = vadd.f32 %v906, %v1506
        %v1763 = vadd.f32 %v907, %v1507
        %v1764 = vadd.f32 %v908, %v1508
        %v1765 = vadd.f32 %v909, %v1509
        %v1766 = vadd.f32 %v910, %v1510
        %v1767 = vadd.f32 %v911, %v1511
        %v1768 = vadd.f32 %v912, %v1512
        %v1769 = vadd.f32 %v913, %v1513
        %v1770 = vadd.f32 %v914, %v1514
        %v1771 = vadd.f32 %v915, %v1515
        %v1772 = vadd.f32 %v916, %v1516
        %v1773 = vadd.f32 %v917, %v1517
        %v1774 = vadd.f32 %v918, %v1518
        %v1775 = vadd.f32 %v919, %v1519
        %v1776 = vadd.f32 %v920, %v1520
        %v1777 = vadd.f32 %v921, %v1521
        %v1778 = vadd.f32 %v922, %v1522
        %v1779 = vadd.f32 %v923, %v1523
        %v1780 = vadd.f32 %v924, %v1524
        %v1781 = vadd.f32 %v925, %v1525
        %v1782 = vadd.f32 %v926, %v1526
        %v1783 = vadd.f32 %v927, %v1527
        %v1784 = vadd.f32 %v928, %v1528
        %v1785 = vadd.f32 %v929, %v1529
        %v1786 = vadd.f32 %v930, %v1530
        %v1787 = vadd.f32 %v931, %v1531
        %v1788 = vadd.f32 %v932, %v1532
        %v1789 = vadd.f32 %v933, %v1533
        %v1790 = vadd.f32 %v934, %v1534
        %v1791 = vadd.f32 %v935, %v1535
        %v1792 = vadd.f32 %v936, %v1536
        %v1793 = vadd.f32 %v937, %v1537
        %v1794 = vadd.f32 %v938, %v1538
        %v1795 = vadd.f32 %v939, %v1539
        %v1796 = vadd.f32 %v940, %v1540
        %v1797 = vadd.f32 %v941, %v1541
        %v1798 = vadd.f32 %v942, %v1542
        %v1799 = vadd.f32 %v943, %v1543
        %v1800 = vadd.f32 %v944, %v1544
        %v1801 = vadd.f32 %v945, %v1545
        %v1802 = vadd.f32 %v946, %v1546
        %v1803 = vadd.f32 %v947, %v1547
        %v1804 = vadd.f32 %v948, %v1548
        %v1805 = vadd.f32 %v949, %v1549
        %v1806 = vadd.f32 %v950, %v1550
        %v1807 = vadd.f32 %v951, %v1551
        %v1808 = vadd.f32 %v952, %v1552
        %v1809 = vadd.f32 %v953, %v1553
        %v1810 = vadd.f32 %v954, %v1554
        %v1811 = vadd.f32 %v955, %v1555
        %v1812 = vadd.f32 %v956, %v1556
        %v1813 = vadd.f32 %v957, %v1557
        %v1814 = vadd.f32 %v958, %v1558
        %v1815 = vadd.f32 %v959, %v1559
        %v1816 = vadd.f32 %v960, %v1560
        %v1817 = vadd.f32 %v961, %v1561
        %v1818 = vadd.f32 %v962, %v1562
        %v1819 = vadd.f32 %v963, %v1563
        %v1820 = vadd.f32 %v964, %v1564
        %v1821 = vadd.f32 %v965, %v1565
        %v1822 = vadd.f32 %v966, %v1566
        %v1823 = vadd.f32 %v967, %v1567
        %v1824 = vadd.f32 %v968, %v1568
        %v1825 = vadd.f32 %v969, %v1569
        %v1826 = vadd.f32 %v970, %v1570
        %v1827 = vadd.f32 %v971, %v1571
        %v1828 = vadd.f32 %v972, %v1572
        %v1829 = vadd.f32 %v973, %v1573
        %v1830 = vadd.f32 %v974, %v1574
        %v1831 = vadd.f32 %v975, %v1575
        %v1832 = vadd.f32 %v976, %v1576
        %v1833 = vadd.f32 %v977, %v1577
        %v1834 = vadd.f32 %v978, %v1578
        %v1835 = vadd.f32 %v979, %v1579
        %v1836 = vadd.f32 %v980, %v1580
        %v1837 = vadd.f32 %v981, %v1581
        %v1838 = vadd.f32 %v982, %v1582
        %v1839 = vadd.f32 %v983, %v1583
        %v1840 = vadd.f32 %v984, %v1584
        %v1841 = vadd.f32 %v985, %v1585
        %v1842 = vadd.f32 %v986, %v1586
        %v1843 = vadd.f32 %v987, %v1587
        %v1844 = vadd.f32 %v988, %v1588
        %v1845 = vadd.f32 %v989, %v1589
        %v1846 = vadd.f32 %v990, %v1590
        %v1847 = vadd.f32 %v991, %v1591
        %v1848 = vadd.f32 %v992, %v1592
        %v1849 = vld [vmem:[%s3] sm:$0xff]
        %v1850 = vld [vmem:[%s3 + $0x8] sm:$0xff]
        %v1851 = vld [vmem:[%s3 + $0x10] sm:$0xff]
        %v1852 = vld [vmem:[%s3 + $0x18] sm:$0xff]
        %1854 = vset.pattern.permute.xlu0 0
        %1855 = vperm.xlu0 %1854, %v1849
        %v1856 = vpop.permute.xlu0 %1855
        %1859 = vset.pattern.permute.xlu0 0
        %1860 = vperm.xlu0 %1859, %v1850
        %v1861 = vpop.permute.xlu0 %1860
        %1864 = vset.pattern.permute.xlu0 0
        %1865 = vperm.xlu0 %1864, %v1851
        %v1866 = vpop.permute.xlu0 %1865
        %1869 = vset.pattern.permute.xlu0 0
        %1870 = vperm.xlu0 %1869, %v1852
        %v1871 = vpop.permute.xlu0 %1870
        %v1873 = vadd.f32 %v1593, %v1856
        %v1874 = vadd.f32 %v1594, %v1856
        %v1875 = vadd.f32 %v1595, %v1856
        %v1876 = vadd.f32 %v1596, %v1856
        %v1877 = vadd.f32 %v1597, %v1856
        %v1878 = vadd.f32 %v1598, %v1856
        %v1879 = vadd.f32 %v1599, %v1856
        %v1880 = vadd.f32 %v1600, %v1856
        %v1881 = vadd.f32 %v1601, %v1856
        %v1882 = vadd.f32 %v1602, %v1856
        %v1883 = vadd.f32 %v1603, %v1856
        %v1884 = vadd.f32 %v1604, %v1856
        %v1885 = vadd.f32 %v1605, %v1856
        %v1886 = vadd.f32 %v1606, %v1856
        %v1887 = vadd.f32 %v1607, %v1856
        %v1888 = vadd.f32 %v1608, %v1856
        %v1889 = vadd.f32 %v1609, %v1856
        %v1890 = vadd.f32 %v1610, %v1856
        %v1891 = vadd.f32 %v1611, %v1856
        %v1892 = vadd.f32 %v1612, %v1856
        %v1893 = vadd.f32 %v1613, %v1856
        %v1894 = vadd.f32 %v1614, %v1856
        %v1895 = vadd.f32 %v1615, %v1856
        %v1896 = vadd.f32 %v1616, %v1856
        %v1897 = vadd.f32 %v1617, %v1856
        %v1898 = vadd.f32 %v1618, %v1856
        %v1899 = vadd.f32 %v1619, %v1856
        %v1900 = vadd.f32 %v1620, %v1856
        %v1901 = vadd.f32 %v1621, %v1856
        %v1902 = vadd.f32 %v1622, %v1856
        %v1903 = vadd.f32 %v1623, %v1856
        %v1904 = vadd.f32 %v1624, %v1856
        %v1905 = vadd.f32 %v1625, %v1856
        %v1906 = vadd.f32 %v1626, %v1856
        %v1907 = vadd.f32 %v1627, %v1856
        %v1908 = vadd.f32 %v1628, %v1856
        %v1909 = vadd.f32 %v1629, %v1856
        %v1910 = vadd.f32 %v1630, %v1856
        %v1911 = vadd.f32 %v1631, %v1856
        %v1912 = vadd.f32 %v1632, %v1856
        %v1913 = vadd.f32 %v1633, %v1856
        %v1914 = vadd.f32 %v1634, %v1856
        %v1915 = vadd.f32 %v1635, %v1856
        %v1916 = vadd.f32 %v1636, %v1856
        %v1917 = vadd.f32 %v1637, %v1856
        %v1918 = vadd.f32 %v1638, %v1856
        %v1919 = vadd.f32 %v1639, %v1856
        %v1920 = vadd.f32 %v1640, %v1856
        %v1921 = vadd.f32 %v1641, %v1856
        %v1922 = vadd.f32 %v1642, %v1856
        %v1923 = vadd.f32 %v1643, %v1856
        %v1924 = vadd.f32 %v1644, %v1856
        %v1925 = vadd.f32 %v1645, %v1856
        %v1926 = vadd.f32 %v1646, %v1856
        %v1927 = vadd.f32 %v1647, %v1856
        %v1928 = vadd.f32 %v1648, %v1856
        %v1929 = vadd.f32 %v1649, %v1856
        %v1930 = vadd.f32 %v1650, %v1856
        %v1931 = vadd.f32 %v1651, %v1856
        %v1932 = vadd.f32 %v1652, %v1856
        %v1933 = vadd.f32 %v1653, %v1856
        %v1934 = vadd.f32 %v1654, %v1856
        %v1935 = vadd.f32 %v1655, %v1856
        %v1936 = vadd.f32 %v1656, %v1856
        %v1937 = vadd.f32 %v1657, %v1861
        %v1938 = vadd.f32 %v1658, %v1861
        %v1939 = vadd.f32 %v1659, %v1861
        %v1940 = vadd.f32 %v1660, %v1861
        %v1941 = vadd.f32 %v1661, %v1861
        %v1942 = vadd.f32 %v1662, %v1861
        %v1943 = vadd.f32 %v1663, %v1861
        %v1944 = vadd.f32 %v1664, %v1861
        %v1945 = vadd.f32 %v1665, %v1861
        %v1946 = vadd.f32 %v1666, %v1861
        %v1947 = vadd.f32 %v1667, %v1861
        %v1948 = vadd.f32 %v1668, %v1861
        %v1949 = vadd.f32 %v1669, %v1861
        %v1950 = vadd.f32 %v1670, %v1861
        %v1951 = vadd.f32 %v1671, %v1861
        %v1952 = vadd.f32 %v1672, %v1861
        %v1953 = vadd.f32 %v1673, %v1861
        %v1954 = vadd.f32 %v1674, %v1861
        %v1955 = vadd.f32 %v1675, %v1861
        %v1956 = vadd.f32 %v1676, %v1861
        %v1957 = vadd.f32 %v1677, %v1861
        %v1958 = vadd.f32 %v1678, %v1861
        %v1959 = vadd.f32 %v1679, %v1861
        %v1960 = vadd.f32 %v1680, %v1861
        %v1961 = vadd.f32 %v1681, %v1861
        %v1962 = vadd.f32 %v1682, %v1861
        %v1963 = vadd.f32 %v1683, %v1861
        %v1964 = vadd.f32 %v1684, %v1861
        %v1965 = vadd.f32 %v1685, %v1861
        %v1966 = vadd.f32 %v1686, %v1861
        %v1967 = vadd.f32 %v1687, %v1861
        %v1968 = vadd.f32 %v1688, %v1861
        %v1969 = vadd.f32 %v1689, %v1861
        %v1970 = vadd.f32 %v1690, %v1861
        %v1971 = vadd.f32 %v1691, %v1861
        %v1972 = vadd.f32 %v1692, %v1861
        %v1973 = vadd.f32 %v1693, %v1861
        %v1974 = vadd.f32 %v1694, %v1861
        %v1975 = vadd.f32 %v1695, %v1861
        %v1976 = vadd.f32 %v1696, %v1861
        %v1977 = vadd.f32 %v1697, %v1861
        %v1978 = vadd.f32 %v1698, %v1861
        %v1979 = vadd.f32 %v1699, %v1861
        %v1980 = vadd.f32 %v1700, %v1861
        %v1981 = vadd.f32 %v1701, %v1861
        %v1982 = vadd.f32 %v1702, %v1861
        %v1983 = vadd.f32 %v1703, %v1861
        %v1984 = vadd.f32 %v1704, %v1861
        %v1985 = vadd.f32 %v1705, %v1861
        %v1986 = vadd.f32 %v1706, %v1861
        %v1987 = vadd.f32 %v1707, %v1861
        %v1988 = vadd.f32 %v1708, %v1861
        %v1989 = vadd.f32 %v1709, %v1861
        %v1990 = vadd.f32 %v1710, %v1861
        %v1991 = vadd.f32 %v1711, %v1861
        %v1992 = vadd.f32 %v1712, %v1861
        %v1993 = vadd.f32 %v1713, %v1861
        %v1994 = vadd.f32 %v1714, %v1861
        %v1995 = vadd.f32 %v1715, %v1861
        %v1996 = vadd.f32 %v1716, %v1861
        %v1997 = vadd.f32 %v1717, %v1861
        %v1998 = vadd.f32 %v1718, %v1861
        %v1999 = vadd.f32 %v1719, %v1861
        %v2000 = vadd.f32 %v1720, %v1861
        %v2001 = vadd.f32 %v1721, %v1866
        %v2002 = vadd.f32 %v1722, %v1866
        %v2003 = vadd.f32 %v1723, %v1866
        %v2004 = vadd.f32 %v1724, %v1866
        %v2005 = vadd.f32 %v1725, %v1866
        %v2006 = vadd.f32 %v1726, %v1866
        %v2007 = vadd.f32 %v1727, %v1866
        %v2008 = vadd.f32 %v1728, %v1866
        %v2009 = vadd.f32 %v1729, %v1866
        %v2010 = vadd.f32 %v1730, %v1866
        %v2011 = vadd.f32 %v1731, %v1866
        %v2012 = vadd.f32 %v1732, %v1866
        %v2013 = vadd.f32 %v1733, %v1866
        %v2014 = vadd.f32 %v1734, %v1866
        %v2015 = vadd.f32 %v1735, %v1866
        %v2016 = vadd.f32 %v1736, %v1866
        %v2017 = vadd.f32 %v1737, %v1866
        %v2018 = vadd.f32 %v1738, %v1866
        %v2019 = vadd.f32 %v1739, %v1866
        %v2020 = vadd.f32 %v1740, %v1866
        %v2021 = vadd.f32 %v1741, %v1866
        %v2022 = vadd.f32 %v1742, %v1866
        %v2023 = vadd.f32 %v1743, %v1866
        %v2024 = vadd.f32 %v1744, %v1866
        %v2025 = vadd.f32 %v1745, %v1866
        %v2026 = vadd.f32 %v1746, %v1866
        %v2027 = vadd.f32 %v1747, %v1866
        %v2028 = vadd.f32 %v1748, %v1866
        %v2029 = vadd.f32 %v1749, %v1866
        %v2030 = vadd.f32 %v1750, %v1866
        %v2031 = vadd.f32 %v1751, %v1866
        %v2032 = vadd.f32 %v1752, %v1866
        %v2033 = vadd.f32 %v1753, %v1866
        %v2034 = vadd.f32 %v1754, %v1866
        %v2035 = vadd.f32 %v1755, %v1866
        %v2036 = vadd.f32 %v1756, %v1866
        %v2037 = vadd.f32 %v1757, %v1866
        %v2038 = vadd.f32 %v1758, %v1866
        %v2039 = vadd.f32 %v1759, %v1866
        %v2040 = vadd.f32 %v1760, %v1866
        %v2041 = vadd.f32 %v1761, %v1866
        %v2042 = vadd.f32 %v1762, %v1866
        %v2043 = vadd.f32 %v1763, %v1866
        %v2044 = vadd.f32 %v1764, %v1866
        %v2045 = vadd.f32 %v1765, %v1866
        %v2046 = vadd.f32 %v1766, %v1866
        %v2047 = vadd.f32 %v1767, %v1866
        %v2048 = vadd.f32 %v1768, %v1866
        %v2049 = vadd.f32 %v1769, %v1866
        %v2050 = vadd.f32 %v1770, %v1866
        %v2051 = vadd.f32 %v1771, %v1866
        %v2052 = vadd.f32 %v1772, %v1866
        %v2053 = vadd.f32 %v1773, %v1866
        %v2054 = vadd.f32 %v1774, %v1866
        %v2055 = vadd.f32 %v1775, %v1866
        %v2056 = vadd.f32 %v1776, %v1866
        %v2057 = vadd.f32 %v1777, %v1866
        %v2058 = vadd.f32 %v1778, %v1866
        %v2059 = vadd.f32 %v1779, %v1866
        %v2060 = vadd.f32 %v1780, %v1866
        %v2061 = vadd.f32 %v1781, %v1866
        %v2062 = vadd.f32 %v1782, %v1866
        %v2063 = vadd.f32 %v1783, %v1866
        %v2064 = vadd.f32 %v1784, %v1866
        %v2065 = vadd.f32 %v1785, %v1871
        %v2066 = vadd.f32 %v1786, %v1871
        %v2067 = vadd.f32 %v1787, %v1871
        %v2068 = vadd.f32 %v1788, %v1871
        %v2069 = vadd.f32 %v1789, %v1871
        %v2070 = vadd.f32 %v1790, %v1871
        %v2071 = vadd.f32 %v1791, %v1871
        %v2072 = vadd.f32 %v1792, %v1871
        %v2073 = vadd.f32 %v1793, %v1871
        %v2074 = vadd.f32 %v1794, %v1871
        %v2075 = vadd.f32 %v1795, %v1871
        %v2076 = vadd.f32 %v1796, %v1871
        %v2077 = vadd.f32 %v1797, %v1871
        %v2078 = vadd.f32 %v1798, %v1871
        %v2079 = vadd.f32 %v1799, %v1871
        %v2080 = vadd.f32 %v1800, %v1871
        %v2081 = vadd.f32 %v1801, %v1871
        %v2082 = vadd.f32 %v1802, %v1871
        %v2083 = vadd.f32 %v1803, %v1871
        %v2084 = vadd.f32 %v1804, %v1871
        %v2085 = vadd.f32 %v1805, %v1871
        %v2086 = vadd.f32 %v1806, %v1871
        %v2087 = vadd.f32 %v1807, %v1871
        %v2088 = vadd.f32 %v1808, %v1871
        %v2089 = vadd.f32 %v1809, %v1871
        %v2090 = vadd.f32 %v1810, %v1871
        %v2091 = vadd.f32 %v1811, %v1871
        %v2092 = vadd.f32 %v1812, %v1871
        %v2093 = vadd.f32 %v1813, %v1871
        %v2094 = vadd.f32 %v1814, %v1871
        %v2095 = vadd.f32 %v1815, %v1871
        %v2096 = vadd.f32 %v1816, %v1871
        %v2097 = vadd.f32 %v1817, %v1871
        %v2098 = vadd.f32 %v1818, %v1871
        %v2099 = vadd.f32 %v1819, %v1871
        %v2100 = vadd.f32 %v1820, %v1871
        %v2101 = vadd.f32 %v1821, %v1871
        %v2102 = vadd.f32 %v1822, %v1871
        %v2103 = vadd.f32 %v1823, %v1871
        %v2104 = vadd.f32 %v1824, %v1871
        %v2105 = vadd.f32 %v1825, %v1871
        %v2106 = vadd.f32 %v1826, %v1871
        %v2107 = vadd.f32 %v1827, %v1871
        %v2108 = vadd.f32 %v1828, %v1871
        %v2109 = vadd.f32 %v1829, %v1871
        %v2110 = vadd.f32 %v1830, %v1871
        %v2111 = vadd.f32 %v1831, %v1871
        %v2112 = vadd.f32 %v1832, %v1871
        %v2113 = vadd.f32 %v1833, %v1871
        %v2114 = vadd.f32 %v1834, %v1871
        %v2115 = vadd.f32 %v1835, %v1871
        %v2116 = vadd.f32 %v1836, %v1871
        %v2117 = vadd.f32 %v1837, %v1871
        %v2118 = vadd.f32 %v1838, %v1871
        %v2119 = vadd.f32 %v1839, %v1871
        %v2120 = vadd.f32 %v1840, %v1871
        %v2121 = vadd.f32 %v1841, %v1871
        %v2122 = vadd.f32 %v1842, %v1871
        %v2123 = vadd.f32 %v1843, %v1871
        %v2124 = vadd.f32 %v1844, %v1871
        %v2125 = vadd.f32 %v1845, %v1871
        %v2126 = vadd.f32 %v1846, %v1871
        %v2127 = vadd.f32 %v1847, %v1871
        %v2128 = vadd.f32 %v1848, %v1871
        %v2129 = vmax.f32 %v1873, 0.0
        %v2130 = vmax.f32 %v1874, 0.0
        %v2131 = vmax.f32 %v1875, 0.0
        %v2132 = vmax.f32 %v1876, 0.0
        %v2133 = vmax.f32 %v1877, 0.0
        %v2134 = vmax.f32 %v1878, 0.0
        %v2135 = vmax.f32 %v1879, 0.0
        %v2136 = vmax.f32 %v1880, 0.0
        %v2137 = vmax.f32 %v1881, 0.0
        %v2138 = vmax.f32 %v1882, 0.0
        %v2139 = vmax.f32 %v1883, 0.0
        %v2140 = vmax.f32 %v1884, 0.0
        %v2141 = vmax.f32 %v1885, 0.0
        %v2142 = vmax.f32 %v1886, 0.0
        %v2143 = vmax.f32 %v1887, 0.0
        %v2144 = vmax.f32 %v1888, 0.0
        %v2145 = vmax.f32 %v1889, 0.0
        %v2146 = vmax.f32 %v1890, 0.0
        %v2147 = vmax.f32 %v1891, 0.0
        %v2148 = vmax.f32 %v1892, 0.0
        %v2149 = vmax.f32 %v1893, 0.0
        %v2150 = vmax.f32 %v1894, 0.0
        %v2151 = vmax.f32 %v1895, 0.0
        %v2152 = vmax.f32 %v1896, 0.0
        %v2153 = vmax.f32 %v1897, 0.0
        %v2154 = vmax.f32 %v1898, 0.0
        %v2155 = vmax.f32 %v1899, 0.0
        %v2156 = vmax.f32 %v1900, 0.0
        %v2157 = vmax.f32 %v1901, 0.0
        %v2158 = vmax.f32 %v1902, 0.0
        %v2159 = vmax.f32 %v1903, 0.0
        %v2160 = vmax.f32 %v1904, 0.0
        %v2161 = vmax.f32 %v1905, 0.0
        %v2162 = vmax.f32 %v1906, 0.0
        %v2163 = vmax.f32 %v1907, 0.0
        %v2164 = vmax.f32 %v1908, 0.0
        %v2165 = vmax.f32 %v1909, 0.0
        %v2166 = vmax.f32 %v1910, 0.0
        %v2167 = vmax.f32 %v1911, 0.0
        %v2168 = vmax.f32 %v1912, 0.0
        %v2169 = vmax.f32 %v1913, 0.0
        %v2170 = vmax.f32 %v1914, 0.0
        %v2171 = vmax.f32 %v1915, 0.0
        %v2172 = vmax.f32 %v1916, 0.0
        %v2173 = vmax.f32 %v1917, 0.0
        %v2174 = vmax.f32 %v1918, 0.0
        %v2175 = vmax.f32 %v1919, 0.0
        %v2176 = vmax.f32 %v1920, 0.0
        %v2177 = vmax.f32 %v1921, 0.0
        %v2178 = vmax.f32 %v1922, 0.0
        %v2179 = vmax.f32 %v1923, 0.0
        %v2180 = vmax.f32 %v1924, 0.0
        %v2181 = vmax.f32 %v1925, 0.0
        %v2182 = vmax.f32 %v1926, 0.0
        %v2183 = vmax.f32 %v1927, 0.0
        %v2184 = vmax.f32 %v1928, 0.0
        %v2185 = vmax.f32 %v1929, 0.0
        %v2186 = vmax.f32 %v1930, 0.0
        %v2187 = vmax.f32 %v1931, 0.0
        %v2188 = vmax.f32 %v1932, 0.0
        %v2189 = vmax.f32 %v1933, 0.0
        %v2190 = vmax.f32 %v1934, 0.0
        %v2191 = vmax.f32 %v1935, 0.0
        %v2192 = vmax.f32 %v1936, 0.0
        %v2193 = vmax.f32 %v1937, 0.0
        %v2194 = vmax.f32 %v1938, 0.0
        %v2195 = vmax.f32 %v1939, 0.0
        %v2196 = vmax.f32 %v1940, 0.0
        %v2197 = vmax.f32 %v1941, 0.0
        %v2198 = vmax.f32 %v1942, 0.0
        %v2199 = vmax.f32 %v1943, 0.0
        %v2200 = vmax.f32 %v1944, 0.0
        %v2201 = vmax.f32 %v1945, 0.0
        %v2202 = vmax.f32 %v1946, 0.0
        %v2203 = vmax.f32 %v1947, 0.0
        %v2204 = vmax.f32 %v1948, 0.0
        %v2205 = vmax.f32 %v1949, 0.0
        %v2206 = vmax.f32 %v1950, 0.0
        %v2207 = vmax.f32 %v1951, 0.0
        %v2208 = vmax.f32 %v1952, 0.0
        %v2209 = vmax.f32 %v1953, 0.0
        %v2210 = vmax.f32 %v1954, 0.0
        %v2211 = vmax.f32 %v1955, 0.0
        %v2212 = vmax.f32 %v1956, 0.0
        %v2213 = vmax.f32 %v1957, 0.0
        %v2214 = vmax.f32 %v1958, 0.0
        %v2215 = vmax.f32 %v1959, 0.0
        %v2216 = vmax.f32 %v1960, 0.0
        %v2217 = vmax.f32 %v1961, 0.0
        %v2218 = vmax.f32 %v1962, 0.0
        %v2219 = vmax.f32 %v1963, 0.0
        %v2220 = vmax.f32 %v1964, 0.0
        %v2221 = vmax.f32 %v1965, 0.0
        %v2222 = vmax.f32 %v1966, 0.0
        %v2223 = vmax.f32 %v1967, 0.0
        %v2224 = vmax.f32 %v1968, 0.0
        %v2225 = vmax.f32 %v1969, 0.0
        %v2226 = vmax.f32 %v1970, 0.0
        %v2227 = vmax.f32 %v1971, 0.0
        %v2228 = vmax.f32 %v1972, 0.0
        %v2229 = vmax.f32 %v1973, 0.0
        %v2230 = vmax.f32 %v1974, 0.0
        %v2231 = vmax.f32 %v1975, 0.0
        %v2232 = vmax.f32 %v1976, 0.0
        %v2233 = vmax.f32 %v1977, 0.0
        %v2234 = vmax.f32 %v1978, 0.0
        %v2235 = vmax.f32 %v1979, 0.0
        %v2236 = vmax.f32 %v1980, 0.0
        %v2237 = vmax.f32 %v1981, 0.0
        %v2238 = vmax.f32 %v1982, 0.0
        %v2239 = vmax.f32 %v1983, 0.0
        %v2240 = vmax.f32 %v1984, 0.0
        %v2241 = vmax.f32 %v1985, 0.0
        %v2242 = vmax.f32 %v1986, 0.0
        %v2243 = vmax.f32 %v1987, 0.0
        %v2244 = vmax.f32 %v1988, 0.0
        %v2245 = vmax.f32 %v1989, 0.0
        %v2246 = vmax.f32 %v1990, 0.0
        %v2247 = vmax.f32 %v1991, 0.0
        %v2248 = vmax.f32 %v1992, 0.0
        %v2249 = vmax.f32 %v1993, 0.0
        %v2250 = vmax.f32 %v1994, 0.0
        %v2251 = vmax.f32 %v1995, 0.0
        %v2252 = vmax.f32 %v1996, 0.0
        %v2253 = vmax.f32 %v1997, 0.0
        %v2254 = vmax.f32 %v1998, 0.0
        %v2255 = vmax.f32 %v1999, 0.0
        %v2256 = vmax.f32 %v2000, 0.0
        %v2257 = vmax.f32 %v2001, 0.0
        %v2258 = vmax.f32 %v2002, 0.0
        %v2259 = vmax.f32 %v2003, 0.0
        %v2260 = vmax.f32 %v2004, 0.0
        %v2261 = vmax.f32 %v2005, 0.0
        %v2262 = vmax.f32 %v2006, 0.0
        %v2263 = vmax.f32 %v2007, 0.0
        %v2264 = vmax.f32 %v2008, 0.0
        %v2265 = vmax.f32 %v2009, 0.0
        %v2266 = vmax.f32 %v2010, 0.0
        %v2267 = vmax.f32 %v2011, 0.0
        %v2268 = vmax.f32 %v2012, 0.0
        %v2269 = vmax.f32 %v2013, 0.0
        %v2270 = vmax.f32 %v2014, 0.0
        %v2271 = vmax.f32 %v2015, 0.0
        %v2272 = vmax.f32 %v2016, 0.0
        %v2273 = vmax.f32 %v2017, 0.0
        %v2274 = vmax.f32 %v2018, 0.0
        %v2275 = vmax.f32 %v2019, 0.0
        %v2276 = vmax.f32 %v2020, 0.0
        %v2277 = vmax.f32 %v2021, 0.0
        %v2278 = vmax.f32 %v2022, 0.0
        %v2279 = vmax.f32 %v2023, 0.0
        %v2280 = vmax.f32 %v2024, 0.0
        %v2281 = vmax.f32 %v2025, 0.0
        %v2282 = vmax.f32 %v2026, 0.0
        %v2283 = vmax.f32 %v2027, 0.0
        %v2284 = vmax.f32 %v2028, 0.0
        %v2285 = vmax.f32 %v2029, 0.0
        %v2286 = vmax.f32 %v2030, 0.0
        %v2287 = vmax.f32 %v2031, 0.0
        %v2288 = vmax.f32 %v2032, 0.0
        %v2289 = vmax.f32 %v2033, 0.0
        %v2290 = vmax.f32 %v2034, 0.0
        %v2291 = vmax.f32 %v2035, 0.0
        %v2292 = vmax.f32 %v2036, 0.0
        %v2293 = vmax.f32 %v2037, 0.0
        %v2294 = vmax.f32 %v2038, 0.0
        %v2295 = vmax.f32 %v2039, 0.0
        %v2296 = vmax.f32 %v2040, 0.0
        %v2297 = vmax.f32 %v2041, 0.0
        %v2298 = vmax.f32 %v2042, 0.0
        %v2299 = vmax.f32 %v2043, 0.0
        %v2300 = vmax.f32 %v2044, 0.0
        %v2301 = vmax.f32 %v2045, 0.0
        %v2302 = vmax.f32 %v2046, 0.0
        %v2303 = vmax.f32 %v2047, 0.0
        %v2304 = vmax.f32 %v2048, 0.0
        %v2305 = vmax.f32 %v2049, 0.0
        %v2306 = vmax.f32 %v2050, 0.0
        %v2307 = vmax.f32 %v2051, 0.0
        %v2308 = vmax.f32 %v2052, 0.0
        %v2309 = vmax.f32 %v2053, 0.0
        %v2310 = vmax.f32 %v2054, 0.0
        %v2311 = vmax.f32 %v2055, 0.0
        %v2312 = vmax.f32 %v2056, 0.0
        %v2313 = vmax.f32 %v2057, 0.0
        %v2314 = vmax.f32 %v2058, 0.0
        %v2315 = vmax.f32 %v2059, 0.0
        %v2316 = vmax.f32 %v2060, 0.0
        %v2317 = vmax.f32 %v2061, 0.0
        %v2318 = vmax.f32 %v2062, 0.0
        %v2319 = vmax.f32 %v2063, 0.0
        %v2320 = vmax.f32 %v2064, 0.0
        %v2321 = vmax.f32 %v2065, 0.0
        %v2322 = vmax.f32 %v2066, 0.0
        %v2323 = vmax.f32 %v2067, 0.0
        %v2324 = vmax.f32 %v2068, 0.0
        %v2325 = vmax.f32 %v2069, 0.0
        %v2326 = vmax.f32 %v2070, 0.0
        %v2327 = vmax.f32 %v2071, 0.0
        %v2328 = vmax.f32 %v2072, 0.0
        %v2329 = vmax.f32 %v2073, 0.0
        %v2330 = vmax.f32 %v2074, 0.0
        %v2331 = vmax.f32 %v2075, 0.0
        %v2332 = vmax.f32 %v2076, 0.0
        %v2333 = vmax.f32 %v2077, 0.0
        %v2334 = vmax.f32 %v2078, 0.0
        %v2335 = vmax.f32 %v2079, 0.0
        %v2336 = vmax.f32 %v2080, 0.0
        %v2337 = vmax.f32 %v2081, 0.0
        %v2338 = vmax.f32 %v2082, 0.0
        %v2339 = vmax.f32 %v2083, 0.0
        %v2340 = vmax.f32 %v2084, 0.0
        %v2341 = vmax.f32 %v2085, 0.0
        %v2342 = vmax.f32 %v2086, 0.0
        %v2343 = vmax.f32 %v2087, 0.0
        %v2344 = vmax.f32 %v2088, 0.0
        %v2345 = vmax.f32 %v2089, 0.0
        %v2346 = vmax.f32 %v2090, 0.0
        %v2347 = vmax.f32 %v2091, 0.0
        %v2348 = vmax.f32 %v2092, 0.0
        %v2349 = vmax.f32 %v2093, 0.0
        %v2350 = vmax.f32 %v2094, 0.0
        %v2351 = vmax.f32 %v2095, 0.0
        %v2352 = vmax.f32 %v2096, 0.0
        %v2353 = vmax.f32 %v2097, 0.0
        %v2354 = vmax.f32 %v2098, 0.0
        %v2355 = vmax.f32 %v2099, 0.0
        %v2356 = vmax.f32 %v2100, 0.0
        %v2357 = vmax.f32 %v2101, 0.0
        %v2358 = vmax.f32 %v2102, 0.0
        %v2359 = vmax.f32 %v2103, 0.0
        %v2360 = vmax.f32 %v2104, 0.0
        %v2361 = vmax.f32 %v2105, 0.0
        %v2362 = vmax.f32 %v2106, 0.0
        %v2363 = vmax.f32 %v2107, 0.0
        %v2364 = vmax.f32 %v2108, 0.0
        %v2365 = vmax.f32 %v2109, 0.0
        %v2366 = vmax.f32 %v2110, 0.0
        %v2367 = vmax.f32 %v2111, 0.0
        %v2368 = vmax.f32 %v2112, 0.0
        %v2369 = vmax.f32 %v2113, 0.0
        %v2370 = vmax.f32 %v2114, 0.0
        %v2371 = vmax.f32 %v2115, 0.0
        %v2372 = vmax.f32 %v2116, 0.0
        %v2373 = vmax.f32 %v2117, 0.0
        %v2374 = vmax.f32 %v2118, 0.0
        %v2375 = vmax.f32 %v2119, 0.0
        %v2376 = vmax.f32 %v2120, 0.0
        %v2377 = vmax.f32 %v2121, 0.0
        %v2378 = vmax.f32 %v2122, 0.0
        %v2379 = vmax.f32 %v2123, 0.0
        %v2380 = vmax.f32 %v2124, 0.0
        %v2381 = vmax.f32 %v2125, 0.0
        %v2382 = vmax.f32 %v2126, 0.0
        %v2383 = vmax.f32 %v2127, 0.0
        %v2384 = vmax.f32 %v2128, 0.0
        %v2385 = vpack.c.bf16 %v2193, %v2129
        %v2386 = vpack.c.bf16 %v2194, %v2130
        %v2387 = vpack.c.bf16 %v2195, %v2131
        %v2388 = vpack.c.bf16 %v2196, %v2132
        %v2389 = vpack.c.bf16 %v2197, %v2133
        %v2390 = vpack.c.bf16 %v2198, %v2134
        %v2391 = vpack.c.bf16 %v2199, %v2135
        %v2392 = vpack.c.bf16 %v2200, %v2136
        %v2393 = vpack.c.bf16 %v2201, %v2137
        %v2394 = vpack.c.bf16 %v2202, %v2138
        %v2395 = vpack.c.bf16 %v2203, %v2139
        %v2396 = vpack.c.bf16 %v2204, %v2140
        %v2397 = vpack.c.bf16 %v2205, %v2141
        %v2398 = vpack.c.bf16 %v2206, %v2142
        %v2399 = vpack.c.bf16 %v2207, %v2143
        %v2400 = vpack.c.bf16 %v2208, %v2144
        %v2401 = vpack.c.bf16 %v2209, %v2145
        %v2402 = vpack.c.bf16 %v2210, %v2146
        %v2403 = vpack.c.bf16 %v2211, %v2147
        %v2404 = vpack.c.bf16 %v2212, %v2148
        %v2405 = vpack.c.bf16 %v2213, %v2149
        %v2406 = vpack.c.bf16 %v2214, %v2150
        %v2407 = vpack.c.bf16 %v2215, %v2151
        %v2408 = vpack.c.bf16 %v2216, %v2152
        %v2409 = vpack.c.bf16 %v2217, %v2153
        %v2410 = vpack.c.bf16 %v2218, %v2154
        %v2411 = vpack.c.bf16 %v2219, %v2155
        %v2412 = vpack.c.bf16 %v2220, %v2156
        %v2413 = vpack.c.bf16 %v2221, %v2157
        %v2414 = vpack.c.bf16 %v2222, %v2158
        %v2415 = vpack.c.bf16 %v2223, %v2159
        %v2416 = vpack.c.bf16 %v2224, %v2160
        %v2417 = vpack.c.bf16 %v2225, %v2161
        %v2418 = vpack.c.bf16 %v2226, %v2162
        %v2419 = vpack.c.bf16 %v2227, %v2163
        %v2420 = vpack.c.bf16 %v2228, %v2164
        %v2421 = vpack.c.bf16 %v2229, %v2165
        %v2422 = vpack.c.bf16 %v2230, %v2166
        %v2423 = vpack.c.bf16 %v2231, %v2167
        %v2424 = vpack.c.bf16 %v2232, %v2168
        %v2425 = vpack.c.bf16 %v2233, %v2169
        %v2426 = vpack.c.bf16 %v2234, %v2170
        %v2427 = vpack.c.bf16 %v2235, %v2171
        %v2428 = vpack.c.bf16 %v2236, %v2172
        %v2429 = vpack.c.bf16 %v2237, %v2173
        %v2430 = vpack.c.bf16 %v2238, %v2174
        %v2431 = vpack.c.bf16 %v2239, %v2175
        %v2432 = vpack.c.bf16 %v2240, %v2176
        %v2433 = vpack.c.bf16 %v2241, %v2177
        %v2434 = vpack.c.bf16 %v2242, %v2178
        %v2435 = vpack.c.bf16 %v2243, %v2179
        %v2436 = vpack.c.bf16 %v2244, %v2180
        %v2437 = vpack.c.bf16 %v2245, %v2181
        %v2438 = vpack.c.bf16 %v2246, %v2182
        %v2439 = vpack.c.bf16 %v2247, %v2183
        %v2440 = vpack.c.bf16 %v2248, %v2184
        %v2441 = vpack.c.bf16 %v2249, %v2185
        %v2442 = vpack.c.bf16 %v2250, %v2186
        %v2443 = vpack.c.bf16 %v2251, %v2187
        %v2444 = vpack.c.bf16 %v2252, %v2188
        %v2445 = vpack.c.bf16 %v2253, %v2189
        %v2446 = vpack.c.bf16 %v2254, %v2190
        %v2447 = vpack.c.bf16 %v2255, %v2191
        %v2448 = vpack.c.bf16 %v2256, %v2192
        %v2449 = vpack.c.bf16 %v2321, %v2257
        %v2450 = vpack.c.bf16 %v2322, %v2258
        %v2451 = vpack.c.bf16 %v2323, %v2259
        %v2452 = vpack.c.bf16 %v2324, %v2260
        %v2453 = vpack.c.bf16 %v2325, %v2261
        %v2454 = vpack.c.bf16 %v2326, %v2262
        %v2455 = vpack.c.bf16 %v2327, %v2263
        %v2456 = vpack.c.bf16 %v2328, %v2264
        %v2457 = vpack.c.bf16 %v2329, %v2265
        %v2458 = vpack.c.bf16 %v2330, %v2266
        %v2459 = vpack.c.bf16 %v2331, %v2267
        %v2460 = vpack.c.bf16 %v2332, %v2268
        %v2461 = vpack.c.bf16 %v2333, %v2269
        %v2462 = vpack.c.bf16 %v2334, %v2270
        %v2463 = vpack.c.bf16 %v2335, %v2271
        %v2464 = vpack.c.bf16 %v2336, %v2272
        %v2465 = vpack.c.bf16 %v2337, %v2273
        %v2466 = vpack.c.bf16 %v2338, %v2274
        %v2467 = vpack.c.bf16 %v2339, %v2275
        %v2468 = vpack.c.bf16 %v2340, %v2276
        %v2469 = vpack.c.bf16 %v2341, %v2277
        %v2470 = vpack.c.bf16 %v2342, %v2278
        %v2471 = vpack.c.bf16 %v2343, %v2279
        %v2472 = vpack.c.bf16 %v2344, %v2280
        %v2473 = vpack.c.bf16 %v2345, %v2281
        %v2474 = vpack.c.bf16 %v2346, %v2282
        %v2475 = vpack.c.bf16 %v2347, %v2283
        %v2476 = vpack.c.bf16 %v2348, %v2284
        %v2477 = vpack.c.bf16 %v2349, %v2285
        %v2478 = vpack.c.bf16 %v2350, %v2286
        %v2479 = vpack.c.bf16 %v2351, %v2287
        %v2480 = vpack.c.bf16 %v2352, %v2288
        %v2481 = vpack.c.bf16 %v2353, %v2289
        %v2482 = vpack.c.bf16 %v2354, %v2290
        %v2483 = vpack.c.bf16 %v2355, %v2291
        %v2484 = vpack.c.bf16 %v2356, %v2292
        %v2485 = vpack.c.bf16 %v2357, %v2293
        %v2486 = vpack.c.bf16 %v2358, %v2294
        %v2487 = vpack.c.bf16 %v2359, %v2295
        %v2488 = vpack.c.bf16 %v2360, %v2296
        %v2489 = vpack.c.bf16 %v2361, %v2297
        %v2490 = vpack.c.bf16 %v2362, %v2298
        %v2491 = vpack.c.bf16 %v2363, %v2299
        %v2492 = vpack.c.bf16 %v2364, %v2300
        %v2493 = vpack.c.bf16 %v2365, %v2301
        %v2494 = vpack.c.bf16 %v2366, %v2302
        %v2495 = vpack.c.bf16 %v2367, %v2303
        %v2496 = vpack.c.bf16 %v2368, %v2304
        %v2497 = vpack.c.bf16 %v2369, %v2305
        %v2498 = vpack.c.bf16 %v2370, %v2306
        %v2499 = vpack.c.bf16 %v2371, %v2307
        %v2500 = vpack.c.bf16 %v2372, %v2308
        %v2501 = vpack.c.bf16 %v2373, %v2309
        %v2502 = vpack.c.bf16 %v2374, %v2310
        %v2503 = vpack.c.bf16 %v2375, %v2311
        %v2504 = vpack.c.bf16 %v2376, %v2312
        %v2505 = vpack.c.bf16 %v2377, %v2313
        %v2506 = vpack.c.bf16 %v2378, %v2314
        %v2507 = vpack.c.bf16 %v2379, %v2315
        %v2508 = vpack.c.bf16 %v2380, %v2316
        %v2509 = vpack.c.bf16 %v2381, %v2317
        %v2510 = vpack.c.bf16 %v2382, %v2318
        %v2511 = vpack.c.bf16 %v2383, %v2319
        %v2512 = vpack.c.bf16 %v2384, %v2320
        %v2513 = vld [vmem:[%s4] sm:$0xf]
        %v2514 = vld [vmem:[%s4 + $0x4] sm:$0xf]
        %v2515 = vld [vmem:[%s4 + $0x8] sm:$0xf]
        %v2516 = vld [vmem:[%s4 + $0xc] sm:$0xf]
        %v2517 = vld [vmem:[%s4 + $0x10] sm:$0xf]
        %v2518 = vld [vmem:[%s4 + $0x14] sm:$0xf]
        %v2519 = vld [vmem:[%s4 + $0x18] sm:$0xf]
        %v2520 = vld [vmem:[%s4 + $0x1c] sm:$0xf]
        %v2521 = vld [vmem:[%s5] sm:$0xff]
        %v2522 = vld [vmem:[%s5 + $0x8] sm:$0xff]
        %v2523 = vld [vmem:[%s5 + $0x10] sm:$0xff]
        %v2524 = vld [vmem:[%s5 + $0x18] sm:$0xff]
        %v2525 = vld [vmem:[%s5 + $0x20] sm:$0xff]
        %v2526 = vld [vmem:[%s5 + $0x28] sm:$0xff]
        %v2527 = vld [vmem:[%s5 + $0x30] sm:$0xff]
        %v2528 = vld [vmem:[%s5 + $0x38] sm:$0xff]
        %2530 = vset.pattern.permute.xlu0 0
        %2531 = vperm.xlu0 %2530, %v2521
        %v2532 = vpop.permute.xlu0 %2531
        %2535 = vset.pattern.permute.xlu0 0
        %2536 = vperm.xlu0 %2535, %v2522
        %v2537 = vpop.permute.xlu0 %2536
        %2540 = vset.pattern.permute.xlu0 0
        %2541 = vperm.xlu0 %2540, %v2523
        %v2542 = vpop.permute.xlu0 %2541
        %2545 = vset.pattern.permute.xlu0 0
        %2546 = vperm.xlu0 %2545, %v2524
        %v2547 = vpop.permute.xlu0 %2546
        %2550 = vset.pattern.permute.xlu0 0
        %2551 = vperm.xlu0 %2550, %v2525
        %v2552 = vpop.permute.xlu0 %2551
        %2555 = vset.pattern.permute.xlu0 0
        %2556 = vperm.xlu0 %2555, %v2526
        %v2557 = vpop.permute.xlu0 %2556
        %2560 = vset.pattern.permute.xlu0 0
        %2561 = vperm.xlu0 %2560, %v2527
        %v2562 = vpop.permute.xlu0 %2561
        %2565 = vset.pattern.permute.xlu0 0
        %2566 = vperm.xlu0 %2565, %v2528
        %v2567 = vpop.permute.xlu0 %2566
        %v2577 = vunpack.c.l.b16 %v2513
        %v2578 = vunpack.c.l.b16 %v2514
        %v2579 = vunpack.c.l.b16 %v2515
        %v2580 = vunpack.c.l.b16 %v2516
        %v2581 = vunpack.c.l.b16 %v2517
        %v2582 = vunpack.c.l.b16 %v2518
        %v2583 = vunpack.c.l.b16 %v2519
        %v2584 = vunpack.c.l.b16 %v2520
        %v2585 = vpack.c.b16 %v2578, %v2577
        %v2586 = vpack.c.b16 %v2580, %v2579
        %v2587 = vpack.c.b16 %v2582, %v2581
        %v2588 = vpack.c.b16 %v2584, %v2583
        %vm2589 = vcmask 261120
        %v2591 = vsel %vm2589, %v2585, 0
        %v2594 = vsel %vm2589, %v2586, 0
        %v2597 = vsel %vm2589, %v2587, 0
        %v2600 = vsel %vm2589, %v2588, 0
        %2602 = vmatprep.subr.bf16.mxu0 %v2386
        %2603 = vmatpush1.bf16.msra.mxu0 %v2385
        %2604 = vmatprep.subr.bf16.mxu0 %v2450
        %2605 = vmatpush1.bf16.msra.mxu0 %v2449
        %2606 = vmatprep.subr.bf16.mxu0 0
        %2607 = vmatpush1.bf16.msra.mxu0 0
        %2608 = vmatprep.subr.bf16.mxu0 0
        %2609 = vmatpush1.bf16.msra.mxu0 0
        %2610 = vmatprep.subr.bf16.mxu0 0
        %2611 = vmatpush1.bf16.msra.mxu0 0
        %2612 = vmatprep.subr.bf16.mxu0 0
        %2613 = vmatpush1.bf16.msra.mxu0 0
        %2614 = vmatprep.subr.bf16.mxu0 0
        %2615 = vmatpush1.bf16.msra.mxu0 0
        %2616 = vmatprep.subr.bf16.mxu0 0
        %2617 = vmatpush1.bf16.msra.mxu0 0
        %2618 = vmatprep.subr.bf16.mxu0 0
        %2619 = vmatpush1.bf16.msra.mxu0 0
        %2620 = vmatprep.subr.bf16.mxu0 0
        %2621 = vmatpush1.bf16.msra.mxu0 0
        %2622 = vmatprep.subr.bf16.mxu0 0
        %2623 = vmatpush1.bf16.msra.mxu0 0
        %2624 = vmatprep.subr.bf16.mxu0 0
        %2625 = vmatpush1.bf16.msra.mxu0 0
        %2626 = vmatprep.subr.bf16.mxu0 0
        %2627 = vmatpush1.bf16.msra.mxu0 0
        %2628 = vmatprep.subr.bf16.mxu0 0
        %2629 = vmatpush1.bf16.msra.mxu0 0
        %2630 = vmatprep.subr.bf16.mxu0 0
        %2631 = vmatpush1.bf16.msra.mxu0 0
        %2632 = vmatprep.subr.bf16.mxu0 0
        %2633 = vmatpush1.bf16.msra.mxu0 0
        %2634 = vmatprep.mubr.bf16.mxu0 0
        %2635 = vmatmul.mubr.bf16.gmra.mrb[0].mxu0 %v2591
        %v2636 = vpop.f32.mrb[0].mxu0
        %v2637 = vadd.f32 %v2532, %v2636
        %v2638 = vpop.f32.mrb[0].mxu0
        %v2639 = vadd.f32 %v2532, %v2638
        %v2640 = vpop.f32.mrb[0].mxu0
        %v2641 = vadd.f32 %v2537, %v2640
        %v2642 = vpop.f32.mrb[0].mxu0
        %v2643 = vadd.f32 %v2537, %v2642
        %2644 = vmatprep.mubr.bf16.mxu0 0
        %2645 = vmatmul.mubr.bf16.gmra.mrb[0].mxu0 %v2594
        %v2646 = vpop.f32.mrb[0].mxu0
        %v2647 = vadd.f32 %v2542, %v2646
        %v2648 = vpop.f32.mrb[0].mxu0
        %v2649 = vadd.f32 %v2542, %v2648
        %v2650 = vpop.f32.mrb[0].mxu0
        %v2651 = vadd.f32 %v2547, %v2650
        %v2652 = vpop.f32.mrb[0].mxu0
        %v2653 = vadd.f32 %v2547, %v2652
        %2654 = vmatprep.mubr.bf16.mxu0 0
        %2655 = vmatmul.mubr.bf16.gmra.mrb[0].mxu0 %v2597
        %v2656 = vpop.f32.mrb[0].mxu0
        %v2657 = vadd.f32 %v2552, %v2656
        %v2658 = vpop.f32.mrb[0].mxu0
        %v2659 = vadd.f32 %v2552, %v2658
        %v2660 = vpop.f32.mrb[0].mxu0
        %v2661 = vadd.f32 %v2557, %v2660
        %v2662 = vpop.f32.mrb[0].mxu0
        %v2663 = vadd.f32 %v2557, %v2662
        %2664 = vmatprep.mubr.bf16.mxu0 0
        %2665 = vmatmul.mubr.bf16.gmra.mrb[0].mxu0 %v2600
        %v2666 = vpop.f32.mrb[0].mxu0
        %v2667 = vadd.f32 %v2562, %v2666
        %v2668 = vpop.f32.mrb[0].mxu0
        %v2669 = vadd.f32 %v2562, %v2668
        %v2670 = vpop.f32.mrb[0].mxu0
        %v2671 = vadd.f32 %v2567, %v2670
        %v2672 = vpop.f32.mrb[0].mxu0
        %v2673 = vadd.f32 %v2567, %v2672
        %2674 = vdwg.mxu0
        %2675 = vmatprep.subr.bf16.mxu0 %v2388
        %2676 = vmatpush1.bf16.msra.mxu0 %v2387
        %2677 = vmatprep.subr.bf16.mxu0 %v2452
        %2678 = vmatpush1.bf16.msra.mxu0 %v2451
        %2679 = vmatprep.subr.bf16.mxu0 0
        %2680 = vmatpush1.bf16.msra.mxu0 0
        %2681 = vmatprep.subr.bf16.mxu0 0
        %2682 = vmatpush1.bf16.msra.mxu0 0
        %2683 = vmatprep.subr.bf16.mxu0 0
        %2684 = vmatpush1.bf16.msra.mxu0 0
        %2685 = vmatprep.subr.bf16.mxu0 0
        %2686 = vmatpush1.bf16.msra.mxu0 0
        %2687 = vmatprep.subr.bf16.mxu0 0
        %2688 = vmatpush1.bf16.msra.mxu0 0
        %2689 = vmatprep.subr.bf16.mxu0 0
        %2690 = vmatpush1.bf16.msra.mxu0 0
        %2691 = vmatprep.subr.bf16.mxu0 0
        %2692 = vmatpush1.bf16.msra.mxu0 0
        %2693 = vmatprep.subr.bf16.mxu0 0
        %2694 = vmatpush1.bf16.msra.mxu0 0
        %2695 = vmatprep.subr.bf16.mxu0 0
        %2696 = vmatpush1.bf16.msra.mxu0 0
        %2697 = vmatprep.subr.bf16.mxu0 0
        %2698 = vmatpush1.bf16.msra.mxu0 0
        %2699 = vmatprep.subr.bf16.mxu0 0
        %2700 = vmatpush1.bf16.msra.mxu0 0
        %2701 = vmatprep.subr.bf16.mxu0 0
        %2702 = vmatpush1.bf16.msra.mxu0 0
        %2703 = vmatprep.subr.bf16.mxu0 0
        %2704 = vmatpush1.bf16.msra.mxu0 0
        %2705 = vmatprep.subr.bf16.mxu0 0
        %2706 = vmatpush1.bf16.msra.mxu0 0
        %2707 = vmatprep.mubr.bf16.mxu0 0
        %2708 = vmatmul.mubr.bf16.gmra.mrb[0].mxu0 %v2591
        %v2709 = vpop.f32.mrb[0].mxu0
        %v2710 = vadd.f32 %v2532, %v2709
        %v2711 = vpop.f32.mrb[0].mxu0
        %v2712 = vadd.f32 %v2532, %v2711
        %v2713 = vpop.f32.mrb[0].mxu0
        %v2714 = vadd.f32 %v2537, %v2713
        %v2715 = vpop.f32.mrb[0].mxu0
        %v2716 = vadd.f32 %v2537, %v2715
        %2717 = vmatprep.mubr.bf16.mxu0 0
        %2718 = vmatmul.mubr.bf16.gmra.mrb[0].mxu0 %v2594
        %v2719 = vpop.f32.mrb[0].mxu0
        %v2720 = vadd.f32 %v2542, %v2719
        %v2721 = vpop.f32.mrb[0].mxu0
        %v2722 = vadd.f32 %v2542, %v2721
        %v2723 = vpop.f32.mrb[0].mxu0
        %v2724 = vadd.f32 %v2547, %v2723
        %v2725 = vpop.f32.mrb[0].mxu0
        %v2726 = vadd.f32 %v2547, %v2725
        %2727 = vmatprep.mubr.bf16.mxu0 0
        %2728 = vmatmul.mubr.bf16.gmra.mrb[0].mxu0 %v2597
        %v2729 = vpop.f32.mrb[0].mxu0
        %v2730 = vadd.f32 %v2552, %v2729
        %v2731 = vpop.f32.mrb[0].mxu0
        %v2732 = vadd.f32 %v2552, %v2731
        %v2733 = vpop.f32.mrb[0].mxu0
        %v2734 = vadd.f32 %v2557, %v2733
        %v2735 = vpop.f32.mrb[0].mxu0
        %v2736 = vadd.f32 %v2557, %v2735
        %2737 = vmatprep.mubr.bf16.mxu0 0
        %2738 = vmatmul.mubr.bf16.gmra.mrb[0].mxu0 %v2600
        %v2739 = vpop.f32.mrb[0].mxu0
        %v2740 = vadd.f32 %v2562, %v2739
        %v2741 = vpop.f32.mrb[0].mxu0
        %v2742 = vadd.f32 %v2562, %v2741
        %v2743 = vpop.f32.mrb[0].mxu0
        %v2744 = vadd.f32 %v2567, %v2743
        %v2745 = vpop.f32.mrb[0].mxu0
        %v2746 = vadd.f32 %v2567, %v2745
        %2747 = vdwg.mxu0
        %2748 = vmatprep.subr.bf16.mxu0 %v2390
        %2749 = vmatpush1.bf16.msra.mxu0 %v2389
        %2750 = vmatprep.subr.bf16.mxu0 %v2454
        %2751 = vmatpush1.bf16.msra.mxu0 %v2453
        %2752 = vmatprep.subr.bf16.mxu0 0
        %2753 = vmatpush1.bf16.msra.mxu0 0
        %2754 = vmatprep.subr.bf16.mxu0 0
        %2755 = vmatpush1.bf16.msra.mxu0 0
        %2756 = vmatprep.subr.bf16.mxu0 0
        %2757 = vmatpush1.bf16.msra.mxu0 0
        %2758 = vmatprep.subr.bf16.mxu0 0
        %2759 = vmatpush1.bf16.msra.mxu0 0
        %2760 = vmatprep.subr.bf16.mxu0 0
        %2761 = vmatpush1.bf16.msra.mxu0 0
        %2762 = vmatprep.subr.bf16.mxu0 0
        %2763 = vmatpush1.bf16.msra.mxu0 0
        %2764 = vmatprep.subr.bf16.mxu0 0
        %2765 = vmatpush1.bf16.msra.mxu0 0
        %2766 = vmatprep.subr.bf16.mxu0 0
        %2767 = vmatpush1.bf16.msra.mxu0 0
        %2768 = vmatprep.subr.bf16.mxu0 0
        %2769 = vmatpush1.bf16.msra.mxu0 0
        %2770 = vmatprep.subr.bf16.mxu0 0
        %2771 = vmatpush1.bf16.msra.mxu0 0
        %2772 = vmatprep.subr.bf16.mxu0 0
        %2773 = vmatpush1.bf16.msra.mxu0 0
        %2774 = vmatprep.subr.bf16.mxu0 0
        %2775 = vmatpush1.bf16.msra.mxu0 0
        %2776 = vmatprep.subr.bf16.mxu0 0
        %2777 = vmatpush1.bf16.msra.mxu0 0
        %2778 = vmatprep.subr.bf16.mxu0 0
        %2779 = vmatpush1.bf16.msra.mxu0 0
        %2780 = vmatprep.mubr.bf16.mxu0 0
        %2781 = vmatmul.mubr.bf16.gmra.mrb[0].mxu0 %v2591
        %v2782 = vpop.f32.mrb[0].mxu0
        %v2783 = vadd.f32 %v2532, %v2782
        %v2784 = vpop.f32.mrb[0].mxu0
        %v2785 = vadd.f32 %v2532, %v2784
        %v2786 = vpop.f32.mrb[0].mxu0
        %v2787 = vadd.f32 %v2537, %v2786
        %v2788 = vpop.f32.mrb[0].mxu0
        %v2789 = vadd.f32 %v2537, %v2788
        %2790 = vmatprep.mubr.bf16.mxu0 0
        %2791 = vmatmul.mubr.bf16.gmra.mrb[0].mxu0 %v2594
        %v2792 = vpop.f32.mrb[0].mxu0
        %v2793 = vadd.f32 %v2542, %v2792
        %v2794 = vpop.f32.mrb[0].mxu0
        %v2795 = vadd.f32 %v2542, %v2794
        %v2796 = vpop.f32.mrb[0].mxu0
        %v2797 = vadd.f32 %v2547, %v2796
        %v2798 = vpop.f32.mrb[0].mxu0
        %v2799 = vadd.f32 %v2547, %v2798
        %2800 = vmatprep.mubr.bf16.mxu0 0
        %2801 = vmatmul.mubr.bf16.gmra.mrb[0].mxu0 %v2597
        %v2802 = vpop.f32.mrb[0].mxu0
        %v2803 = vadd.f32 %v2552, %v2802
        %v2804 = vpop.f32.mrb[0].mxu0
        %v2805 = vadd.f32 %v2552, %v2804
        %v2806 = vpop.f32.mrb[0].mxu0
        %v2807 = vadd.f32 %v2557, %v2806
        %v2808 = vpop.f32.mrb[0].mxu0
        %v2809 = vadd.f32 %v2557, %v2808
        %2810 = vmatprep.mubr.bf16.mxu0 0
        %2811 = vmatmul.mubr.bf16.gmra.mrb[0].mxu0 %v2600
        %v2812 = vpop.f32.mrb[0].mxu0
        %v2813 = vadd.f32 %v2562, %v2812
        %v2814 = vpop.f32.mrb[0].mxu0
        %v2815 = vadd.f32 %v2562, %v2814
        %v2816 = vpop.f32.mrb[0].mxu0
        %v2817 = vadd.f32 %v2567, %v2816
        %v2818 = vpop.f32.mrb[0].mxu0
        %v2819 = vadd.f32 %v2567, %v2818
        %2820 = vdwg.mxu0
        %2821 = vmatprep.subr.bf16.mxu0 %v2392
        %2822 = vmatpush1.bf16.msra.mxu0 %v2391
        %2823 = vmatprep.subr.bf16.mxu0 %v2456
        %2824 = vmatpush1.bf16.msra.mxu0 %v2455
        %2825 = vmatprep.subr.bf16.mxu0 0
        %2826 = vmatpush1.bf16.msra.mxu0 0
        %2827 = vmatprep.subr.bf16.mxu0 0
        %2828 = vmatpush1.bf16.msra.mxu0 0
        %2829 = vmatprep.subr.bf16.mxu0 0
        %2830 = vmatpush1.bf16.msra.mxu0 0
        %2831 = vmatprep.subr.bf16.mxu0 0
        %2832 = vmatpush1.bf16.msra.mxu0 0
        %2833 = vmatprep.subr.bf16.mxu0 0
        %2834 = vmatpush1.bf16.msra.mxu0 0
        %2835 = vmatprep.subr.bf16.mxu0 0
        %2836 = vmatpush1.bf16.msra.mxu0 0
        %2837 = vmatprep.subr.bf16.mxu0 0
        %2838 = vmatpush1.bf16.msra.mxu0 0
        %2839 = vmatprep.subr.bf16.mxu0 0
        %2840 = vmatpush1.bf16.msra.mxu0 0
        %2841 = vmatprep.subr.bf16.mxu0 0
        %2842 = vmatpush1.bf16.msra.mxu0 0
        %2843 = vmatprep.subr.bf16.mxu0 0
        %2844 = vmatpush1.bf16.msra.mxu0 0
        %2845 = vmatprep.subr.bf16.mxu0 0
        %2846 = vmatpush1.bf16.msra.mxu0 0
        %2847 = vmatprep.subr.bf16.mxu0 0
        %2848 = vmatpush1.bf16.msra.mxu0 0
        %2849 = vmatprep.subr.bf16.mxu0 0
        %2850 = vmatpush1.bf16.msra.mxu0 0
        %2851 = vmatprep.subr.bf16.mxu0 0
        %2852 = vmatpush1.bf16.msra.mxu0 0
        %2853 = vmatprep.mubr.bf16.mxu0 0
        %2854 = vmatmul.mubr.bf16.gmra.mrb[0].mxu0 %v2591
        %v2855 = vpop.f32.mrb[0].mxu0
        %v2856 = vadd.f32 %v2532, %v2855
        %v2857 = vpop.f32.mrb[0].mxu0
        %v2858 = vadd.f32 %v2532, %v2857
        %v2859 = vpop.f32.mrb[0].mxu0
        %v2860 = vadd.f32 %v2537, %v2859
        %v2861 = vpop.f32.mrb[0].mxu0
        %v2862 = vadd.f32 %v2537, %v2861
        %2863 = vmatprep.mubr.bf16.mxu0 0
        %2864 = vmatmul.mubr.bf16.gmra.mrb[0].mxu0 %v2594
        %v2865 = vpop.f32.mrb[0].mxu0
        %v2866 = vadd.f32 %v2542, %v2865
        %v2867 = vpop.f32.mrb[0].mxu0
        %v2868 = vadd.f32 %v2542, %v2867
        %v2869 = vpop.f32.mrb[0].mxu0
        %v2870 = vadd.f32 %v2547, %v2869
        %v2871 = vpop.f32.mrb[0].mxu0
        %v2872 = vadd.f32 %v2547, %v2871
        %2873 = vmatprep.mubr.bf16.mxu0 0
        %2874 = vmatmul.mubr.bf16.gmra.mrb[0].mxu0 %v2597
        %v2875 = vpop.f32.mrb[0].mxu0
        %v2876 = vadd.f32 %v2552, %v2875
        %v2877 = vpop.f32.mrb[0].mxu0
        %v2878 = vadd.f32 %v2552, %v2877
        %v2879 = vpop.f32.mrb[0].mxu0
        %v2880 = vadd.f32 %v2557, %v2879
        %v2881 = vpop.f32.mrb[0].mxu0
        %v2882 = vadd.f32 %v2557, %v2881
        %2883 = vmatprep.mubr.bf16.mxu0 0
        %2884 = vmatmul.mubr.bf16.gmra.mrb[0].mxu0 %v2600
        %v2885 = vpop.f32.mrb[0].mxu0
        %v2886 = vadd.f32 %v2562, %v2885
        %v2887 = vpop.f32.mrb[0].mxu0
        %v2888 = vadd.f32 %v2562, %v2887
        %v2889 = vpop.f32.mrb[0].mxu0
        %v2890 = vadd.f32 %v2567, %v2889
        %v2891 = vpop.f32.mrb[0].mxu0
        %v2892 = vadd.f32 %v2567, %v2891
        %2893 = vdwg.mxu0
        %2894 = vmatprep.subr.bf16.mxu0 %v2394
        %2895 = vmatpush1.bf16.msra.mxu0 %v2393
        %2896 = vmatprep.subr.bf16.mxu0 %v2458
        %2897 = vmatpush1.bf16.msra.mxu0 %v2457
        %2898 = vmatprep.subr.bf16.mxu0 0
        %2899 = vmatpush1.bf16.msra.mxu0 0
        %2900 = vmatprep.subr.bf16.mxu0 0
        %2901 = vmatpush1.bf16.msra.mxu0 0
        %2902 = vmatprep.subr.bf16.mxu0 0
        %2903 = vmatpush1.bf16.msra.mxu0 0
        %2904 = vmatprep.subr.bf16.mxu0 0
        %2905 = vmatpush1.bf16.msra.mxu0 0
        %2906 = vmatprep.subr.bf16.mxu0 0
        %2907 = vmatpush1.bf16.msra.mxu0 0
        %2908 = vmatprep.subr.bf16.mxu0 0
        %2909 = vmatpush1.bf16.msra.mxu0 0
        %2910 = vmatprep.subr.bf16.mxu0 0
        %2911 = vmatpush1.bf16.msra.mxu0 0
        %2912 = vmatprep.subr.bf16.mxu0 0
        %2913 = vmatpush1.bf16.msra.mxu0 0
        %2914 = vmatprep.subr.bf16.mxu0 0
        %2915 = vmatpush1.bf16.msra.mxu0 0
        %2916 = vmatprep.subr.bf16.mxu0 0
        %2917 = vmatpush1.bf16.msra.mxu0 0
        %2918 = vmatprep.subr.bf16.mxu0 0
        %2919 = vmatpush1.bf16.msra.mxu0 0
        %2920 = vmatprep.subr.bf16.mxu0 0
        %2921 = vmatpush1.bf16.msra.mxu0 0
        %2922 = vmatprep.subr.bf16.mxu0 0
        %2923 = vmatpush1.bf16.msra.mxu0 0
        %2924 = vmatprep.subr.bf16.mxu0 0
        %2925 = vmatpush1.bf16.msra.mxu0 0
        %2926 = vmatprep.mubr.bf16.mxu0 0
        %2927 = vmatmul.mubr.bf16.gmra.mrb[0].mxu0 %v2591
        %v2928 = vpop.f32.mrb[0].mxu0
        %v2929 = vadd.f32 %v2532, %v2928
        %v2930 = vpop.f32.mrb[0].mxu0
        %v2931 = vadd.f32 %v2532, %v2930
        %v2932 = vpop.f32.mrb[0].mxu0
        %v2933 = vadd.f32 %v2537, %v2932
        %v2934 = vpop.f32.mrb[0].mxu0
        %v2935 = vadd.f32 %v2537, %v2934
        %2936 = vmatprep.mubr.bf16.mxu0 0
        %2937 = vmatmul.mubr.bf16.gmra.mrb[0].mxu0 %v2594
        %v2938 = vpop.f32.mrb[0].mxu0
        %v2939 = vadd.f32 %v2542, %v2938
        %v2940 = vpop.f32.mrb[0].mxu0
        %v2941 = vadd.f32 %v2542, %v2940
        %v2942 = vpop.f32.mrb[0].mxu0
        %v2943 = vadd.f32 %v2547, %v2942
        %v2944 = vpop.f32.mrb[0].mxu0
        %v2945 = vadd.f32 %v2547, %v2944
        %2946 = vmatprep.mubr.bf16.mxu0 0
        %2947 = vmatmul.mubr.bf16.gmra.mrb[0].mxu0 %v2597
        %v2948 = vpop.f32.mrb[0].mxu0
        %v2949 = vadd.f32 %v2552, %v2948
        %v2950 = vpop.f32.mrb[0].mxu0
        %v2951 = vadd.f32 %v2552, %v2950
        %v2952 = vpop.f32.mrb[0].mxu0
        %v2953 = vadd.f32 %v2557, %v2952
        %v2954 = vpop.f32.mrb[0].mxu0
        %v2955 = vadd.f32 %v2557, %v2954
        %2956 = vmatprep.mubr.bf16.mxu0 0
        %2957 = vmatmul.mubr.bf16.gmra.mrb[0].mxu0 %v2600
        %v2958 = vpop.f32.mrb[0].mxu0
        %v2959 = vadd.f32 %v2562, %v2958
        %v2960 = vpop.f32.mrb[0].mxu0
        %v2961 = vadd.f32 %v2562, %v2960
        %v2962 = vpop.f32.mrb[0].mxu0
        %v2963 = vadd.f32 %v2567, %v2962
        %v2964 = vpop.f32.mrb[0].mxu0
        %v2965 = vadd.f32 %v2567, %v2964
        %2966 = vdwg.mxu0
        %2967 = vmatprep.subr.bf16.mxu0 %v2396
        %2968 = vmatpush1.bf16.msra.mxu0 %v2395
        %2969 = vmatprep.subr.bf16.mxu0 %v2460
        %2970 = vmatpush1.bf16.msra.mxu0 %v2459
        %2971 = vmatprep.subr.bf16.mxu0 0
        %2972 = vmatpush1.bf16.msra.mxu0 0
        %2973 = vmatprep.subr.bf16.mxu0 0
        %2974 = vmatpush1.bf16.msra.mxu0 0
        %2975 = vmatprep.subr.bf16.mxu0 0
        %2976 = vmatpush1.bf16.msra.mxu0 0
        %2977 = vmatprep.subr.bf16.mxu0 0
        %2978 = vmatpush1.bf16.msra.mxu0 0
        %2979 = vmatprep.subr.bf16.mxu0 0
        %2980 = vmatpush1.bf16.msra.mxu0 0
        %2981 = vmatprep.subr.bf16.mxu0 0
        %2982 = vmatpush1.bf16.msra.mxu0 0
        %2983 = vmatprep.subr.bf16.mxu0 0
        %2984 = vmatpush1.bf16.msra.mxu0 0
        %2985 = vmatprep.subr.bf16.mxu0 0
        %2986 = vmatpush1.bf16.msra.mxu0 0
        %2987 = vmatprep.subr.bf16.mxu0 0
        %2988 = vmatpush1.bf16.msra.mxu0 0
        %2989 = vmatprep.subr.bf16.mxu0 0
        %2990 = vmatpush1.bf16.msra.mxu0 0
        %2991 = vmatprep.subr.bf16.mxu0 0
        %2992 = vmatpush1.bf16.msra.mxu0 0
        %2993 = vmatprep.subr.bf16.mxu0 0
        %2994 = vmatpush1.bf16.msra.mxu0 0
        %2995 = vmatprep.subr.bf16.mxu0 0
        %2996 = vmatpush1.bf16.msra.mxu0 0
        %2997 = vmatprep.subr.bf16.mxu0 0
        %2998 = vmatpush1.bf16.msra.mxu0 0
        %2999 = vmatprep.mubr.bf16.mxu0 0
        %3000 = vmatmul.mubr.bf16.gmra.mrb[0].mxu0 %v2591
        %v3001 = vpop.f32.mrb[0].mxu0
        %v3002 = vadd.f32 %v2532, %v3001
        %v3003 = vpop.f32.mrb[0].mxu0
        %v3004 = vadd.f32 %v2532, %v3003
        %v3005 = vpop.f32.mrb[0].mxu0
        %v3006 = vadd.f32 %v2537, %v3005
        %v3007 = vpop.f32.mrb[0].mxu0
        %v3008 = vadd.f32 %v2537, %v3007
        %3009 = vmatprep.mubr.bf16.mxu0 0
        %3010 = vmatmul.mubr.bf16.gmra.mrb[0].mxu0 %v2594
        %v3011 = vpop.f32.mrb[0].mxu0
        %v3012 = vadd.f32 %v2542, %v3011
        %v3013 = vpop.f32.mrb[0].mxu0
        %v3014 = vadd.f32 %v2542, %v3013
        %v3015 = vpop.f32.mrb[0].mxu0
        %v3016 = vadd.f32 %v2547, %v3015
        %v3017 = vpop.f32.mrb[0].mxu0
        %v3018 = vadd.f32 %v2547, %v3017
        %3019 = vmatprep.mubr.bf16.mxu0 0
        %3020 = vmatmul.mubr.bf16.gmra.mrb[0].mxu0 %v2597
        %v3021 = vpop.f32.mrb[0].mxu0
        %v3022 = vadd.f32 %v2552, %v3021
        %v3023 = vpop.f32.mrb[0].mxu0
        %v3024 = vadd.f32 %v2552, %v3023
        %v3025 = vpop.f32.mrb[0].mxu0
        %v3026 = vadd.f32 %v2557, %v3025
        %v3027 = vpop.f32.mrb[0].mxu0
        %v3028 = vadd.f32 %v2557, %v3027
        %3029 = vmatprep.mubr.bf16.mxu0 0
        %3030 = vmatmul.mubr.bf16.gmra.mrb[0].mxu0 %v2600
        %v3031 = vpop.f32.mrb[0].mxu0
        %v3032 = vadd.f32 %v2562, %v3031
        %v3033 = vpop.f32.mrb[0].mxu0
        %v3034 = vadd.f32 %v2562, %v3033
        %v3035 = vpop.f32.mrb[0].mxu0
        %v3036 = vadd.f32 %v2567, %v3035
        %v3037 = vpop.f32.mrb[0].mxu0
        %v3038 = vadd.f32 %v2567, %v3037
        %3039 = vdwg.mxu0
        %3040 = vmatprep.subr.bf16.mxu0 %v2398
        %3041 = vmatpush1.bf16.msra.mxu0 %v2397
        %3042 = vmatprep.subr.bf16.mxu0 %v2462
        %3043 = vmatpush1.bf16.msra.mxu0 %v2461
        %3044 = vmatprep.subr.bf16.mxu0 0
        %3045 = vmatpush1.bf16.msra.mxu0 0
        %3046 = vmatprep.subr.bf16.mxu0 0
        %3047 = vmatpush1.bf16.msra.mxu0 0
        %3048 = vmatprep.subr.bf16.mxu0 0
        %3049 = vmatpush1.bf16.msra.mxu0 0
        %3050 = vmatprep.subr.bf16.mxu0 0
        %3051 = vmatpush1.bf16.msra.mxu0 0
        %3052 = vmatprep.subr.bf16.mxu0 0
        %3053 = vmatpush1.bf16.msra.mxu0 0
        %3054 = vmatprep.subr.bf16.mxu0 0
        %3055 = vmatpush1.bf16.msra.mxu0 0
        %3056 = vmatprep.subr.bf16.mxu0 0
        %3057 = vmatpush1.bf16.msra.mxu0 0
        %3058 = vmatprep.subr.bf16.mxu0 0
        %3059 = vmatpush1.bf16.msra.mxu0 0
        %3060 = vmatprep.subr.bf16.mxu0 0
        %3061 = vmatpush1.bf16.msra.mxu0 0
        %3062 = vmatprep.subr.bf16.mxu0 0
        %3063 = vmatpush1.bf16.msra.mxu0 0
        %3064 = vmatprep.subr.bf16.mxu0 0
        %3065 = vmatpush1.bf16.msra.mxu0 0
        %3066 = vmatprep.subr.bf16.mxu0 0
        %3067 = vmatpush1.bf16.msra.mxu0 0
        %3068 = vmatprep.subr.bf16.mxu0 0
        %3069 = vmatpush1.bf16.msra.mxu0 0
        %3070 = vmatprep.subr.bf16.mxu0 0
        %3071 = vmatpush1.bf16.msra.mxu0 0
        %3072 = vmatprep.mubr.bf16.mxu0 0
        %3073 = vmatmul.mubr.bf16.gmra.mrb[0].mxu0 %v2591
        %v3074 = vpop.f32.mrb[0].mxu0
        %v3075 = vadd.f32 %v2532, %v3074
        %v3076 = vpop.f32.mrb[0].mxu0
        %v3077 = vadd.f32 %v2532, %v3076
        %v3078 = vpop.f32.mrb[0].mxu0
        %v3079 = vadd.f32 %v2537, %v3078
        %v3080 = vpop.f32.mrb[0].mxu0
        %v3081 = vadd.f32 %v2537, %v3080
        %3082 = vmatprep.mubr.bf16.mxu0 0
        %3083 = vmatmul.mubr.bf16.gmra.mrb[0].mxu0 %v2594
        %v3084 = vpop.f32.mrb[0].mxu0
        %v3085 = vadd.f32 %v2542, %v3084
        %v3086 = vpop.f32.mrb[0].mxu0
        %v3087 = vadd.f32 %v2542, %v3086
        %v3088 = vpop.f32.mrb[0].mxu0
        %v3089 = vadd.f32 %v2547, %v3088
        %v3090 = vpop.f32.mrb[0].mxu0
        %v3091 = vadd.f32 %v2547, %v3090
        %3092 = vmatprep.mubr.bf16.mxu0 0
        %3093 = vmatmul.mubr.bf16.gmra.mrb[0].mxu0 %v2597
        %v3094 = vpop.f32.mrb[0].mxu0
        %v3095 = vadd.f32 %v2552, %v3094
        %v3096 = vpop.f32.mrb[0].mxu0
        %v3097 = vadd.f32 %v2552, %v3096
        %v3098 = vpop.f32.mrb[0].mxu0
        %v3099 = vadd.f32 %v2557, %v3098
        %v3100 = vpop.f32.mrb[0].mxu0
        %v3101 = vadd.f32 %v2557, %v3100
        %3102 = vmatprep.mubr.bf16.mxu0 0
        %3103 = vmatmul.mubr.bf16.gmra.mrb[0].mxu0 %v2600
        %v3104 = vpop.f32.mrb[0].mxu0
        %v3105 = vadd.f32 %v2562, %v3104
        %v3106 = vpop.f32.mrb[0].mxu0
        %v3107 = vadd.f32 %v2562, %v3106
        %v3108 = vpop.f32.mrb[0].mxu0
        %v3109 = vadd.f32 %v2567, %v3108
        %v3110 = vpop.f32.mrb[0].mxu0
        %v3111 = vadd.f32 %v2567, %v3110
        %3112 = vdwg.mxu0
        %3113 = vmatprep.subr.bf16.mxu0 %v2400
        %3114 = vmatpush1.bf16.msra.mxu0 %v2399
        %3115 = vmatprep.subr.bf16.mxu0 %v2464
        %3116 = vmatpush1.bf16.msra.mxu0 %v2463
        %3117 = vmatprep.subr.bf16.mxu0 0
        %3118 = vmatpush1.bf16.msra.mxu0 0
        %3119 = vmatprep.subr.bf16.mxu0 0
        %3120 = vmatpush1.bf16.msra.mxu0 0
        %3121 = vmatprep.subr.bf16.mxu0 0
        %3122 = vmatpush1.bf16.msra.mxu0 0
        %3123 = vmatprep.subr.bf16.mxu0 0
        %3124 = vmatpush1.bf16.msra.mxu0 0
        %3125 = vmatprep.subr.bf16.mxu0 0
        %3126 = vmatpush1.bf16.msra.mxu0 0
        %3127 = vmatprep.subr.bf16.mxu0 0
        %3128 = vmatpush1.bf16.msra.mxu0 0
        %3129 = vmatprep.subr.bf16.mxu0 0
        %3130 = vmatpush1.bf16.msra.mxu0 0
        %3131 = vmatprep.subr.bf16.mxu0 0
        %3132 = vmatpush1.bf16.msra.mxu0 0
        %3133 = vmatprep.subr.bf16.mxu0 0
        %3134 = vmatpush1.bf16.msra.mxu0 0
        %3135 = vmatprep.subr.bf16.mxu0 0
        %3136 = vmatpush1.bf16.msra.mxu0 0
        %3137 = vmatprep.subr.bf16.mxu0 0
        %3138 = vmatpush1.bf16.msra.mxu0 0
        %3139 = vmatprep.subr.bf16.mxu0 0
        %3140 = vmatpush1.bf16.msra.mxu0 0
        %3141 = vmatprep.subr.bf16.mxu0 0
        %3142 = vmatpush1.bf16.msra.mxu0 0
        %3143 = vmatprep.subr.bf16.mxu0 0
        %3144 = vmatpush1.bf16.msra.mxu0 0
        %3145 = vmatprep.mubr.bf16.mxu0 0
        %3146 = vmatmul.mubr.bf16.gmra.mrb[0].mxu0 %v2591
        %v3147 = vpop.f32.mrb[0].mxu0
        %v3148 = vadd.f32 %v2532, %v3147
        %v3149 = vpop.f32.mrb[0].mxu0
        %v3150 = vadd.f32 %v2532, %v3149
        %v3151 = vpop.f32.mrb[0].mxu0
        %v3152 = vadd.f32 %v2537, %v3151
        %v3153 = vpop.f32.mrb[0].mxu0
        %v3154 = vadd.f32 %v2537, %v3153
        %3155 = vmatprep.mubr.bf16.mxu0 0
        %3156 = vmatmul.mubr.bf16.gmra.mrb[0].mxu0 %v2594
        %v3157 = vpop.f32.mrb[0].mxu0
        %v3158 = vadd.f32 %v2542, %v3157
        %v3159 = vpop.f32.mrb[0].mxu0
        %v3160 = vadd.f32 %v2542, %v3159
        %v3161 = vpop.f32.mrb[0].mxu0
        %v3162 = vadd.f32 %v2547, %v3161
        %v3163 = vpop.f32.mrb[0].mxu0
        %v3164 = vadd.f32 %v2547, %v3163
        %3165 = vmatprep.mubr.bf16.mxu0 0
        %3166 = vmatmul.mubr.bf16.gmra.mrb[0].mxu0 %v2597
        %v3167 = vpop.f32.mrb[0].mxu0
        %v3168 = vadd.f32 %v2552, %v3167
        %v3169 = vpop.f32.mrb[0].mxu0
        %v3170 = vadd.f32 %v2552, %v3169
        %v3171 = vpop.f32.mrb[0].mxu0
        %v3172 = vadd.f32 %v2557, %v3171
        %v3173 = vpop.f32.mrb[0].mxu0
        %v3174 = vadd.f32 %v2557, %v3173
        %3175 = vmatprep.mubr.bf16.mxu0 0
        %3176 = vmatmul.mubr.bf16.gmra.mrb[0].mxu0 %v2600
        %v3177 = vpop.f32.mrb[0].mxu0
        %v3178 = vadd.f32 %v2562, %v3177
        %v3179 = vpop.f32.mrb[0].mxu0
        %v3180 = vadd.f32 %v2562, %v3179
        %v3181 = vpop.f32.mrb[0].mxu0
        %v3182 = vadd.f32 %v2567, %v3181
        %v3183 = vpop.f32.mrb[0].mxu0
        %v3184 = vadd.f32 %v2567, %v3183
        %3185 = vdwg.mxu0
        %3186 = vmatprep.subr.bf16.mxu0 %v2402
        %3187 = vmatpush1.bf16.msra.mxu0 %v2401
        %3188 = vmatprep.subr.bf16.mxu0 %v2466
        %3189 = vmatpush1.bf16.msra.mxu0 %v2465
        %3190 = vmatprep.subr.bf16.mxu0 0
        %3191 = vmatpush1.bf16.msra.mxu0 0
        %3192 = vmatprep.subr.bf16.mxu0 0
        %3193 = vmatpush1.bf16.msra.mxu0 0
        %3194 = vmatprep.subr.bf16.mxu0 0
        %3195 = vmatpush1.bf16.msra.mxu0 0
        %3196 = vmatprep.subr.bf16.mxu0 0
        %3197 = vmatpush1.bf16.msra.mxu0 0
        %3198 = vmatprep.subr.bf16.mxu0 0
        %3199 = vmatpush1.bf16.msra.mxu0 0
        %3200 = vmatprep.subr.bf16.mxu0 0
        %3201 = vmatpush1.bf16.msra.mxu0 0
        %3202 = vmatprep.subr.bf16.mxu0 0
        %3203 = vmatpush1.bf16.msra.mxu0 0
        %3204 = vmatprep.subr.bf16.mxu0 0
        %3205 = vmatpush1.bf16.msra.mxu0 0
        %3206 = vmatprep.subr.bf16.mxu0 0
        %3207 = vmatpush1.bf16.msra.mxu0 0
        %3208 = vmatprep.subr.bf16.mxu0 0
        %3209 = vmatpush1.bf16.msra.mxu0 0
        %3210 = vmatprep.subr.bf16.mxu0 0
        %3211 = vmatpush1.bf16.msra.mxu0 0
        %3212 = vmatprep.subr.bf16.mxu0 0
        %3213 = vmatpush1.bf16.msra.mxu0 0
        %3214 = vmatprep.subr.bf16.mxu0 0
        %3215 = vmatpush1.bf16.msra.mxu0 0
        %3216 = vmatprep.subr.bf16.mxu0 0
        %3217 = vmatpush1.bf16.msra.mxu0 0
        %3218 = vmatprep.mubr.bf16.mxu0 0
        %3219 = vmatmul.mubr.bf16.gmra.mrb[0].mxu0 %v2591
        %v3220 = vpop.f32.mrb[0].mxu0
        %v3221 = vadd.f32 %v2532, %v3220
        %v3222 = vpop.f32.mrb[0].mxu0
        %v3223 = vadd.f32 %v2532, %v3222
        %v3224 = vpop.f32.mrb[0].mxu0
        %v3225 = vadd.f32 %v2537, %v3224
        %v3226 = vpop.f32.mrb[0].mxu0
        %v3227 = vadd.f32 %v2537, %v3226
        %3228 = vmatprep.mubr.bf16.mxu0 0
        %3229 = vmatmul.mubr.bf16.gmra.mrb[0].mxu0 %v2594
        %v3230 = vpop.f32.mrb[0].mxu0
        %v3231 = vadd.f32 %v2542, %v3230
        %v3232 = vpop.f32.mrb[0].mxu0
        %v3233 = vadd.f32 %v2542, %v3232
        %v3234 = vpop.f32.mrb[0].mxu0
        %v3235 = vadd.f32 %v2547, %v3234
        %v3236 = vpop.f32.mrb[0].mxu0
        %v3237 = vadd.f32 %v2547, %v3236
        %3238 = vmatprep.mubr.bf16.mxu0 0
        %3239 = vmatmul.mubr.bf16.gmra.mrb[0].mxu0 %v2597
        %v3240 = vpop.f32.mrb[0].mxu0
        %v3241 = vadd.f32 %v2552, %v3240
        %v3242 = vpop.f32.mrb[0].mxu0
        %v3243 = vadd.f32 %v2552, %v3242
        %v3244 = vpop.f32.mrb[0].mxu0
        %v3245 = vadd.f32 %v2557, %v3244
        %v3246 = vpop.f32.mrb[0].mxu0
        %v3247 = vadd.f32 %v2557, %v3246
        %3248 = vmatprep.mubr.bf16.mxu0 0
        %3249 = vmatmul.mubr.bf16.gmra.mrb[0].mxu0 %v2600
        %v3250 = vpop.f32.mrb[0].mxu0
        %v3251 = vadd.f32 %v2562, %v3250
        %v3252 = vpop.f32.mrb[0].mxu0
        %v3253 = vadd.f32 %v2562, %v3252
        %v3254 = vpop.f32.mrb[0].mxu0
        %v3255 = vadd.f32 %v2567, %v3254
        %v3256 = vpop.f32.mrb[0].mxu0
        %v3257 = vadd.f32 %v2567, %v3256
        %3258 = vdwg.mxu0
        %3259 = vmatprep.subr.bf16.mxu0 %v2404
        %3260 = vmatpush1.bf16.msra.mxu0 %v2403
        %3261 = vmatprep.subr.bf16.mxu0 %v2468
        %3262 = vmatpush1.bf16.msra.mxu0 %v2467
        %3263 = vmatprep.subr.bf16.mxu0 0
        %3264 = vmatpush1.bf16.msra.mxu0 0
        %3265 = vmatprep.subr.bf16.mxu0 0
        %3266 = vmatpush1.bf16.msra.mxu0 0
        %3267 = vmatprep.subr.bf16.mxu0 0
        %3268 = vmatpush1.bf16.msra.mxu0 0
        %3269 = vmatprep.subr.bf16.mxu0 0
        %3270 = vmatpush1.bf16.msra.mxu0 0
        %3271 = vmatprep.subr.bf16.mxu0 0
        %3272 = vmatpush1.bf16.msra.mxu0 0
        %3273 = vmatprep.subr.bf16.mxu0 0
        %3274 = vmatpush1.bf16.msra.mxu0 0
        %3275 = vmatprep.subr.bf16.mxu0 0
        %3276 = vmatpush1.bf16.msra.mxu0 0
        %3277 = vmatprep.subr.bf16.mxu0 0
        %3278 = vmatpush1.bf16.msra.mxu0 0
        %3279 = vmatprep.subr.bf16.mxu0 0
        %3280 = vmatpush1.bf16.msra.mxu0 0
        %3281 = vmatprep.subr.bf16.mxu0 0
        %3282 = vmatpush1.bf16.msra.mxu0 0
        %3283 = vmatprep.subr.bf16.mxu0 0
        %3284 = vmatpush1.bf16.msra.mxu0 0
        %3285 = vmatprep.subr.bf16.mxu0 0
        %3286 = vmatpush1.bf16.msra.mxu0 0
        %3287 = vmatprep.subr.bf16.mxu0 0
        %3288 = vmatpush1.bf16.msra.mxu0 0
        %3289 = vmatprep.subr.bf16.mxu0 0
        %3290 = vmatpush1.bf16.msra.mxu0 0
        %3291 = vmatprep.mubr.bf16.mxu0 0
        %3292 = vmatmul.mubr.bf16.gmra.mrb[0].mxu0 %v2591
        %v3293 = vpop.f32.mrb[0].mxu0
        %v3294 = vadd.f32 %v2532, %v3293
        %v3295 = vpop.f32.mrb[0].mxu0
        %v3296 = vadd.f32 %v2532, %v3295
        %v3297 = vpop.f32.mrb[0].mxu0
        %v3298 = vadd.f32 %v2537, %v3297
        %v3299 = vpop.f32.mrb[0].mxu0
        %v3300 = vadd.f32 %v2537, %v3299
        %3301 = vmatprep.mubr.bf16.mxu0 0
        %3302 = vmatmul.mubr.bf16.gmra.mrb[0].mxu0 %v2594
        %v3303 = vpop.f32.mrb[0].mxu0
        %v3304 = vadd.f32 %v2542, %v3303
        %v3305 = vpop.f32.mrb[0].mxu0
        %v3306 = vadd.f32 %v2542, %v3305
        %v3307 = vpop.f32.mrb[0].mxu0
        %v3308 = vadd.f32 %v2547, %v3307
        %v3309 = vpop.f32.mrb[0].mxu0
        %v3310 = vadd.f32 %v2547, %v3309
        %3311 = vmatprep.mubr.bf16.mxu0 0
        %3312 = vmatmul.mubr.bf16.gmra.mrb[0].mxu0 %v2597
        %v3313 = vpop.f32.mrb[0].mxu0
        %v3314 = vadd.f32 %v2552, %v3313
        %v3315 = vpop.f32.mrb[0].mxu0
        %v3316 = vadd.f32 %v2552, %v3315
        %v3317 = vpop.f32.mrb[0].mxu0
        %v3318 = vadd.f32 %v2557, %v3317
        %v3319 = vpop.f32.mrb[0].mxu0
        %v3320 = vadd.f32 %v2557, %v3319
        %3321 = vmatprep.mubr.bf16.mxu0 0
        %3322 = vmatmul.mubr.bf16.gmra.mrb[0].mxu0 %v2600
        %v3323 = vpop.f32.mrb[0].mxu0
        %v3324 = vadd.f32 %v2562, %v3323
        %v3325 = vpop.f32.mrb[0].mxu0
        %v3326 = vadd.f32 %v2562, %v3325
        %v3327 = vpop.f32.mrb[0].mxu0
        %v3328 = vadd.f32 %v2567, %v3327
        %v3329 = vpop.f32.mrb[0].mxu0
        %v3330 = vadd.f32 %v2567, %v3329
        %3331 = vdwg.mxu0
        %3332 = vmatprep.subr.bf16.mxu0 %v2406
        %3333 = vmatpush1.bf16.msra.mxu0 %v2405
        %3334 = vmatprep.subr.bf16.mxu0 %v2470
        %3335 = vmatpush1.bf16.msra.mxu0 %v2469
        %3336 = vmatprep.subr.bf16.mxu0 0
        %3337 = vmatpush1.bf16.msra.mxu0 0
        %3338 = vmatprep.subr.bf16.mxu0 0
        %3339 = vmatpush1.bf16.msra.mxu0 0
        %3340 = vmatprep.subr.bf16.mxu0 0
        %3341 = vmatpush1.bf16.msra.mxu0 0
        %3342 = vmatprep.subr.bf16.mxu0 0
        %3343 = vmatpush1.bf16.msra.mxu0 0
        %3344 = vmatprep.subr.bf16.mxu0 0
        %3345 = vmatpush1.bf16.msra.mxu0 0
        %3346 = vmatprep.subr.bf16.mxu0 0
        %3347 = vmatpush1.bf16.msra.mxu0 0
        %3348 = vmatprep.subr.bf16.mxu0 0
        %3349 = vmatpush1.bf16.msra.mxu0 0
        %3350 = vmatprep.subr.bf16.mxu0 0
        %3351 = vmatpush1.bf16.msra.mxu0 0
        %3352 = vmatprep.subr.bf16.mxu0 0
        %3353 = vmatpush1.bf16.msra.mxu0 0
        %3354 = vmatprep.subr.bf16.mxu0 0
        %3355 = vmatpush1.bf16.msra.mxu0 0
        %3356 = vmatprep.subr.bf16.mxu0 0
        %3357 = vmatpush1.bf16.msra.mxu0 0
        %3358 = vmatprep.subr.bf16.mxu0 0
        %3359 = vmatpush1.bf16.msra.mxu0 0
        %3360 = vmatprep.subr.bf16.mxu0 0
        %3361 = vmatpush1.bf16.msra.mxu0 0
        %3362 = vmatprep.subr.bf16.mxu0 0
        %3363 = vmatpush1.bf16.msra.mxu0 0
        %3364 = vmatprep.mubr.bf16.mxu0 0
        %3365 = vmatmul.mubr.bf16.gmra.mrb[0].mxu0 %v2591
        %v3366 = vpop.f32.mrb[0].mxu0
        %v3367 = vadd.f32 %v2532, %v3366
        %v3368 = vpop.f32.mrb[0].mxu0
        %v3369 = vadd.f32 %v2532, %v3368
        %v3370 = vpop.f32.mrb[0].mxu0
        %v3371 = vadd.f32 %v2537, %v3370
        %v3372 = vpop.f32.mrb[0].mxu0
        %v3373 = vadd.f32 %v2537, %v3372
        %3374 = vmatprep.mubr.bf16.mxu0 0
        %3375 = vmatmul.mubr.bf16.gmra.mrb[0].mxu0 %v2594
        %v3376 = vpop.f32.mrb[0].mxu0
        %v3377 = vadd.f32 %v2542, %v3376
        %v3378 = vpop.f32.mrb[0].mxu0
        %v3379 = vadd.f32 %v2542, %v3378
        %v3380 = vpop.f32.mrb[0].mxu0
        %v3381 = vadd.f32 %v2547, %v3380
        %v3382 = vpop.f32.mrb[0].mxu0
        %v3383 = vadd.f32 %v2547, %v3382
        %3384 = vmatprep.mubr.bf16.mxu0 0
        %3385 = vmatmul.mubr.bf16.gmra.mrb[0].mxu0 %v2597
        %v3386 = vpop.f32.mrb[0].mxu0
        %v3387 = vadd.f32 %v2552, %v3386
        %v3388 = vpop.f32.mrb[0].mxu0
        %v3389 = vadd.f32 %v2552, %v3388
        %v3390 = vpop.f32.mrb[0].mxu0
        %v3391 = vadd.f32 %v2557, %v3390
        %v3392 = vpop.f32.mrb[0].mxu0
        %v3393 = vadd.f32 %v2557, %v3392
        %3394 = vmatprep.mubr.bf16.mxu0 0
        %3395 = vmatmul.mubr.bf16.gmra.mrb[0].mxu0 %v2600
        %v3396 = vpop.f32.mrb[0].mxu0
        %v3397 = vadd.f32 %v2562, %v3396
        %v3398 = vpop.f32.mrb[0].mxu0
        %v3399 = vadd.f32 %v2562, %v3398
        %v3400 = vpop.f32.mrb[0].mxu0
        %v3401 = vadd.f32 %v2567, %v3400
        %v3402 = vpop.f32.mrb[0].mxu0
        %v3403 = vadd.f32 %v2567, %v3402
        %3404 = vdwg.mxu0
        %3405 = vmatprep.subr.bf16.mxu0 %v2408
        %3406 = vmatpush1.bf16.msra.mxu0 %v2407
        %3407 = vmatprep.subr.bf16.mxu0 %v2472
        %3408 = vmatpush1.bf16.msra.mxu0 %v2471
        %3409 = vmatprep.subr.bf16.mxu0 0
        %3410 = vmatpush1.bf16.msra.mxu0 0
        %3411 = vmatprep.subr.bf16.mxu0 0
        %3412 = vmatpush1.bf16.msra.mxu0 0
        %3413 = vmatprep.subr.bf16.mxu0 0
        %3414 = vmatpush1.bf16.msra.mxu0 0
        %3415 = vmatprep.subr.bf16.mxu0 0
        %3416 = vmatpush1.bf16.msra.mxu0 0
        %3417 = vmatprep.subr.bf16.mxu0 0
        %3418 = vmatpush1.bf16.msra.mxu0 0
        %3419 = vmatprep.subr.bf16.mxu0 0
        %3420 = vmatpush1.bf16.msra.mxu0 0
        %3421 = vmatprep.subr.bf16.mxu0 0
        %3422 = vmatpush1.bf16.msra.mxu0 0
        %3423 = vmatprep.subr.bf16.mxu0 0
        %3424 = vmatpush1.bf16.msra.mxu0 0
        %3425 = vmatprep.subr.bf16.mxu0 0
        %3426 = vmatpush1.bf16.msra.mxu0 0
        %3427 = vmatprep.subr.bf16.mxu0 0
        %3428 = vmatpush1.bf16.msra.mxu0 0
        %3429 = vmatprep.subr.bf16.mxu0 0
        %3430 = vmatpush1.bf16.msra.mxu0 0
        %3431 = vmatprep.subr.bf16.mxu0 0
        %3432 = vmatpush1.bf16.msra.mxu0 0
        %3433 = vmatprep.subr.bf16.mxu0 0
        %3434 = vmatpush1.bf16.msra.mxu0 0
        %3435 = vmatprep.subr.bf16.mxu0 0
        %3436 = vmatpush1.bf16.msra.mxu0 0
        %3437 = vmatprep.mubr.bf16.mxu0 0
        %3438 = vmatmul.mubr.bf16.gmra.mrb[0].mxu0 %v2591
        %v3439 = vpop.f32.mrb[0].mxu0
        %v3440 = vadd.f32 %v2532, %v3439
        %v3441 = vpop.f32.mrb[0].mxu0
        %v3442 = vadd.f32 %v2532, %v3441
        %v3443 = vpop.f32.mrb[0].mxu0
        %v3444 = vadd.f32 %v2537, %v3443
        %v3445 = vpop.f32.mrb[0].mxu0
        %v3446 = vadd.f32 %v2537, %v3445
        %3447 = vmatprep.mubr.bf16.mxu0 0
        %3448 = vmatmul.mubr.bf16.gmra.mrb[0].mxu0 %v2594
        %v3449 = vpop.f32.mrb[0].mxu0
        %v3450 = vadd.f32 %v2542, %v3449
        %v3451 = vpop.f32.mrb[0].mxu0
        %v3452 = vadd.f32 %v2542, %v3451
        %v3453 = vpop.f32.mrb[0].mxu0
        %v3454 = vadd.f32 %v2547, %v3453
        %v3455 = vpop.f32.mrb[0].mxu0
        %v3456 = vadd.f32 %v2547, %v3455
        %3457 = vmatprep.mubr.bf16.mxu0 0
        %3458 = vmatmul.mubr.bf16.gmra.mrb[0].mxu0 %v2597
        %v3459 = vpop.f32.mrb[0].mxu0
        %v3460 = vadd.f32 %v2552, %v3459
        %v3461 = vpop.f32.mrb[0].mxu0
        %v3462 = vadd.f32 %v2552, %v3461
        %v3463 = vpop.f32.mrb[0].mxu0
        %v3464 = vadd.f32 %v2557, %v3463
        %v3465 = vpop.f32.mrb[0].mxu0
        %v3466 = vadd.f32 %v2557, %v3465
        %3467 = vmatprep.mubr.bf16.mxu0 0
        %3468 = vmatmul.mubr.bf16.gmra.mrb[0].mxu0 %v2600
        %v3469 = vpop.f32.mrb[0].mxu0
        %v3470 = vadd.f32 %v2562, %v3469
        %v3471 = vpop.f32.mrb[0].mxu0
        %v3472 = vadd.f32 %v2562, %v3471
        %v3473 = vpop.f32.mrb[0].mxu0
        %v3474 = vadd.f32 %v2567, %v3473
        %v3475 = vpop.f32.mrb[0].mxu0
        %v3476 = vadd.f32 %v2567, %v3475
        %3477 = vdwg.mxu0
        %3478 = vmatprep.subr.bf16.mxu0 %v2410
        %3479 = vmatpush1.bf16.msra.mxu0 %v2409
        %3480 = vmatprep.subr.bf16.mxu0 %v2474
        %3481 = vmatpush1.bf16.msra.mxu0 %v2473
        %3482 = vmatprep.subr.bf16.mxu0 0
        %3483 = vmatpush1.bf16.msra.mxu0 0
        %3484 = vmatprep.subr.bf16.mxu0 0
        %3485 = vmatpush1.bf16.msra.mxu0 0
        %3486 = vmatprep.subr.bf16.mxu0 0
        %3487 = vmatpush1.bf16.msra.mxu0 0
        %3488 = vmatprep.subr.bf16.mxu0 0
        %3489 = vmatpush1.bf16.msra.mxu0 0
        %3490 = vmatprep.subr.bf16.mxu0 0
        %3491 = vmatpush1.bf16.msra.mxu0 0
        %3492 = vmatprep.subr.bf16.mxu0 0
        %3493 = vmatpush1.bf16.msra.mxu0 0
        %3494 = vmatprep.subr.bf16.mxu0 0
        %3495 = vmatpush1.bf16.msra.mxu0 0
        %3496 = vmatprep.subr.bf16.mxu0 0
        %3497 = vmatpush1.bf16.msra.mxu0 0
        %3498 = vmatprep.subr.bf16.mxu0 0
        %3499 = vmatpush1.bf16.msra.mxu0 0
        %3500 = vmatprep.subr.bf16.mxu0 0
        %3501 = vmatpush1.bf16.msra.mxu0 0
        %3502 = vmatprep.subr.bf16.mxu0 0
        %3503 = vmatpush1.bf16.msra.mxu0 0
        %3504 = vmatprep.subr.bf16.mxu0 0
        %3505 = vmatpush1.bf16.msra.mxu0 0
        %3506 = vmatprep.subr.bf16.mxu0 0
        %3507 = vmatpush1.bf16.msra.mxu0 0
        %3508 = vmatprep.subr.bf16.mxu0 0
        %3509 = vmatpush1.bf16.msra.mxu0 0
        %3510 = vmatprep.mubr.bf16.mxu0 0
        %3511 = vmatmul.mubr.bf16.gmra.mrb[0].mxu0 %v2591
        %v3512 = vpop.f32.mrb[0].mxu0
        %v3513 = vadd.f32 %v2532, %v3512
        %v3514 = vpop.f32.mrb[0].mxu0
        %v3515 = vadd.f32 %v2532, %v3514
        %v3516 = vpop.f32.mrb[0].mxu0
        %v3517 = vadd.f32 %v2537, %v3516
        %v3518 = vpop.f32.mrb[0].mxu0
        %v3519 = vadd.f32 %v2537, %v3518
        %3520 = vmatprep.mubr.bf16.mxu0 0
        %3521 = vmatmul.mubr.bf16.gmra.mrb[0].mxu0 %v2594
        %v3522 = vpop.f32.mrb[0].mxu0
        %v3523 = vadd.f32 %v2542, %v3522
        %v3524 = vpop.f32.mrb[0].mxu0
        %v3525 = vadd.f32 %v2542, %v3524
        %v3526 = vpop.f32.mrb[0].mxu0
        %v3527 = vadd.f32 %v2547, %v3526
        %v3528 = vpop.f32.mrb[0].mxu0
        %v3529 = vadd.f32 %v2547, %v3528
        %3530 = vmatprep.mubr.bf16.mxu0 0
        %3531 = vmatmul.mubr.bf16.gmra.mrb[0].mxu0 %v2597
        %v3532 = vpop.f32.mrb[0].mxu0
        %v3533 = vadd.f32 %v2552, %v3532
        %v3534 = vpop.f32.mrb[0].mxu0
        %v3535 = vadd.f32 %v2552, %v3534
        %v3536 = vpop.f32.mrb[0].mxu0
        %v3537 = vadd.f32 %v2557, %v3536
        %v3538 = vpop.f32.mrb[0].mxu0
        %v3539 = vadd.f32 %v2557, %v3538
        %3540 = vmatprep.mubr.bf16.mxu0 0
        %3541 = vmatmul.mubr.bf16.gmra.mrb[0].mxu0 %v2600
        %v3542 = vpop.f32.mrb[0].mxu0
        %v3543 = vadd.f32 %v2562, %v3542
        %v3544 = vpop.f32.mrb[0].mxu0
        %v3545 = vadd.f32 %v2562, %v3544
        %v3546 = vpop.f32.mrb[0].mxu0
        %v3547 = vadd.f32 %v2567, %v3546
        %v3548 = vpop.f32.mrb[0].mxu0
        %v3549 = vadd.f32 %v2567, %v3548
        %3550 = vdwg.mxu0
        %3551 = vmatprep.subr.bf16.mxu0 %v2412
        %3552 = vmatpush1.bf16.msra.mxu0 %v2411
        %3553 = vmatprep.subr.bf16.mxu0 %v2476
        %3554 = vmatpush1.bf16.msra.mxu0 %v2475
        %3555 = vmatprep.subr.bf16.mxu0 0
        %3556 = vmatpush1.bf16.msra.mxu0 0
        %3557 = vmatprep.subr.bf16.mxu0 0
        %3558 = vmatpush1.bf16.msra.mxu0 0
        %3559 = vmatprep.subr.bf16.mxu0 0
        %3560 = vmatpush1.bf16.msra.mxu0 0
        %3561 = vmatprep.subr.bf16.mxu0 0
        %3562 = vmatpush1.bf16.msra.mxu0 0
        %3563 = vmatprep.subr.bf16.mxu0 0
        %3564 = vmatpush1.bf16.msra.mxu0 0
        %3565 = vmatprep.subr.bf16.mxu0 0
        %3566 = vmatpush1.bf16.msra.mxu0 0
        %3567 = vmatprep.subr.bf16.mxu0 0
        %3568 = vmatpush1.bf16.msra.mxu0 0
        %3569 = vmatprep.subr.bf16.mxu0 0
        %3570 = vmatpush1.bf16.msra.mxu0 0
        %3571 = vmatprep.subr.bf16.mxu0 0
        %3572 = vmatpush1.bf16.msra.mxu0 0
        %3573 = vmatprep.subr.bf16.mxu0 0
        %3574 = vmatpush1.bf16.msra.mxu0 0
        %3575 = vmatprep.subr.bf16.mxu0 0
        %3576 = vmatpush1.bf16.msra.mxu0 0
        %3577 = vmatprep.subr.bf16.mxu0 0
        %3578 = vmatpush1.bf16.msra.mxu0 0
        %3579 = vmatprep.subr.bf16.mxu0 0
        %3580 = vmatpush1.bf16.msra.mxu0 0
        %3581 = vmatprep.subr.bf16.mxu0 0
        %3582 = vmatpush1.bf16.msra.mxu0 0
        %3583 = vmatprep.mubr.bf16.mxu0 0
        %3584 = vmatmul.mubr.bf16.gmra.mrb[0].mxu0 %v2591
        %v3585 = vpop.f32.mrb[0].mxu0
        %v3586 = vadd.f32 %v2532, %v3585
        %v3587 = vpop.f32.mrb[0].mxu0
        %v3588 = vadd.f32 %v2532, %v3587
        %v3589 = vpop.f32.mrb[0].mxu0
        %v3590 = vadd.f32 %v2537, %v3589
        %v3591 = vpop.f32.mrb[0].mxu0
        %v3592 = vadd.f32 %v2537, %v3591
        %3593 = vmatprep.mubr.bf16.mxu0 0
        %3594 = vmatmul.mubr.bf16.gmra.mrb[0].mxu0 %v2594
        %v3595 = vpop.f32.mrb[0].mxu0
        %v3596 = vadd.f32 %v2542, %v3595
        %v3597 = vpop.f32.mrb[0].mxu0
        %v3598 = vadd.f32 %v2542, %v3597
        %v3599 = vpop.f32.mrb[0].mxu0
        %v3600 = vadd.f32 %v2547, %v3599
        %v3601 = vpop.f32.mrb[0].mxu0
        %v3602 = vadd.f32 %v2547, %v3601
        %3603 = vmatprep.mubr.bf16.mxu0 0
        %3604 = vmatmul.mubr.bf16.gmra.mrb[0].mxu0 %v2597
        %v3605 = vpop.f32.mrb[0].mxu0
        %v3606 = vadd.f32 %v2552, %v3605
        %v3607 = vpop.f32.mrb[0].mxu0
        %v3608 = vadd.f32 %v2552, %v3607
        %v3609 = vpop.f32.mrb[0].mxu0
        %v3610 = vadd.f32 %v2557, %v3609
        %v3611 = vpop.f32.mrb[0].mxu0
        %v3612 = vadd.f32 %v2557, %v3611
        %3613 = vmatprep.mubr.bf16.mxu0 0
        %3614 = vmatmul.mubr.bf16.gmra.mrb[0].mxu0 %v2600
        %v3615 = vpop.f32.mrb[0].mxu0
        %v3616 = vadd.f32 %v2562, %v3615
        %v3617 = vpop.f32.mrb[0].mxu0
        %v3618 = vadd.f32 %v2562, %v3617
        %v3619 = vpop.f32.mrb[0].mxu0
        %v3620 = vadd.f32 %v2567, %v3619
        %v3621 = vpop.f32.mrb[0].mxu0
        %v3622 = vadd.f32 %v2567, %v3621
        %3623 = vdwg.mxu0
        %3624 = vmatprep.subr.bf16.mxu0 %v2414
        %3625 = vmatpush1.bf16.msra.mxu0 %v2413
        %3626 = vmatprep.subr.bf16.mxu0 %v2478
        %3627 = vmatpush1.bf16.msra.mxu0 %v2477
        %3628 = vmatprep.subr.bf16.mxu0 0
        %3629 = vmatpush1.bf16.msra.mxu0 0
        %3630 = vmatprep.subr.bf16.mxu0 0
        %3631 = vmatpush1.bf16.msra.mxu0 0
        %3632 = vmatprep.subr.bf16.mxu0 0
        %3633 = vmatpush1.bf16.msra.mxu0 0
        %3634 = vmatprep.subr.bf16.mxu0 0
        %3635 = vmatpush1.bf16.msra.mxu0 0
        %3636 = vmatprep.subr.bf16.mxu0 0
        %3637 = vmatpush1.bf16.msra.mxu0 0
        %3638 = vmatprep.subr.bf16.mxu0 0
        %3639 = vmatpush1.bf16.msra.mxu0 0
        %3640 = vmatprep.subr.bf16.mxu0 0
        %3641 = vmatpush1.bf16.msra.mxu0 0
        %3642 = vmatprep.subr.bf16.mxu0 0
        %3643 = vmatpush1.bf16.msra.mxu0 0
        %3644 = vmatprep.subr.bf16.mxu0 0
        %3645 = vmatpush1.bf16.msra.mxu0 0
        %3646 = vmatprep.subr.bf16.mxu0 0
        %3647 = vmatpush1.bf16.msra.mxu0 0
        %3648 = vmatprep.subr.bf16.mxu0 0
        %3649 = vmatpush1.bf16.msra.mxu0 0
        %3650 = vmatprep.subr.bf16.mxu0 0
        %3651 = vmatpush1.bf16.msra.mxu0 0
        %3652 = vmatprep.subr.bf16.mxu0 0
        %3653 = vmatpush1.bf16.msra.mxu0 0
        %3654 = vmatprep.subr.bf16.mxu0 0
        %3655 = vmatpush1.bf16.msra.mxu0 0
        %3656 = vmatprep.mubr.bf16.mxu0 0
        %3657 = vmatmul.mubr.bf16.gmra.mrb[0].mxu0 %v2591
        %v3658 = vpop.f32.mrb[0].mxu0
        %v3659 = vadd.f32 %v2532, %v3658
        %v3660 = vpop.f32.mrb[0].mxu0
        %v3661 = vadd.f32 %v2532, %v3660
        %v3662 = vpop.f32.mrb[0].mxu0
        %v3663 = vadd.f32 %v2537, %v3662
        %v3664 = vpop.f32.mrb[0].mxu0
        %v3665 = vadd.f32 %v2537, %v3664
        %3666 = vmatprep.mubr.bf16.mxu0 0
        %3667 = vmatmul.mubr.bf16.gmra.mrb[0].mxu0 %v2594
        %v3668 = vpop.f32.mrb[0].mxu0
        %v3669 = vadd.f32 %v2542, %v3668
        %v3670 = vpop.f32.mrb[0].mxu0
        %v3671 = vadd.f32 %v2542, %v3670
        %v3672 = vpop.f32.mrb[0].mxu0
        %v3673 = vadd.f32 %v2547, %v3672
        %v3674 = vpop.f32.mrb[0].mxu0
        %v3675 = vadd.f32 %v2547, %v3674
        %3676 = vmatprep.mubr.bf16.mxu0 0
        %3677 = vmatmul.mubr.bf16.gmra.mrb[0].mxu0 %v2597
        %v3678 = vpop.f32.mrb[0].mxu0
        %v3679 = vadd.f32 %v2552, %v3678
        %v3680 = vpop.f32.mrb[0].mxu0
        %v3681 = vadd.f32 %v2552, %v3680
        %v3682 = vpop.f32.mrb[0].mxu0
        %v3683 = vadd.f32 %v2557, %v3682
        %v3684 = vpop.f32.mrb[0].mxu0
        %v3685 = vadd.f32 %v2557, %v3684
        %3686 = vmatprep.mubr.bf16.mxu0 0
        %3687 = vmatmul.mubr.bf16.gmra.mrb[0].mxu0 %v2600
        %v3688 = vpop.f32.mrb[0].mxu0
        %v3689 = vadd.f32 %v2562, %v3688
        %v3690 = vpop.f32.mrb[0].mxu0
        %v3691 = vadd.f32 %v2562, %v3690
        %v3692 = vpop.f32.mrb[0].mxu0
        %v3693 = vadd.f32 %v2567, %v3692
        %v3694 = vpop.f32.mrb[0].mxu0
        %v3695 = vadd.f32 %v2567, %v3694
        %3696 = vdwg.mxu0
        %3697 = vmatprep.subr.bf16.mxu0 %v2416
        %3698 = vmatpush1.bf16.msra.mxu0 %v2415
        %3699 = vmatprep.subr.bf16.mxu0 %v2480
        %3700 = vmatpush1.bf16.msra.mxu0 %v2479
        %3701 = vmatprep.subr.bf16.mxu0 0
        %3702 = vmatpush1.bf16.msra.mxu0 0
        %3703 = vmatprep.subr.bf16.mxu0 0
        %3704 = vmatpush1.bf16.msra.mxu0 0
        %3705 = vmatprep.subr.bf16.mxu0 0
        %3706 = vmatpush1.bf16.msra.mxu0 0
        %3707 = vmatprep.subr.bf16.mxu0 0
        %3708 = vmatpush1.bf16.msra.mxu0 0
        %3709 = vmatprep.subr.bf16.mxu0 0
        %3710 = vmatpush1.bf16.msra.mxu0 0
        %3711 = vmatprep.subr.bf16.mxu0 0
        %3712 = vmatpush1.bf16.msra.mxu0 0
        %3713 = vmatprep.subr.bf16.mxu0 0
        %3714 = vmatpush1.bf16.msra.mxu0 0
        %3715 = vmatprep.subr.bf16.mxu0 0
        %3716 = vmatpush1.bf16.msra.mxu0 0
        %3717 = vmatprep.subr.bf16.mxu0 0
        %3718 = vmatpush1.bf16.msra.mxu0 0
        %3719 = vmatprep.subr.bf16.mxu0 0
        %3720 = vmatpush1.bf16.msra.mxu0 0
        %3721 = vmatprep.subr.bf16.mxu0 0
        %3722 = vmatpush1.bf16.msra.mxu0 0
        %3723 = vmatprep.subr.bf16.mxu0 0
        %3724 = vmatpush1.bf16.msra.mxu0 0
        %3725 = vmatprep.subr.bf16.mxu0 0
        %3726 = vmatpush1.bf16.msra.mxu0 0
        %3727 = vmatprep.subr.bf16.mxu0 0
        %3728 = vmatpush1.bf16.msra.mxu0 0
        %3729 = vmatprep.mubr.bf16.mxu0 0
        %3730 = vmatmul.mubr.bf16.gmra.mrb[0].mxu0 %v2591
        %v3731 = vpop.f32.mrb[0].mxu0
        %v3732 = vadd.f32 %v2532, %v3731
        %v3733 = vpop.f32.mrb[0].mxu0
        %v3734 = vadd.f32 %v2532, %v3733
        %v3735 = vpop.f32.mrb[0].mxu0
        %v3736 = vadd.f32 %v2537, %v3735
        %v3737 = vpop.f32.mrb[0].mxu0
        %v3738 = vadd.f32 %v2537, %v3737
        %3739 = vmatprep.mubr.bf16.mxu0 0
        %3740 = vmatmul.mubr.bf16.gmra.mrb[0].mxu0 %v2594
        %v3741 = vpop.f32.mrb[0].mxu0
        %v3742 = vadd.f32 %v2542, %v3741
        %v3743 = vpop.f32.mrb[0].mxu0
        %v3744 = vadd.f32 %v2542, %v3743
        %v3745 = vpop.f32.mrb[0].mxu0
        %v3746 = vadd.f32 %v2547, %v3745
        %v3747 = vpop.f32.mrb[0].mxu0
        %v3748 = vadd.f32 %v2547, %v3747
        %3749 = vmatprep.mubr.bf16.mxu0 0
        %3750 = vmatmul.mubr.bf16.gmra.mrb[0].mxu0 %v2597
        %v3751 = vpop.f32.mrb[0].mxu0
        %v3752 = vadd.f32 %v2552, %v3751
        %v3753 = vpop.f32.mrb[0].mxu0
        %v3754 = vadd.f32 %v2552, %v3753
        %v3755 = vpop.f32.mrb[0].mxu0
        %v3756 = vadd.f32 %v2557, %v3755
        %v3757 = vpop.f32.mrb[0].mxu0
        %v3758 = vadd.f32 %v2557, %v3757
        %3759 = vmatprep.mubr.bf16.mxu0 0
        %3760 = vmatmul.mubr.bf16.gmra.mrb[0].mxu0 %v2600
        %v3761 = vpop.f32.mrb[0].mxu0
        %v3762 = vadd.f32 %v2562, %v3761
        %v3763 = vpop.f32.mrb[0].mxu0
        %v3764 = vadd.f32 %v2562, %v3763
        %v3765 = vpop.f32.mrb[0].mxu0
        %v3766 = vadd.f32 %v2567, %v3765
        %v3767 = vpop.f32.mrb[0].mxu0
        %v3768 = vadd.f32 %v2567, %v3767
        %3769 = vdwg.mxu0
        %3770 = vmatprep.subr.bf16.mxu0 %v2418
        %3771 = vmatpush1.bf16.msra.mxu0 %v2417
        %3772 = vmatprep.subr.bf16.mxu0 %v2482
        %3773 = vmatpush1.bf16.msra.mxu0 %v2481
        %3774 = vmatprep.subr.bf16.mxu0 0
        %3775 = vmatpush1.bf16.msra.mxu0 0
        %3776 = vmatprep.subr.bf16.mxu0 0
        %3777 = vmatpush1.bf16.msra.mxu0 0
        %3778 = vmatprep.subr.bf16.mxu0 0
        %3779 = vmatpush1.bf16.msra.mxu0 0
        %3780 = vmatprep.subr.bf16.mxu0 0
        %3781 = vmatpush1.bf16.msra.mxu0 0
        %3782 = vmatprep.subr.bf16.mxu0 0
        %3783 = vmatpush1.bf16.msra.mxu0 0
        %3784 = vmatprep.subr.bf16.mxu0 0
        %3785 = vmatpush1.bf16.msra.mxu0 0
        %3786 = vmatprep.subr.bf16.mxu0 0
        %3787 = vmatpush1.bf16.msra.mxu0 0
        %3788 = vmatprep.subr.bf16.mxu0 0
        %3789 = vmatpush1.bf16.msra.mxu0 0
        %3790 = vmatprep.subr.bf16.mxu0 0
        %3791 = vmatpush1.bf16.msra.mxu0 0
        %3792 = vmatprep.subr.bf16.mxu0 0
        %3793 = vmatpush1.bf16.msra.mxu0 0
        %3794 = vmatprep.subr.bf16.mxu0 0
        %3795 = vmatpush1.bf16.msra.mxu0 0
        %3796 = vmatprep.subr.bf16.mxu0 0
        %3797 = vmatpush1.bf16.msra.mxu0 0
        %3798 = vmatprep.subr.bf16.mxu0 0
        %3799 = vmatpush1.bf16.msra.mxu0 0
        %3800 = vmatprep.subr.bf16.mxu0 0
        %3801 = vmatpush1.bf16.msra.mxu0 0
        %3802 = vmatprep.mubr.bf16.mxu0 0
        %3803 = vmatmul.mubr.bf16.gmra.mrb[0].mxu0 %v2591
        %v3804 = vpop.f32.mrb[0].mxu0
        %v3805 = vadd.f32 %v2532, %v3804
        %v3806 = vpop.f32.mrb[0].mxu0
        %v3807 = vadd.f32 %v2532, %v3806
        %v3808 = vpop.f32.mrb[0].mxu0
        %v3809 = vadd.f32 %v2537, %v3808
        %v3810 = vpop.f32.mrb[0].mxu0
        %v3811 = vadd.f32 %v2537, %v3810
        %3812 = vmatprep.mubr.bf16.mxu0 0
        %3813 = vmatmul.mubr.bf16.gmra.mrb[0].mxu0 %v2594
        %v3814 = vpop.f32.mrb[0].mxu0
        %v3815 = vadd.f32 %v2542, %v3814
        %v3816 = vpop.f32.mrb[0].mxu0
        %v3817 = vadd.f32 %v2542, %v3816
        %v3818 = vpop.f32.mrb[0].mxu0
        %v3819 = vadd.f32 %v2547, %v3818
        %v3820 = vpop.f32.mrb[0].mxu0
        %v3821 = vadd.f32 %v2547, %v3820
        %3822 = vmatprep.mubr.bf16.mxu0 0
        %3823 = vmatmul.mubr.bf16.gmra.mrb[0].mxu0 %v2597
        %v3824 = vpop.f32.mrb[0].mxu0
        %v3825 = vadd.f32 %v2552, %v3824
        %v3826 = vpop.f32.mrb[0].mxu0
        %v3827 = vadd.f32 %v2552, %v3826
        %v3828 = vpop.f32.mrb[0].mxu0
        %v3829 = vadd.f32 %v2557, %v3828
        %v3830 = vpop.f32.mrb[0].mxu0
        %v3831 = vadd.f32 %v2557, %v3830
        %3832 = vmatprep.mubr.bf16.mxu0 0
        %3833 = vmatmul.mubr.bf16.gmra.mrb[0].mxu0 %v2600
        %v3834 = vpop.f32.mrb[0].mxu0
        %v3835 = vadd.f32 %v2562, %v3834
        %v3836 = vpop.f32.mrb[0].mxu0
        %v3837 = vadd.f32 %v2562, %v3836
        %v3838 = vpop.f32.mrb[0].mxu0
        %v3839 = vadd.f32 %v2567, %v3838
        %v3840 = vpop.f32.mrb[0].mxu0
        %v3841 = vadd.f32 %v2567, %v3840
        %3842 = vdwg.mxu0
        %3843 = vmatprep.subr.bf16.mxu0 %v2420
        %3844 = vmatpush1.bf16.msra.mxu0 %v2419
        %3845 = vmatprep.subr.bf16.mxu0 %v2484
        %3846 = vmatpush1.bf16.msra.mxu0 %v2483
        %3847 = vmatprep.subr.bf16.mxu0 0
        %3848 = vmatpush1.bf16.msra.mxu0 0
        %3849 = vmatprep.subr.bf16.mxu0 0
        %3850 = vmatpush1.bf16.msra.mxu0 0
        %3851 = vmatprep.subr.bf16.mxu0 0
        %3852 = vmatpush1.bf16.msra.mxu0 0
        %3853 = vmatprep.subr.bf16.mxu0 0
        %3854 = vmatpush1.bf16.msra.mxu0 0
        %3855 = vmatprep.subr.bf16.mxu0 0
        %3856 = vmatpush1.bf16.msra.mxu0 0
        %3857 = vmatprep.subr.bf16.mxu0 0
        %3858 = vmatpush1.bf16.msra.mxu0 0
        %3859 = vmatprep.subr.bf16.mxu0 0
        %3860 = vmatpush1.bf16.msra.mxu0 0
        %3861 = vmatprep.subr.bf16.mxu0 0
        %3862 = vmatpush1.bf16.msra.mxu0 0
        %3863 = vmatprep.subr.bf16.mxu0 0
        %3864 = vmatpush1.bf16.msra.mxu0 0
        %3865 = vmatprep.subr.bf16.mxu0 0
        %3866 = vmatpush1.bf16.msra.mxu0 0
        %3867 = vmatprep.subr.bf16.mxu0 0
        %3868 = vmatpush1.bf16.msra.mxu0 0
        %3869 = vmatprep.subr.bf16.mxu0 0
        %3870 = vmatpush1.bf16.msra.mxu0 0
        %3871 = vmatprep.subr.bf16.mxu0 0
        %3872 = vmatpush1.bf16.msra.mxu0 0
        %3873 = vmatprep.subr.bf16.mxu0 0
        %3874 = vmatpush1.bf16.msra.mxu0 0
        %3875 = vmatprep.mubr.bf16.mxu0 0
        %3876 = vmatmul.mubr.bf16.gmra.mrb[0].mxu0 %v2591
        %v3877 = vpop.f32.mrb[0].mxu0
        %v3878 = vadd.f32 %v2532, %v3877
        %v3879 = vpop.f32.mrb[0].mxu0
        %v3880 = vadd.f32 %v2532, %v3879
        %v3881 = vpop.f32.mrb[0].mxu0
        %v3882 = vadd.f32 %v2537, %v3881
        %v3883 = vpop.f32.mrb[0].mxu0
        %v3884 = vadd.f32 %v2537, %v3883
        %3885 = vmatprep.mubr.bf16.mxu0 0
        %3886 = vmatmul.mubr.bf16.gmra.mrb[0].mxu0 %v2594
        %v3887 = vpop.f32.mrb[0].mxu0
        %v3888 = vadd.f32 %v2542, %v3887
        %v3889 = vpop.f32.mrb[0].mxu0
        %v3890 = vadd.f32 %v2542, %v3889
        %v3891 = vpop.f32.mrb[0].mxu0
        %v3892 = vadd.f32 %v2547, %v3891
        %v3893 = vpop.f32.mrb[0].mxu0
        %v3894 = vadd.f32 %v2547, %v3893
        %3895 = vmatprep.mubr.bf16.mxu0 0
        %3896 = vmatmul.mubr.bf16.gmra.mrb[0].mxu0 %v2597
        %v3897 = vpop.f32.mrb[0].mxu0
        %v3898 = vadd.f32 %v2552, %v3897
        %v3899 = vpop.f32.mrb[0].mxu0
        %v3900 = vadd.f32 %v2552, %v3899
        %v3901 = vpop.f32.mrb[0].mxu0
        %v3902 = vadd.f32 %v2557, %v3901
        %v3903 = vpop.f32.mrb[0].mxu0
        %v3904 = vadd.f32 %v2557, %v3903
        %3905 = vmatprep.mubr.bf16.mxu0 0
        %3906 = vmatmul.mubr.bf16.gmra.mrb[0].mxu0 %v2600
        %v3907 = vpop.f32.mrb[0].mxu0
        %v3908 = vadd.f32 %v2562, %v3907
        %v3909 = vpop.f32.mrb[0].mxu0
        %v3910 = vadd.f32 %v2562, %v3909
        %v3911 = vpop.f32.mrb[0].mxu0
        %v3912 = vadd.f32 %v2567, %v3911
        %v3913 = vpop.f32.mrb[0].mxu0
        %v3914 = vadd.f32 %v2567, %v3913
        %3915 = vdwg.mxu0
        %3916 = vmatprep.subr.bf16.mxu0 %v2422
        %3917 = vmatpush1.bf16.msra.mxu0 %v2421
        %3918 = vmatprep.subr.bf16.mxu0 %v2486
        %3919 = vmatpush1.bf16.msra.mxu0 %v2485
        %3920 = vmatprep.subr.bf16.mxu0 0
        %3921 = vmatpush1.bf16.msra.mxu0 0
        %3922 = vmatprep.subr.bf16.mxu0 0
        %3923 = vmatpush1.bf16.msra.mxu0 0
        %3924 = vmatprep.subr.bf16.mxu0 0
        %3925 = vmatpush1.bf16.msra.mxu0 0
        %3926 = vmatprep.subr.bf16.mxu0 0
        %3927 = vmatpush1.bf16.msra.mxu0 0
        %3928 = vmatprep.subr.bf16.mxu0 0
        %3929 = vmatpush1.bf16.msra.mxu0 0
        %3930 = vmatprep.subr.bf16.mxu0 0
        %3931 = vmatpush1.bf16.msra.mxu0 0
        %3932 = vmatprep.subr.bf16.mxu0 0
        %3933 = vmatpush1.bf16.msra.mxu0 0
        %3934 = vmatprep.subr.bf16.mxu0 0
        %3935 = vmatpush1.bf16.msra.mxu0 0
        %3936 = vmatprep.subr.bf16.mxu0 0
        %3937 = vmatpush1.bf16.msra.mxu0 0
        %3938 = vmatprep.subr.bf16.mxu0 0
        %3939 = vmatpush1.bf16.msra.mxu0 0
        %3940 = vmatprep.subr.bf16.mxu0 0
        %3941 = vmatpush1.bf16.msra.mxu0 0
        %3942 = vmatprep.subr.bf16.mxu0 0
        %3943 = vmatpush1.bf16.msra.mxu0 0
        %3944 = vmatprep.subr.bf16.mxu0 0
        %3945 = vmatpush1.bf16.msra.mxu0 0
        %3946 = vmatprep.subr.bf16.mxu0 0
        %3947 = vmatpush1.bf16.msra.mxu0 0
        %3948 = vmatprep.mubr.bf16.mxu0 0
        %3949 = vmatmul.mubr.bf16.gmra.mrb[0].mxu0 %v2591
        %v3950 = vpop.f32.mrb[0].mxu0
        %v3951 = vadd.f32 %v2532, %v3950
        %v3952 = vpop.f32.mrb[0].mxu0
        %v3953 = vadd.f32 %v2532, %v3952
        %v3954 = vpop.f32.mrb[0].mxu0
        %v3955 = vadd.f32 %v2537, %v3954
        %v3956 = vpop.f32.mrb[0].mxu0
        %v3957 = vadd.f32 %v2537, %v3956
        %3958 = vmatprep.mubr.bf16.mxu0 0
        %3959 = vmatmul.mubr.bf16.gmra.mrb[0].mxu0 %v2594
        %v3960 = vpop.f32.mrb[0].mxu0
        %v3961 = vadd.f32 %v2542, %v3960
        %v3962 = vpop.f32.mrb[0].mxu0
        %v3963 = vadd.f32 %v2542, %v3962
        %v3964 = vpop.f32.mrb[0].mxu0
        %v3965 = vadd.f32 %v2547, %v3964
        %v3966 = vpop.f32.mrb[0].mxu0
        %v3967 = vadd.f32 %v2547, %v3966
        %3968 = vmatprep.mubr.bf16.mxu0 0
        %3969 = vmatmul.mubr.bf16.gmra.mrb[0].mxu0 %v2597
        %v3970 = vpop.f32.mrb[0].mxu0
        %v3971 = vadd.f32 %v2552, %v3970
        %v3972 = vpop.f32.mrb[0].mxu0
        %v3973 = vadd.f32 %v2552, %v3972
        %v3974 = vpop.f32.mrb[0].mxu0
        %v3975 = vadd.f32 %v2557, %v3974
        %v3976 = vpop.f32.mrb[0].mxu0
        %v3977 = vadd.f32 %v2557, %v3976
        %3978 = vmatprep.mubr.bf16.mxu0 0
        %3979 = vmatmul.mubr.bf16.gmra.mrb[0].mxu0 %v2600
        %v3980 = vpop.f32.mrb[0].mxu0
        %v3981 = vadd.f32 %v2562, %v3980
        %v3982 = vpop.f32.mrb[0].mxu0
        %v3983 = vadd.f32 %v2562, %v3982
        %v3984 = vpop.f32.mrb[0].mxu0
        %v3985 = vadd.f32 %v2567, %v3984
        %v3986 = vpop.f32.mrb[0].mxu0
        %v3987 = vadd.f32 %v2567, %v3986
        %3988 = vdwg.mxu0
        %3989 = vmatprep.subr.bf16.mxu0 %v2424
        %3990 = vmatpush1.bf16.msra.mxu0 %v2423
        %3991 = vmatprep.subr.bf16.mxu0 %v2488
        %3992 = vmatpush1.bf16.msra.mxu0 %v2487
        %3993 = vmatprep.subr.bf16.mxu0 0
        %3994 = vmatpush1.bf16.msra.mxu0 0
        %3995 = vmatprep.subr.bf16.mxu0 0
        %3996 = vmatpush1.bf16.msra.mxu0 0
        %3997 = vmatprep.subr.bf16.mxu0 0
        %3998 = vmatpush1.bf16.msra.mxu0 0
        %3999 = vmatprep.subr.bf16.mxu0 0
        %4000 = vmatpush1.bf16.msra.mxu0 0
        %4001 = vmatprep.subr.bf16.mxu0 0
        %4002 = vmatpush1.bf16.msra.mxu0 0
        %4003 = vmatprep.subr.bf16.mxu0 0
        %4004 = vmatpush1.bf16.msra.mxu0 0
        %4005 = vmatprep.subr.bf16.mxu0 0
        %4006 = vmatpush1.bf16.msra.mxu0 0
        %4007 = vmatprep.subr.bf16.mxu0 0
        %4008 = vmatpush1.bf16.msra.mxu0 0
        %4009 = vmatprep.subr.bf16.mxu0 0
        %4010 = vmatpush1.bf16.msra.mxu0 0
        %4011 = vmatprep.subr.bf16.mxu0 0
        %4012 = vmatpush1.bf16.msra.mxu0 0
        %4013 = vmatprep.subr.bf16.mxu0 0
        %4014 = vmatpush1.bf16.msra.mxu0 0
        %4015 = vmatprep.subr.bf16.mxu0 0
        %4016 = vmatpush1.bf16.msra.mxu0 0
        %4017 = vmatprep.subr.bf16.mxu0 0
        %4018 = vmatpush1.bf16.msra.mxu0 0
        %4019 = vmatprep.subr.bf16.mxu0 0
        %4020 = vmatpush1.bf16.msra.mxu0 0
        %4021 = vmatprep.mubr.bf16.mxu0 0
        %4022 = vmatmul.mubr.bf16.gmra.mrb[0].mxu0 %v2591
        %v4023 = vpop.f32.mrb[0].mxu0
        %v4024 = vadd.f32 %v2532, %v4023
        %v4025 = vpop.f32.mrb[0].mxu0
        %v4026 = vadd.f32 %v2532, %v4025
        %v4027 = vpop.f32.mrb[0].mxu0
        %v4028 = vadd.f32 %v2537, %v4027
        %v4029 = vpop.f32.mrb[0].mxu0
        %v4030 = vadd.f32 %v2537, %v4029
        %4031 = vmatprep.mubr.bf16.mxu0 0
        %4032 = vmatmul.mubr.bf16.gmra.mrb[0].mxu0 %v2594
        %v4033 = vpop.f32.mrb[0].mxu0
        %v4034 = vadd.f32 %v2542, %v4033
        %v4035 = vpop.f32.mrb[0].mxu0
        %v4036 = vadd.f32 %v2542, %v4035
        %v4037 = vpop.f32.mrb[0].mxu0
        %v4038 = vadd.f32 %v2547, %v4037
        %v4039 = vpop.f32.mrb[0].mxu0
        %v4040 = vadd.f32 %v2547, %v4039
        %4041 = vmatprep.mubr.bf16.mxu0 0
        %4042 = vmatmul.mubr.bf16.gmra.mrb[0].mxu0 %v2597
        %v4043 = vpop.f32.mrb[0].mxu0
        %v4044 = vadd.f32 %v2552, %v4043
        %v4045 = vpop.f32.mrb[0].mxu0
        %v4046 = vadd.f32 %v2552, %v4045
        %v4047 = vpop.f32.mrb[0].mxu0
        %v4048 = vadd.f32 %v2557, %v4047
        %v4049 = vpop.f32.mrb[0].mxu0
        %v4050 = vadd.f32 %v2557, %v4049
        %4051 = vmatprep.mubr.bf16.mxu0 0
        %4052 = vmatmul.mubr.bf16.gmra.mrb[0].mxu0 %v2600
        %v4053 = vpop.f32.mrb[0].mxu0
        %v4054 = vadd.f32 %v2562, %v4053
        %v4055 = vpop.f32.mrb[0].mxu0
        %v4056 = vadd.f32 %v2562, %v4055
        %v4057 = vpop.f32.mrb[0].mxu0
        %v4058 = vadd.f32 %v2567, %v4057
        %v4059 = vpop.f32.mrb[0].mxu0
        %v4060 = vadd.f32 %v2567, %v4059
        %4061 = vdwg.mxu0
        %4062 = vmatprep.subr.bf16.mxu0 %v2426
        %4063 = vmatpush1.bf16.msra.mxu0 %v2425
        %4064 = vmatprep.subr.bf16.mxu0 %v2490
        %4065 = vmatpush1.bf16.msra.mxu0 %v2489
        %4066 = vmatprep.subr.bf16.mxu0 0
        %4067 = vmatpush1.bf16.msra.mxu0 0
        %4068 = vmatprep.subr.bf16.mxu0 0
        %4069 = vmatpush1.bf16.msra.mxu0 0
        %4070 = vmatprep.subr.bf16.mxu0 0
        %4071 = vmatpush1.bf16.msra.mxu0 0
        %4072 = vmatprep.subr.bf16.mxu0 0
        %4073 = vmatpush1.bf16.msra.mxu0 0
        %4074 = vmatprep.subr.bf16.mxu0 0
        %4075 = vmatpush1.bf16.msra.mxu0 0
        %4076 = vmatprep.subr.bf16.mxu0 0
        %4077 = vmatpush1.bf16.msra.mxu0 0
        %4078 = vmatprep.subr.bf16.mxu0 0
        %4079 = vmatpush1.bf16.msra.mxu0 0
        %4080 = vmatprep.subr.bf16.mxu0 0
        %4081 = vmatpush1.bf16.msra.mxu0 0
        %4082 = vmatprep.subr.bf16.mxu0 0
        %4083 = vmatpush1.bf16.msra.mxu0 0
        %4084 = vmatprep.subr.bf16.mxu0 0
        %4085 = vmatpush1.bf16.msra.mxu0 0
        %4086 = vmatprep.subr.bf16.mxu0 0
        %4087 = vmatpush1.bf16.msra.mxu0 0
        %4088 = vmatprep.subr.bf16.mxu0 0
        %4089 = vmatpush1.bf16.msra.mxu0 0
        %4090 = vmatprep.subr.bf16.mxu0 0
        %4091 = vmatpush1.bf16.msra.mxu0 0
        %4092 = vmatprep.subr.bf16.mxu0 0
        %4093 = vmatpush1.bf16.msra.mxu0 0
        %4094 = vmatprep.mubr.bf16.mxu0 0
        %4095 = vmatmul.mubr.bf16.gmra.mrb[0].mxu0 %v2591
        %v4096 = vpop.f32.mrb[0].mxu0
        %v4097 = vadd.f32 %v2532, %v4096
        %v4098 = vpop.f32.mrb[0].mxu0
        %v4099 = vadd.f32 %v2532, %v4098
        %v4100 = vpop.f32.mrb[0].mxu0
        %v4101 = vadd.f32 %v2537, %v4100
        %v4102 = vpop.f32.mrb[0].mxu0
        %v4103 = vadd.f32 %v2537, %v4102
        %4104 = vmatprep.mubr.bf16.mxu0 0
        %4105 = vmatmul.mubr.bf16.gmra.mrb[0].mxu0 %v2594
        %v4106 = vpop.f32.mrb[0].mxu0
        %v4107 = vadd.f32 %v2542, %v4106
        %v4108 = vpop.f32.mrb[0].mxu0
        %v4109 = vadd.f32 %v2542, %v4108
        %v4110 = vpop.f32.mrb[0].mxu0
        %v4111 = vadd.f32 %v2547, %v4110
        %v4112 = vpop.f32.mrb[0].mxu0
        %v4113 = vadd.f32 %v2547, %v4112
        %4114 = vmatprep.mubr.bf16.mxu0 0
        %4115 = vmatmul.mubr.bf16.gmra.mrb[0].mxu0 %v2597
        %v4116 = vpop.f32.mrb[0].mxu0
        %v4117 = vadd.f32 %v2552, %v4116
        %v4118 = vpop.f32.mrb[0].mxu0
        %v4119 = vadd.f32 %v2552, %v4118
        %v4120 = vpop.f32.mrb[0].mxu0
        %v4121 = vadd.f32 %v2557, %v4120
        %v4122 = vpop.f32.mrb[0].mxu0
        %v4123 = vadd.f32 %v2557, %v4122
        %4124 = vmatprep.mubr.bf16.mxu0 0
        %4125 = vmatmul.mubr.bf16.gmra.mrb[0].mxu0 %v2600
        %v4126 = vpop.f32.mrb[0].mxu0
        %v4127 = vadd.f32 %v2562, %v4126
        %v4128 = vpop.f32.mrb[0].mxu0
        %v4129 = vadd.f32 %v2562, %v4128
        %v4130 = vpop.f32.mrb[0].mxu0
        %v4131 = vadd.f32 %v2567, %v4130
        %v4132 = vpop.f32.mrb[0].mxu0
        %v4133 = vadd.f32 %v2567, %v4132
        %4134 = vdwg.mxu0
        %4135 = vmatprep.subr.bf16.mxu0 %v2428
        %4136 = vmatpush1.bf16.msra.mxu0 %v2427
        %4137 = vmatprep.subr.bf16.mxu0 %v2492
        %4138 = vmatpush1.bf16.msra.mxu0 %v2491
        %4139 = vmatprep.subr.bf16.mxu0 0
        %4140 = vmatpush1.bf16.msra.mxu0 0
        %4141 = vmatprep.subr.bf16.mxu0 0
        %4142 = vmatpush1.bf16.msra.mxu0 0
        %4143 = vmatprep.subr.bf16.mxu0 0
        %4144 = vmatpush1.bf16.msra.mxu0 0
        %4145 = vmatprep.subr.bf16.mxu0 0
        %4146 = vmatpush1.bf16.msra.mxu0 0
        %4147 = vmatprep.subr.bf16.mxu0 0
        %4148 = vmatpush1.bf16.msra.mxu0 0
        %4149 = vmatprep.subr.bf16.mxu0 0
        %4150 = vmatpush1.bf16.msra.mxu0 0
        %4151 = vmatprep.subr.bf16.mxu0 0
        %4152 = vmatpush1.bf16.msra.mxu0 0
        %4153 = vmatprep.subr.bf16.mxu0 0
        %4154 = vmatpush1.bf16.msra.mxu0 0
        %4155 = vmatprep.subr.bf16.mxu0 0
        %4156 = vmatpush1.bf16.msra.mxu0 0
        %4157 = vmatprep.subr.bf16.mxu0 0
        %4158 = vmatpush1.bf16.msra.mxu0 0
        %4159 = vmatprep.subr.bf16.mxu0 0
        %4160 = vmatpush1.bf16.msra.mxu0 0
        %4161 = vmatprep.subr.bf16.mxu0 0
        %4162 = vmatpush1.bf16.msra.mxu0 0
        %4163 = vmatprep.subr.bf16.mxu0 0
        %4164 = vmatpush1.bf16.msra.mxu0 0
        %4165 = vmatprep.subr.bf16.mxu0 0
        %4166 = vmatpush1.bf16.msra.mxu0 0
        %4167 = vmatprep.mubr.bf16.mxu0 0
        %4168 = vmatmul.mubr.bf16.gmra.mrb[0].mxu0 %v2591
        %v4169 = vpop.f32.mrb[0].mxu0
        %v4170 = vadd.f32 %v2532, %v4169
        %v4171 = vpop.f32.mrb[0].mxu0
        %v4172 = vadd.f32 %v2532, %v4171
        %v4173 = vpop.f32.mrb[0].mxu0
        %v4174 = vadd.f32 %v2537, %v4173
        %v4175 = vpop.f32.mrb[0].mxu0
        %v4176 = vadd.f32 %v2537, %v4175
        %4177 = vmatprep.mubr.bf16.mxu0 0
        %4178 = vmatmul.mubr.bf16.gmra.mrb[0].mxu0 %v2594
        %v4179 = vpop.f32.mrb[0].mxu0
        %v4180 = vadd.f32 %v2542, %v4179
        %v4181 = vpop.f32.mrb[0].mxu0
        %v4182 = vadd.f32 %v2542, %v4181
        %v4183 = vpop.f32.mrb[0].mxu0
        %v4184 = vadd.f32 %v2547, %v4183
        %v4185 = vpop.f32.mrb[0].mxu0
        %v4186 = vadd.f32 %v2547, %v4185
        %4187 = vmatprep.mubr.bf16.mxu0 0
        %4188 = vmatmul.mubr.bf16.gmra.mrb[0].mxu0 %v2597
        %v4189 = vpop.f32.mrb[0].mxu0
        %v4190 = vadd.f32 %v2552, %v4189
        %v4191 = vpop.f32.mrb[0].mxu0
        %v4192 = vadd.f32 %v2552, %v4191
        %v4193 = vpop.f32.mrb[0].mxu0
        %v4194 = vadd.f32 %v2557, %v4193
        %v4195 = vpop.f32.mrb[0].mxu0
        %v4196 = vadd.f32 %v2557, %v4195
        %4197 = vmatprep.mubr.bf16.mxu0 0
        %4198 = vmatmul.mubr.bf16.gmra.mrb[0].mxu0 %v2600
        %v4199 = vpop.f32.mrb[0].mxu0
        %v4200 = vadd.f32 %v2562, %v4199
        %v4201 = vpop.f32.mrb[0].mxu0
        %v4202 = vadd.f32 %v2562, %v4201
        %v4203 = vpop.f32.mrb[0].mxu0
        %v4204 = vadd.f32 %v2567, %v4203
        %v4205 = vpop.f32.mrb[0].mxu0
        %v4206 = vadd.f32 %v2567, %v4205
        %4207 = vdwg.mxu0
        %4208 = vmatprep.subr.bf16.mxu0 %v2430
        %4209 = vmatpush1.bf16.msra.mxu0 %v2429
        %4210 = vmatprep.subr.bf16.mxu0 %v2494
        %4211 = vmatpush1.bf16.msra.mxu0 %v2493
        %4212 = vmatprep.subr.bf16.mxu0 0
        %4213 = vmatpush1.bf16.msra.mxu0 0
        %4214 = vmatprep.subr.bf16.mxu0 0
        %4215 = vmatpush1.bf16.msra.mxu0 0
        %4216 = vmatprep.subr.bf16.mxu0 0
        %4217 = vmatpush1.bf16.msra.mxu0 0
        %4218 = vmatprep.subr.bf16.mxu0 0
        %4219 = vmatpush1.bf16.msra.mxu0 0
        %4220 = vmatprep.subr.bf16.mxu0 0
        %4221 = vmatpush1.bf16.msra.mxu0 0
        %4222 = vmatprep.subr.bf16.mxu0 0
        %4223 = vmatpush1.bf16.msra.mxu0 0
        %4224 = vmatprep.subr.bf16.mxu0 0
        %4225 = vmatpush1.bf16.msra.mxu0 0
        %4226 = vmatprep.subr.bf16.mxu0 0
        %4227 = vmatpush1.bf16.msra.mxu0 0
        %4228 = vmatprep.subr.bf16.mxu0 0
        %4229 = vmatpush1.bf16.msra.mxu0 0
        %4230 = vmatprep.subr.bf16.mxu0 0
        %4231 = vmatpush1.bf16.msra.mxu0 0
        %4232 = vmatprep.subr.bf16.mxu0 0
        %4233 = vmatpush1.bf16.msra.mxu0 0
        %4234 = vmatprep.subr.bf16.mxu0 0
        %4235 = vmatpush1.bf16.msra.mxu0 0
        %4236 = vmatprep.subr.bf16.mxu0 0
        %4237 = vmatpush1.bf16.msra.mxu0 0
        %4238 = vmatprep.subr.bf16.mxu0 0
        %4239 = vmatpush1.bf16.msra.mxu0 0
        %4240 = vmatprep.mubr.bf16.mxu0 0
        %4241 = vmatmul.mubr.bf16.gmra.mrb[0].mxu0 %v2591
        %v4242 = vpop.f32.mrb[0].mxu0
        %v4243 = vadd.f32 %v2532, %v4242
        %v4244 = vpop.f32.mrb[0].mxu0
        %v4245 = vadd.f32 %v2532, %v4244
        %v4246 = vpop.f32.mrb[0].mxu0
        %v4247 = vadd.f32 %v2537, %v4246
        %v4248 = vpop.f32.mrb[0].mxu0
        %v4249 = vadd.f32 %v2537, %v4248
        %4250 = vmatprep.mubr.bf16.mxu0 0
        %4251 = vmatmul.mubr.bf16.gmra.mrb[0].mxu0 %v2594
        %v4252 = vpop.f32.mrb[0].mxu0
        %v4253 = vadd.f32 %v2542, %v4252
        %v4254 = vpop.f32.mrb[0].mxu0
        %v4255 = vadd.f32 %v2542, %v4254
        %v4256 = vpop.f32.mrb[0].mxu0
        %v4257 = vadd.f32 %v2547, %v4256
        %v4258 = vpop.f32.mrb[0].mxu0
        %v4259 = vadd.f32 %v2547, %v4258
        %4260 = vmatprep.mubr.bf16.mxu0 0
        %4261 = vmatmul.mubr.bf16.gmra.mrb[0].mxu0 %v2597
        %v4262 = vpop.f32.mrb[0].mxu0
        %v4263 = vadd.f32 %v2552, %v4262
        %v4264 = vpop.f32.mrb[0].mxu0
        %v4265 = vadd.f32 %v2552, %v4264
        %v4266 = vpop.f32.mrb[0].mxu0
        %v4267 = vadd.f32 %v2557, %v4266
        %v4268 = vpop.f32.mrb[0].mxu0
        %v4269 = vadd.f32 %v2557, %v4268
        %4270 = vmatprep.mubr.bf16.mxu0 0
        %4271 = vmatmul.mubr.bf16.gmra.mrb[0].mxu0 %v2600
        %v4272 = vpop.f32.mrb[0].mxu0
        %v4273 = vadd.f32 %v2562, %v4272
        %v4274 = vpop.f32.mrb[0].mxu0
        %v4275 = vadd.f32 %v2562, %v4274
        %v4276 = vpop.f32.mrb[0].mxu0
        %v4277 = vadd.f32 %v2567, %v4276
        %v4278 = vpop.f32.mrb[0].mxu0
        %v4279 = vadd.f32 %v2567, %v4278
        %4280 = vdwg.mxu0
        %4281 = vmatprep.subr.bf16.mxu0 %v2432
        %4282 = vmatpush1.bf16.msra.mxu0 %v2431
        %4283 = vmatprep.subr.bf16.mxu0 %v2496
        %4284 = vmatpush1.bf16.msra.mxu0 %v2495
        %4285 = vmatprep.subr.bf16.mxu0 0
        %4286 = vmatpush1.bf16.msra.mxu0 0
        %4287 = vmatprep.subr.bf16.mxu0 0
        %4288 = vmatpush1.bf16.msra.mxu0 0
        %4289 = vmatprep.subr.bf16.mxu0 0
        %4290 = vmatpush1.bf16.msra.mxu0 0
        %4291 = vmatprep.subr.bf16.mxu0 0
        %4292 = vmatpush1.bf16.msra.mxu0 0
        %4293 = vmatprep.subr.bf16.mxu0 0
        %4294 = vmatpush1.bf16.msra.mxu0 0
        %4295 = vmatprep.subr.bf16.mxu0 0
        %4296 = vmatpush1.bf16.msra.mxu0 0
        %4297 = vmatprep.subr.bf16.mxu0 0
        %4298 = vmatpush1.bf16.msra.mxu0 0
        %4299 = vmatprep.subr.bf16.mxu0 0
        %4300 = vmatpush1.bf16.msra.mxu0 0
        %4301 = vmatprep.subr.bf16.mxu0 0
        %4302 = vmatpush1.bf16.msra.mxu0 0
        %4303 = vmatprep.subr.bf16.mxu0 0
        %4304 = vmatpush1.bf16.msra.mxu0 0
        %4305 = vmatprep.subr.bf16.mxu0 0
        %4306 = vmatpush1.bf16.msra.mxu0 0
        %4307 = vmatprep.subr.bf16.mxu0 0
        %4308 = vmatpush1.bf16.msra.mxu0 0
        %4309 = vmatprep.subr.bf16.mxu0 0
        %4310 = vmatpush1.bf16.msra.mxu0 0
        %4311 = vmatprep.subr.bf16.mxu0 0
        %4312 = vmatpush1.bf16.msra.mxu0 0
        %4313 = vmatprep.mubr.bf16.mxu0 0
        %4314 = vmatmul.mubr.bf16.gmra.mrb[0].mxu0 %v2591
        %v4315 = vpop.f32.mrb[0].mxu0
        %v4316 = vadd.f32 %v2532, %v4315
        %v4317 = vpop.f32.mrb[0].mxu0
        %v4318 = vadd.f32 %v2532, %v4317
        %v4319 = vpop.f32.mrb[0].mxu0
        %v4320 = vadd.f32 %v2537, %v4319
        %v4321 = vpop.f32.mrb[0].mxu0
        %v4322 = vadd.f32 %v2537, %v4321
        %4323 = vmatprep.mubr.bf16.mxu0 0
        %4324 = vmatmul.mubr.bf16.gmra.mrb[0].mxu0 %v2594
        %v4325 = vpop.f32.mrb[0].mxu0
        %v4326 = vadd.f32 %v2542, %v4325
        %v4327 = vpop.f32.mrb[0].mxu0
        %v4328 = vadd.f32 %v2542, %v4327
        %v4329 = vpop.f32.mrb[0].mxu0
        %v4330 = vadd.f32 %v2547, %v4329
        %v4331 = vpop.f32.mrb[0].mxu0
        %v4332 = vadd.f32 %v2547, %v4331
        %4333 = vmatprep.mubr.bf16.mxu0 0
        %4334 = vmatmul.mubr.bf16.gmra.mrb[0].mxu0 %v2597
        %v4335 = vpop.f32.mrb[0].mxu0
        %v4336 = vadd.f32 %v2552, %v4335
        %v4337 = vpop.f32.mrb[0].mxu0
        %v4338 = vadd.f32 %v2552, %v4337
        %v4339 = vpop.f32.mrb[0].mxu0
        %v4340 = vadd.f32 %v2557, %v4339
        %v4341 = vpop.f32.mrb[0].mxu0
        %v4342 = vadd.f32 %v2557, %v4341
        %4343 = vmatprep.mubr.bf16.mxu0 0
        %4344 = vmatmul.mubr.bf16.gmra.mrb[0].mxu0 %v2600
        %v4345 = vpop.f32.mrb[0].mxu0
        %v4346 = vadd.f32 %v2562, %v4345
        %v4347 = vpop.f32.mrb[0].mxu0
        %v4348 = vadd.f32 %v2562, %v4347
        %v4349 = vpop.f32.mrb[0].mxu0
        %v4350 = vadd.f32 %v2567, %v4349
        %v4351 = vpop.f32.mrb[0].mxu0
        %v4352 = vadd.f32 %v2567, %v4351
        %4353 = vdwg.mxu0
        %4354 = vmatprep.subr.bf16.mxu0 %v2434
        %4355 = vmatpush1.bf16.msra.mxu0 %v2433
        %4356 = vmatprep.subr.bf16.mxu0 %v2498
        %4357 = vmatpush1.bf16.msra.mxu0 %v2497
        %4358 = vmatprep.subr.bf16.mxu0 0
        %4359 = vmatpush1.bf16.msra.mxu0 0
        %4360 = vmatprep.subr.bf16.mxu0 0
        %4361 = vmatpush1.bf16.msra.mxu0 0
        %4362 = vmatprep.subr.bf16.mxu0 0
        %4363 = vmatpush1.bf16.msra.mxu0 0
        %4364 = vmatprep.subr.bf16.mxu0 0
        %4365 = vmatpush1.bf16.msra.mxu0 0
        %4366 = vmatprep.subr.bf16.mxu0 0
        %4367 = vmatpush1.bf16.msra.mxu0 0
        %4368 = vmatprep.subr.bf16.mxu0 0
        %4369 = vmatpush1.bf16.msra.mxu0 0
        %4370 = vmatprep.subr.bf16.mxu0 0
        %4371 = vmatpush1.bf16.msra.mxu0 0
        %4372 = vmatprep.subr.bf16.mxu0 0
        %4373 = vmatpush1.bf16.msra.mxu0 0
        %4374 = vmatprep.subr.bf16.mxu0 0
        %4375 = vmatpush1.bf16.msra.mxu0 0
        %4376 = vmatprep.subr.bf16.mxu0 0
        %4377 = vmatpush1.bf16.msra.mxu0 0
        %4378 = vmatprep.subr.bf16.mxu0 0
        %4379 = vmatpush1.bf16.msra.mxu0 0
        %4380 = vmatprep.subr.bf16.mxu0 0
        %4381 = vmatpush1.bf16.msra.mxu0 0
        %4382 = vmatprep.subr.bf16.mxu0 0
        %4383 = vmatpush1.bf16.msra.mxu0 0
        %4384 = vmatprep.subr.bf16.mxu0 0
        %4385 = vmatpush1.bf16.msra.mxu0 0
        %4386 = vmatprep.mubr.bf16.mxu0 0
        %4387 = vmatmul.mubr.bf16.gmra.mrb[0].mxu0 %v2591
        %v4388 = vpop.f32.mrb[0].mxu0
        %v4389 = vadd.f32 %v2532, %v4388
        %v4390 = vpop.f32.mrb[0].mxu0
        %v4391 = vadd.f32 %v2532, %v4390
        %v4392 = vpop.f32.mrb[0].mxu0
        %v4393 = vadd.f32 %v2537, %v4392
        %v4394 = vpop.f32.mrb[0].mxu0
        %v4395 = vadd.f32 %v2537, %v4394
        %4396 = vmatprep.mubr.bf16.mxu0 0
        %4397 = vmatmul.mubr.bf16.gmra.mrb[0].mxu0 %v2594
        %v4398 = vpop.f32.mrb[0].mxu0
        %v4399 = vadd.f32 %v2542, %v4398
        %v4400 = vpop.f32.mrb[0].mxu0
        %v4401 = vadd.f32 %v2542, %v4400
        %v4402 = vpop.f32.mrb[0].mxu0
        %v4403 = vadd.f32 %v2547, %v4402
        %v4404 = vpop.f32.mrb[0].mxu0
        %v4405 = vadd.f32 %v2547, %v4404
        %4406 = vmatprep.mubr.bf16.mxu0 0
        %4407 = vmatmul.mubr.bf16.gmra.mrb[0].mxu0 %v2597
        %v4408 = vpop.f32.mrb[0].mxu0
        %v4409 = vadd.f32 %v2552, %v4408
        %v4410 = vpop.f32.mrb[0].mxu0
        %v4411 = vadd.f32 %v2552, %v4410
        %v4412 = vpop.f32.mrb[0].mxu0
        %v4413 = vadd.f32 %v2557, %v4412
        %v4414 = vpop.f32.mrb[0].mxu0
        %v4415 = vadd.f32 %v2557, %v4414
        %4416 = vmatprep.mubr.bf16.mxu0 0
        %4417 = vmatmul.mubr.bf16.gmra.mrb[0].mxu0 %v2600
        %v4418 = vpop.f32.mrb[0].mxu0
        %v4419 = vadd.f32 %v2562, %v4418
        %v4420 = vpop.f32.mrb[0].mxu0
        %v4421 = vadd.f32 %v2562, %v4420
        %v4422 = vpop.f32.mrb[0].mxu0
        %v4423 = vadd.f32 %v2567, %v4422
        %v4424 = vpop.f32.mrb[0].mxu0
        %v4425 = vadd.f32 %v2567, %v4424
        %4426 = vdwg.mxu0
        %4427 = vmatprep.subr.bf16.mxu0 %v2436
        %4428 = vmatpush1.bf16.msra.mxu0 %v2435
        %4429 = vmatprep.subr.bf16.mxu0 %v2500
        %4430 = vmatpush1.bf16.msra.mxu0 %v2499
        %4431 = vmatprep.subr.bf16.mxu0 0
        %4432 = vmatpush1.bf16.msra.mxu0 0
        %4433 = vmatprep.subr.bf16.mxu0 0
        %4434 = vmatpush1.bf16.msra.mxu0 0
        %4435 = vmatprep.subr.bf16.mxu0 0
        %4436 = vmatpush1.bf16.msra.mxu0 0
        %4437 = vmatprep.subr.bf16.mxu0 0
        %4438 = vmatpush1.bf16.msra.mxu0 0
        %4439 = vmatprep.subr.bf16.mxu0 0
        %4440 = vmatpush1.bf16.msra.mxu0 0
        %4441 = vmatprep.subr.bf16.mxu0 0
        %4442 = vmatpush1.bf16.msra.mxu0 0
        %4443 = vmatprep.subr.bf16.mxu0 0
        %4444 = vmatpush1.bf16.msra.mxu0 0
        %4445 = vmatprep.subr.bf16.mxu0 0
        %4446 = vmatpush1.bf16.msra.mxu0 0
        %4447 = vmatprep.subr.bf16.mxu0 0
        %4448 = vmatpush1.bf16.msra.mxu0 0
        %4449 = vmatprep.subr.bf16.mxu0 0
        %4450 = vmatpush1.bf16.msra.mxu0 0
        %4451 = vmatprep.subr.bf16.mxu0 0
        %4452 = vmatpush1.bf16.msra.mxu0 0
        %4453 = vmatprep.subr.bf16.mxu0 0
        %4454 = vmatpush1.bf16.msra.mxu0 0
        %4455 = vmatprep.subr.bf16.mxu0 0
        %4456 = vmatpush1.bf16.msra.mxu0 0
        %4457 = vmatprep.subr.bf16.mxu0 0
        %4458 = vmatpush1.bf16.msra.mxu0 0
        %4459 = vmatprep.mubr.bf16.mxu0 0
        %4460 = vmatmul.mubr.bf16.gmra.mrb[0].mxu0 %v2591
        %v4461 = vpop.f32.mrb[0].mxu0
        %v4462 = vadd.f32 %v2532, %v4461
        %v4463 = vpop.f32.mrb[0].mxu0
        %v4464 = vadd.f32 %v2532, %v4463
        %v4465 = vpop.f32.mrb[0].mxu0
        %v4466 = vadd.f32 %v2537, %v4465
        %v4467 = vpop.f32.mrb[0].mxu0
        %v4468 = vadd.f32 %v2537, %v4467
        %4469 = vmatprep.mubr.bf16.mxu0 0
        %4470 = vmatmul.mubr.bf16.gmra.mrb[0].mxu0 %v2594
        %v4471 = vpop.f32.mrb[0].mxu0
        %v4472 = vadd.f32 %v2542, %v4471
        %v4473 = vpop.f32.mrb[0].mxu0
        %v4474 = vadd.f32 %v2542, %v4473
        %v4475 = vpop.f32.mrb[0].mxu0
        %v4476 = vadd.f32 %v2547, %v4475
        %v4477 = vpop.f32.mrb[0].mxu0
        %v4478 = vadd.f32 %v2547, %v4477
        %4479 = vmatprep.mubr.bf16.mxu0 0
        %4480 = vmatmul.mubr.bf16.gmra.mrb[0].mxu0 %v2597
        %v4481 = vpop.f32.mrb[0].mxu0
        %v4482 = vadd.f32 %v2552, %v4481
        %v4483 = vpop.f32.mrb[0].mxu0
        %v4484 = vadd.f32 %v2552, %v4483
        %v4485 = vpop.f32.mrb[0].mxu0
        %v4486 = vadd.f32 %v2557, %v4485
        %v4487 = vpop.f32.mrb[0].mxu0
        %v4488 = vadd.f32 %v2557, %v4487
        %4489 = vmatprep.mubr.bf16.mxu0 0
        %4490 = vmatmul.mubr.bf16.gmra.mrb[0].mxu0 %v2600
        %v4491 = vpop.f32.mrb[0].mxu0
        %v4492 = vadd.f32 %v2562, %v4491
        %v4493 = vpop.f32.mrb[0].mxu0
        %v4494 = vadd.f32 %v2562, %v4493
        %v4495 = vpop.f32.mrb[0].mxu0
        %v4496 = vadd.f32 %v2567, %v4495
        %v4497 = vpop.f32.mrb[0].mxu0
        %v4498 = vadd.f32 %v2567, %v4497
        %4499 = vdwg.mxu0
        %4500 = vmatprep.subr.bf16.mxu0 %v2438
        %4501 = vmatpush1.bf16.msra.mxu0 %v2437
        %4502 = vmatprep.subr.bf16.mxu0 %v2502
        %4503 = vmatpush1.bf16.msra.mxu0 %v2501
        %4504 = vmatprep.subr.bf16.mxu0 0
        %4505 = vmatpush1.bf16.msra.mxu0 0
        %4506 = vmatprep.subr.bf16.mxu0 0
        %4507 = vmatpush1.bf16.msra.mxu0 0
        %4508 = vmatprep.subr.bf16.mxu0 0
        %4509 = vmatpush1.bf16.msra.mxu0 0
        %4510 = vmatprep.subr.bf16.mxu0 0
        %4511 = vmatpush1.bf16.msra.mxu0 0
        %4512 = vmatprep.subr.bf16.mxu0 0
        %4513 = vmatpush1.bf16.msra.mxu0 0
        %4514 = vmatprep.subr.bf16.mxu0 0
        %4515 = vmatpush1.bf16.msra.mxu0 0
        %4516 = vmatprep.subr.bf16.mxu0 0
        %4517 = vmatpush1.bf16.msra.mxu0 0
        %4518 = vmatprep.subr.bf16.mxu0 0
        %4519 = vmatpush1.bf16.msra.mxu0 0
        %4520 = vmatprep.subr.bf16.mxu0 0
        %4521 = vmatpush1.bf16.msra.mxu0 0
        %4522 = vmatprep.subr.bf16.mxu0 0
        %4523 = vmatpush1.bf16.msra.mxu0 0
        %4524 = vmatprep.subr.bf16.mxu0 0
        %4525 = vmatpush1.bf16.msra.mxu0 0
        %4526 = vmatprep.subr.bf16.mxu0 0
        %4527 = vmatpush1.bf16.msra.mxu0 0
        %4528 = vmatprep.subr.bf16.mxu0 0
        %4529 = vmatpush1.bf16.msra.mxu0 0
        %4530 = vmatprep.subr.bf16.mxu0 0
        %4531 = vmatpush1.bf16.msra.mxu0 0
        %4532 = vmatprep.mubr.bf16.mxu0 0
        %4533 = vmatmul.mubr.bf16.gmra.mrb[0].mxu0 %v2591
        %v4534 = vpop.f32.mrb[0].mxu0
        %v4535 = vadd.f32 %v2532, %v4534
        %v4536 = vpop.f32.mrb[0].mxu0
        %v4537 = vadd.f32 %v2532, %v4536
        %v4538 = vpop.f32.mrb[0].mxu0
        %v4539 = vadd.f32 %v2537, %v4538
        %v4540 = vpop.f32.mrb[0].mxu0
        %v4541 = vadd.f32 %v2537, %v4540
        %4542 = vmatprep.mubr.bf16.mxu0 0
        %4543 = vmatmul.mubr.bf16.gmra.mrb[0].mxu0 %v2594
        %v4544 = vpop.f32.mrb[0].mxu0
        %v4545 = vadd.f32 %v2542, %v4544
        %v4546 = vpop.f32.mrb[0].mxu0
        %v4547 = vadd.f32 %v2542, %v4546
        %v4548 = vpop.f32.mrb[0].mxu0
        %v4549 = vadd.f32 %v2547, %v4548
        %v4550 = vpop.f32.mrb[0].mxu0
        %v4551 = vadd.f32 %v2547, %v4550
        %4552 = vmatprep.mubr.bf16.mxu0 0
        %4553 = vmatmul.mubr.bf16.gmra.mrb[0].mxu0 %v2597
        %v4554 = vpop.f32.mrb[0].mxu0
        %v4555 = vadd.f32 %v2552, %v4554
        %v4556 = vpop.f32.mrb[0].mxu0
        %v4557 = vadd.f32 %v2552, %v4556
        %v4558 = vpop.f32.mrb[0].mxu0
        %v4559 = vadd.f32 %v2557, %v4558
        %v4560 = vpop.f32.mrb[0].mxu0
        %v4561 = vadd.f32 %v2557, %v4560
        %4562 = vmatprep.mubr.bf16.mxu0 0
        %4563 = vmatmul.mubr.bf16.gmra.mrb[0].mxu0 %v2600
        %v4564 = vpop.f32.mrb[0].mxu0
        %v4565 = vadd.f32 %v2562, %v4564
        %v4566 = vpop.f32.mrb[0].mxu0
        %v4567 = vadd.f32 %v2562, %v4566
        %v4568 = vpop.f32.mrb[0].mxu0
        %v4569 = vadd.f32 %v2567, %v4568
        %v4570 = vpop.f32.mrb[0].mxu0
        %v4571 = vadd.f32 %v2567, %v4570
        %4572 = vdwg.mxu0
        %4573 = vmatprep.subr.bf16.mxu0 %v2440
        %4574 = vmatpush1.bf16.msra.mxu0 %v2439
        %4575 = vmatprep.subr.bf16.mxu0 %v2504
        %4576 = vmatpush1.bf16.msra.mxu0 %v2503
        %4577 = vmatprep.subr.bf16.mxu0 0
        %4578 = vmatpush1.bf16.msra.mxu0 0
        %4579 = vmatprep.subr.bf16.mxu0 0
        %4580 = vmatpush1.bf16.msra.mxu0 0
        %4581 = vmatprep.subr.bf16.mxu0 0
        %4582 = vmatpush1.bf16.msra.mxu0 0
        %4583 = vmatprep.subr.bf16.mxu0 0
        %4584 = vmatpush1.bf16.msra.mxu0 0
        %4585 = vmatprep.subr.bf16.mxu0 0
        %4586 = vmatpush1.bf16.msra.mxu0 0
        %4587 = vmatprep.subr.bf16.mxu0 0
        %4588 = vmatpush1.bf16.msra.mxu0 0
        %4589 = vmatprep.subr.bf16.mxu0 0
        %4590 = vmatpush1.bf16.msra.mxu0 0
        %4591 = vmatprep.subr.bf16.mxu0 0
        %4592 = vmatpush1.bf16.msra.mxu0 0
        %4593 = vmatprep.subr.bf16.mxu0 0
        %4594 = vmatpush1.bf16.msra.mxu0 0
        %4595 = vmatprep.subr.bf16.mxu0 0
        %4596 = vmatpush1.bf16.msra.mxu0 0
        %4597 = vmatprep.subr.bf16.mxu0 0
        %4598 = vmatpush1.bf16.msra.mxu0 0
        %4599 = vmatprep.subr.bf16.mxu0 0
        %4600 = vmatpush1.bf16.msra.mxu0 0
        %4601 = vmatprep.subr.bf16.mxu0 0
        %4602 = vmatpush1.bf16.msra.mxu0 0
        %4603 = vmatprep.subr.bf16.mxu0 0
        %4604 = vmatpush1.bf16.msra.mxu0 0
        %4605 = vmatprep.mubr.bf16.mxu0 0
        %4606 = vmatmul.mubr.bf16.gmra.mrb[0].mxu0 %v2591
        %v4607 = vpop.f32.mrb[0].mxu0
        %v4608 = vadd.f32 %v2532, %v4607
        %v4609 = vpop.f32.mrb[0].mxu0
        %v4610 = vadd.f32 %v2532, %v4609
        %v4611 = vpop.f32.mrb[0].mxu0
        %v4612 = vadd.f32 %v2537, %v4611
        %v4613 = vpop.f32.mrb[0].mxu0
        %v4614 = vadd.f32 %v2537, %v4613
        %4615 = vmatprep.mubr.bf16.mxu0 0
        %4616 = vmatmul.mubr.bf16.gmra.mrb[0].mxu0 %v2594
        %v4617 = vpop.f32.mrb[0].mxu0
        %v4618 = vadd.f32 %v2542, %v4617
        %v4619 = vpop.f32.mrb[0].mxu0
        %v4620 = vadd.f32 %v2542, %v4619
        %v4621 = vpop.f32.mrb[0].mxu0
        %v4622 = vadd.f32 %v2547, %v4621
        %v4623 = vpop.f32.mrb[0].mxu0
        %v4624 = vadd.f32 %v2547, %v4623
        %4625 = vmatprep.mubr.bf16.mxu0 0
        %4626 = vmatmul.mubr.bf16.gmra.mrb[0].mxu0 %v2597
        %v4627 = vpop.f32.mrb[0].mxu0
        %v4628 = vadd.f32 %v2552, %v4627
        %v4629 = vpop.f32.mrb[0].mxu0
        %v4630 = vadd.f32 %v2552, %v4629
        %v4631 = vpop.f32.mrb[0].mxu0
        %v4632 = vadd.f32 %v2557, %v4631
        %v4633 = vpop.f32.mrb[0].mxu0
        %v4634 = vadd.f32 %v2557, %v4633
        %4635 = vmatprep.mubr.bf16.mxu0 0
        %4636 = vmatmul.mubr.bf16.gmra.mrb[0].mxu0 %v2600
        %v4637 = vpop.f32.mrb[0].mxu0
        %v4638 = vadd.f32 %v2562, %v4637
        %v4639 = vpop.f32.mrb[0].mxu0
        %v4640 = vadd.f32 %v2562, %v4639
        %v4641 = vpop.f32.mrb[0].mxu0
        %v4642 = vadd.f32 %v2567, %v4641
        %v4643 = vpop.f32.mrb[0].mxu0
        %v4644 = vadd.f32 %v2567, %v4643
        %4645 = vdwg.mxu0
        %4646 = vmatprep.subr.bf16.mxu0 %v2442
        %4647 = vmatpush1.bf16.msra.mxu0 %v2441
        %4648 = vmatprep.subr.bf16.mxu0 %v2506
        %4649 = vmatpush1.bf16.msra.mxu0 %v2505
        %4650 = vmatprep.subr.bf16.mxu0 0
        %4651 = vmatpush1.bf16.msra.mxu0 0
        %4652 = vmatprep.subr.bf16.mxu0 0
        %4653 = vmatpush1.bf16.msra.mxu0 0
        %4654 = vmatprep.subr.bf16.mxu0 0
        %4655 = vmatpush1.bf16.msra.mxu0 0
        %4656 = vmatprep.subr.bf16.mxu0 0
        %4657 = vmatpush1.bf16.msra.mxu0 0
        %4658 = vmatprep.subr.bf16.mxu0 0
        %4659 = vmatpush1.bf16.msra.mxu0 0
        %4660 = vmatprep.subr.bf16.mxu0 0
        %4661 = vmatpush1.bf16.msra.mxu0 0
        %4662 = vmatprep.subr.bf16.mxu0 0
        %4663 = vmatpush1.bf16.msra.mxu0 0
        %4664 = vmatprep.subr.bf16.mxu0 0
        %4665 = vmatpush1.bf16.msra.mxu0 0
        %4666 = vmatprep.subr.bf16.mxu0 0
        %4667 = vmatpush1.bf16.msra.mxu0 0
        %4668 = vmatprep.subr.bf16.mxu0 0
        %4669 = vmatpush1.bf16.msra.mxu0 0
        %4670 = vmatprep.subr.bf16.mxu0 0
        %4671 = vmatpush1.bf16.msra.mxu0 0
        %4672 = vmatprep.subr.bf16.mxu0 0
        %4673 = vmatpush1.bf16.msra.mxu0 0
        %4674 = vmatprep.subr.bf16.mxu0 0
        %4675 = vmatpush1.bf16.msra.mxu0 0
        %4676 = vmatprep.subr.bf16.mxu0 0
        %4677 = vmatpush1.bf16.msra.mxu0 0
        %4678 = vmatprep.mubr.bf16.mxu0 0
        %4679 = vmatmul.mubr.bf16.gmra.mrb[0].mxu0 %v2591
        %v4680 = vpop.f32.mrb[0].mxu0
        %v4681 = vadd.f32 %v2532, %v4680
        %v4682 = vpop.f32.mrb[0].mxu0
        %v4683 = vadd.f32 %v2532, %v4682
        %v4684 = vpop.f32.mrb[0].mxu0
        %v4685 = vadd.f32 %v2537, %v4684
        %v4686 = vpop.f32.mrb[0].mxu0
        %v4687 = vadd.f32 %v2537, %v4686
        %4688 = vmatprep.mubr.bf16.mxu0 0
        %4689 = vmatmul.mubr.bf16.gmra.mrb[0].mxu0 %v2594
        %v4690 = vpop.f32.mrb[0].mxu0
        %v4691 = vadd.f32 %v2542, %v4690
        %v4692 = vpop.f32.mrb[0].mxu0
        %v4693 = vadd.f32 %v2542, %v4692
        %v4694 = vpop.f32.mrb[0].mxu0
        %v4695 = vadd.f32 %v2547, %v4694
        %v4696 = vpop.f32.mrb[0].mxu0
        %v4697 = vadd.f32 %v2547, %v4696
        %4698 = vmatprep.mubr.bf16.mxu0 0
        %4699 = vmatmul.mubr.bf16.gmra.mrb[0].mxu0 %v2597
        %v4700 = vpop.f32.mrb[0].mxu0
        %v4701 = vadd.f32 %v2552, %v4700
        %v4702 = vpop.f32.mrb[0].mxu0
        %v4703 = vadd.f32 %v2552, %v4702
        %v4704 = vpop.f32.mrb[0].mxu0
        %v4705 = vadd.f32 %v2557, %v4704
        %v4706 = vpop.f32.mrb[0].mxu0
        %v4707 = vadd.f32 %v2557, %v4706
        %4708 = vmatprep.mubr.bf16.mxu0 0
        %4709 = vmatmul.mubr.bf16.gmra.mrb[0].mxu0 %v2600
        %v4710 = vpop.f32.mrb[0].mxu0
        %v4711 = vadd.f32 %v2562, %v4710
        %v4712 = vpop.f32.mrb[0].mxu0
        %v4713 = vadd.f32 %v2562, %v4712
        %v4714 = vpop.f32.mrb[0].mxu0
        %v4715 = vadd.f32 %v2567, %v4714
        %v4716 = vpop.f32.mrb[0].mxu0
        %v4717 = vadd.f32 %v2567, %v4716
        %4718 = vdwg.mxu0
        %4719 = vmatprep.subr.bf16.mxu0 %v2444
        %4720 = vmatpush1.bf16.msra.mxu0 %v2443
        %4721 = vmatprep.subr.bf16.mxu0 %v2508
        %4722 = vmatpush1.bf16.msra.mxu0 %v2507
        %4723 = vmatprep.subr.bf16.mxu0 0
        %4724 = vmatpush1.bf16.msra.mxu0 0
        %4725 = vmatprep.subr.bf16.mxu0 0
        %4726 = vmatpush1.bf16.msra.mxu0 0
        %4727 = vmatprep.subr.bf16.mxu0 0
        %4728 = vmatpush1.bf16.msra.mxu0 0
        %4729 = vmatprep.subr.bf16.mxu0 0
        %4730 = vmatpush1.bf16.msra.mxu0 0
        %4731 = vmatprep.subr.bf16.mxu0 0
        %4732 = vmatpush1.bf16.msra.mxu0 0
        %4733 = vmatprep.subr.bf16.mxu0 0
        %4734 = vmatpush1.bf16.msra.mxu0 0
        %4735 = vmatprep.subr.bf16.mxu0 0
        %4736 = vmatpush1.bf16.msra.mxu0 0
        %4737 = vmatprep.subr.bf16.mxu0 0
        %4738 = vmatpush1.bf16.msra.mxu0 0
        %4739 = vmatprep.subr.bf16.mxu0 0
        %4740 = vmatpush1.bf16.msra.mxu0 0
        %4741 = vmatprep.subr.bf16.mxu0 0
        %4742 = vmatpush1.bf16.msra.mxu0 0
        %4743 = vmatprep.subr.bf16.mxu0 0
        %4744 = vmatpush1.bf16.msra.mxu0 0
        %4745 = vmatprep.subr.bf16.mxu0 0
        %4746 = vmatpush1.bf16.msra.mxu0 0
        %4747 = vmatprep.subr.bf16.mxu0 0
        %4748 = vmatpush1.bf16.msra.mxu0 0
        %4749 = vmatprep.subr.bf16.mxu0 0
        %4750 = vmatpush1.bf16.msra.mxu0 0
        %4751 = vmatprep.mubr.bf16.mxu0 0
        %4752 = vmatmul.mubr.bf16.gmra.mrb[0].mxu0 %v2591
        %v4753 = vpop.f32.mrb[0].mxu0
        %v4754 = vadd.f32 %v2532, %v4753
        %v4755 = vpop.f32.mrb[0].mxu0
        %v4756 = vadd.f32 %v2532, %v4755
        %v4757 = vpop.f32.mrb[0].mxu0
        %v4758 = vadd.f32 %v2537, %v4757
        %v4759 = vpop.f32.mrb[0].mxu0
        %v4760 = vadd.f32 %v2537, %v4759
        %4761 = vmatprep.mubr.bf16.mxu0 0
        %4762 = vmatmul.mubr.bf16.gmra.mrb[0].mxu0 %v2594
        %v4763 = vpop.f32.mrb[0].mxu0
        %v4764 = vadd.f32 %v2542, %v4763
        %v4765 = vpop.f32.mrb[0].mxu0
        %v4766 = vadd.f32 %v2542, %v4765
        %v4767 = vpop.f32.mrb[0].mxu0
        %v4768 = vadd.f32 %v2547, %v4767
        %v4769 = vpop.f32.mrb[0].mxu0
        %v4770 = vadd.f32 %v2547, %v4769
        %4771 = vmatprep.mubr.bf16.mxu0 0
        %4772 = vmatmul.mubr.bf16.gmra.mrb[0].mxu0 %v2597
        %v4773 = vpop.f32.mrb[0].mxu0
        %v4774 = vadd.f32 %v2552, %v4773
        %v4775 = vpop.f32.mrb[0].mxu0
        %v4776 = vadd.f32 %v2552, %v4775
        %v4777 = vpop.f32.mrb[0].mxu0
        %v4778 = vadd.f32 %v2557, %v4777
        %v4779 = vpop.f32.mrb[0].mxu0
        %v4780 = vadd.f32 %v2557, %v4779
        %4781 = vmatprep.mubr.bf16.mxu0 0
        %4782 = vmatmul.mubr.bf16.gmra.mrb[0].mxu0 %v2600
        %v4783 = vpop.f32.mrb[0].mxu0
        %v4784 = vadd.f32 %v2562, %v4783
        %v4785 = vpop.f32.mrb[0].mxu0
        %v4786 = vadd.f32 %v2562, %v4785
        %v4787 = vpop.f32.mrb[0].mxu0
        %v4788 = vadd.f32 %v2567, %v4787
        %v4789 = vpop.f32.mrb[0].mxu0
        %v4790 = vadd.f32 %v2567, %v4789
        %4791 = vdwg.mxu0
        %4792 = vmatprep.subr.bf16.mxu0 %v2446
        %4793 = vmatpush1.bf16.msra.mxu0 %v2445
        %4794 = vmatprep.subr.bf16.mxu0 %v2510
        %4795 = vmatpush1.bf16.msra.mxu0 %v2509
        %4796 = vmatprep.subr.bf16.mxu0 0
        %4797 = vmatpush1.bf16.msra.mxu0 0
        %4798 = vmatprep.subr.bf16.mxu0 0
        %4799 = vmatpush1.bf16.msra.mxu0 0
        %4800 = vmatprep.subr.bf16.mxu0 0
        %4801 = vmatpush1.bf16.msra.mxu0 0
        %4802 = vmatprep.subr.bf16.mxu0 0
        %4803 = vmatpush1.bf16.msra.mxu0 0
        %4804 = vmatprep.subr.bf16.mxu0 0
        %4805 = vmatpush1.bf16.msra.mxu0 0
        %4806 = vmatprep.subr.bf16.mxu0 0
        %4807 = vmatpush1.bf16.msra.mxu0 0
        %4808 = vmatprep.subr.bf16.mxu0 0
        %4809 = vmatpush1.bf16.msra.mxu0 0
        %4810 = vmatprep.subr.bf16.mxu0 0
        %4811 = vmatpush1.bf16.msra.mxu0 0
        %4812 = vmatprep.subr.bf16.mxu0 0
        %4813 = vmatpush1.bf16.msra.mxu0 0
        %4814 = vmatprep.subr.bf16.mxu0 0
        %4815 = vmatpush1.bf16.msra.mxu0 0
        %4816 = vmatprep.subr.bf16.mxu0 0
        %4817 = vmatpush1.bf16.msra.mxu0 0
        %4818 = vmatprep.subr.bf16.mxu0 0
        %4819 = vmatpush1.bf16.msra.mxu0 0
        %4820 = vmatprep.subr.bf16.mxu0 0
        %4821 = vmatpush1.bf16.msra.mxu0 0
        %4822 = vmatprep.subr.bf16.mxu0 0
        %4823 = vmatpush1.bf16.msra.mxu0 0
        %4824 = vmatprep.mubr.bf16.mxu0 0
        %4825 = vmatmul.mubr.bf16.gmra.mrb[0].mxu0 %v2591
        %v4826 = vpop.f32.mrb[0].mxu0
        %v4827 = vadd.f32 %v2532, %v4826
        %v4828 = vpop.f32.mrb[0].mxu0
        %v4829 = vadd.f32 %v2532, %v4828
        %v4830 = vpop.f32.mrb[0].mxu0
        %v4831 = vadd.f32 %v2537, %v4830
        %v4832 = vpop.f32.mrb[0].mxu0
        %v4833 = vadd.f32 %v2537, %v4832
        %4834 = vmatprep.mubr.bf16.mxu0 0
        %4835 = vmatmul.mubr.bf16.gmra.mrb[0].mxu0 %v2594
        %v4836 = vpop.f32.mrb[0].mxu0
        %v4837 = vadd.f32 %v2542, %v4836
        %v4838 = vpop.f32.mrb[0].mxu0
        %v4839 = vadd.f32 %v2542, %v4838
        %v4840 = vpop.f32.mrb[0].mxu0
        %v4841 = vadd.f32 %v2547, %v4840
        %v4842 = vpop.f32.mrb[0].mxu0
        %v4843 = vadd.f32 %v2547, %v4842
        %4844 = vmatprep.mubr.bf16.mxu0 0
        %4845 = vmatmul.mubr.bf16.gmra.mrb[0].mxu0 %v2597
        %v4846 = vpop.f32.mrb[0].mxu0
        %v4847 = vadd.f32 %v2552, %v4846
        %v4848 = vpop.f32.mrb[0].mxu0
        %v4849 = vadd.f32 %v2552, %v4848
        %v4850 = vpop.f32.mrb[0].mxu0
        %v4851 = vadd.f32 %v2557, %v4850
        %v4852 = vpop.f32.mrb[0].mxu0
        %v4853 = vadd.f32 %v2557, %v4852
        %4854 = vmatprep.mubr.bf16.mxu0 0
        %4855 = vmatmul.mubr.bf16.gmra.mrb[0].mxu0 %v2600
        %v4856 = vpop.f32.mrb[0].mxu0
        %v4857 = vadd.f32 %v2562, %v4856
        %v4858 = vpop.f32.mrb[0].mxu0
        %v4859 = vadd.f32 %v2562, %v4858
        %v4860 = vpop.f32.mrb[0].mxu0
        %v4861 = vadd.f32 %v2567, %v4860
        %v4862 = vpop.f32.mrb[0].mxu0
        %v4863 = vadd.f32 %v2567, %v4862
        %4864 = vdwg.mxu0
        %4865 = vmatprep.subr.bf16.mxu0 %v2448
        %4866 = vmatpush1.bf16.msra.mxu0 %v2447
        %4867 = vmatprep.subr.bf16.mxu0 %v2512
        %4868 = vmatpush1.bf16.msra.mxu0 %v2511
        %4869 = vmatprep.subr.bf16.mxu0 0
        %4870 = vmatpush1.bf16.msra.mxu0 0
        %4871 = vmatprep.subr.bf16.mxu0 0
        %4872 = vmatpush1.bf16.msra.mxu0 0
        %4873 = vmatprep.subr.bf16.mxu0 0
        %4874 = vmatpush1.bf16.msra.mxu0 0
        %4875 = vmatprep.subr.bf16.mxu0 0
        %4876 = vmatpush1.bf16.msra.mxu0 0
        %4877 = vmatprep.subr.bf16.mxu0 0
        %4878 = vmatpush1.bf16.msra.mxu0 0
        %4879 = vmatprep.subr.bf16.mxu0 0
        %4880 = vmatpush1.bf16.msra.mxu0 0
        %4881 = vmatprep.subr.bf16.mxu0 0
        %4882 = vmatpush1.bf16.msra.mxu0 0
        %4883 = vmatprep.subr.bf16.mxu0 0
        %4884 = vmatpush1.bf16.msra.mxu0 0
        %4885 = vmatprep.subr.bf16.mxu0 0
        %4886 = vmatpush1.bf16.msra.mxu0 0
        %4887 = vmatprep.subr.bf16.mxu0 0
        %4888 = vmatpush1.bf16.msra.mxu0 0
        %4889 = vmatprep.subr.bf16.mxu0 0
        %4890 = vmatpush1.bf16.msra.mxu0 0
        %4891 = vmatprep.subr.bf16.mxu0 0
        %4892 = vmatpush1.bf16.msra.mxu0 0
        %4893 = vmatprep.subr.bf16.mxu0 0
        %4894 = vmatpush1.bf16.msra.mxu0 0
        %4895 = vmatprep.subr.bf16.mxu0 0
        %4896 = vmatpush1.bf16.msra.mxu0 0
        %4897 = vmatprep.mubr.bf16.mxu0 0
        %4898 = vmatmul.mubr.bf16.gmra.mrb[0].mxu0 %v2591
        %v4899 = vpop.f32.mrb[0].mxu0
        %v4900 = vadd.f32 %v2532, %v4899
        %v4901 = vpop.f32.mrb[0].mxu0
        %v4902 = vadd.f32 %v2532, %v4901
        %v4903 = vpop.f32.mrb[0].mxu0
        %v4904 = vadd.f32 %v2537, %v4903
        %v4905 = vpop.f32.mrb[0].mxu0
        %v4906 = vadd.f32 %v2537, %v4905
        %4907 = vmatprep.mubr.bf16.mxu0 0
        %4908 = vmatmul.mubr.bf16.gmra.mrb[0].mxu0 %v2594
        %v4909 = vpop.f32.mrb[0].mxu0
        %v4910 = vadd.f32 %v2542, %v4909
        %v4911 = vpop.f32.mrb[0].mxu0
        %v4912 = vadd.f32 %v2542, %v4911
        %v4913 = vpop.f32.mrb[0].mxu0
        %v4914 = vadd.f32 %v2547, %v4913
        %v4915 = vpop.f32.mrb[0].mxu0
        %v4916 = vadd.f32 %v2547, %v4915
        %4917 = vmatprep.mubr.bf16.mxu0 0
        %4918 = vmatmul.mubr.bf16.gmra.mrb[0].mxu0 %v2597
        %v4919 = vpop.f32.mrb[0].mxu0
        %v4920 = vadd.f32 %v2552, %v4919
        %v4921 = vpop.f32.mrb[0].mxu0
        %v4922 = vadd.f32 %v2552, %v4921
        %v4923 = vpop.f32.mrb[0].mxu0
        %v4924 = vadd.f32 %v2557, %v4923
        %v4925 = vpop.f32.mrb[0].mxu0
        %v4926 = vadd.f32 %v2557, %v4925
        %4927 = vmatprep.mubr.bf16.mxu0 0
        %4928 = vmatmul.mubr.bf16.gmra.mrb[0].mxu0 %v2600
        %v4929 = vpop.f32.mrb[0].mxu0
        %v4930 = vadd.f32 %v2562, %v4929
        %v4931 = vpop.f32.mrb[0].mxu0
        %v4932 = vadd.f32 %v2562, %v4931
        %v4933 = vpop.f32.mrb[0].mxu0
        %v4934 = vadd.f32 %v2567, %v4933
        %v4935 = vpop.f32.mrb[0].mxu0
        %v4936 = vadd.f32 %v2567, %v4935
        %4937 = vdwg.mxu0
        %v4938 = vmax.f32 %v2637, 0.0
        %v4939 = vmax.f32 %v2639, 0.0
        %v4940 = vmax.f32 %v2710, 0.0
        %v4941 = vmax.f32 %v2712, 0.0
        %v4942 = vmax.f32 %v2783, 0.0
        %v4943 = vmax.f32 %v2785, 0.0
        %v4944 = vmax.f32 %v2856, 0.0
        %v4945 = vmax.f32 %v2858, 0.0
        %v4946 = vmax.f32 %v2929, 0.0
        %v4947 = vmax.f32 %v2931, 0.0
        %v4948 = vmax.f32 %v3002, 0.0
        %v4949 = vmax.f32 %v3004, 0.0
        %v4950 = vmax.f32 %v3075, 0.0
        %v4951 = vmax.f32 %v3077, 0.0
        %v4952 = vmax.f32 %v3148, 0.0
        %v4953 = vmax.f32 %v3150, 0.0
        %v4954 = vmax.f32 %v3221, 0.0
        %v4955 = vmax.f32 %v3223, 0.0
        %v4956 = vmax.f32 %v3294, 0.0
        %v4957 = vmax.f32 %v3296, 0.0
        %v4958 = vmax.f32 %v3367, 0.0
        %v4959 = vmax.f32 %v3369, 0.0
        %v4960 = vmax.f32 %v3440, 0.0
        %v4961 = vmax.f32 %v3442, 0.0
        %v4962 = vmax.f32 %v3513, 0.0
        %v4963 = vmax.f32 %v3515, 0.0
        %v4964 = vmax.f32 %v3586, 0.0
        %v4965 = vmax.f32 %v3588, 0.0
        %v4966 = vmax.f32 %v3659, 0.0
        %v4967 = vmax.f32 %v3661, 0.0
        %v4968 = vmax.f32 %v3732, 0.0
        %v4969 = vmax.f32 %v3734, 0.0
        %v4970 = vmax.f32 %v3805, 0.0
        %v4971 = vmax.f32 %v3807, 0.0
        %v4972 = vmax.f32 %v3878, 0.0
        %v4973 = vmax.f32 %v3880, 0.0
        %v4974 = vmax.f32 %v3951, 0.0
        %v4975 = vmax.f32 %v3953, 0.0
        %v4976 = vmax.f32 %v4024, 0.0
        %v4977 = vmax.f32 %v4026, 0.0
        %v4978 = vmax.f32 %v4097, 0.0
        %v4979 = vmax.f32 %v4099, 0.0
        %v4980 = vmax.f32 %v4170, 0.0
        %v4981 = vmax.f32 %v4172, 0.0
        %v4982 = vmax.f32 %v4243, 0.0
        %v4983 = vmax.f32 %v4245, 0.0
        %v4984 = vmax.f32 %v4316, 0.0
        %v4985 = vmax.f32 %v4318, 0.0
        %v4986 = vmax.f32 %v4389, 0.0
        %v4987 = vmax.f32 %v4391, 0.0
        %v4988 = vmax.f32 %v4462, 0.0
        %v4989 = vmax.f32 %v4464, 0.0
        %v4990 = vmax.f32 %v4535, 0.0
        %v4991 = vmax.f32 %v4537, 0.0
        %v4992 = vmax.f32 %v4608, 0.0
        %v4993 = vmax.f32 %v4610, 0.0
        %v4994 = vmax.f32 %v4681, 0.0
        %v4995 = vmax.f32 %v4683, 0.0
        %v4996 = vmax.f32 %v4754, 0.0
        %v4997 = vmax.f32 %v4756, 0.0
        %v4998 = vmax.f32 %v4827, 0.0
        %v4999 = vmax.f32 %v4829, 0.0
        %v5000 = vmax.f32 %v4900, 0.0
        %v5001 = vmax.f32 %v4902, 0.0
        %v5002 = vmax.f32 %v2641, 0.0
        %v5003 = vmax.f32 %v2643, 0.0
        %v5004 = vmax.f32 %v2714, 0.0
        %v5005 = vmax.f32 %v2716, 0.0
        %v5006 = vmax.f32 %v2787, 0.0
        %v5007 = vmax.f32 %v2789, 0.0
        %v5008 = vmax.f32 %v2860, 0.0
        %v5009 = vmax.f32 %v2862, 0.0
        %v5010 = vmax.f32 %v2933, 0.0
        %v5011 = vmax.f32 %v2935, 0.0
        %v5012 = vmax.f32 %v3006, 0.0
        %v5013 = vmax.f32 %v3008, 0.0
        %v5014 = vmax.f32 %v3079, 0.0
        %v5015 = vmax.f32 %v3081, 0.0
        %v5016 = vmax.f32 %v3152, 0.0
        %v5017 = vmax.f32 %v3154, 0.0
        %v5018 = vmax.f32 %v3225, 0.0
        %v5019 = vmax.f32 %v3227, 0.0
        %v5020 = vmax.f32 %v3298, 0.0
        %v5021 = vmax.f32 %v3300, 0.0
        %v5022 = vmax.f32 %v3371, 0.0
        %v5023 = vmax.f32 %v3373, 0.0
        %v5024 = vmax.f32 %v3444, 0.0
        %v5025 = vmax.f32 %v3446, 0.0
        %v5026 = vmax.f32 %v3517, 0.0
        %v5027 = vmax.f32 %v3519, 0.0
        %v5028 = vmax.f32 %v3590, 0.0
        %v5029 = vmax.f32 %v3592, 0.0
        %v5030 = vmax.f32 %v3663, 0.0
        %v5031 = vmax.f32 %v3665, 0.0
        %v5032 = vmax.f32 %v3736, 0.0
        %v5033 = vmax.f32 %v3738, 0.0
        %v5034 = vmax.f32 %v3809, 0.0
        %v5035 = vmax.f32 %v3811, 0.0
        %v5036 = vmax.f32 %v3882, 0.0
        %v5037 = vmax.f32 %v3884, 0.0
        %v5038 = vmax.f32 %v3955, 0.0
        %v5039 = vmax.f32 %v3957, 0.0
        %v5040 = vmax.f32 %v4028, 0.0
        %v5041 = vmax.f32 %v4030, 0.0
        %v5042 = vmax.f32 %v4101, 0.0
        %v5043 = vmax.f32 %v4103, 0.0
        %v5044 = vmax.f32 %v4174, 0.0
        %v5045 = vmax.f32 %v4176, 0.0
        %v5046 = vmax.f32 %v4247, 0.0
        %v5047 = vmax.f32 %v4249, 0.0
        %v5048 = vmax.f32 %v4320, 0.0
        %v5049 = vmax.f32 %v4322, 0.0
        %v5050 = vmax.f32 %v4393, 0.0
        %v5051 = vmax.f32 %v4395, 0.0
        %v5052 = vmax.f32 %v4466, 0.0
        %v5053 = vmax.f32 %v4468, 0.0
        %v5054 = vmax.f32 %v4539, 0.0
        %v5055 = vmax.f32 %v4541, 0.0
        %v5056 = vmax.f32 %v4612, 0.0
        %v5057 = vmax.f32 %v4614, 0.0
        %v5058 = vmax.f32 %v4685, 0.0
        %v5059 = vmax.f32 %v4687, 0.0
        %v5060 = vmax.f32 %v4758, 0.0
        %v5061 = vmax.f32 %v4760, 0.0
        %v5062 = vmax.f32 %v4831, 0.0
        %v5063 = vmax.f32 %v4833, 0.0
        %v5064 = vmax.f32 %v4904, 0.0
        %v5065 = vmax.f32 %v4906, 0.0
        %v5066 = vmax.f32 %v2647, 0.0
        %v5067 = vmax.f32 %v2649, 0.0
        %v5068 = vmax.f32 %v2720, 0.0
        %v5069 = vmax.f32 %v2722, 0.0
        %v5070 = vmax.f32 %v2793, 0.0
        %v5071 = vmax.f32 %v2795, 0.0
        %v5072 = vmax.f32 %v2866, 0.0
        %v5073 = vmax.f32 %v2868, 0.0
        %v5074 = vmax.f32 %v2939, 0.0
        %v5075 = vmax.f32 %v2941, 0.0
        %v5076 = vmax.f32 %v3012, 0.0
        %v5077 = vmax.f32 %v3014, 0.0
        %v5078 = vmax.f32 %v3085, 0.0
        %v5079 = vmax.f32 %v3087, 0.0
        %v5080 = vmax.f32 %v3158, 0.0
        %v5081 = vmax.f32 %v3160, 0.0
        %v5082 = vmax.f32 %v3231, 0.0
        %v5083 = vmax.f32 %v3233, 0.0
        %v5084 = vmax.f32 %v3304, 0.0
        %v5085 = vmax.f32 %v3306, 0.0
        %v5086 = vmax.f32 %v3377, 0.0
        %v5087 = vmax.f32 %v3379, 0.0
        %v5088 = vmax.f32 %v3450, 0.0
        %v5089 = vmax.f32 %v3452, 0.0
        %v5090 = vmax.f32 %v3523, 0.0
        %v5091 = vmax.f32 %v3525, 0.0
        %v5092 = vmax.f32 %v3596, 0.0
        %v5093 = vmax.f32 %v3598, 0.0
        %v5094 = vmax.f32 %v3669, 0.0
        %v5095 = vmax.f32 %v3671, 0.0
        %v5096 = vmax.f32 %v3742, 0.0
        %v5097 = vmax.f32 %v3744, 0.0
        %v5098 = vmax.f32 %v3815, 0.0
        %v5099 = vmax.f32 %v3817, 0.0
        %v5100 = vmax.f32 %v3888, 0.0
        %v5101 = vmax.f32 %v3890, 0.0
        %v5102 = vmax.f32 %v3961, 0.0
        %v5103 = vmax.f32 %v3963, 0.0
        %v5104 = vmax.f32 %v4034, 0.0
        %v5105 = vmax.f32 %v4036, 0.0
        %v5106 = vmax.f32 %v4107, 0.0
        %v5107 = vmax.f32 %v4109, 0.0
        %v5108 = vmax.f32 %v4180, 0.0
        %v5109 = vmax.f32 %v4182, 0.0
        %v5110 = vmax.f32 %v4253, 0.0
        %v5111 = vmax.f32 %v4255, 0.0
        %v5112 = vmax.f32 %v4326, 0.0
        %v5113 = vmax.f32 %v4328, 0.0
        %v5114 = vmax.f32 %v4399, 0.0
        %v5115 = vmax.f32 %v4401, 0.0
        %v5116 = vmax.f32 %v4472, 0.0
        %v5117 = vmax.f32 %v4474, 0.0
        %v5118 = vmax.f32 %v4545, 0.0
        %v5119 = vmax.f32 %v4547, 0.0
        %v5120 = vmax.f32 %v4618, 0.0
        %v5121 = vmax.f32 %v4620, 0.0
        %v5122 = vmax.f32 %v4691, 0.0
        %v5123 = vmax.f32 %v4693, 0.0
        %v5124 = vmax.f32 %v4764, 0.0
        %v5125 = vmax.f32 %v4766, 0.0
        %v5126 = vmax.f32 %v4837, 0.0
        %v5127 = vmax.f32 %v4839, 0.0
        %v5128 = vmax.f32 %v4910, 0.0
        %v5129 = vmax.f32 %v4912, 0.0
        %v5130 = vmax.f32 %v2651, 0.0
        %v5131 = vmax.f32 %v2653, 0.0
        %v5132 = vmax.f32 %v2724, 0.0
        %v5133 = vmax.f32 %v2726, 0.0
        %v5134 = vmax.f32 %v2797, 0.0
        %v5135 = vmax.f32 %v2799, 0.0
        %v5136 = vmax.f32 %v2870, 0.0
        %v5137 = vmax.f32 %v2872, 0.0
        %v5138 = vmax.f32 %v2943, 0.0
        %v5139 = vmax.f32 %v2945, 0.0
        %v5140 = vmax.f32 %v3016, 0.0
        %v5141 = vmax.f32 %v3018, 0.0
        %v5142 = vmax.f32 %v3089, 0.0
        %v5143 = vmax.f32 %v3091, 0.0
        %v5144 = vmax.f32 %v3162, 0.0
        %v5145 = vmax.f32 %v3164, 0.0
        %v5146 = vmax.f32 %v3235, 0.0
        %v5147 = vmax.f32 %v3237, 0.0
        %v5148 = vmax.f32 %v3308, 0.0
        %v5149 = vmax.f32 %v3310, 0.0
        %v5150 = vmax.f32 %v3381, 0.0
        %v5151 = vmax.f32 %v3383, 0.0
        %v5152 = vmax.f32 %v3454, 0.0
        %v5153 = vmax.f32 %v3456, 0.0
        %v5154 = vmax.f32 %v3527, 0.0
        %v5155 = vmax.f32 %v3529, 0.0
        %v5156 = vmax.f32 %v3600, 0.0
        %v5157 = vmax.f32 %v3602, 0.0
        %v5158 = vmax.f32 %v3673, 0.0
        %v5159 = vmax.f32 %v3675, 0.0
        %v5160 = vmax.f32 %v3746, 0.0
        %v5161 = vmax.f32 %v3748, 0.0
        %v5162 = vmax.f32 %v3819, 0.0
        %v5163 = vmax.f32 %v3821, 0.0
        %v5164 = vmax.f32 %v3892, 0.0
        %v5165 = vmax.f32 %v3894, 0.0
        %v5166 = vmax.f32 %v3965, 0.0
        %v5167 = vmax.f32 %v3967, 0.0
        %v5168 = vmax.f32 %v4038, 0.0
        %v5169 = vmax.f32 %v4040, 0.0
        %v5170 = vmax.f32 %v4111, 0.0
        %v5171 = vmax.f32 %v4113, 0.0
        %v5172 = vmax.f32 %v4184, 0.0
        %v5173 = vmax.f32 %v4186, 0.0
        %v5174 = vmax.f32 %v4257, 0.0
        %v5175 = vmax.f32 %v4259, 0.0
        %v5176 = vmax.f32 %v4330, 0.0
        %v5177 = vmax.f32 %v4332, 0.0
        %v5178 = vmax.f32 %v4403, 0.0
        %v5179 = vmax.f32 %v4405, 0.0
        %v5180 = vmax.f32 %v4476, 0.0
        %v5181 = vmax.f32 %v4478, 0.0
        %v5182 = vmax.f32 %v4549, 0.0
        %v5183 = vmax.f32 %v4551, 0.0
        %v5184 = vmax.f32 %v4622, 0.0
        %v5185 = vmax.f32 %v4624, 0.0
        %v5186 = vmax.f32 %v4695, 0.0
        %v5187 = vmax.f32 %v4697, 0.0
        %v5188 = vmax.f32 %v4768, 0.0
        %v5189 = vmax.f32 %v4770, 0.0
        %v5190 = vmax.f32 %v4841, 0.0
        %v5191 = vmax.f32 %v4843, 0.0
        %v5192 = vmax.f32 %v4914, 0.0
        %v5193 = vmax.f32 %v4916, 0.0
        %v5194 = vmax.f32 %v2657, 0.0
        %v5195 = vmax.f32 %v2659, 0.0
        %v5196 = vmax.f32 %v2730, 0.0
        %v5197 = vmax.f32 %v2732, 0.0
        %v5198 = vmax.f32 %v2803, 0.0
        %v5199 = vmax.f32 %v2805, 0.0
        %v5200 = vmax.f32 %v2876, 0.0
        %v5201 = vmax.f32 %v2878, 0.0
        %v5202 = vmax.f32 %v2949, 0.0
        %v5203 = vmax.f32 %v2951, 0.0
        %v5204 = vmax.f32 %v3022, 0.0
        %v5205 = vmax.f32 %v3024, 0.0
        %v5206 = vmax.f32 %v3095, 0.0
        %v5207 = vmax.f32 %v3097, 0.0
        %v5208 = vmax.f32 %v3168, 0.0
        %v5209 = vmax.f32 %v3170, 0.0
        %v5210 = vmax.f32 %v3241, 0.0
        %v5211 = vmax.f32 %v3243, 0.0
        %v5212 = vmax.f32 %v3314, 0.0
        %v5213 = vmax.f32 %v3316, 0.0
        %v5214 = vmax.f32 %v3387, 0.0
        %v5215 = vmax.f32 %v3389, 0.0
        %v5216 = vmax.f32 %v3460, 0.0
        %v5217 = vmax.f32 %v3462, 0.0
        %v5218 = vmax.f32 %v3533, 0.0
        %v5219 = vmax.f32 %v3535, 0.0
        %v5220 = vmax.f32 %v3606, 0.0
        %v5221 = vmax.f32 %v3608, 0.0
        %v5222 = vmax.f32 %v3679, 0.0
        %v5223 = vmax.f32 %v3681, 0.0
        %v5224 = vmax.f32 %v3752, 0.0
        %v5225 = vmax.f32 %v3754, 0.0
        %v5226 = vmax.f32 %v3825, 0.0
        %v5227 = vmax.f32 %v3827, 0.0
        %v5228 = vmax.f32 %v3898, 0.0
        %v5229 = vmax.f32 %v3900, 0.0
        %v5230 = vmax.f32 %v3971, 0.0
        %v5231 = vmax.f32 %v3973, 0.0
        %v5232 = vmax.f32 %v4044, 0.0
        %v5233 = vmax.f32 %v4046, 0.0
        %v5234 = vmax.f32 %v4117, 0.0
        %v5235 = vmax.f32 %v4119, 0.0
        %v5236 = vmax.f32 %v4190, 0.0
        %v5237 = vmax.f32 %v4192, 0.0
        %v5238 = vmax.f32 %v4263, 0.0
        %v5239 = vmax.f32 %v4265, 0.0
        %v5240 = vmax.f32 %v4336, 0.0
        %v5241 = vmax.f32 %v4338, 0.0
        %v5242 = vmax.f32 %v4409, 0.0
        %v5243 = vmax.f32 %v4411, 0.0
        %v5244 = vmax.f32 %v4482, 0.0
        %v5245 = vmax.f32 %v4484, 0.0
        %v5246 = vmax.f32 %v4555, 0.0
        %v5247 = vmax.f32 %v4557, 0.0
        %v5248 = vmax.f32 %v4628, 0.0
        %v5249 = vmax.f32 %v4630, 0.0
        %v5250 = vmax.f32 %v4701, 0.0
        %v5251 = vmax.f32 %v4703, 0.0
        %v5252 = vmax.f32 %v4774, 0.0
        %v5253 = vmax.f32 %v4776, 0.0
        %v5254 = vmax.f32 %v4847, 0.0
        %v5255 = vmax.f32 %v4849, 0.0
        %v5256 = vmax.f32 %v4920, 0.0
        %v5257 = vmax.f32 %v4922, 0.0
        %v5258 = vmax.f32 %v2661, 0.0
        %v5259 = vmax.f32 %v2663, 0.0
        %v5260 = vmax.f32 %v2734, 0.0
        %v5261 = vmax.f32 %v2736, 0.0
        %v5262 = vmax.f32 %v2807, 0.0
        %v5263 = vmax.f32 %v2809, 0.0
        %v5264 = vmax.f32 %v2880, 0.0
        %v5265 = vmax.f32 %v2882, 0.0
        %v5266 = vmax.f32 %v2953, 0.0
        %v5267 = vmax.f32 %v2955, 0.0
        %v5268 = vmax.f32 %v3026, 0.0
        %v5269 = vmax.f32 %v3028, 0.0
        %v5270 = vmax.f32 %v3099, 0.0
        %v5271 = vmax.f32 %v3101, 0.0
        %v5272 = vmax.f32 %v3172, 0.0
        %v5273 = vmax.f32 %v3174, 0.0
        %v5274 = vmax.f32 %v3245, 0.0
        %v5275 = vmax.f32 %v3247, 0.0
        %v5276 = vmax.f32 %v3318, 0.0
        %v5277 = vmax.f32 %v3320, 0.0
        %v5278 = vmax.f32 %v3391, 0.0
        %v5279 = vmax.f32 %v3393, 0.0
        %v5280 = vmax.f32 %v3464, 0.0
        %v5281 = vmax.f32 %v3466, 0.0
        %v5282 = vmax.f32 %v3537, 0.0
        %v5283 = vmax.f32 %v3539, 0.0
        %v5284 = vmax.f32 %v3610, 0.0
        %v5285 = vmax.f32 %v3612, 0.0
        %v5286 = vmax.f32 %v3683, 0.0
        %v5287 = vmax.f32 %v3685, 0.0
        %v5288 = vmax.f32 %v3756, 0.0
        %v5289 = vmax.f32 %v3758, 0.0
        %v5290 = vmax.f32 %v3829, 0.0
        %v5291 = vmax.f32 %v3831, 0.0
        %v5292 = vmax.f32 %v3902, 0.0
        %v5293 = vmax.f32 %v3904, 0.0
        %v5294 = vmax.f32 %v3975, 0.0
        %v5295 = vmax.f32 %v3977, 0.0
        %v5296 = vmax.f32 %v4048, 0.0
        %v5297 = vmax.f32 %v4050, 0.0
        %v5298 = vmax.f32 %v4121, 0.0
        %v5299 = vmax.f32 %v4123, 0.0
        %v5300 = vmax.f32 %v4194, 0.0
        %v5301 = vmax.f32 %v4196, 0.0
        %v5302 = vmax.f32 %v4267, 0.0
        %v5303 = vmax.f32 %v4269, 0.0
        %v5304 = vmax.f32 %v4340, 0.0
        %v5305 = vmax.f32 %v4342, 0.0
        %v5306 = vmax.f32 %v4413, 0.0
        %v5307 = vmax.f32 %v4415, 0.0
        %v5308 = vmax.f32 %v4486, 0.0
        %v5309 = vmax.f32 %v4488, 0.0
        %v5310 = vmax.f32 %v4559, 0.0
        %v5311 = vmax.f32 %v4561, 0.0
        %v5312 = vmax.f32 %v4632, 0.0
        %v5313 = vmax.f32 %v4634, 0.0
        %v5314 = vmax.f32 %v4705, 0.0
        %v5315 = vmax.f32 %v4707, 0.0
        %v5316 = vmax.f32 %v4778, 0.0
        %v5317 = vmax.f32 %v4780, 0.0
        %v5318 = vmax.f32 %v4851, 0.0
        %v5319 = vmax.f32 %v4853, 0.0
        %v5320 = vmax.f32 %v4924, 0.0
        %v5321 = vmax.f32 %v4926, 0.0
        %v5322 = vmax.f32 %v2667, 0.0
        %v5323 = vmax.f32 %v2669, 0.0
        %v5324 = vmax.f32 %v2740, 0.0
        %v5325 = vmax.f32 %v2742, 0.0
        %v5326 = vmax.f32 %v2813, 0.0
        %v5327 = vmax.f32 %v2815, 0.0
        %v5328 = vmax.f32 %v2886, 0.0
        %v5329 = vmax.f32 %v2888, 0.0
        %v5330 = vmax.f32 %v2959, 0.0
        %v5331 = vmax.f32 %v2961, 0.0
        %v5332 = vmax.f32 %v3032, 0.0
        %v5333 = vmax.f32 %v3034, 0.0
        %v5334 = vmax.f32 %v3105, 0.0
        %v5335 = vmax.f32 %v3107, 0.0
        %v5336 = vmax.f32 %v3178, 0.0
        %v5337 = vmax.f32 %v3180, 0.0
        %v5338 = vmax.f32 %v3251, 0.0
        %v5339 = vmax.f32 %v3253, 0.0
        %v5340 = vmax.f32 %v3324, 0.0
        %v5341 = vmax.f32 %v3326, 0.0
        %v5342 = vmax.f32 %v3397, 0.0
        %v5343 = vmax.f32 %v3399, 0.0
        %v5344 = vmax.f32 %v3470, 0.0
        %v5345 = vmax.f32 %v3472, 0.0
        %v5346 = vmax.f32 %v3543, 0.0
        %v5347 = vmax.f32 %v3545, 0.0
        %v5348 = vmax.f32 %v3616, 0.0
        %v5349 = vmax.f32 %v3618, 0.0
        %v5350 = vmax.f32 %v3689, 0.0
        %v5351 = vmax.f32 %v3691, 0.0
        %v5352 = vmax.f32 %v3762, 0.0
        %v5353 = vmax.f32 %v3764, 0.0
        %v5354 = vmax.f32 %v3835, 0.0
        %v5355 = vmax.f32 %v3837, 0.0
        %v5356 = vmax.f32 %v3908, 0.0
        %v5357 = vmax.f32 %v3910, 0.0
        %v5358 = vmax.f32 %v3981, 0.0
        %v5359 = vmax.f32 %v3983, 0.0
        %v5360 = vmax.f32 %v4054, 0.0
        %v5361 = vmax.f32 %v4056, 0.0
        %v5362 = vmax.f32 %v4127, 0.0
        %v5363 = vmax.f32 %v4129, 0.0
        %v5364 = vmax.f32 %v4200, 0.0
        %v5365 = vmax.f32 %v4202, 0.0
        %v5366 = vmax.f32 %v4273, 0.0
        %v5367 = vmax.f32 %v4275, 0.0
        %v5368 = vmax.f32 %v4346, 0.0
        %v5369 = vmax.f32 %v4348, 0.0
        %v5370 = vmax.f32 %v4419, 0.0
        %v5371 = vmax.f32 %v4421, 0.0
        %v5372 = vmax.f32 %v4492, 0.0
        %v5373 = vmax.f32 %v4494, 0.0
        %v5374 = vmax.f32 %v4565, 0.0
        %v5375 = vmax.f32 %v4567, 0.0
        %v5376 = vmax.f32 %v4638, 0.0
        %v5377 = vmax.f32 %v4640, 0.0
        %v5378 = vmax.f32 %v4711, 0.0
        %v5379 = vmax.f32 %v4713, 0.0
        %v5380 = vmax.f32 %v4784, 0.0
        %v5381 = vmax.f32 %v4786, 0.0
        %v5382 = vmax.f32 %v4857, 0.0
        %v5383 = vmax.f32 %v4859, 0.0
        %v5384 = vmax.f32 %v4930, 0.0
        %v5385 = vmax.f32 %v4932, 0.0
        %v5386 = vmax.f32 %v2671, 0.0
        %v5387 = vmax.f32 %v2673, 0.0
        %v5388 = vmax.f32 %v2744, 0.0
        %v5389 = vmax.f32 %v2746, 0.0
        %v5390 = vmax.f32 %v2817, 0.0
        %v5391 = vmax.f32 %v2819, 0.0
        %v5392 = vmax.f32 %v2890, 0.0
        %v5393 = vmax.f32 %v2892, 0.0
        %v5394 = vmax.f32 %v2963, 0.0
        %v5395 = vmax.f32 %v2965, 0.0
        %v5396 = vmax.f32 %v3036, 0.0
        %v5397 = vmax.f32 %v3038, 0.0
        %v5398 = vmax.f32 %v3109, 0.0
        %v5399 = vmax.f32 %v3111, 0.0
        %v5400 = vmax.f32 %v3182, 0.0
        %v5401 = vmax.f32 %v3184, 0.0
        %v5402 = vmax.f32 %v3255, 0.0
        %v5403 = vmax.f32 %v3257, 0.0
        %v5404 = vmax.f32 %v3328, 0.0
        %v5405 = vmax.f32 %v3330, 0.0
        %v5406 = vmax.f32 %v3401, 0.0
        %v5407 = vmax.f32 %v3403, 0.0
        %v5408 = vmax.f32 %v3474, 0.0
        %v5409 = vmax.f32 %v3476, 0.0
        %v5410 = vmax.f32 %v3547, 0.0
        %v5411 = vmax.f32 %v3549, 0.0
        %v5412 = vmax.f32 %v3620, 0.0
        %v5413 = vmax.f32 %v3622, 0.0
        %v5414 = vmax.f32 %v3693, 0.0
        %v5415 = vmax.f32 %v3695, 0.0
        %v5416 = vmax.f32 %v3766, 0.0
        %v5417 = vmax.f32 %v3768, 0.0
        %v5418 = vmax.f32 %v3839, 0.0
        %v5419 = vmax.f32 %v3841, 0.0
        %v5420 = vmax.f32 %v3912, 0.0
        %v5421 = vmax.f32 %v3914, 0.0
        %v5422 = vmax.f32 %v3985, 0.0
        %v5423 = vmax.f32 %v3987, 0.0
        %v5424 = vmax.f32 %v4058, 0.0
        %v5425 = vmax.f32 %v4060, 0.0
        %v5426 = vmax.f32 %v4131, 0.0
        %v5427 = vmax.f32 %v4133, 0.0
        %v5428 = vmax.f32 %v4204, 0.0
        %v5429 = vmax.f32 %v4206, 0.0
        %v5430 = vmax.f32 %v4277, 0.0
        %v5431 = vmax.f32 %v4279, 0.0
        %v5432 = vmax.f32 %v4350, 0.0
        %v5433 = vmax.f32 %v4352, 0.0
        %v5434 = vmax.f32 %v4423, 0.0
        %v5435 = vmax.f32 %v4425, 0.0
        %v5436 = vmax.f32 %v4496, 0.0
        %v5437 = vmax.f32 %v4498, 0.0
        %v5438 = vmax.f32 %v4569, 0.0
        %v5439 = vmax.f32 %v4571, 0.0
        %v5440 = vmax.f32 %v4642, 0.0
        %v5441 = vmax.f32 %v4644, 0.0
        %v5442 = vmax.f32 %v4715, 0.0
        %v5443 = vmax.f32 %v4717, 0.0
        %v5444 = vmax.f32 %v4788, 0.0
        %v5445 = vmax.f32 %v4790, 0.0
        %v5446 = vmax.f32 %v4861, 0.0
        %v5447 = vmax.f32 %v4863, 0.0
        %v5448 = vmax.f32 %v4934, 0.0
        %v5449 = vmax.f32 %v4936, 0.0
        %v5450 = vpack.c.bf16 %v5002, %v4938
        %v5451 = vpack.c.bf16 %v5003, %v4939
        %v5452 = vpack.c.bf16 %v5004, %v4940
        %v5453 = vpack.c.bf16 %v5005, %v4941
        %v5454 = vpack.c.bf16 %v5006, %v4942
        %v5455 = vpack.c.bf16 %v5007, %v4943
        %v5456 = vpack.c.bf16 %v5008, %v4944
        %v5457 = vpack.c.bf16 %v5009, %v4945
        %v5458 = vpack.c.bf16 %v5010, %v4946
        %v5459 = vpack.c.bf16 %v5011, %v4947
        %v5460 = vpack.c.bf16 %v5012, %v4948
        %v5461 = vpack.c.bf16 %v5013, %v4949
        %v5462 = vpack.c.bf16 %v5014, %v4950
        %v5463 = vpack.c.bf16 %v5015, %v4951
        %v5464 = vpack.c.bf16 %v5016, %v4952
        %v5465 = vpack.c.bf16 %v5017, %v4953
        %v5466 = vpack.c.bf16 %v5018, %v4954
        %v5467 = vpack.c.bf16 %v5019, %v4955
        %v5468 = vpack.c.bf16 %v5020, %v4956
        %v5469 = vpack.c.bf16 %v5021, %v4957
        %v5470 = vpack.c.bf16 %v5022, %v4958
        %v5471 = vpack.c.bf16 %v5023, %v4959
        %v5472 = vpack.c.bf16 %v5024, %v4960
        %v5473 = vpack.c.bf16 %v5025, %v4961
        %v5474 = vpack.c.bf16 %v5026, %v4962
        %v5475 = vpack.c.bf16 %v5027, %v4963
        %v5476 = vpack.c.bf16 %v5028, %v4964
        %v5477 = vpack.c.bf16 %v5029, %v4965
        %v5478 = vpack.c.bf16 %v5030, %v4966
        %v5479 = vpack.c.bf16 %v5031, %v4967
        %v5480 = vpack.c.bf16 %v5032, %v4968
        %v5481 = vpack.c.bf16 %v5033, %v4969
        %v5482 = vpack.c.bf16 %v5034, %v4970
        %v5483 = vpack.c.bf16 %v5035, %v4971
        %v5484 = vpack.c.bf16 %v5036, %v4972
        %v5485 = vpack.c.bf16 %v5037, %v4973
        %v5486 = vpack.c.bf16 %v5038, %v4974
        %v5487 = vpack.c.bf16 %v5039, %v4975
        %v5488 = vpack.c.bf16 %v5040, %v4976
        %v5489 = vpack.c.bf16 %v5041, %v4977
        %v5490 = vpack.c.bf16 %v5042, %v4978
        %v5491 = vpack.c.bf16 %v5043, %v4979
        %v5492 = vpack.c.bf16 %v5044, %v4980
        %v5493 = vpack.c.bf16 %v5045, %v4981
        %v5494 = vpack.c.bf16 %v5046, %v4982
        %v5495 = vpack.c.bf16 %v5047, %v4983
        %v5496 = vpack.c.bf16 %v5048, %v4984
        %v5497 = vpack.c.bf16 %v5049, %v4985
        %v5498 = vpack.c.bf16 %v5050, %v4986
        %v5499 = vpack.c.bf16 %v5051, %v4987
        %v5500 = vpack.c.bf16 %v5052, %v4988
        %v5501 = vpack.c.bf16 %v5053, %v4989
        %v5502 = vpack.c.bf16 %v5054, %v4990
        %v5503 = vpack.c.bf16 %v5055, %v4991
        %v5504 = vpack.c.bf16 %v5056, %v4992
        %v5505 = vpack.c.bf16 %v5057, %v4993
        %v5506 = vpack.c.bf16 %v5058, %v4994
        %v5507 = vpack.c.bf16 %v5059, %v4995
        %v5508 = vpack.c.bf16 %v5060, %v4996
        %v5509 = vpack.c.bf16 %v5061, %v4997
        %v5510 = vpack.c.bf16 %v5062, %v4998
        %v5511 = vpack.c.bf16 %v5063, %v4999
        %v5512 = vpack.c.bf16 %v5064, %v5000
        %v5513 = vpack.c.bf16 %v5065, %v5001
        %v5514 = vpack.c.bf16 %v5130, %v5066
        %v5515 = vpack.c.bf16 %v5131, %v5067
        %v5516 = vpack.c.bf16 %v5132, %v5068
        %v5517 = vpack.c.bf16 %v5133, %v5069
        %v5518 = vpack.c.bf16 %v5134, %v5070
        %v5519 = vpack.c.bf16 %v5135, %v5071
        %v5520 = vpack.c.bf16 %v5136, %v5072
        %v5521 = vpack.c.bf16 %v5137, %v5073
        %v5522 = vpack.c.bf16 %v5138, %v5074
        %v5523 = vpack.c.bf16 %v5139, %v5075
        %v5524 = vpack.c.bf16 %v5140, %v5076
        %v5525 = vpack.c.bf16 %v5141, %v5077
        %v5526 = vpack.c.bf16 %v5142, %v5078
        %v5527 = vpack.c.bf16 %v5143, %v5079
        %v5528 = vpack.c.bf16 %v5144, %v5080
        %v5529 = vpack.c.bf16 %v5145, %v5081
        %v5530 = vpack.c.bf16 %v5146, %v5082
        %v5531 = vpack.c.bf16 %v5147, %v5083
        %v5532 = vpack.c.bf16 %v5148, %v5084
        %v5533 = vpack.c.bf16 %v5149, %v5085
        %v5534 = vpack.c.bf16 %v5150, %v5086
        %v5535 = vpack.c.bf16 %v5151, %v5087
        %v5536 = vpack.c.bf16 %v5152, %v5088
        %v5537 = vpack.c.bf16 %v5153, %v5089
        %v5538 = vpack.c.bf16 %v5154, %v5090
        %v5539 = vpack.c.bf16 %v5155, %v5091
        %v5540 = vpack.c.bf16 %v5156, %v5092
        %v5541 = vpack.c.bf16 %v5157, %v5093
        %v5542 = vpack.c.bf16 %v5158, %v5094
        %v5543 = vpack.c.bf16 %v5159, %v5095
        %v5544 = vpack.c.bf16 %v5160, %v5096
        %v5545 = vpack.c.bf16 %v5161, %v5097
        %v5546 = vpack.c.bf16 %v5162, %v5098
        %v5547 = vpack.c.bf16 %v5163, %v5099
        %v5548 = vpack.c.bf16 %v5164, %v5100
        %v5549 = vpack.c.bf16 %v5165, %v5101
        %v5550 = vpack.c.bf16 %v5166, %v5102
        %v5551 = vpack.c.bf16 %v5167, %v5103
        %v5552 = vpack.c.bf16 %v5168, %v5104
        %v5553 = vpack.c.bf16 %v5169, %v5105
        %v5554 = vpack.c.bf16 %v5170, %v5106
        %v5555 = vpack.c.bf16 %v5171, %v5107
        %v5556 = vpack.c.bf16 %v5172, %v5108
        %v5557 = vpack.c.bf16 %v5173, %v5109
        %v5558 = vpack.c.bf16 %v5174, %v5110
        %v5559 = vpack.c.bf16 %v5175, %v5111
        %v5560 = vpack.c.bf16 %v5176, %v5112
        %v5561 = vpack.c.bf16 %v5177, %v5113
        %v5562 = vpack.c.bf16 %v5178, %v5114
        %v5563 = vpack.c.bf16 %v5179, %v5115
        %v5564 = vpack.c.bf16 %v5180, %v5116
        %v5565 = vpack.c.bf16 %v5181, %v5117
        %v5566 = vpack.c.bf16 %v5182, %v5118
        %v5567 = vpack.c.bf16 %v5183, %v5119
        %v5568 = vpack.c.bf16 %v5184, %v5120
        %v5569 = vpack.c.bf16 %v5185, %v5121
        %v5570 = vpack.c.bf16 %v5186, %v5122
        %v5571 = vpack.c.bf16 %v5187, %v5123
        %v5572 = vpack.c.bf16 %v5188, %v5124
        %v5573 = vpack.c.bf16 %v5189, %v5125
        %v5574 = vpack.c.bf16 %v5190, %v5126
        %v5575 = vpack.c.bf16 %v5191, %v5127
        %v5576 = vpack.c.bf16 %v5192, %v5128
        %v5577 = vpack.c.bf16 %v5193, %v5129
        %v5578 = vpack.c.bf16 %v5258, %v5194
        %v5579 = vpack.c.bf16 %v5259, %v5195
        %v5580 = vpack.c.bf16 %v5260, %v5196
        %v5581 = vpack.c.bf16 %v5261, %v5197
        %v5582 = vpack.c.bf16 %v5262, %v5198
        %v5583 = vpack.c.bf16 %v5263, %v5199
        %v5584 = vpack.c.bf16 %v5264, %v5200
        %v5585 = vpack.c.bf16 %v5265, %v5201
        %v5586 = vpack.c.bf16 %v5266, %v5202
        %v5587 = vpack.c.bf16 %v5267, %v5203
        %v5588 = vpack.c.bf16 %v5268, %v5204
        %v5589 = vpack.c.bf16 %v5269, %v5205
        %v5590 = vpack.c.bf16 %v5270, %v5206
        %v5591 = vpack.c.bf16 %v5271, %v5207
        %v5592 = vpack.c.bf16 %v5272, %v5208
        %v5593 = vpack.c.bf16 %v5273, %v5209
        %v5594 = vpack.c.bf16 %v5274, %v5210
        %v5595 = vpack.c.bf16 %v5275, %v5211
        %v5596 = vpack.c.bf16 %v5276, %v5212
        %v5597 = vpack.c.bf16 %v5277, %v5213
        %v5598 = vpack.c.bf16 %v5278, %v5214
        %v5599 = vpack.c.bf16 %v5279, %v5215
        %v5600 = vpack.c.bf16 %v5280, %v5216
        %v5601 = vpack.c.bf16 %v5281, %v5217
        %v5602 = vpack.c.bf16 %v5282, %v5218
        %v5603 = vpack.c.bf16 %v5283, %v5219
        %v5604 = vpack.c.bf16 %v5284, %v5220
        %v5605 = vpack.c.bf16 %v5285, %v5221
        %v5606 = vpack.c.bf16 %v5286, %v5222
        %v5607 = vpack.c.bf16 %v5287, %v5223
        %v5608 = vpack.c.bf16 %v5288, %v5224
        %v5609 = vpack.c.bf16 %v5289, %v5225
        %v5610 = vpack.c.bf16 %v5290, %v5226
        %v5611 = vpack.c.bf16 %v5291, %v5227
        %v5612 = vpack.c.bf16 %v5292, %v5228
        %v5613 = vpack.c.bf16 %v5293, %v5229
        %v5614 = vpack.c.bf16 %v5294, %v5230
        %v5615 = vpack.c.bf16 %v5295, %v5231
        %v5616 = vpack.c.bf16 %v5296, %v5232
        %v5617 = vpack.c.bf16 %v5297, %v5233
        %v5618 = vpack.c.bf16 %v5298, %v5234
        %v5619 = vpack.c.bf16 %v5299, %v5235
        %v5620 = vpack.c.bf16 %v5300, %v5236
        %v5621 = vpack.c.bf16 %v5301, %v5237
        %v5622 = vpack.c.bf16 %v5302, %v5238
        %v5623 = vpack.c.bf16 %v5303, %v5239
        %v5624 = vpack.c.bf16 %v5304, %v5240
        %v5625 = vpack.c.bf16 %v5305, %v5241
        %v5626 = vpack.c.bf16 %v5306, %v5242
        %v5627 = vpack.c.bf16 %v5307, %v5243
        %v5628 = vpack.c.bf16 %v5308, %v5244
        %v5629 = vpack.c.bf16 %v5309, %v5245
        %v5630 = vpack.c.bf16 %v5310, %v5246
        %v5631 = vpack.c.bf16 %v5311, %v5247
        %v5632 = vpack.c.bf16 %v5312, %v5248
        %v5633 = vpack.c.bf16 %v5313, %v5249
        %v5634 = vpack.c.bf16 %v5314, %v5250
        %v5635 = vpack.c.bf16 %v5315, %v5251
        %v5636 = vpack.c.bf16 %v5316, %v5252
        %v5637 = vpack.c.bf16 %v5317, %v5253
        %v5638 = vpack.c.bf16 %v5318, %v5254
        %v5639 = vpack.c.bf16 %v5319, %v5255
        %v5640 = vpack.c.bf16 %v5320, %v5256
        %v5641 = vpack.c.bf16 %v5321, %v5257
        %v5642 = vpack.c.bf16 %v5386, %v5322
        %v5643 = vpack.c.bf16 %v5387, %v5323
        %v5644 = vpack.c.bf16 %v5388, %v5324
        %v5645 = vpack.c.bf16 %v5389, %v5325
        %v5646 = vpack.c.bf16 %v5390, %v5326
        %v5647 = vpack.c.bf16 %v5391, %v5327
        %v5648 = vpack.c.bf16 %v5392, %v5328
        %v5649 = vpack.c.bf16 %v5393, %v5329
        %v5650 = vpack.c.bf16 %v5394, %v5330
        %v5651 = vpack.c.bf16 %v5395, %v5331
        %v5652 = vpack.c.bf16 %v5396, %v5332
        %v5653 = vpack.c.bf16 %v5397, %v5333
        %v5654 = vpack.c.bf16 %v5398, %v5334
        %v5655 = vpack.c.bf16 %v5399, %v5335
        %v5656 = vpack.c.bf16 %v5400, %v5336
        %v5657 = vpack.c.bf16 %v5401, %v5337
        %v5658 = vpack.c.bf16 %v5402, %v5338
        %v5659 = vpack.c.bf16 %v5403, %v5339
        %v5660 = vpack.c.bf16 %v5404, %v5340
        %v5661 = vpack.c.bf16 %v5405, %v5341
        %v5662 = vpack.c.bf16 %v5406, %v5342
        %v5663 = vpack.c.bf16 %v5407, %v5343
        %v5664 = vpack.c.bf16 %v5408, %v5344
        %v5665 = vpack.c.bf16 %v5409, %v5345
        %v5666 = vpack.c.bf16 %v5410, %v5346
        %v5667 = vpack.c.bf16 %v5411, %v5347
        %v5668 = vpack.c.bf16 %v5412, %v5348
        %v5669 = vpack.c.bf16 %v5413, %v5349
        %v5670 = vpack.c.bf16 %v5414, %v5350
        %v5671 = vpack.c.bf16 %v5415, %v5351
        %v5672 = vpack.c.bf16 %v5416, %v5352
        %v5673 = vpack.c.bf16 %v5417, %v5353
        %v5674 = vpack.c.bf16 %v5418, %v5354
        %v5675 = vpack.c.bf16 %v5419, %v5355
        %v5676 = vpack.c.bf16 %v5420, %v5356
        %v5677 = vpack.c.bf16 %v5421, %v5357
        %v5678 = vpack.c.bf16 %v5422, %v5358
        %v5679 = vpack.c.bf16 %v5423, %v5359
        %v5680 = vpack.c.bf16 %v5424, %v5360
        %v5681 = vpack.c.bf16 %v5425, %v5361
        %v5682 = vpack.c.bf16 %v5426, %v5362
        %v5683 = vpack.c.bf16 %v5427, %v5363
        %v5684 = vpack.c.bf16 %v5428, %v5364
        %v5685 = vpack.c.bf16 %v5429, %v5365
        %v5686 = vpack.c.bf16 %v5430, %v5366
        %v5687 = vpack.c.bf16 %v5431, %v5367
        %v5688 = vpack.c.bf16 %v5432, %v5368
        %v5689 = vpack.c.bf16 %v5433, %v5369
        %v5690 = vpack.c.bf16 %v5434, %v5370
        %v5691 = vpack.c.bf16 %v5435, %v5371
        %v5692 = vpack.c.bf16 %v5436, %v5372
        %v5693 = vpack.c.bf16 %v5437, %v5373
        %v5694 = vpack.c.bf16 %v5438, %v5374
        %v5695 = vpack.c.bf16 %v5439, %v5375
        %v5696 = vpack.c.bf16 %v5440, %v5376
        %v5697 = vpack.c.bf16 %v5441, %v5377
        %v5698 = vpack.c.bf16 %v5442, %v5378
        %v5699 = vpack.c.bf16 %v5443, %v5379
        %v5700 = vpack.c.bf16 %v5444, %v5380
        %v5701 = vpack.c.bf16 %v5445, %v5381
        %v5702 = vpack.c.bf16 %v5446, %v5382
        %v5703 = vpack.c.bf16 %v5447, %v5383
        %v5704 = vpack.c.bf16 %v5448, %v5384
        %v5705 = vpack.c.bf16 %v5449, %v5385
        %v5706 = vld [vmem:[%s6] sm:$0x1]
        %s5707 = sld [smem:[#allocation2]]
        %v5708 = vstv %s5707
        %vm5709 = vcmask 523264
        %v5711 = vsel %vm5709, %v5706, 0
        %5713 = vmatprep.subr.bf16.mxu0 %v5451
        %5714 = vmatpush1.bf16.msra.mxu0 %v5450
        %5715 = vmatprep.subr.bf16.mxu0 %v5515
        %5716 = vmatpush1.bf16.msra.mxu0 %v5514
        %5717 = vmatprep.subr.bf16.mxu0 %v5579
        %5718 = vmatpush1.bf16.msra.mxu0 %v5578
        %5719 = vmatprep.subr.bf16.mxu0 %v5643
        %5720 = vmatpush1.bf16.msra.mxu0 %v5642
        %5721 = vmatprep.subr.bf16.mxu0 0
        %5722 = vmatpush1.bf16.msra.mxu0 0
        %5723 = vmatprep.subr.bf16.mxu0 0
        %5724 = vmatpush1.bf16.msra.mxu0 0
        %5725 = vmatprep.subr.bf16.mxu0 0
        %5726 = vmatpush1.bf16.msra.mxu0 0
        %5727 = vmatprep.subr.bf16.mxu0 0
        %5728 = vmatpush1.bf16.msra.mxu0 0
        %5729 = vmatprep.subr.bf16.mxu0 0
        %5730 = vmatpush1.bf16.msra.mxu0 0
        %5731 = vmatprep.subr.bf16.mxu0 0
        %5732 = vmatpush1.bf16.msra.mxu0 0
        %5733 = vmatprep.subr.bf16.mxu0 0
        %5734 = vmatpush1.bf16.msra.mxu0 0
        %5735 = vmatprep.subr.bf16.mxu0 0
        %5736 = vmatpush1.bf16.msra.mxu0 0
        %5737 = vmatprep.subr.bf16.mxu0 0
        %5738 = vmatpush1.bf16.msra.mxu0 0
        %5739 = vmatprep.subr.bf16.mxu0 0
        %5740 = vmatpush1.bf16.msra.mxu0 0
        %5741 = vmatprep.subr.bf16.mxu0 0
        %5742 = vmatpush1.bf16.msra.mxu0 0
        %5743 = vmatprep.subr.bf16.mxu0 0
        %5744 = vmatpush1.bf16.msra.mxu0 0
        %5745 = vmatprep.mubr.bf16.mxu0 0
        %5746 = vmatmul.mubr.bf16.gmra.mrb[0].mxu0 %v5711
        %v5747 = vpop.f32.mrb[0].mxu0
        %v5748 = vadd.f32 %v5708, %v5747
        %v5749 = vpop.f32.mrb[0].mxu0
        %v5750 = vadd.f32 %v5708, %v5749
        %v5751 = vpop.f32.mrb[0].mxu0
        %v5752 = vpop.f32.mrb[0].mxu0
        %5753 = vdwg.mxu0
        %5754 = vmatprep.subr.bf16.mxu0 %v5453
        %5755 = vmatpush1.bf16.msra.mxu0 %v5452
        %5756 = vmatprep.subr.bf16.mxu0 %v5517
        %5757 = vmatpush1.bf16.msra.mxu0 %v5516
        %5758 = vmatprep.subr.bf16.mxu0 %v5581
        %5759 = vmatpush1.bf16.msra.mxu0 %v5580
        %5760 = vmatprep.subr.bf16.mxu0 %v5645
        %5761 = vmatpush1.bf16.msra.mxu0 %v5644
        %5762 = vmatprep.subr.bf16.mxu0 0
        %5763 = vmatpush1.bf16.msra.mxu0 0
        %5764 = vmatprep.subr.bf16.mxu0 0
        %5765 = vmatpush1.bf16.msra.mxu0 0
        %5766 = vmatprep.subr.bf16.mxu0 0
        %5767 = vmatpush1.bf16.msra.mxu0 0
        %5768 = vmatprep.subr.bf16.mxu0 0
        %5769 = vmatpush1.bf16.msra.mxu0 0
        %5770 = vmatprep.subr.bf16.mxu0 0
        %5771 = vmatpush1.bf16.msra.mxu0 0
        %5772 = vmatprep.subr.bf16.mxu0 0
        %5773 = vmatpush1.bf16.msra.mxu0 0
        %5774 = vmatprep.subr.bf16.mxu0 0
        %5775 = vmatpush1.bf16.msra.mxu0 0
        %5776 = vmatprep.subr.bf16.mxu0 0
        %5777 = vmatpush1.bf16.msra.mxu0 0
        %5778 = vmatprep.subr.bf16.mxu0 0
        %5779 = vmatpush1.bf16.msra.mxu0 0
        %5780 = vmatprep.subr.bf16.mxu0 0
        %5781 = vmatpush1.bf16.msra.mxu0 0
        %5782 = vmatprep.subr.bf16.mxu0 0
        %5783 = vmatpush1.bf16.msra.mxu0 0
        %5784 = vmatprep.subr.bf16.mxu0 0
        %5785 = vmatpush1.bf16.msra.mxu0 0
        %5786 = vmatprep.mubr.bf16.mxu0 0
        %5787 = vmatmul.mubr.bf16.gmra.mrb[0].mxu0 %v5711
        %v5788 = vpop.f32.mrb[0].mxu0
        %v5789 = vadd.f32 %v5708, %v5788
        %v5790 = vpop.f32.mrb[0].mxu0
        %v5791 = vadd.f32 %v5708, %v5790
        %v5792 = vpop.f32.mrb[0].mxu0
        %v5793 = vpop.f32.mrb[0].mxu0
        %5794 = vdwg.mxu0
        %5795 = vmatprep.subr.bf16.mxu0 %v5455
        %5796 = vmatpush1.bf16.msra.mxu0 %v5454
        %5797 = vmatprep.subr.bf16.mxu0 %v5519
        %5798 = vmatpush1.bf16.msra.mxu0 %v5518
        %5799 = vmatprep.subr.bf16.mxu0 %v5583
        %5800 = vmatpush1.bf16.msra.mxu0 %v5582
        %5801 = vmatprep.subr.bf16.mxu0 %v5647
        %5802 = vmatpush1.bf16.msra.mxu0 %v5646
        %5803 = vmatprep.subr.bf16.mxu0 0
        %5804 = vmatpush1.bf16.msra.mxu0 0
        %5805 = vmatprep.subr.bf16.mxu0 0
        %5806 = vmatpush1.bf16.msra.mxu0 0
        %5807 = vmatprep.subr.bf16.mxu0 0
        %5808 = vmatpush1.bf16.msra.mxu0 0
        %5809 = vmatprep.subr.bf16.mxu0 0
        %5810 = vmatpush1.bf16.msra.mxu0 0
        %5811 = vmatprep.subr.bf16.mxu0 0
        %5812 = vmatpush1.bf16.msra.mxu0 0
        %5813 = vmatprep.subr.bf16.mxu0 0
        %5814 = vmatpush1.bf16.msra.mxu0 0
        %5815 = vmatprep.subr.bf16.mxu0 0
        %5816 = vmatpush1.bf16.msra.mxu0 0
        %5817 = vmatprep.subr.bf16.mxu0 0
        %5818 = vmatpush1.bf16.msra.mxu0 0
        %5819 = vmatprep.subr.bf16.mxu0 0
        %5820 = vmatpush1.bf16.msra.mxu0 0
        %5821 = vmatprep.subr.bf16.mxu0 0
        %5822 = vmatpush1.bf16.msra.mxu0 0
        %5823 = vmatprep.subr.bf16.mxu0 0
        %5824 = vmatpush1.bf16.msra.mxu0 0
        %5825 = vmatprep.subr.bf16.mxu0 0
        %5826 = vmatpush1.bf16.msra.mxu0 0
        %5827 = vmatprep.mubr.bf16.mxu0 0
        %5828 = vmatmul.mubr.bf16.gmra.mrb[0].mxu0 %v5711
        %v5829 = vpop.f32.mrb[0].mxu0
        %v5830 = vadd.f32 %v5708, %v5829
        %v5831 = vpop.f32.mrb[0].mxu0
        %v5832 = vadd.f32 %v5708, %v5831
        %v5833 = vpop.f32.mrb[0].mxu0
        %v5834 = vpop.f32.mrb[0].mxu0
        %5835 = vdwg.mxu0
        %5836 = vmatprep.subr.bf16.mxu0 %v5457
        %5837 = vmatpush1.bf16.msra.mxu0 %v5456
        %5838 = vmatprep.subr.bf16.mxu0 %v5521
        %5839 = vmatpush1.bf16.msra.mxu0 %v5520
        %5840 = vmatprep.subr.bf16.mxu0 %v5585
        %5841 = vmatpush1.bf16.msra.mxu0 %v5584
        %5842 = vmatprep.subr.bf16.mxu0 %v5649
        %5843 = vmatpush1.bf16.msra.mxu0 %v5648
        %5844 = vmatprep.subr.bf16.mxu0 0
        %5845 = vmatpush1.bf16.msra.mxu0 0
        %5846 = vmatprep.subr.bf16.mxu0 0
        %5847 = vmatpush1.bf16.msra.mxu0 0
        %5848 = vmatprep.subr.bf16.mxu0 0
        %5849 = vmatpush1.bf16.msra.mxu0 0
        %5850 = vmatprep.subr.bf16.mxu0 0
        %5851 = vmatpush1.bf16.msra.mxu0 0
        %5852 = vmatprep.subr.bf16.mxu0 0
        %5853 = vmatpush1.bf16.msra.mxu0 0
        %5854 = vmatprep.subr.bf16.mxu0 0
        %5855 = vmatpush1.bf16.msra.mxu0 0
        %5856 = vmatprep.subr.bf16.mxu0 0
        %5857 = vmatpush1.bf16.msra.mxu0 0
        %5858 = vmatprep.subr.bf16.mxu0 0
        %5859 = vmatpush1.bf16.msra.mxu0 0
        %5860 = vmatprep.subr.bf16.mxu0 0
        %5861 = vmatpush1.bf16.msra.mxu0 0
        %5862 = vmatprep.subr.bf16.mxu0 0
        %5863 = vmatpush1.bf16.msra.mxu0 0
        %5864 = vmatprep.subr.bf16.mxu0 0
        %5865 = vmatpush1.bf16.msra.mxu0 0
        %5866 = vmatprep.subr.bf16.mxu0 0
        %5867 = vmatpush1.bf16.msra.mxu0 0
        %5868 = vmatprep.mubr.bf16.mxu0 0
        %5869 = vmatmul.mubr.bf16.gmra.mrb[0].mxu0 %v5711
        %v5870 = vpop.f32.mrb[0].mxu0
        %v5871 = vadd.f32 %v5708, %v5870
        %v5872 = vpop.f32.mrb[0].mxu0
        %v5873 = vadd.f32 %v5708, %v5872
        %v5874 = vpop.f32.mrb[0].mxu0
        %v5875 = vpop.f32.mrb[0].mxu0
        %5876 = vdwg.mxu0
        %5877 = vmatprep.subr.bf16.mxu0 %v5459
        %5878 = vmatpush1.bf16.msra.mxu0 %v5458
        %5879 = vmatprep.subr.bf16.mxu0 %v5523
        %5880 = vmatpush1.bf16.msra.mxu0 %v5522
        %5881 = vmatprep.subr.bf16.mxu0 %v5587
        %5882 = vmatpush1.bf16.msra.mxu0 %v5586
        %5883 = vmatprep.subr.bf16.mxu0 %v5651
        %5884 = vmatpush1.bf16.msra.mxu0 %v5650
        %5885 = vmatprep.subr.bf16.mxu0 0
        %5886 = vmatpush1.bf16.msra.mxu0 0
        %5887 = vmatprep.subr.bf16.mxu0 0
        %5888 = vmatpush1.bf16.msra.mxu0 0
        %5889 = vmatprep.subr.bf16.mxu0 0
        %5890 = vmatpush1.bf16.msra.mxu0 0
        %5891 = vmatprep.subr.bf16.mxu0 0
        %5892 = vmatpush1.bf16.msra.mxu0 0
        %5893 = vmatprep.subr.bf16.mxu0 0
        %5894 = vmatpush1.bf16.msra.mxu0 0
        %5895 = vmatprep.subr.bf16.mxu0 0
        %5896 = vmatpush1.bf16.msra.mxu0 0
        %5897 = vmatprep.subr.bf16.mxu0 0
        %5898 = vmatpush1.bf16.msra.mxu0 0
        %5899 = vmatprep.subr.bf16.mxu0 0
        %5900 = vmatpush1.bf16.msra.mxu0 0
        %5901 = vmatprep.subr.bf16.mxu0 0
        %5902 = vmatpush1.bf16.msra.mxu0 0
        %5903 = vmatprep.subr.bf16.mxu0 0
        %5904 = vmatpush1.bf16.msra.mxu0 0
        %5905 = vmatprep.subr.bf16.mxu0 0
        %5906 = vmatpush1.bf16.msra.mxu0 0
        %5907 = vmatprep.subr.bf16.mxu0 0
        %5908 = vmatpush1.bf16.msra.mxu0 0
        %5909 = vmatprep.mubr.bf16.mxu0 0
        %5910 = vmatmul.mubr.bf16.gmra.mrb[0].mxu0 %v5711
        %v5911 = vpop.f32.mrb[0].mxu0
        %v5912 = vadd.f32 %v5708, %v5911
        %v5913 = vpop.f32.mrb[0].mxu0
        %v5914 = vadd.f32 %v5708, %v5913
        %v5915 = vpop.f32.mrb[0].mxu0
        %v5916 = vpop.f32.mrb[0].mxu0
        %5917 = vdwg.mxu0
        %5918 = vmatprep.subr.bf16.mxu0 %v5461
        %5919 = vmatpush1.bf16.msra.mxu0 %v5460
        %5920 = vmatprep.subr.bf16.mxu0 %v5525
        %5921 = vmatpush1.bf16.msra.mxu0 %v5524
        %5922 = vmatprep.subr.bf16.mxu0 %v5589
        %5923 = vmatpush1.bf16.msra.mxu0 %v5588
        %5924 = vmatprep.subr.bf16.mxu0 %v5653
        %5925 = vmatpush1.bf16.msra.mxu0 %v5652
        %5926 = vmatprep.subr.bf16.mxu0 0
        %5927 = vmatpush1.bf16.msra.mxu0 0
        %5928 = vmatprep.subr.bf16.mxu0 0
        %5929 = vmatpush1.bf16.msra.mxu0 0
        %5930 = vmatprep.subr.bf16.mxu0 0
        %5931 = vmatpush1.bf16.msra.mxu0 0
        %5932 = vmatprep.subr.bf16.mxu0 0
        %5933 = vmatpush1.bf16.msra.mxu0 0
        %5934 = vmatprep.subr.bf16.mxu0 0
        %5935 = vmatpush1.bf16.msra.mxu0 0
        %5936 = vmatprep.subr.bf16.mxu0 0
        %5937 = vmatpush1.bf16.msra.mxu0 0
        %5938 = vmatprep.subr.bf16.mxu0 0
        %5939 = vmatpush1.bf16.msra.mxu0 0
        %5940 = vmatprep.subr.bf16.mxu0 0
        %5941 = vmatpush1.bf16.msra.mxu0 0
        %5942 = vmatprep.subr.bf16.mxu0 0
        %5943 = vmatpush1.bf16.msra.mxu0 0
        %5944 = vmatprep.subr.bf16.mxu0 0
        %5945 = vmatpush1.bf16.msra.mxu0 0
        %5946 = vmatprep.subr.bf16.mxu0 0
        %5947 = vmatpush1.bf16.msra.mxu0 0
        %5948 = vmatprep.subr.bf16.mxu0 0
        %5949 = vmatpush1.bf16.msra.mxu0 0
        %5950 = vmatprep.mubr.bf16.mxu0 0
        %5951 = vmatmul.mubr.bf16.gmra.mrb[0].mxu0 %v5711
        %v5952 = vpop.f32.mrb[0].mxu0
        %v5953 = vadd.f32 %v5708, %v5952
        %v5954 = vpop.f32.mrb[0].mxu0
        %v5955 = vadd.f32 %v5708, %v5954
        %v5956 = vpop.f32.mrb[0].mxu0
        %v5957 = vpop.f32.mrb[0].mxu0
        %5958 = vdwg.mxu0
        %5959 = vmatprep.subr.bf16.mxu0 %v5463
        %5960 = vmatpush1.bf16.msra.mxu0 %v5462
        %5961 = vmatprep.subr.bf16.mxu0 %v5527
        %5962 = vmatpush1.bf16.msra.mxu0 %v5526
        %5963 = vmatprep.subr.bf16.mxu0 %v5591
        %5964 = vmatpush1.bf16.msra.mxu0 %v5590
        %5965 = vmatprep.subr.bf16.mxu0 %v5655
        %5966 = vmatpush1.bf16.msra.mxu0 %v5654
        %5967 = vmatprep.subr.bf16.mxu0 0
        %5968 = vmatpush1.bf16.msra.mxu0 0
        %5969 = vmatprep.subr.bf16.mxu0 0
        %5970 = vmatpush1.bf16.msra.mxu0 0
        %5971 = vmatprep.subr.bf16.mxu0 0
        %5972 = vmatpush1.bf16.msra.mxu0 0
        %5973 = vmatprep.subr.bf16.mxu0 0
        %5974 = vmatpush1.bf16.msra.mxu0 0
        %5975 = vmatprep.subr.bf16.mxu0 0
        %5976 = vmatpush1.bf16.msra.mxu0 0
        %5977 = vmatprep.subr.bf16.mxu0 0
        %5978 = vmatpush1.bf16.msra.mxu0 0
        %5979 = vmatprep.subr.bf16.mxu0 0
        %5980 = vmatpush1.bf16.msra.mxu0 0
        %5981 = vmatprep.subr.bf16.mxu0 0
        %5982 = vmatpush1.bf16.msra.mxu0 0
        %5983 = vmatprep.subr.bf16.mxu0 0
        %5984 = vmatpush1.bf16.msra.mxu0 0
        %5985 = vmatprep.subr.bf16.mxu0 0
        %5986 = vmatpush1.bf16.msra.mxu0 0
        %5987 = vmatprep.subr.bf16.mxu0 0
        %5988 = vmatpush1.bf16.msra.mxu0 0
        %5989 = vmatprep.subr.bf16.mxu0 0
        %5990 = vmatpush1.bf16.msra.mxu0 0
        %5991 = vmatprep.mubr.bf16.mxu0 0
        %5992 = vmatmul.mubr.bf16.gmra.mrb[0].mxu0 %v5711
        %v5993 = vpop.f32.mrb[0].mxu0
        %v5994 = vadd.f32 %v5708, %v5993
        %v5995 = vpop.f32.mrb[0].mxu0
        %v5996 = vadd.f32 %v5708, %v5995
        %v5997 = vpop.f32.mrb[0].mxu0
        %v5998 = vpop.f32.mrb[0].mxu0
        %5999 = vdwg.mxu0
        %6000 = vmatprep.subr.bf16.mxu0 %v5465
        %6001 = vmatpush1.bf16.msra.mxu0 %v5464
        %6002 = vmatprep.subr.bf16.mxu0 %v5529
        %6003 = vmatpush1.bf16.msra.mxu0 %v5528
        %6004 = vmatprep.subr.bf16.mxu0 %v5593
        %6005 = vmatpush1.bf16.msra.mxu0 %v5592
        %6006 = vmatprep.subr.bf16.mxu0 %v5657
        %6007 = vmatpush1.bf16.msra.mxu0 %v5656
        %6008 = vmatprep.subr.bf16.mxu0 0
        %6009 = vmatpush1.bf16.msra.mxu0 0
        %6010 = vmatprep.subr.bf16.mxu0 0
        %6011 = vmatpush1.bf16.msra.mxu0 0
        %6012 = vmatprep.subr.bf16.mxu0 0
        %6013 = vmatpush1.bf16.msra.mxu0 0
        %6014 = vmatprep.subr.bf16.mxu0 0
        %6015 = vmatpush1.bf16.msra.mxu0 0
        %6016 = vmatprep.subr.bf16.mxu0 0
        %6017 = vmatpush1.bf16.msra.mxu0 0
        %6018 = vmatprep.subr.bf16.mxu0 0
        %6019 = vmatpush1.bf16.msra.mxu0 0
        %6020 = vmatprep.subr.bf16.mxu0 0
        %6021 = vmatpush1.bf16.msra.mxu0 0
        %6022 = vmatprep.subr.bf16.mxu0 0
        %6023 = vmatpush1.bf16.msra.mxu0 0
        %6024 = vmatprep.subr.bf16.mxu0 0
        %6025 = vmatpush1.bf16.msra.mxu0 0
        %6026 = vmatprep.subr.bf16.mxu0 0
        %6027 = vmatpush1.bf16.msra.mxu0 0
        %6028 = vmatprep.subr.bf16.mxu0 0
        %6029 = vmatpush1.bf16.msra.mxu0 0
        %6030 = vmatprep.subr.bf16.mxu0 0
        %6031 = vmatpush1.bf16.msra.mxu0 0
        %6032 = vmatprep.mubr.bf16.mxu0 0
        %6033 = vmatmul.mubr.bf16.gmra.mrb[0].mxu0 %v5711
        %v6034 = vpop.f32.mrb[0].mxu0
        %v6035 = vadd.f32 %v5708, %v6034
        %v6036 = vpop.f32.mrb[0].mxu0
        %v6037 = vadd.f32 %v5708, %v6036
        %v6038 = vpop.f32.mrb[0].mxu0
        %v6039 = vpop.f32.mrb[0].mxu0
        %6040 = vdwg.mxu0
        %6041 = vmatprep.subr.bf16.mxu0 %v5467
        %6042 = vmatpush1.bf16.msra.mxu0 %v5466
        %6043 = vmatprep.subr.bf16.mxu0 %v5531
        %6044 = vmatpush1.bf16.msra.mxu0 %v5530
        %6045 = vmatprep.subr.bf16.mxu0 %v5595
        %6046 = vmatpush1.bf16.msra.mxu0 %v5594
        %6047 = vmatprep.subr.bf16.mxu0 %v5659
        %6048 = vmatpush1.bf16.msra.mxu0 %v5658
        %6049 = vmatprep.subr.bf16.mxu0 0
        %6050 = vmatpush1.bf16.msra.mxu0 0
        %6051 = vmatprep.subr.bf16.mxu0 0
        %6052 = vmatpush1.bf16.msra.mxu0 0
        %6053 = vmatprep.subr.bf16.mxu0 0
        %6054 = vmatpush1.bf16.msra.mxu0 0
        %6055 = vmatprep.subr.bf16.mxu0 0
        %6056 = vmatpush1.bf16.msra.mxu0 0
        %6057 = vmatprep.subr.bf16.mxu0 0
        %6058 = vmatpush1.bf16.msra.mxu0 0
        %6059 = vmatprep.subr.bf16.mxu0 0
        %6060 = vmatpush1.bf16.msra.mxu0 0
        %6061 = vmatprep.subr.bf16.mxu0 0
        %6062 = vmatpush1.bf16.msra.mxu0 0
        %6063 = vmatprep.subr.bf16.mxu0 0
        %6064 = vmatpush1.bf16.msra.mxu0 0
        %6065 = vmatprep.subr.bf16.mxu0 0
        %6066 = vmatpush1.bf16.msra.mxu0 0
        %6067 = vmatprep.subr.bf16.mxu0 0
        %6068 = vmatpush1.bf16.msra.mxu0 0
        %6069 = vmatprep.subr.bf16.mxu0 0
        %6070 = vmatpush1.bf16.msra.mxu0 0
        %6071 = vmatprep.subr.bf16.mxu0 0
        %6072 = vmatpush1.bf16.msra.mxu0 0
        %6073 = vmatprep.mubr.bf16.mxu0 0
        %6074 = vmatmul.mubr.bf16.gmra.mrb[0].mxu0 %v5711
        %v6075 = vpop.f32.mrb[0].mxu0
        %v6076 = vadd.f32 %v5708, %v6075
        %v6077 = vpop.f32.mrb[0].mxu0
        %v6078 = vadd.f32 %v5708, %v6077
        %v6079 = vpop.f32.mrb[0].mxu0
        %v6080 = vpop.f32.mrb[0].mxu0
        %6081 = vdwg.mxu0
        %6082 = vmatprep.subr.bf16.mxu0 %v5469
        %6083 = vmatpush1.bf16.msra.mxu0 %v5468
        %6084 = vmatprep.subr.bf16.mxu0 %v5533
        %6085 = vmatpush1.bf16.msra.mxu0 %v5532
        %6086 = vmatprep.subr.bf16.mxu0 %v5597
        %6087 = vmatpush1.bf16.msra.mxu0 %v5596
        %6088 = vmatprep.subr.bf16.mxu0 %v5661
        %6089 = vmatpush1.bf16.msra.mxu0 %v5660
        %6090 = vmatprep.subr.bf16.mxu0 0
        %6091 = vmatpush1.bf16.msra.mxu0 0
        %6092 = vmatprep.subr.bf16.mxu0 0
        %6093 = vmatpush1.bf16.msra.mxu0 0
        %6094 = vmatprep.subr.bf16.mxu0 0
        %6095 = vmatpush1.bf16.msra.mxu0 0
        %6096 = vmatprep.subr.bf16.mxu0 0
        %6097 = vmatpush1.bf16.msra.mxu0 0
        %6098 = vmatprep.subr.bf16.mxu0 0
        %6099 = vmatpush1.bf16.msra.mxu0 0
        %6100 = vmatprep.subr.bf16.mxu0 0
        %6101 = vmatpush1.bf16.msra.mxu0 0
        %6102 = vmatprep.subr.bf16.mxu0 0
        %6103 = vmatpush1.bf16.msra.mxu0 0
        %6104 = vmatprep.subr.bf16.mxu0 0
        %6105 = vmatpush1.bf16.msra.mxu0 0
        %6106 = vmatprep.subr.bf16.mxu0 0
        %6107 = vmatpush1.bf16.msra.mxu0 0
        %6108 = vmatprep.subr.bf16.mxu0 0
        %6109 = vmatpush1.bf16.msra.mxu0 0
        %6110 = vmatprep.subr.bf16.mxu0 0
        %6111 = vmatpush1.bf16.msra.mxu0 0
        %6112 = vmatprep.subr.bf16.mxu0 0
        %6113 = vmatpush1.bf16.msra.mxu0 0
        %6114 = vmatprep.mubr.bf16.mxu0 0
        %6115 = vmatmul.mubr.bf16.gmra.mrb[0].mxu0 %v5711
        %v6116 = vpop.f32.mrb[0].mxu0
        %v6117 = vadd.f32 %v5708, %v6116
        %v6118 = vpop.f32.mrb[0].mxu0
        %v6119 = vadd.f32 %v5708, %v6118
        %v6120 = vpop.f32.mrb[0].mxu0
        %v6121 = vpop.f32.mrb[0].mxu0
        %6122 = vdwg.mxu0
        %6123 = vmatprep.subr.bf16.mxu0 %v5471
        %6124 = vmatpush1.bf16.msra.mxu0 %v5470
        %6125 = vmatprep.subr.bf16.mxu0 %v5535
        %6126 = vmatpush1.bf16.msra.mxu0 %v5534
        %6127 = vmatprep.subr.bf16.mxu0 %v5599
        %6128 = vmatpush1.bf16.msra.mxu0 %v5598
        %6129 = vmatprep.subr.bf16.mxu0 %v5663
        %6130 = vmatpush1.bf16.msra.mxu0 %v5662
        %6131 = vmatprep.subr.bf16.mxu0 0
        %6132 = vmatpush1.bf16.msra.mxu0 0
        %6133 = vmatprep.subr.bf16.mxu0 0
        %6134 = vmatpush1.bf16.msra.mxu0 0
        %6135 = vmatprep.subr.bf16.mxu0 0
        %6136 = vmatpush1.bf16.msra.mxu0 0
        %6137 = vmatprep.subr.bf16.mxu0 0
        %6138 = vmatpush1.bf16.msra.mxu0 0
        %6139 = vmatprep.subr.bf16.mxu0 0
        %6140 = vmatpush1.bf16.msra.mxu0 0
        %6141 = vmatprep.subr.bf16.mxu0 0
        %6142 = vmatpush1.bf16.msra.mxu0 0
        %6143 = vmatprep.subr.bf16.mxu0 0
        %6144 = vmatpush1.bf16.msra.mxu0 0
        %6145 = vmatprep.subr.bf16.mxu0 0
        %6146 = vmatpush1.bf16.msra.mxu0 0
        %6147 = vmatprep.subr.bf16.mxu0 0
        %6148 = vmatpush1.bf16.msra.mxu0 0
        %6149 = vmatprep.subr.bf16.mxu0 0
        %6150 = vmatpush1.bf16.msra.mxu0 0
        %6151 = vmatprep.subr.bf16.mxu0 0
        %6152 = vmatpush1.bf16.msra.mxu0 0
        %6153 = vmatprep.subr.bf16.mxu0 0
        %6154 = vmatpush1.bf16.msra.mxu0 0
        %6155 = vmatprep.mubr.bf16.mxu0 0
        %6156 = vmatmul.mubr.bf16.gmra.mrb[0].mxu0 %v5711
        %v6157 = vpop.f32.mrb[0].mxu0
        %v6158 = vadd.f32 %v5708, %v6157
        %v6159 = vpop.f32.mrb[0].mxu0
        %v6160 = vadd.f32 %v5708, %v6159
        %v6161 = vpop.f32.mrb[0].mxu0
        %v6162 = vpop.f32.mrb[0].mxu0
        %6163 = vdwg.mxu0
        %6164 = vmatprep.subr.bf16.mxu0 %v5473
        %6165 = vmatpush1.bf16.msra.mxu0 %v5472
        %6166 = vmatprep.subr.bf16.mxu0 %v5537
        %6167 = vmatpush1.bf16.msra.mxu0 %v5536
        %6168 = vmatprep.subr.bf16.mxu0 %v5601
        %6169 = vmatpush1.bf16.msra.mxu0 %v5600
        %6170 = vmatprep.subr.bf16.mxu0 %v5665
        %6171 = vmatpush1.bf16.msra.mxu0 %v5664
        %6172 = vmatprep.subr.bf16.mxu0 0
        %6173 = vmatpush1.bf16.msra.mxu0 0
        %6174 = vmatprep.subr.bf16.mxu0 0
        %6175 = vmatpush1.bf16.msra.mxu0 0
        %6176 = vmatprep.subr.bf16.mxu0 0
        %6177 = vmatpush1.bf16.msra.mxu0 0
        %6178 = vmatprep.subr.bf16.mxu0 0
        %6179 = vmatpush1.bf16.msra.mxu0 0
        %6180 = vmatprep.subr.bf16.mxu0 0
        %6181 = vmatpush1.bf16.msra.mxu0 0
        %6182 = vmatprep.subr.bf16.mxu0 0
        %6183 = vmatpush1.bf16.msra.mxu0 0
        %6184 = vmatprep.subr.bf16.mxu0 0
        %6185 = vmatpush1.bf16.msra.mxu0 0
        %6186 = vmatprep.subr.bf16.mxu0 0
        %6187 = vmatpush1.bf16.msra.mxu0 0
        %6188 = vmatprep.subr.bf16.mxu0 0
        %6189 = vmatpush1.bf16.msra.mxu0 0
        %6190 = vmatprep.subr.bf16.mxu0 0
        %6191 = vmatpush1.bf16.msra.mxu0 0
        %6192 = vmatprep.subr.bf16.mxu0 0
        %6193 = vmatpush1.bf16.msra.mxu0 0
        %6194 = vmatprep.subr.bf16.mxu0 0
        %6195 = vmatpush1.bf16.msra.mxu0 0
        %6196 = vmatprep.mubr.bf16.mxu0 0
        %6197 = vmatmul.mubr.bf16.gmra.mrb[0].mxu0 %v5711
        %v6198 = vpop.f32.mrb[0].mxu0
        %v6199 = vadd.f32 %v5708, %v6198
        %v6200 = vpop.f32.mrb[0].mxu0
        %v6201 = vadd.f32 %v5708, %v6200
        %v6202 = vpop.f32.mrb[0].mxu0
        %v6203 = vpop.f32.mrb[0].mxu0
        %6204 = vdwg.mxu0
        %6205 = vmatprep.subr.bf16.mxu0 %v5475
        %6206 = vmatpush1.bf16.msra.mxu0 %v5474
        %6207 = vmatprep.subr.bf16.mxu0 %v5539
        %6208 = vmatpush1.bf16.msra.mxu0 %v5538
        %6209 = vmatprep.subr.bf16.mxu0 %v5603
        %6210 = vmatpush1.bf16.msra.mxu0 %v5602
        %6211 = vmatprep.subr.bf16.mxu0 %v5667
        %6212 = vmatpush1.bf16.msra.mxu0 %v5666
        %6213 = vmatprep.subr.bf16.mxu0 0
        %6214 = vmatpush1.bf16.msra.mxu0 0
        %6215 = vmatprep.subr.bf16.mxu0 0
        %6216 = vmatpush1.bf16.msra.mxu0 0
        %6217 = vmatprep.subr.bf16.mxu0 0
        %6218 = vmatpush1.bf16.msra.mxu0 0
        %6219 = vmatprep.subr.bf16.mxu0 0
        %6220 = vmatpush1.bf16.msra.mxu0 0
        %6221 = vmatprep.subr.bf16.mxu0 0
        %6222 = vmatpush1.bf16.msra.mxu0 0
        %6223 = vmatprep.subr.bf16.mxu0 0
        %6224 = vmatpush1.bf16.msra.mxu0 0
        %6225 = vmatprep.subr.bf16.mxu0 0
        %6226 = vmatpush1.bf16.msra.mxu0 0
        %6227 = vmatprep.subr.bf16.mxu0 0
        %6228 = vmatpush1.bf16.msra.mxu0 0
        %6229 = vmatprep.subr.bf16.mxu0 0
        %6230 = vmatpush1.bf16.msra.mxu0 0
        %6231 = vmatprep.subr.bf16.mxu0 0
        %6232 = vmatpush1.bf16.msra.mxu0 0
        %6233 = vmatprep.subr.bf16.mxu0 0
        %6234 = vmatpush1.bf16.msra.mxu0 0
        %6235 = vmatprep.subr.bf16.mxu0 0
        %6236 = vmatpush1.bf16.msra.mxu0 0
        %6237 = vmatprep.mubr.bf16.mxu0 0
        %6238 = vmatmul.mubr.bf16.gmra.mrb[0].mxu0 %v5711
        %v6239 = vpop.f32.mrb[0].mxu0
        %v6240 = vadd.f32 %v5708, %v6239
        %v6241 = vpop.f32.mrb[0].mxu0
        %v6242 = vadd.f32 %v5708, %v6241
        %v6243 = vpop.f32.mrb[0].mxu0
        %v6244 = vpop.f32.mrb[0].mxu0
        %6245 = vdwg.mxu0
        %6246 = vmatprep.subr.bf16.mxu0 %v5477
        %6247 = vmatpush1.bf16.msra.mxu0 %v5476
        %6248 = vmatprep.subr.bf16.mxu0 %v5541
        %6249 = vmatpush1.bf16.msra.mxu0 %v5540
        %6250 = vmatprep.subr.bf16.mxu0 %v5605
        %6251 = vmatpush1.bf16.msra.mxu0 %v5604
        %6252 = vmatprep.subr.bf16.mxu0 %v5669
        %6253 = vmatpush1.bf16.msra.mxu0 %v5668
        %6254 = vmatprep.subr.bf16.mxu0 0
        %6255 = vmatpush1.bf16.msra.mxu0 0
        %6256 = vmatprep.subr.bf16.mxu0 0
        %6257 = vmatpush1.bf16.msra.mxu0 0
        %6258 = vmatprep.subr.bf16.mxu0 0
        %6259 = vmatpush1.bf16.msra.mxu0 0
        %6260 = vmatprep.subr.bf16.mxu0 0
        %6261 = vmatpush1.bf16.msra.mxu0 0
        %6262 = vmatprep.subr.bf16.mxu0 0
        %6263 = vmatpush1.bf16.msra.mxu0 0
        %6264 = vmatprep.subr.bf16.mxu0 0
        %6265 = vmatpush1.bf16.msra.mxu0 0
        %6266 = vmatprep.subr.bf16.mxu0 0
        %6267 = vmatpush1.bf16.msra.mxu0 0
        %6268 = vmatprep.subr.bf16.mxu0 0
        %6269 = vmatpush1.bf16.msra.mxu0 0
        %6270 = vmatprep.subr.bf16.mxu0 0
        %6271 = vmatpush1.bf16.msra.mxu0 0
        %6272 = vmatprep.subr.bf16.mxu0 0
        %6273 = vmatpush1.bf16.msra.mxu0 0
        %6274 = vmatprep.subr.bf16.mxu0 0
        %6275 = vmatpush1.bf16.msra.mxu0 0
        %6276 = vmatprep.subr.bf16.mxu0 0
        %6277 = vmatpush1.bf16.msra.mxu0 0
        %6278 = vmatprep.mubr.bf16.mxu0 0
        %6279 = vmatmul.mubr.bf16.gmra.mrb[0].mxu0 %v5711
        %v6280 = vpop.f32.mrb[0].mxu0
        %v6281 = vadd.f32 %v5708, %v6280
        %v6282 = vpop.f32.mrb[0].mxu0
        %v6283 = vadd.f32 %v5708, %v6282
        %v6284 = vpop.f32.mrb[0].mxu0
        %v6285 = vpop.f32.mrb[0].mxu0
        %6286 = vdwg.mxu0
        %6287 = vmatprep.subr.bf16.mxu0 %v5479
        %6288 = vmatpush1.bf16.msra.mxu0 %v5478
        %6289 = vmatprep.subr.bf16.mxu0 %v5543
        %6290 = vmatpush1.bf16.msra.mxu0 %v5542
        %6291 = vmatprep.subr.bf16.mxu0 %v5607
        %6292 = vmatpush1.bf16.msra.mxu0 %v5606
        %6293 = vmatprep.subr.bf16.mxu0 %v5671
        %6294 = vmatpush1.bf16.msra.mxu0 %v5670
        %6295 = vmatprep.subr.bf16.mxu0 0
        %6296 = vmatpush1.bf16.msra.mxu0 0
        %6297 = vmatprep.subr.bf16.mxu0 0
        %6298 = vmatpush1.bf16.msra.mxu0 0
        %6299 = vmatprep.subr.bf16.mxu0 0
        %6300 = vmatpush1.bf16.msra.mxu0 0
        %6301 = vmatprep.subr.bf16.mxu0 0
        %6302 = vmatpush1.bf16.msra.mxu0 0
        %6303 = vmatprep.subr.bf16.mxu0 0
        %6304 = vmatpush1.bf16.msra.mxu0 0
        %6305 = vmatprep.subr.bf16.mxu0 0
        %6306 = vmatpush1.bf16.msra.mxu0 0
        %6307 = vmatprep.subr.bf16.mxu0 0
        %6308 = vmatpush1.bf16.msra.mxu0 0
        %6309 = vmatprep.subr.bf16.mxu0 0
        %6310 = vmatpush1.bf16.msra.mxu0 0
        %6311 = vmatprep.subr.bf16.mxu0 0
        %6312 = vmatpush1.bf16.msra.mxu0 0
        %6313 = vmatprep.subr.bf16.mxu0 0
        %6314 = vmatpush1.bf16.msra.mxu0 0
        %6315 = vmatprep.subr.bf16.mxu0 0
        %6316 = vmatpush1.bf16.msra.mxu0 0
        %6317 = vmatprep.subr.bf16.mxu0 0
        %6318 = vmatpush1.bf16.msra.mxu0 0
        %6319 = vmatprep.mubr.bf16.mxu0 0
        %6320 = vmatmul.mubr.bf16.gmra.mrb[0].mxu0 %v5711
        %v6321 = vpop.f32.mrb[0].mxu0
        %v6322 = vadd.f32 %v5708, %v6321
        %v6323 = vpop.f32.mrb[0].mxu0
        %v6324 = vadd.f32 %v5708, %v6323
        %v6325 = vpop.f32.mrb[0].mxu0
        %v6326 = vpop.f32.mrb[0].mxu0
        %6327 = vdwg.mxu0
        %6328 = vmatprep.subr.bf16.mxu0 %v5481
        %6329 = vmatpush1.bf16.msra.mxu0 %v5480
        %6330 = vmatprep.subr.bf16.mxu0 %v5545
        %6331 = vmatpush1.bf16.msra.mxu0 %v5544
        %6332 = vmatprep.subr.bf16.mxu0 %v5609
        %6333 = vmatpush1.bf16.msra.mxu0 %v5608
        %6334 = vmatprep.subr.bf16.mxu0 %v5673
        %6335 = vmatpush1.bf16.msra.mxu0 %v5672
        %6336 = vmatprep.subr.bf16.mxu0 0
        %6337 = vmatpush1.bf16.msra.mxu0 0
        %6338 = vmatprep.subr.bf16.mxu0 0
        %6339 = vmatpush1.bf16.msra.mxu0 0
        %6340 = vmatprep.subr.bf16.mxu0 0
        %6341 = vmatpush1.bf16.msra.mxu0 0
        %6342 = vmatprep.subr.bf16.mxu0 0
        %6343 = vmatpush1.bf16.msra.mxu0 0
        %6344 = vmatprep.subr.bf16.mxu0 0
        %6345 = vmatpush1.bf16.msra.mxu0 0
        %6346 = vmatprep.subr.bf16.mxu0 0
        %6347 = vmatpush1.bf16.msra.mxu0 0
        %6348 = vmatprep.subr.bf16.mxu0 0
        %6349 = vmatpush1.bf16.msra.mxu0 0
        %6350 = vmatprep.subr.bf16.mxu0 0
        %6351 = vmatpush1.bf16.msra.mxu0 0
        %6352 = vmatprep.subr.bf16.mxu0 0
        %6353 = vmatpush1.bf16.msra.mxu0 0
        %6354 = vmatprep.subr.bf16.mxu0 0
        %6355 = vmatpush1.bf16.msra.mxu0 0
        %6356 = vmatprep.subr.bf16.mxu0 0
        %6357 = vmatpush1.bf16.msra.mxu0 0
        %6358 = vmatprep.subr.bf16.mxu0 0
        %6359 = vmatpush1.bf16.msra.mxu0 0
        %6360 = vmatprep.mubr.bf16.mxu0 0
        %6361 = vmatmul.mubr.bf16.gmra.mrb[0].mxu0 %v5711
        %v6362 = vpop.f32.mrb[0].mxu0
        %v6363 = vadd.f32 %v5708, %v6362
        %v6364 = vpop.f32.mrb[0].mxu0
        %v6365 = vadd.f32 %v5708, %v6364
        %v6366 = vpop.f32.mrb[0].mxu0
        %v6367 = vpop.f32.mrb[0].mxu0
        %6368 = vdwg.mxu0
        %6369 = vmatprep.subr.bf16.mxu0 %v5483
        %6370 = vmatpush1.bf16.msra.mxu0 %v5482
        %6371 = vmatprep.subr.bf16.mxu0 %v5547
        %6372 = vmatpush1.bf16.msra.mxu0 %v5546
        %6373 = vmatprep.subr.bf16.mxu0 %v5611
        %6374 = vmatpush1.bf16.msra.mxu0 %v5610
        %6375 = vmatprep.subr.bf16.mxu0 %v5675
        %6376 = vmatpush1.bf16.msra.mxu0 %v5674
        %6377 = vmatprep.subr.bf16.mxu0 0
        %6378 = vmatpush1.bf16.msra.mxu0 0
        %6379 = vmatprep.subr.bf16.mxu0 0
        %6380 = vmatpush1.bf16.msra.mxu0 0
        %6381 = vmatprep.subr.bf16.mxu0 0
        %6382 = vmatpush1.bf16.msra.mxu0 0
        %6383 = vmatprep.subr.bf16.mxu0 0
        %6384 = vmatpush1.bf16.msra.mxu0 0
        %6385 = vmatprep.subr.bf16.mxu0 0
        %6386 = vmatpush1.bf16.msra.mxu0 0
        %6387 = vmatprep.subr.bf16.mxu0 0
        %6388 = vmatpush1.bf16.msra.mxu0 0
        %6389 = vmatprep.subr.bf16.mxu0 0
        %6390 = vmatpush1.bf16.msra.mxu0 0
        %6391 = vmatprep.subr.bf16.mxu0 0
        %6392 = vmatpush1.bf16.msra.mxu0 0
        %6393 = vmatprep.subr.bf16.mxu0 0
        %6394 = vmatpush1.bf16.msra.mxu0 0
        %6395 = vmatprep.subr.bf16.mxu0 0
        %6396 = vmatpush1.bf16.msra.mxu0 0
        %6397 = vmatprep.subr.bf16.mxu0 0
        %6398 = vmatpush1.bf16.msra.mxu0 0
        %6399 = vmatprep.subr.bf16.mxu0 0
        %6400 = vmatpush1.bf16.msra.mxu0 0
        %6401 = vmatprep.mubr.bf16.mxu0 0
        %6402 = vmatmul.mubr.bf16.gmra.mrb[0].mxu0 %v5711
        %v6403 = vpop.f32.mrb[0].mxu0
        %v6404 = vadd.f32 %v5708, %v6403
        %v6405 = vpop.f32.mrb[0].mxu0
        %v6406 = vadd.f32 %v5708, %v6405
        %v6407 = vpop.f32.mrb[0].mxu0
        %v6408 = vpop.f32.mrb[0].mxu0
        %6409 = vdwg.mxu0
        %6410 = vmatprep.subr.bf16.mxu0 %v5485
        %6411 = vmatpush1.bf16.msra.mxu0 %v5484
        %6412 = vmatprep.subr.bf16.mxu0 %v5549
        %6413 = vmatpush1.bf16.msra.mxu0 %v5548
        %6414 = vmatprep.subr.bf16.mxu0 %v5613
        %6415 = vmatpush1.bf16.msra.mxu0 %v5612
        %6416 = vmatprep.subr.bf16.mxu0 %v5677
        %6417 = vmatpush1.bf16.msra.mxu0 %v5676
        %6418 = vmatprep.subr.bf16.mxu0 0
        %6419 = vmatpush1.bf16.msra.mxu0 0
        %6420 = vmatprep.subr.bf16.mxu0 0
        %6421 = vmatpush1.bf16.msra.mxu0 0
        %6422 = vmatprep.subr.bf16.mxu0 0
        %6423 = vmatpush1.bf16.msra.mxu0 0
        %6424 = vmatprep.subr.bf16.mxu0 0
        %6425 = vmatpush1.bf16.msra.mxu0 0
        %6426 = vmatprep.subr.bf16.mxu0 0
        %6427 = vmatpush1.bf16.msra.mxu0 0
        %6428 = vmatprep.subr.bf16.mxu0 0
        %6429 = vmatpush1.bf16.msra.mxu0 0
        %6430 = vmatprep.subr.bf16.mxu0 0
        %6431 = vmatpush1.bf16.msra.mxu0 0
        %6432 = vmatprep.subr.bf16.mxu0 0
        %6433 = vmatpush1.bf16.msra.mxu0 0
        %6434 = vmatprep.subr.bf16.mxu0 0
        %6435 = vmatpush1.bf16.msra.mxu0 0
        %6436 = vmatprep.subr.bf16.mxu0 0
        %6437 = vmatpush1.bf16.msra.mxu0 0
        %6438 = vmatprep.subr.bf16.mxu0 0
        %6439 = vmatpush1.bf16.msra.mxu0 0
        %6440 = vmatprep.subr.bf16.mxu0 0
        %6441 = vmatpush1.bf16.msra.mxu0 0
        %6442 = vmatprep.mubr.bf16.mxu0 0
        %6443 = vmatmul.mubr.bf16.gmra.mrb[0].mxu0 %v5711
        %v6444 = vpop.f32.mrb[0].mxu0
        %v6445 = vadd.f32 %v5708, %v6444
        %v6446 = vpop.f32.mrb[0].mxu0
        %v6447 = vadd.f32 %v5708, %v6446
        %v6448 = vpop.f32.mrb[0].mxu0
        %v6449 = vpop.f32.mrb[0].mxu0
        %6450 = vdwg.mxu0
        %6451 = vmatprep.subr.bf16.mxu0 %v5487
        %6452 = vmatpush1.bf16.msra.mxu0 %v5486
        %6453 = vmatprep.subr.bf16.mxu0 %v5551
        %6454 = vmatpush1.bf16.msra.mxu0 %v5550
        %6455 = vmatprep.subr.bf16.mxu0 %v5615
        %6456 = vmatpush1.bf16.msra.mxu0 %v5614
        %6457 = vmatprep.subr.bf16.mxu0 %v5679
        %6458 = vmatpush1.bf16.msra.mxu0 %v5678
        %6459 = vmatprep.subr.bf16.mxu0 0
        %6460 = vmatpush1.bf16.msra.mxu0 0
        %6461 = vmatprep.subr.bf16.mxu0 0
        %6462 = vmatpush1.bf16.msra.mxu0 0
        %6463 = vmatprep.subr.bf16.mxu0 0
        %6464 = vmatpush1.bf16.msra.mxu0 0
        %6465 = vmatprep.subr.bf16.mxu0 0
        %6466 = vmatpush1.bf16.msra.mxu0 0
        %6467 = vmatprep.subr.bf16.mxu0 0
        %6468 = vmatpush1.bf16.msra.mxu0 0
        %6469 = vmatprep.subr.bf16.mxu0 0
        %6470 = vmatpush1.bf16.msra.mxu0 0
        %6471 = vmatprep.subr.bf16.mxu0 0
        %6472 = vmatpush1.bf16.msra.mxu0 0
        %6473 = vmatprep.subr.bf16.mxu0 0
        %6474 = vmatpush1.bf16.msra.mxu0 0
        %6475 = vmatprep.subr.bf16.mxu0 0
        %6476 = vmatpush1.bf16.msra.mxu0 0
        %6477 = vmatprep.subr.bf16.mxu0 0
        %6478 = vmatpush1.bf16.msra.mxu0 0
        %6479 = vmatprep.subr.bf16.mxu0 0
        %6480 = vmatpush1.bf16.msra.mxu0 0
        %6481 = vmatprep.subr.bf16.mxu0 0
        %6482 = vmatpush1.bf16.msra.mxu0 0
        %6483 = vmatprep.mubr.bf16.mxu0 0
        %6484 = vmatmul.mubr.bf16.gmra.mrb[0].mxu0 %v5711
        %v6485 = vpop.f32.mrb[0].mxu0
        %v6486 = vadd.f32 %v5708, %v6485
        %v6487 = vpop.f32.mrb[0].mxu0
        %v6488 = vadd.f32 %v5708, %v6487
        %v6489 = vpop.f32.mrb[0].mxu0
        %v6490 = vpop.f32.mrb[0].mxu0
        %6491 = vdwg.mxu0
        %6492 = vmatprep.subr.bf16.mxu0 %v5489
        %6493 = vmatpush1.bf16.msra.mxu0 %v5488
        %6494 = vmatprep.subr.bf16.mxu0 %v5553
        %6495 = vmatpush1.bf16.msra.mxu0 %v5552
        %6496 = vmatprep.subr.bf16.mxu0 %v5617
        %6497 = vmatpush1.bf16.msra.mxu0 %v5616
        %6498 = vmatprep.subr.bf16.mxu0 %v5681
        %6499 = vmatpush1.bf16.msra.mxu0 %v5680
        %6500 = vmatprep.subr.bf16.mxu0 0
        %6501 = vmatpush1.bf16.msra.mxu0 0
        %6502 = vmatprep.subr.bf16.mxu0 0
        %6503 = vmatpush1.bf16.msra.mxu0 0
        %6504 = vmatprep.subr.bf16.mxu0 0
        %6505 = vmatpush1.bf16.msra.mxu0 0
        %6506 = vmatprep.subr.bf16.mxu0 0
        %6507 = vmatpush1.bf16.msra.mxu0 0
        %6508 = vmatprep.subr.bf16.mxu0 0
        %6509 = vmatpush1.bf16.msra.mxu0 0
        %6510 = vmatprep.subr.bf16.mxu0 0
        %6511 = vmatpush1.bf16.msra.mxu0 0
        %6512 = vmatprep.subr.bf16.mxu0 0
        %6513 = vmatpush1.bf16.msra.mxu0 0
        %6514 = vmatprep.subr.bf16.mxu0 0
        %6515 = vmatpush1.bf16.msra.mxu0 0
        %6516 = vmatprep.subr.bf16.mxu0 0
        %6517 = vmatpush1.bf16.msra.mxu0 0
        %6518 = vmatprep.subr.bf16.mxu0 0
        %6519 = vmatpush1.bf16.msra.mxu0 0
        %6520 = vmatprep.subr.bf16.mxu0 0
        %6521 = vmatpush1.bf16.msra.mxu0 0
        %6522 = vmatprep.subr.bf16.mxu0 0
        %6523 = vmatpush1.bf16.msra.mxu0 0
        %6524 = vmatprep.mubr.bf16.mxu0 0
        %6525 = vmatmul.mubr.bf16.gmra.mrb[0].mxu0 %v5711
        %v6526 = vpop.f32.mrb[0].mxu0
        %v6527 = vadd.f32 %v5708, %v6526
        %v6528 = vpop.f32.mrb[0].mxu0
        %v6529 = vadd.f32 %v5708, %v6528
        %v6530 = vpop.f32.mrb[0].mxu0
        %v6531 = vpop.f32.mrb[0].mxu0
        %6532 = vdwg.mxu0
        %6533 = vmatprep.subr.bf16.mxu0 %v5491
        %6534 = vmatpush1.bf16.msra.mxu0 %v5490
        %6535 = vmatprep.subr.bf16.mxu0 %v5555
        %6536 = vmatpush1.bf16.msra.mxu0 %v5554
        %6537 = vmatprep.subr.bf16.mxu0 %v5619
        %6538 = vmatpush1.bf16.msra.mxu0 %v5618
        %6539 = vmatprep.subr.bf16.mxu0 %v5683
        %6540 = vmatpush1.bf16.msra.mxu0 %v5682
        %6541 = vmatprep.subr.bf16.mxu0 0
        %6542 = vmatpush1.bf16.msra.mxu0 0
        %6543 = vmatprep.subr.bf16.mxu0 0
        %6544 = vmatpush1.bf16.msra.mxu0 0
        %6545 = vmatprep.subr.bf16.mxu0 0
        %6546 = vmatpush1.bf16.msra.mxu0 0
        %6547 = vmatprep.subr.bf16.mxu0 0
        %6548 = vmatpush1.bf16.msra.mxu0 0
        %6549 = vmatprep.subr.bf16.mxu0 0
        %6550 = vmatpush1.bf16.msra.mxu0 0
        %6551 = vmatprep.subr.bf16.mxu0 0
        %6552 = vmatpush1.bf16.msra.mxu0 0
        %6553 = vmatprep.subr.bf16.mxu0 0
        %6554 = vmatpush1.bf16.msra.mxu0 0
        %6555 = vmatprep.subr.bf16.mxu0 0
        %6556 = vmatpush1.bf16.msra.mxu0 0
        %6557 = vmatprep.subr.bf16.mxu0 0
        %6558 = vmatpush1.bf16.msra.mxu0 0
        %6559 = vmatprep.subr.bf16.mxu0 0
        %6560 = vmatpush1.bf16.msra.mxu0 0
        %6561 = vmatprep.subr.bf16.mxu0 0
        %6562 = vmatpush1.bf16.msra.mxu0 0
        %6563 = vmatprep.subr.bf16.mxu0 0
        %6564 = vmatpush1.bf16.msra.mxu0 0
        %6565 = vmatprep.mubr.bf16.mxu0 0
        %6566 = vmatmul.mubr.bf16.gmra.mrb[0].mxu0 %v5711
        %v6567 = vpop.f32.mrb[0].mxu0
        %v6568 = vadd.f32 %v5708, %v6567
        %v6569 = vpop.f32.mrb[0].mxu0
        %v6570 = vadd.f32 %v5708, %v6569
        %v6571 = vpop.f32.mrb[0].mxu0
        %v6572 = vpop.f32.mrb[0].mxu0
        %6573 = vdwg.mxu0
        %6574 = vmatprep.subr.bf16.mxu0 %v5493
        %6575 = vmatpush1.bf16.msra.mxu0 %v5492
        %6576 = vmatprep.subr.bf16.mxu0 %v5557
        %6577 = vmatpush1.bf16.msra.mxu0 %v5556
        %6578 = vmatprep.subr.bf16.mxu0 %v5621
        %6579 = vmatpush1.bf16.msra.mxu0 %v5620
        %6580 = vmatprep.subr.bf16.mxu0 %v5685
        %6581 = vmatpush1.bf16.msra.mxu0 %v5684
        %6582 = vmatprep.subr.bf16.mxu0 0
        %6583 = vmatpush1.bf16.msra.mxu0 0
        %6584 = vmatprep.subr.bf16.mxu0 0
        %6585 = vmatpush1.bf16.msra.mxu0 0
        %6586 = vmatprep.subr.bf16.mxu0 0
        %6587 = vmatpush1.bf16.msra.mxu0 0
        %6588 = vmatprep.subr.bf16.mxu0 0
        %6589 = vmatpush1.bf16.msra.mxu0 0
        %6590 = vmatprep.subr.bf16.mxu0 0
        %6591 = vmatpush1.bf16.msra.mxu0 0
        %6592 = vmatprep.subr.bf16.mxu0 0
        %6593 = vmatpush1.bf16.msra.mxu0 0
        %6594 = vmatprep.subr.bf16.mxu0 0
        %6595 = vmatpush1.bf16.msra.mxu0 0
        %6596 = vmatprep.subr.bf16.mxu0 0
        %6597 = vmatpush1.bf16.msra.mxu0 0
        %6598 = vmatprep.subr.bf16.mxu0 0
        %6599 = vmatpush1.bf16.msra.mxu0 0
        %6600 = vmatprep.subr.bf16.mxu0 0
        %6601 = vmatpush1.bf16.msra.mxu0 0
        %6602 = vmatprep.subr.bf16.mxu0 0
        %6603 = vmatpush1.bf16.msra.mxu0 0
        %6604 = vmatprep.subr.bf16.mxu0 0
        %6605 = vmatpush1.bf16.msra.mxu0 0
        %6606 = vmatprep.mubr.bf16.mxu0 0
        %6607 = vmatmul.mubr.bf16.gmra.mrb[0].mxu0 %v5711
        %v6608 = vpop.f32.mrb[0].mxu0
        %v6609 = vadd.f32 %v5708, %v6608
        %v6610 = vpop.f32.mrb[0].mxu0
        %v6611 = vadd.f32 %v5708, %v6610
        %v6612 = vpop.f32.mrb[0].mxu0
        %v6613 = vpop.f32.mrb[0].mxu0
        %6614 = vdwg.mxu0
        %6615 = vmatprep.subr.bf16.mxu0 %v5495
        %6616 = vmatpush1.bf16.msra.mxu0 %v5494
        %6617 = vmatprep.subr.bf16.mxu0 %v5559
        %6618 = vmatpush1.bf16.msra.mxu0 %v5558
        %6619 = vmatprep.subr.bf16.mxu0 %v5623
        %6620 = vmatpush1.bf16.msra.mxu0 %v5622
        %6621 = vmatprep.subr.bf16.mxu0 %v5687
        %6622 = vmatpush1.bf16.msra.mxu0 %v5686
        %6623 = vmatprep.subr.bf16.mxu0 0
        %6624 = vmatpush1.bf16.msra.mxu0 0
        %6625 = vmatprep.subr.bf16.mxu0 0
        %6626 = vmatpush1.bf16.msra.mxu0 0
        %6627 = vmatprep.subr.bf16.mxu0 0
        %6628 = vmatpush1.bf16.msra.mxu0 0
        %6629 = vmatprep.subr.bf16.mxu0 0
        %6630 = vmatpush1.bf16.msra.mxu0 0
        %6631 = vmatprep.subr.bf16.mxu0 0
        %6632 = vmatpush1.bf16.msra.mxu0 0
        %6633 = vmatprep.subr.bf16.mxu0 0
        %6634 = vmatpush1.bf16.msra.mxu0 0
        %6635 = vmatprep.subr.bf16.mxu0 0
        %6636 = vmatpush1.bf16.msra.mxu0 0
        %6637 = vmatprep.subr.bf16.mxu0 0
        %6638 = vmatpush1.bf16.msra.mxu0 0
        %6639 = vmatprep.subr.bf16.mxu0 0
        %6640 = vmatpush1.bf16.msra.mxu0 0
        %6641 = vmatprep.subr.bf16.mxu0 0
        %6642 = vmatpush1.bf16.msra.mxu0 0
        %6643 = vmatprep.subr.bf16.mxu0 0
        %6644 = vmatpush1.bf16.msra.mxu0 0
        %6645 = vmatprep.subr.bf16.mxu0 0
        %6646 = vmatpush1.bf16.msra.mxu0 0
        %6647 = vmatprep.mubr.bf16.mxu0 0
        %6648 = vmatmul.mubr.bf16.gmra.mrb[0].mxu0 %v5711
        %v6649 = vpop.f32.mrb[0].mxu0
        %v6650 = vadd.f32 %v5708, %v6649
        %v6651 = vpop.f32.mrb[0].mxu0
        %v6652 = vadd.f32 %v5708, %v6651
        %v6653 = vpop.f32.mrb[0].mxu0
        %v6654 = vpop.f32.mrb[0].mxu0
        %6655 = vdwg.mxu0
        %6656 = vmatprep.subr.bf16.mxu0 %v5497
        %6657 = vmatpush1.bf16.msra.mxu0 %v5496
        %6658 = vmatprep.subr.bf16.mxu0 %v5561
        %6659 = vmatpush1.bf16.msra.mxu0 %v5560
        %6660 = vmatprep.subr.bf16.mxu0 %v5625
        %6661 = vmatpush1.bf16.msra.mxu0 %v5624
        %6662 = vmatprep.subr.bf16.mxu0 %v5689
        %6663 = vmatpush1.bf16.msra.mxu0 %v5688
        %6664 = vmatprep.subr.bf16.mxu0 0
        %6665 = vmatpush1.bf16.msra.mxu0 0
        %6666 = vmatprep.subr.bf16.mxu0 0
        %6667 = vmatpush1.bf16.msra.mxu0 0
        %6668 = vmatprep.subr.bf16.mxu0 0
        %6669 = vmatpush1.bf16.msra.mxu0 0
        %6670 = vmatprep.subr.bf16.mxu0 0
        %6671 = vmatpush1.bf16.msra.mxu0 0
        %6672 = vmatprep.subr.bf16.mxu0 0
        %6673 = vmatpush1.bf16.msra.mxu0 0
        %6674 = vmatprep.subr.bf16.mxu0 0
        %6675 = vmatpush1.bf16.msra.mxu0 0
        %6676 = vmatprep.subr.bf16.mxu0 0
        %6677 = vmatpush1.bf16.msra.mxu0 0
        %6678 = vmatprep.subr.bf16.mxu0 0
        %6679 = vmatpush1.bf16.msra.mxu0 0
        %6680 = vmatprep.subr.bf16.mxu0 0
        %6681 = vmatpush1.bf16.msra.mxu0 0
        %6682 = vmatprep.subr.bf16.mxu0 0
        %6683 = vmatpush1.bf16.msra.mxu0 0
        %6684 = vmatprep.subr.bf16.mxu0 0
        %6685 = vmatpush1.bf16.msra.mxu0 0
        %6686 = vmatprep.subr.bf16.mxu0 0
        %6687 = vmatpush1.bf16.msra.mxu0 0
        %6688 = vmatprep.mubr.bf16.mxu0 0
        %6689 = vmatmul.mubr.bf16.gmra.mrb[0].mxu0 %v5711
        %v6690 = vpop.f32.mrb[0].mxu0
        %v6691 = vadd.f32 %v5708, %v6690
        %v6692 = vpop.f32.mrb[0].mxu0
        %v6693 = vadd.f32 %v5708, %v6692
        %v6694 = vpop.f32.mrb[0].mxu0
        %v6695 = vpop.f32.mrb[0].mxu0
        %6696 = vdwg.mxu0
        %6697 = vmatprep.subr.bf16.mxu0 %v5499
        %6698 = vmatpush1.bf16.msra.mxu0 %v5498
        %6699 = vmatprep.subr.bf16.mxu0 %v5563
        %6700 = vmatpush1.bf16.msra.mxu0 %v5562
        %6701 = vmatprep.subr.bf16.mxu0 %v5627
        %6702 = vmatpush1.bf16.msra.mxu0 %v5626
        %6703 = vmatprep.subr.bf16.mxu0 %v5691
        %6704 = vmatpush1.bf16.msra.mxu0 %v5690
        %6705 = vmatprep.subr.bf16.mxu0 0
        %6706 = vmatpush1.bf16.msra.mxu0 0
        %6707 = vmatprep.subr.bf16.mxu0 0
        %6708 = vmatpush1.bf16.msra.mxu0 0
        %6709 = vmatprep.subr.bf16.mxu0 0
        %6710 = vmatpush1.bf16.msra.mxu0 0
        %6711 = vmatprep.subr.bf16.mxu0 0
        %6712 = vmatpush1.bf16.msra.mxu0 0
        %6713 = vmatprep.subr.bf16.mxu0 0
        %6714 = vmatpush1.bf16.msra.mxu0 0
        %6715 = vmatprep.subr.bf16.mxu0 0
        %6716 = vmatpush1.bf16.msra.mxu0 0
        %6717 = vmatprep.subr.bf16.mxu0 0
        %6718 = vmatpush1.bf16.msra.mxu0 0
        %6719 = vmatprep.subr.bf16.mxu0 0
        %6720 = vmatpush1.bf16.msra.mxu0 0
        %6721 = vmatprep.subr.bf16.mxu0 0
        %6722 = vmatpush1.bf16.msra.mxu0 0
        %6723 = vmatprep.subr.bf16.mxu0 0
        %6724 = vmatpush1.bf16.msra.mxu0 0
        %6725 = vmatprep.subr.bf16.mxu0 0
        %6726 = vmatpush1.bf16.msra.mxu0 0
        %6727 = vmatprep.subr.bf16.mxu0 0
        %6728 = vmatpush1.bf16.msra.mxu0 0
        %6729 = vmatprep.mubr.bf16.mxu0 0
        %6730 = vmatmul.mubr.bf16.gmra.mrb[0].mxu0 %v5711
        %v6731 = vpop.f32.mrb[0].mxu0
        %v6732 = vadd.f32 %v5708, %v6731
        %v6733 = vpop.f32.mrb[0].mxu0
        %v6734 = vadd.f32 %v5708, %v6733
        %v6735 = vpop.f32.mrb[0].mxu0
        %v6736 = vpop.f32.mrb[0].mxu0
        %6737 = vdwg.mxu0
        %6738 = vmatprep.subr.bf16.mxu0 %v5501
        %6739 = vmatpush1.bf16.msra.mxu0 %v5500
        %6740 = vmatprep.subr.bf16.mxu0 %v5565
        %6741 = vmatpush1.bf16.msra.mxu0 %v5564
        %6742 = vmatprep.subr.bf16.mxu0 %v5629
        %6743 = vmatpush1.bf16.msra.mxu0 %v5628
        %6744 = vmatprep.subr.bf16.mxu0 %v5693
        %6745 = vmatpush1.bf16.msra.mxu0 %v5692
        %6746 = vmatprep.subr.bf16.mxu0 0
        %6747 = vmatpush1.bf16.msra.mxu0 0
        %6748 = vmatprep.subr.bf16.mxu0 0
        %6749 = vmatpush1.bf16.msra.mxu0 0
        %6750 = vmatprep.subr.bf16.mxu0 0
        %6751 = vmatpush1.bf16.msra.mxu0 0
        %6752 = vmatprep.subr.bf16.mxu0 0
        %6753 = vmatpush1.bf16.msra.mxu0 0
        %6754 = vmatprep.subr.bf16.mxu0 0
        %6755 = vmatpush1.bf16.msra.mxu0 0
        %6756 = vmatprep.subr.bf16.mxu0 0
        %6757 = vmatpush1.bf16.msra.mxu0 0
        %6758 = vmatprep.subr.bf16.mxu0 0
        %6759 = vmatpush1.bf16.msra.mxu0 0
        %6760 = vmatprep.subr.bf16.mxu0 0
        %6761 = vmatpush1.bf16.msra.mxu0 0
        %6762 = vmatprep.subr.bf16.mxu0 0
        %6763 = vmatpush1.bf16.msra.mxu0 0
        %6764 = vmatprep.subr.bf16.mxu0 0
        %6765 = vmatpush1.bf16.msra.mxu0 0
        %6766 = vmatprep.subr.bf16.mxu0 0
        %6767 = vmatpush1.bf16.msra.mxu0 0
        %6768 = vmatprep.subr.bf16.mxu0 0
        %6769 = vmatpush1.bf16.msra.mxu0 0
        %6770 = vmatprep.mubr.bf16.mxu0 0
        %6771 = vmatmul.mubr.bf16.gmra.mrb[0].mxu0 %v5711
        %v6772 = vpop.f32.mrb[0].mxu0
        %v6773 = vadd.f32 %v5708, %v6772
        %v6774 = vpop.f32.mrb[0].mxu0
        %v6775 = vadd.f32 %v5708, %v6774
        %v6776 = vpop.f32.mrb[0].mxu0
        %v6777 = vpop.f32.mrb[0].mxu0
        %6778 = vdwg.mxu0
        %6779 = vmatprep.subr.bf16.mxu0 %v5503
        %6780 = vmatpush1.bf16.msra.mxu0 %v5502
        %6781 = vmatprep.subr.bf16.mxu0 %v5567
        %6782 = vmatpush1.bf16.msra.mxu0 %v5566
        %6783 = vmatprep.subr.bf16.mxu0 %v5631
        %6784 = vmatpush1.bf16.msra.mxu0 %v5630
        %6785 = vmatprep.subr.bf16.mxu0 %v5695
        %6786 = vmatpush1.bf16.msra.mxu0 %v5694
        %6787 = vmatprep.subr.bf16.mxu0 0
        %6788 = vmatpush1.bf16.msra.mxu0 0
        %6789 = vmatprep.subr.bf16.mxu0 0
        %6790 = vmatpush1.bf16.msra.mxu0 0
        %6791 = vmatprep.subr.bf16.mxu0 0
        %6792 = vmatpush1.bf16.msra.mxu0 0
        %6793 = vmatprep.subr.bf16.mxu0 0
        %6794 = vmatpush1.bf16.msra.mxu0 0
        %6795 = vmatprep.subr.bf16.mxu0 0
        %6796 = vmatpush1.bf16.msra.mxu0 0
        %6797 = vmatprep.subr.bf16.mxu0 0
        %6798 = vmatpush1.bf16.msra.mxu0 0
        %6799 = vmatprep.subr.bf16.mxu0 0
        %6800 = vmatpush1.bf16.msra.mxu0 0
        %6801 = vmatprep.subr.bf16.mxu0 0
        %6802 = vmatpush1.bf16.msra.mxu0 0
        %6803 = vmatprep.subr.bf16.mxu0 0
        %6804 = vmatpush1.bf16.msra.mxu0 0
        %6805 = vmatprep.subr.bf16.mxu0 0
        %6806 = vmatpush1.bf16.msra.mxu0 0
        %6807 = vmatprep.subr.bf16.mxu0 0
        %6808 = vmatpush1.bf16.msra.mxu0 0
        %6809 = vmatprep.subr.bf16.mxu0 0
        %6810 = vmatpush1.bf16.msra.mxu0 0
        %6811 = vmatprep.mubr.bf16.mxu0 0
        %6812 = vmatmul.mubr.bf16.gmra.mrb[0].mxu0 %v5711
        %v6813 = vpop.f32.mrb[0].mxu0
        %v6814 = vadd.f32 %v5708, %v6813
        %v6815 = vpop.f32.mrb[0].mxu0
        %v6816 = vadd.f32 %v5708, %v6815
        %v6817 = vpop.f32.mrb[0].mxu0
        %v6818 = vpop.f32.mrb[0].mxu0
        %6819 = vdwg.mxu0
        %6820 = vmatprep.subr.bf16.mxu0 %v5505
        %6821 = vmatpush1.bf16.msra.mxu0 %v5504
        %6822 = vmatprep.subr.bf16.mxu0 %v5569
        %6823 = vmatpush1.bf16.msra.mxu0 %v5568
        %6824 = vmatprep.subr.bf16.mxu0 %v5633
        %6825 = vmatpush1.bf16.msra.mxu0 %v5632
        %6826 = vmatprep.subr.bf16.mxu0 %v5697
        %6827 = vmatpush1.bf16.msra.mxu0 %v5696
        %6828 = vmatprep.subr.bf16.mxu0 0
        %6829 = vmatpush1.bf16.msra.mxu0 0
        %6830 = vmatprep.subr.bf16.mxu0 0
        %6831 = vmatpush1.bf16.msra.mxu0 0
        %6832 = vmatprep.subr.bf16.mxu0 0
        %6833 = vmatpush1.bf16.msra.mxu0 0
        %6834 = vmatprep.subr.bf16.mxu0 0
        %6835 = vmatpush1.bf16.msra.mxu0 0
        %6836 = vmatprep.subr.bf16.mxu0 0
        %6837 = vmatpush1.bf16.msra.mxu0 0
        %6838 = vmatprep.subr.bf16.mxu0 0
        %6839 = vmatpush1.bf16.msra.mxu0 0
        %6840 = vmatprep.subr.bf16.mxu0 0
        %6841 = vmatpush1.bf16.msra.mxu0 0
        %6842 = vmatprep.subr.bf16.mxu0 0
        %6843 = vmatpush1.bf16.msra.mxu0 0
        %6844 = vmatprep.subr.bf16.mxu0 0
        %6845 = vmatpush1.bf16.msra.mxu0 0
        %6846 = vmatprep.subr.bf16.mxu0 0
        %6847 = vmatpush1.bf16.msra.mxu0 0
        %6848 = vmatprep.subr.bf16.mxu0 0
        %6849 = vmatpush1.bf16.msra.mxu0 0
        %6850 = vmatprep.subr.bf16.mxu0 0
        %6851 = vmatpush1.bf16.msra.mxu0 0
        %6852 = vmatprep.mubr.bf16.mxu0 0
        %6853 = vmatmul.mubr.bf16.gmra.mrb[0].mxu0 %v5711
        %v6854 = vpop.f32.mrb[0].mxu0
        %v6855 = vadd.f32 %v5708, %v6854
        %v6856 = vpop.f32.mrb[0].mxu0
        %v6857 = vadd.f32 %v5708, %v6856
        %v6858 = vpop.f32.mrb[0].mxu0
        %v6859 = vpop.f32.mrb[0].mxu0
        %6860 = vdwg.mxu0
        %6861 = vmatprep.subr.bf16.mxu0 %v5507
        %6862 = vmatpush1.bf16.msra.mxu0 %v5506
        %6863 = vmatprep.subr.bf16.mxu0 %v5571
        %6864 = vmatpush1.bf16.msra.mxu0 %v5570
        %6865 = vmatprep.subr.bf16.mxu0 %v5635
        %6866 = vmatpush1.bf16.msra.mxu0 %v5634
        %6867 = vmatprep.subr.bf16.mxu0 %v5699
        %6868 = vmatpush1.bf16.msra.mxu0 %v5698
        %6869 = vmatprep.subr.bf16.mxu0 0
        %6870 = vmatpush1.bf16.msra.mxu0 0
        %6871 = vmatprep.subr.bf16.mxu0 0
        %6872 = vmatpush1.bf16.msra.mxu0 0
        %6873 = vmatprep.subr.bf16.mxu0 0
        %6874 = vmatpush1.bf16.msra.mxu0 0
        %6875 = vmatprep.subr.bf16.mxu0 0
        %6876 = vmatpush1.bf16.msra.mxu0 0
        %6877 = vmatprep.subr.bf16.mxu0 0
        %6878 = vmatpush1.bf16.msra.mxu0 0
        %6879 = vmatprep.subr.bf16.mxu0 0
        %6880 = vmatpush1.bf16.msra.mxu0 0
        %6881 = vmatprep.subr.bf16.mxu0 0
        %6882 = vmatpush1.bf16.msra.mxu0 0
        %6883 = vmatprep.subr.bf16.mxu0 0
        %6884 = vmatpush1.bf16.msra.mxu0 0
        %6885 = vmatprep.subr.bf16.mxu0 0
        %6886 = vmatpush1.bf16.msra.mxu0 0
        %6887 = vmatprep.subr.bf16.mxu0 0
        %6888 = vmatpush1.bf16.msra.mxu0 0
        %6889 = vmatprep.subr.bf16.mxu0 0
        %6890 = vmatpush1.bf16.msra.mxu0 0
        %6891 = vmatprep.subr.bf16.mxu0 0
        %6892 = vmatpush1.bf16.msra.mxu0 0
        %6893 = vmatprep.mubr.bf16.mxu0 0
        %6894 = vmatmul.mubr.bf16.gmra.mrb[0].mxu0 %v5711
        %v6895 = vpop.f32.mrb[0].mxu0
        %v6896 = vadd.f32 %v5708, %v6895
        %v6897 = vpop.f32.mrb[0].mxu0
        %v6898 = vadd.f32 %v5708, %v6897
        %v6899 = vpop.f32.mrb[0].mxu0
        %v6900 = vpop.f32.mrb[0].mxu0
        %6901 = vdwg.mxu0
        %6902 = vmatprep.subr.bf16.mxu0 %v5509
        %6903 = vmatpush1.bf16.msra.mxu0 %v5508
        %6904 = vmatprep.subr.bf16.mxu0 %v5573
        %6905 = vmatpush1.bf16.msra.mxu0 %v5572
        %6906 = vmatprep.subr.bf16.mxu0 %v5637
        %6907 = vmatpush1.bf16.msra.mxu0 %v5636
        %6908 = vmatprep.subr.bf16.mxu0 %v5701
        %6909 = vmatpush1.bf16.msra.mxu0 %v5700
        %6910 = vmatprep.subr.bf16.mxu0 0
        %6911 = vmatpush1.bf16.msra.mxu0 0
        %6912 = vmatprep.subr.bf16.mxu0 0
        %6913 = vmatpush1.bf16.msra.mxu0 0
        %6914 = vmatprep.subr.bf16.mxu0 0
        %6915 = vmatpush1.bf16.msra.mxu0 0
        %6916 = vmatprep.subr.bf16.mxu0 0
        %6917 = vmatpush1.bf16.msra.mxu0 0
        %6918 = vmatprep.subr.bf16.mxu0 0
        %6919 = vmatpush1.bf16.msra.mxu0 0
        %6920 = vmatprep.subr.bf16.mxu0 0
        %6921 = vmatpush1.bf16.msra.mxu0 0
        %6922 = vmatprep.subr.bf16.mxu0 0
        %6923 = vmatpush1.bf16.msra.mxu0 0
        %6924 = vmatprep.subr.bf16.mxu0 0
        %6925 = vmatpush1.bf16.msra.mxu0 0
        %6926 = vmatprep.subr.bf16.mxu0 0
        %6927 = vmatpush1.bf16.msra.mxu0 0
        %6928 = vmatprep.subr.bf16.mxu0 0
        %6929 = vmatpush1.bf16.msra.mxu0 0
        %6930 = vmatprep.subr.bf16.mxu0 0
        %6931 = vmatpush1.bf16.msra.mxu0 0
        %6932 = vmatprep.subr.bf16.mxu0 0
        %6933 = vmatpush1.bf16.msra.mxu0 0
        %6934 = vmatprep.mubr.bf16.mxu0 0
        %6935 = vmatmul.mubr.bf16.gmra.mrb[0].mxu0 %v5711
        %v6936 = vpop.f32.mrb[0].mxu0
        %v6937 = vadd.f32 %v5708, %v6936
        %v6938 = vpop.f32.mrb[0].mxu0
        %v6939 = vadd.f32 %v5708, %v6938
        %v6940 = vpop.f32.mrb[0].mxu0
        %v6941 = vpop.f32.mrb[0].mxu0
        %6942 = vdwg.mxu0
        %6943 = vmatprep.subr.bf16.mxu0 %v5511
        %6944 = vmatpush1.bf16.msra.mxu0 %v5510
        %6945 = vmatprep.subr.bf16.mxu0 %v5575
        %6946 = vmatpush1.bf16.msra.mxu0 %v5574
        %6947 = vmatprep.subr.bf16.mxu0 %v5639
        %6948 = vmatpush1.bf16.msra.mxu0 %v5638
        %6949 = vmatprep.subr.bf16.mxu0 %v5703
        %6950 = vmatpush1.bf16.msra.mxu0 %v5702
        %6951 = vmatprep.subr.bf16.mxu0 0
        %6952 = vmatpush1.bf16.msra.mxu0 0
        %6953 = vmatprep.subr.bf16.mxu0 0
        %6954 = vmatpush1.bf16.msra.mxu0 0
        %6955 = vmatprep.subr.bf16.mxu0 0
        %6956 = vmatpush1.bf16.msra.mxu0 0
        %6957 = vmatprep.subr.bf16.mxu0 0
        %6958 = vmatpush1.bf16.msra.mxu0 0
        %6959 = vmatprep.subr.bf16.mxu0 0
        %6960 = vmatpush1.bf16.msra.mxu0 0
        %6961 = vmatprep.subr.bf16.mxu0 0
        %6962 = vmatpush1.bf16.msra.mxu0 0
        %6963 = vmatprep.subr.bf16.mxu0 0
        %6964 = vmatpush1.bf16.msra.mxu0 0
        %6965 = vmatprep.subr.bf16.mxu0 0
        %6966 = vmatpush1.bf16.msra.mxu0 0
        %6967 = vmatprep.subr.bf16.mxu0 0
        %6968 = vmatpush1.bf16.msra.mxu0 0
        %6969 = vmatprep.subr.bf16.mxu0 0
        %6970 = vmatpush1.bf16.msra.mxu0 0
        %6971 = vmatprep.subr.bf16.mxu0 0
        %6972 = vmatpush1.bf16.msra.mxu0 0
        %6973 = vmatprep.subr.bf16.mxu0 0
        %6974 = vmatpush1.bf16.msra.mxu0 0
        %6975 = vmatprep.mubr.bf16.mxu0 0
        %6976 = vmatmul.mubr.bf16.gmra.mrb[0].mxu0 %v5711
        %v6977 = vpop.f32.mrb[0].mxu0
        %v6978 = vadd.f32 %v5708, %v6977
        %v6979 = vpop.f32.mrb[0].mxu0
        %v6980 = vadd.f32 %v5708, %v6979
        %v6981 = vpop.f32.mrb[0].mxu0
        %v6982 = vpop.f32.mrb[0].mxu0
        %6983 = vdwg.mxu0
        %6984 = vmatprep.subr.bf16.mxu0 %v5513
        %6985 = vmatpush1.bf16.msra.mxu0 %v5512
        %6986 = vmatprep.subr.bf16.mxu0 %v5577
        %6987 = vmatpush1.bf16.msra.mxu0 %v5576
        %6988 = vmatprep.subr.bf16.mxu0 %v5641
        %6989 = vmatpush1.bf16.msra.mxu0 %v5640
        %6990 = vmatprep.subr.bf16.mxu0 %v5705
        %6991 = vmatpush1.bf16.msra.mxu0 %v5704
        %6992 = vmatprep.subr.bf16.mxu0 0
        %6993 = vmatpush1.bf16.msra.mxu0 0
        %6994 = vmatprep.subr.bf16.mxu0 0
        %6995 = vmatpush1.bf16.msra.mxu0 0
        %6996 = vmatprep.subr.bf16.mxu0 0
        %6997 = vmatpush1.bf16.msra.mxu0 0
        %6998 = vmatprep.subr.bf16.mxu0 0
        %6999 = vmatpush1.bf16.msra.mxu0 0
        %7000 = vmatprep.subr.bf16.mxu0 0
        %7001 = vmatpush1.bf16.msra.mxu0 0
        %7002 = vmatprep.subr.bf16.mxu0 0
        %7003 = vmatpush1.bf16.msra.mxu0 0
        %7004 = vmatprep.subr.bf16.mxu0 0
        %7005 = vmatpush1.bf16.msra.mxu0 0
        %7006 = vmatprep.subr.bf16.mxu0 0
        %7007 = vmatpush1.bf16.msra.mxu0 0
        %7008 = vmatprep.subr.bf16.mxu0 0
        %7009 = vmatpush1.bf16.msra.mxu0 0
        %7010 = vmatprep.subr.bf16.mxu0 0
        %7011 = vmatpush1.bf16.msra.mxu0 0
        %7012 = vmatprep.subr.bf16.mxu0 0
        %7013 = vmatpush1.bf16.msra.mxu0 0
        %7014 = vmatprep.subr.bf16.mxu0 0
        %7015 = vmatpush1.bf16.msra.mxu0 0
        %7016 = vmatprep.mubr.bf16.mxu0 0
        %7017 = vmatmul.mubr.bf16.gmra.mrb[0].mxu0 %v5711
        %v7018 = vpop.f32.mrb[0].mxu0
        %v7019 = vadd.f32 %v5708, %v7018
        %v7020 = vpop.f32.mrb[0].mxu0
        %v7021 = vadd.f32 %v5708, %v7020
        %v7022 = vpop.f32.mrb[0].mxu0
        %v7023 = vpop.f32.mrb[0].mxu0
        %7024 = vdwg.mxu0
        %v7089 = vcombine.low %v5748, %v5750
        %v7090 = vcombine.low %v5789, %v5791
        %v7091 = vcombine.low %v5830, %v5832
        %v7092 = vcombine.low %v5871, %v5873
        %v7094 = vunpack.c.l.s4 1966171168
        %v7095 = vunpack.c.0.s8 %v7094
        %v7096 = vlaneseq
        %v7097 = vshrl.u32 %v7096, 7
        %v7098 = vsub.s32 %v7095, %v7097
        %v7099 = vrot.slane %v7089, %v7098
        %v7101 = vunpack.c.l.s4 1966171168
        %v7102 = vunpack.c.0.s8 %v7101
        %v7103 = vlaneseq
        %v7104 = vshrl.u32 %v7103, 7
        %v7105 = vsub.s32 %v7102, %v7104
        %v7106 = vrot.slane %v7090, %v7105
        %v7108 = vunpack.c.l.s4 1966171168
        %v7109 = vunpack.c.0.s8 %v7108
        %v7110 = vlaneseq
        %v7111 = vshrl.u32 %v7110, 7
        %v7112 = vsub.s32 %v7109, %v7111
        %v7113 = vrot.slane %v7091, %v7112
        %v7115 = vunpack.c.l.s4 1966171168
        %v7116 = vunpack.c.0.s8 %v7115
        %v7117 = vlaneseq
        %v7118 = vshrl.u32 %v7117, 7
        %v7119 = vsub.s32 %v7116, %v7118
        %v7120 = vrot.slane %v7092, %v7119
        %v7121 = vcombine.low %v7099, %v7106
        %v7122 = vcombine.low %v7113, %v7120
        %v7124 = vunpack.c.l.s4 1966171168
        %v7125 = vunpack.c.0.s8 %v7124
        %v7126 = vlaneseq
        %v7127 = vshrl.u32 %v7126, 7
        %v7128 = vsub.s32 %v7125, %v7127
        %v7129 = vrot.slane %v7121, %v7128
        %v7131 = vunpack.c.l.s4 1966171168
        %v7132 = vunpack.c.0.s8 %v7131
        %v7133 = vlaneseq
        %v7134 = vshrl.u32 %v7133, 7
        %v7135 = vsub.s32 %v7132, %v7134
        %v7136 = vrot.slane %v7122, %v7135
        %v7137 = vcombine.low %v7129, %v7136
        %v7138 = vcombine.low %v5912, %v5914
        %v7139 = vcombine.low %v5953, %v5955
        %v7140 = vcombine.low %v5994, %v5996
        %v7141 = vcombine.low %v6035, %v6037
        %v7143 = vunpack.c.l.s4 1966171168
        %v7144 = vunpack.c.0.s8 %v7143
        %v7145 = vlaneseq
        %v7146 = vshrl.u32 %v7145, 7
        %v7147 = vsub.s32 %v7144, %v7146
        %v7148 = vrot.slane %v7138, %v7147
        %v7150 = vunpack.c.l.s4 1966171168
        %v7151 = vunpack.c.0.s8 %v7150
        %v7152 = vlaneseq
        %v7153 = vshrl.u32 %v7152, 7
        %v7154 = vsub.s32 %v7151, %v7153
        %v7155 = vrot.slane %v7139, %v7154
        %v7157 = vunpack.c.l.s4 1966171168
        %v7158 = vunpack.c.0.s8 %v7157
        %v7159 = vlaneseq
        %v7160 = vshrl.u32 %v7159, 7
        %v7161 = vsub.s32 %v7158, %v7160
        %v7162 = vrot.slane %v7140, %v7161
        %v7164 = vunpack.c.l.s4 1966171168
        %v7165 = vunpack.c.0.s8 %v7164
        %v7166 = vlaneseq
        %v7167 = vshrl.u32 %v7166, 7
        %v7168 = vsub.s32 %v7165, %v7167
        %v7169 = vrot.slane %v7141, %v7168
        %v7170 = vcombine.low %v7148, %v7155
        %v7171 = vcombine.low %v7162, %v7169
        %v7173 = vunpack.c.l.s4 1966171168
        %v7174 = vunpack.c.0.s8 %v7173
        %v7175 = vlaneseq
        %v7176 = vshrl.u32 %v7175, 7
        %v7177 = vsub.s32 %v7174, %v7176
        %v7178 = vrot.slane %v7170, %v7177
        %v7180 = vunpack.c.l.s4 1966171168
        %v7181 = vunpack.c.0.s8 %v7180
        %v7182 = vlaneseq
        %v7183 = vshrl.u32 %v7182, 7
        %v7184 = vsub.s32 %v7181, %v7183
        %v7185 = vrot.slane %v7171, %v7184
        %v7186 = vcombine.low %v7178, %v7185
        %v7187 = vcombine.low %v6076, %v6078
        %v7188 = vcombine.low %v6117, %v6119
        %v7189 = vcombine.low %v6158, %v6160
        %v7190 = vcombine.low %v6199, %v6201
        %v7192 = vunpack.c.l.s4 1966171168
        %v7193 = vunpack.c.0.s8 %v7192
        %v7194 = vlaneseq
        %v7195 = vshrl.u32 %v7194, 7
        %v7196 = vsub.s32 %v7193, %v7195
        %v7197 = vrot.slane %v7187, %v7196
        %v7199 = vunpack.c.l.s4 1966171168
        %v7200 = vunpack.c.0.s8 %v7199
        %v7201 = vlaneseq
        %v7202 = vshrl.u32 %v7201, 7
        %v7203 = vsub.s32 %v7200, %v7202
        %v7204 = vrot.slane %v7188, %v7203
        %v7206 = vunpack.c.l.s4 1966171168
        %v7207 = vunpack.c.0.s8 %v7206
        %v7208 = vlaneseq
        %v7209 = vshrl.u32 %v7208, 7
        %v7210 = vsub.s32 %v7207, %v7209
        %v7211 = vrot.slane %v7189, %v7210
        %v7213 = vunpack.c.l.s4 1966171168
        %v7214 = vunpack.c.0.s8 %v7213
        %v7215 = vlaneseq
        %v7216 = vshrl.u32 %v7215, 7
        %v7217 = vsub.s32 %v7214, %v7216
        %v7218 = vrot.slane %v7190, %v7217
        %v7219 = vcombine.low %v7197, %v7204
        %v7220 = vcombine.low %v7211, %v7218
        %v7222 = vunpack.c.l.s4 1966171168
        %v7223 = vunpack.c.0.s8 %v7222
        %v7224 = vlaneseq
        %v7225 = vshrl.u32 %v7224, 7
        %v7226 = vsub.s32 %v7223, %v7225
        %v7227 = vrot.slane %v7219, %v7226
        %v7229 = vunpack.c.l.s4 1966171168
        %v7230 = vunpack.c.0.s8 %v7229
        %v7231 = vlaneseq
        %v7232 = vshrl.u32 %v7231, 7
        %v7233 = vsub.s32 %v7230, %v7232
        %v7234 = vrot.slane %v7220, %v7233
        %v7235 = vcombine.low %v7227, %v7234
        %v7236 = vcombine.low %v6240, %v6242
        %v7237 = vcombine.low %v6281, %v6283
        %v7238 = vcombine.low %v6322, %v6324
        %v7239 = vcombine.low %v6363, %v6365
        %v7241 = vunpack.c.l.s4 1966171168
        %v7242 = vunpack.c.0.s8 %v7241
        %v7243 = vlaneseq
        %v7244 = vshrl.u32 %v7243, 7
        %v7245 = vsub.s32 %v7242, %v7244
        %v7246 = vrot.slane %v7236, %v7245
        %v7248 = vunpack.c.l.s4 1966171168
        %v7249 = vunpack.c.0.s8 %v7248
        %v7250 = vlaneseq
        %v7251 = vshrl.u32 %v7250, 7
        %v7252 = vsub.s32 %v7249, %v7251
        %v7253 = vrot.slane %v7237, %v7252
        %v7255 = vunpack.c.l.s4 1966171168
        %v7256 = vunpack.c.0.s8 %v7255
        %v7257 = vlaneseq
        %v7258 = vshrl.u32 %v7257, 7
        %v7259 = vsub.s32 %v7256, %v7258
        %v7260 = vrot.slane %v7238, %v7259
        %v7262 = vunpack.c.l.s4 1966171168
        %v7263 = vunpack.c.0.s8 %v7262
        %v7264 = vlaneseq
        %v7265 = vshrl.u32 %v7264, 7
        %v7266 = vsub.s32 %v7263, %v7265
        %v7267 = vrot.slane %v7239, %v7266
        %v7268 = vcombine.low %v7246, %v7253
        %v7269 = vcombine.low %v7260, %v7267
        %v7271 = vunpack.c.l.s4 1966171168
        %v7272 = vunpack.c.0.s8 %v7271
        %v7273 = vlaneseq
        %v7274 = vshrl.u32 %v7273, 7
        %v7275 = vsub.s32 %v7272, %v7274
        %v7276 = vrot.slane %v7268, %v7275
        %v7278 = vunpack.c.l.s4 1966171168
        %v7279 = vunpack.c.0.s8 %v7278
        %v7280 = vlaneseq
        %v7281 = vshrl.u32 %v7280, 7
        %v7282 = vsub.s32 %v7279, %v7281
        %v7283 = vrot.slane %v7269, %v7282
        %v7284 = vcombine.low %v7276, %v7283
        %v7285 = vcombine.low %v6404, %v6406
        %v7286 = vcombine.low %v6445, %v6447
        %v7287 = vcombine.low %v6486, %v6488
        %v7288 = vcombine.low %v6527, %v6529
        %v7290 = vunpack.c.l.s4 1966171168
        %v7291 = vunpack.c.0.s8 %v7290
        %v7292 = vlaneseq
        %v7293 = vshrl.u32 %v7292, 7
        %v7294 = vsub.s32 %v7291, %v7293
        %v7295 = vrot.slane %v7285, %v7294
        %v7297 = vunpack.c.l.s4 1966171168
        %v7298 = vunpack.c.0.s8 %v7297
        %v7299 = vlaneseq
        %v7300 = vshrl.u32 %v7299, 7
        %v7301 = vsub.s32 %v7298, %v7300
        %v7302 = vrot.slane %v7286, %v7301
        %v7304 = vunpack.c.l.s4 1966171168
        %v7305 = vunpack.c.0.s8 %v7304
        %v7306 = vlaneseq
        %v7307 = vshrl.u32 %v7306, 7
        %v7308 = vsub.s32 %v7305, %v7307
        %v7309 = vrot.slane %v7287, %v7308
        %v7311 = vunpack.c.l.s4 1966171168
        %v7312 = vunpack.c.0.s8 %v7311
        %v7313 = vlaneseq
        %v7314 = vshrl.u32 %v7313, 7
        %v7315 = vsub.s32 %v7312, %v7314
        %v7316 = vrot.slane %v7288, %v7315
        %v7317 = vcombine.low %v7295, %v7302
        %v7318 = vcombine.low %v7309, %v7316
        %v7320 = vunpack.c.l.s4 1966171168
        %v7321 = vunpack.c.0.s8 %v7320
        %v7322 = vlaneseq
        %v7323 = vshrl.u32 %v7322, 7
        %v7324 = vsub.s32 %v7321, %v7323
        %v7325 = vrot.slane %v7317, %v7324
        %v7327 = vunpack.c.l.s4 1966171168
        %v7328 = vunpack.c.0.s8 %v7327
        %v7329 = vlaneseq
        %v7330 = vshrl.u32 %v7329, 7
        %v7331 = vsub.s32 %v7328, %v7330
        %v7332 = vrot.slane %v7318, %v7331
        %v7333 = vcombine.low %v7325, %v7332
        %v7334 = vcombine.low %v6568, %v6570
        %v7335 = vcombine.low %v6609, %v6611
        %v7336 = vcombine.low %v6650, %v6652
        %v7337 = vcombine.low %v6691, %v6693
        %v7339 = vunpack.c.l.s4 1966171168
        %v7340 = vunpack.c.0.s8 %v7339
        %v7341 = vlaneseq
        %v7342 = vshrl.u32 %v7341, 7
        %v7343 = vsub.s32 %v7340, %v7342
        %v7344 = vrot.slane %v7334, %v7343
        %v7346 = vunpack.c.l.s4 1966171168
        %v7347 = vunpack.c.0.s8 %v7346
        %v7348 = vlaneseq
        %v7349 = vshrl.u32 %v7348, 7
        %v7350 = vsub.s32 %v7347, %v7349
        %v7351 = vrot.slane %v7335, %v7350
        %v7353 = vunpack.c.l.s4 1966171168
        %v7354 = vunpack.c.0.s8 %v7353
        %v7355 = vlaneseq
        %v7356 = vshrl.u32 %v7355, 7
        %v7357 = vsub.s32 %v7354, %v7356
        %v7358 = vrot.slane %v7336, %v7357
        %v7360 = vunpack.c.l.s4 1966171168
        %v7361 = vunpack.c.0.s8 %v7360
        %v7362 = vlaneseq
        %v7363 = vshrl.u32 %v7362, 7
        %v7364 = vsub.s32 %v7361, %v7363
        %v7365 = vrot.slane %v7337, %v7364
        %v7366 = vcombine.low %v7344, %v7351
        %v7367 = vcombine.low %v7358, %v7365
        %v7369 = vunpack.c.l.s4 1966171168
        %v7370 = vunpack.c.0.s8 %v7369
        %v7371 = vlaneseq
        %v7372 = vshrl.u32 %v7371, 7
        %v7373 = vsub.s32 %v7370, %v7372
        %v7374 = vrot.slane %v7366, %v7373
        %v7376 = vunpack.c.l.s4 1966171168
        %v7377 = vunpack.c.0.s8 %v7376
        %v7378 = vlaneseq
        %v7379 = vshrl.u32 %v7378, 7
        %v7380 = vsub.s32 %v7377, %v7379
        %v7381 = vrot.slane %v7367, %v7380
        %v7382 = vcombine.low %v7374, %v7381
        %v7383 = vcombine.low %v6732, %v6734
        %v7384 = vcombine.low %v6773, %v6775
        %v7385 = vcombine.low %v6814, %v6816
        %v7386 = vcombine.low %v6855, %v6857
        %v7388 = vunpack.c.l.s4 1966171168
        %v7389 = vunpack.c.0.s8 %v7388
        %v7390 = vlaneseq
        %v7391 = vshrl.u32 %v7390, 7
        %v7392 = vsub.s32 %v7389, %v7391
        %v7393 = vrot.slane %v7383, %v7392
        %v7395 = vunpack.c.l.s4 1966171168
        %v7396 = vunpack.c.0.s8 %v7395
        %v7397 = vlaneseq
        %v7398 = vshrl.u32 %v7397, 7
        %v7399 = vsub.s32 %v7396, %v7398
        %v7400 = vrot.slane %v7384, %v7399
        %v7402 = vunpack.c.l.s4 1966171168
        %v7403 = vunpack.c.0.s8 %v7402
        %v7404 = vlaneseq
        %v7405 = vshrl.u32 %v7404, 7
        %v7406 = vsub.s32 %v7403, %v7405
        %v7407 = vrot.slane %v7385, %v7406
        %v7409 = vunpack.c.l.s4 1966171168
        %v7410 = vunpack.c.0.s8 %v7409
        %v7411 = vlaneseq
        %v7412 = vshrl.u32 %v7411, 7
        %v7413 = vsub.s32 %v7410, %v7412
        %v7414 = vrot.slane %v7386, %v7413
        %v7415 = vcombine.low %v7393, %v7400
        %v7416 = vcombine.low %v7407, %v7414
        %v7418 = vunpack.c.l.s4 1966171168
        %v7419 = vunpack.c.0.s8 %v7418
        %v7420 = vlaneseq
        %v7421 = vshrl.u32 %v7420, 7
        %v7422 = vsub.s32 %v7419, %v7421
        %v7423 = vrot.slane %v7415, %v7422
        %v7425 = vunpack.c.l.s4 1966171168
        %v7426 = vunpack.c.0.s8 %v7425
        %v7427 = vlaneseq
        %v7428 = vshrl.u32 %v7427, 7
        %v7429 = vsub.s32 %v7426, %v7428
        %v7430 = vrot.slane %v7416, %v7429
        %v7431 = vcombine.low %v7423, %v7430
        %v7432 = vcombine.low %v6896, %v6898
        %v7433 = vcombine.low %v6937, %v6939
        %v7434 = vcombine.low %v6978, %v6980
        %v7435 = vcombine.low %v7019, %v7021
        %v7437 = vunpack.c.l.s4 1966171168
        %v7438 = vunpack.c.0.s8 %v7437
        %v7439 = vlaneseq
        %v7440 = vshrl.u32 %v7439, 7
        %v7441 = vsub.s32 %v7438, %v7440
        %v7442 = vrot.slane %v7432, %v7441
        %v7444 = vunpack.c.l.s4 1966171168
        %v7445 = vunpack.c.0.s8 %v7444
        %v7446 = vlaneseq
        %v7447 = vshrl.u32 %v7446, 7
        %v7448 = vsub.s32 %v7445, %v7447
        %v7449 = vrot.slane %v7433, %v7448
        %v7451 = vunpack.c.l.s4 1966171168
        %v7452 = vunpack.c.0.s8 %v7451
        %v7453 = vlaneseq
        %v7454 = vshrl.u32 %v7453, 7
        %v7455 = vsub.s32 %v7452, %v7454
        %v7456 = vrot.slane %v7434, %v7455
        %v7458 = vunpack.c.l.s4 1966171168
        %v7459 = vunpack.c.0.s8 %v7458
        %v7460 = vlaneseq
        %v7461 = vshrl.u32 %v7460, 7
        %v7462 = vsub.s32 %v7459, %v7461
        %v7463 = vrot.slane %v7435, %v7462
        %v7464 = vcombine.low %v7442, %v7449
        %v7465 = vcombine.low %v7456, %v7463
        %v7467 = vunpack.c.l.s4 1966171168
        %v7468 = vunpack.c.0.s8 %v7467
        %v7469 = vlaneseq
        %v7470 = vshrl.u32 %v7469, 7
        %v7471 = vsub.s32 %v7468, %v7470
        %v7472 = vrot.slane %v7464, %v7471
        %v7474 = vunpack.c.l.s4 1966171168
        %v7475 = vunpack.c.0.s8 %v7474
        %v7476 = vlaneseq
        %v7477 = vshrl.u32 %v7476, 7
        %v7478 = vsub.s32 %v7475, %v7477
        %v7479 = vrot.slane %v7465, %v7478
        %v7480 = vcombine.low %v7472, %v7479
        %7489 = vst [vmem:[%s336] sm:$0xff] %v7137
        %7490 = vst [vmem:[%s336 + $0x8] sm:$0xff] %v7186
        %7491 = vst [vmem:[%s336 + $0x10] sm:$0xff] %v7235
        %7492 = vst [vmem:[%s336 + $0x18] sm:$0xff] %v7284
        %7493 = vst [vmem:[%s336 + $0x20] sm:$0xff] %v7333
        %7494 = vst [vmem:[%s336 + $0x28] sm:$0xff] %v7382
        %7495 = vst [vmem:[%s336 + $0x30] sm:$0xff] %v7431
        %7496 = vst [vmem:[%s336 + $0x38] sm:$0xff] %v7480
        %s7497 = sand.u32 %s209, 1
        %s7498 = scalar_lea.sflag [#allocation4], %s7497
        %s7499 = sand.u32 %s209, 1
        %s7500 = smul.addr %s7499, 64
        %s7501 = scalar_lea.vmem [#allocation3], %s7500
        // Predicated region
        $region53: #{tpu_custom_call.1} parent=51 // pred_check
          %p7502 = pneg %p219
        $region54: #{tpu_custom_call.1} parent=51 // pred_check_branch
          %7504 = sbr.rel (%p7502) target = $region56
        $region55: #{tpu_custom_call.1} parent=51 // pred_region
          %s7505 = smul.u32 64, %s23
          %s7506 = ssub.s32 79, %s7505
          %p7507 = scmp.lt.s32.totalorder %s7506, 64
          %s7508 = scalar_select %p7507, %s7506, 64
          %s7509 = smul.u32 16, %s7508
          %s7511 = ssub.s32 1024, %s7509
          %7512 = vsyncadd %s7498, %s7511
          %p7513 = scmp.ne.s32.totalorder 0, %s7509
          %s7514 = smul.addr %s7505, 16
          %s7515 = scalar_lea.hbm %s8, %s7514
          %s7516 = sshll.u32 %s7508, 4
          %s7517 = sshll.u32 %s7501, 4
          %s7518 = int_to_ptr.vmem [resolvable:$true] %s7517
          %7520 = dma.vmem_to_hbm [thread:$0]  (%p7513), %s7518, %s7516, %s7515, %s7498
        $region56: #{tpu_custom_call.1} parent=51 // pred_fallthru
          _
      $region52: #{tpu_custom_call.1} parent=5 // pred_fallthru
        _
      %p7521 = scmp.le.s32.totalorder 2, %s18
      // Predicated region
      $region57: #{tpu_custom_call.1} parent=5 // pred_check
        %p7522 = pneg %p7521
      $region58: #{tpu_custom_call.1} parent=5 // pred_check_branch
        %7524 = sbr.rel (%p7522) target = $region60
      $region59: #{tpu_custom_call.1} parent=5 // pred_region
        %s7525 = ssub.s32 %s18, 2
        // Predicated region
        $region61: #{tpu_custom_call.1} parent=59 // pred_check
          %p7526 = pneg %p225
        $region62: #{tpu_custom_call.1} parent=59 // pred_check_branch
          %7528 = sbr.rel (%p7526) target = $region64
        $region63: #{tpu_custom_call.1} parent=59 // pred_region
          %s7529 = sand.u32 %s210, 1
          %s7530 = scalar_lea.sflag [#allocation4], %s7529
          %s7531 = sand.u32 %s210, 1
          %s7532 = smul.addr %s7531, 64
          %s7533 = scalar_lea.vmem [#allocation3], %s7532
          %7534 = dma.done %s7530, 1024
        $region64: #{tpu_custom_call.1} parent=59 // pred_fallthru
          _
      $region60: #{tpu_custom_call.1} parent=5 // pred_fallthru
        _
    $region6: #{tpu_custom_call.1} parent=1 // loop_footer
      %s22 = sadd.s32 1, %s18
    $region7: #{tpu_custom_call.1} parent=1 // loop_footer_branch
      %17 = sbr.rel target = $region3
    $region8: #{tpu_custom_call.1} parent=1 // loop_exit
      _
    %7535 = vsyncpa [#allocation4], 1
    %s7536 = scalar_lea.sflag [#allocation4], 1
    %7537 = vsyncpa %s7536, 1

</llo_original>
